<compile_context>
chip_gen: v5e
topology: v5e:2x2
jax: 0.10.0
libtpu: 0.0.40
codegen_flags: <defaults>
</compile_context>

<pallas_src>
import functools

import numpy as np
import jax
import jax.numpy as jnp
from jax.experimental import pallas as pl
from jax.experimental.pallas import tpu as pltpu


# torchvision vgg16 "D" configuration.
VGG16_CFG = [64, 64, "M", 128, 128, "M", 256, 256, 256, "M",
             512, 512, 512, "M", 512, 512, 512, "M"]

VMEM_LIMIT = 32 * 1024 * 1024   # safe scoped-VMEM ceiling on v5e/v6e/v7x


def _round_up(x, m):
    return (x + m - 1) // m * m


def _pick_tm(m, cap=1152):
    """Largest tm <= cap that divides m and is a multiple of 8."""
    nm = 1
    while (m // nm) > cap or (m % nm) or ((m // nm) % 8):
        nm += 1
    return m // nm


# ----------------------------------------------------------------------------
# Fused 3x3 conv kernel: 9 shifted row-window matmuls + bias + ReLU epilogue.
# Activation is the whole zero-padded image, flattened to (Hp*Wp + 8, Cin)
# rows; tap (di, dj) is a constant flat row offset di*Wp + dj.
# ----------------------------------------------------------------------------
def _conv3x3_kernel(x_ref, w_ref, b_ref, o_ref, *, wp, relu):
    tm, tn = o_ref.shape
    base = pl.program_id(2) * tm
    acc = jnp.zeros((tm, tn), jnp.float32)
    for di in range(3):
        start = pl.multiple_of(base + di * wp, 8)      # 8-aligned dynamic start
        rows = x_ref[pl.ds(start, tm + 8), :]          # (tm+8, Cin) bf16
        for dj in range(3):
            a = rows[dj:dj + tm, :]                    # static sublane shift
            acc = acc + jnp.dot(a, w_ref[3 * di + dj],
                                preferred_element_type=jnp.float32)
    y = acc + b_ref[...]
    if relu:
        y = jnp.maximum(y, 0.0)
    o_ref[...] = y.astype(o_ref.dtype)


@functools.lru_cache(maxsize=None)
def _build_conv(nb, a_rows, cin_p, m, coutp, tm, tn, wp, relu):
    kernel = functools.partial(_conv3x3_kernel, wp=wp, relu=relu)
    # Grid (j, b, mt): weight block only changes with j (outermost) => every
    # conv weight streams from HBM exactly once; activation re-fetched per b.
    grid = (coutp // tn, nb, m // tm)
    return pl.pallas_call(
        kernel,
        out_shape=jax.ShapeDtypeStruct((nb, m, coutp), jnp.bfloat16),
        grid_spec=pltpu.PrefetchScalarGridSpec(
            num_scalar_prefetch=0,
            grid=grid,
            in_specs=[
                pl.BlockSpec((None, a_rows, cin_p), lambda j, b, mt: (b, 0, 0)),
                pl.BlockSpec((9, cin_p, tn), lambda j, b, mt: (0, 0, j)),
                pl.BlockSpec((1, tn), lambda j, b, mt: (0, j)),
            ],
            out_specs=pl.BlockSpec((None, tm, tn), lambda j, b, mt: (b, mt, j)),
            scratch_shapes=[]),
        compiler_params=pltpu.CompilerParams(
            dimension_semantics=("parallel", "parallel", "parallel"),
            vmem_limit_bytes=VMEM_LIMIT),
    )


def conv2d_relu(x, layer):
    """x: (N, H, W, Cin_p) bf16 (channels already padded). -> (N, H, W, Coutp) bf16."""
    n, h, w, cin_p = x.shape
    wp = _round_up(w + 2, 8)                 # padded width, multiple of 8
    m = h * wp                               # output rows per image (incl. garbage cols)
    a_rows = (h + 2) * wp + 8                # flattened padded image + 8 guard rows
    xp = jnp.pad(x, ((0, 0), (1, 1), (1, wp - w - 1), (0, 0)))
    a = xp.reshape(n, (h + 2) * wp, cin_p)
    a = jnp.pad(a, ((0, 0), (0, 8), (0, 0)))
    tm = _pick_tm(m)
    conv = _build_conv(n, a_rows, cin_p, m, layer["coutp"], tm, layer["tn"], wp, True)
    out = conv(a, layer["w"], layer["b"])
    out = out.reshape(n, h, wp, layer["coutp"])[:, :, :w, :]
    return out


def max_pool_2x2(x):
    n, h, w, c = x.shape
    return x.reshape(n, h // 2, 2, w // 2, 2, c).max(axis=(2, 4))


# ----------------------------------------------------------------------------
# Fused single-K matmul kernel (bias + optional ReLU) for the classifier.
# ----------------------------------------------------------------------------
def _mm_bias_kernel(a_ref, b_ref, bias_ref, o_ref, *, relu):
    y = jnp.dot(a_ref[...], b_ref[...], preferred_element_type=jnp.float32)
    y = y + bias_ref[...]
    if relu:
        y = jnp.maximum(y, 0.0)
    o_ref[...] = y.astype(o_ref.dtype)


@functools.lru_cache(maxsize=None)
def _build_mm(mp, kp, np_, tm, tn, relu, out_dtype_name):
    out_dtype = jnp.dtype(out_dtype_name)
    kernel = functools.partial(_mm_bias_kernel, relu=relu)
    return pl.pallas_call(
        kernel,
        out_shape=jax.ShapeDtypeStruct((mp, np_), out_dtype),
        grid_spec=pltpu.PrefetchScalarGridSpec(
            num_scalar_prefetch=0,
            grid=(mp // tm, np_ // tn),
            in_specs=[pl.BlockSpec((tm, kp), lambda i, j: (i, 0)),
                      pl.BlockSpec((kp, tn), lambda i, j: (0, j)),
                      pl.BlockSpec((1, tn), lambda i, j: (0, j))],
            out_specs=pl.BlockSpec((tm, tn), lambda i, j: (i, j)),
            scratch_shapes=[]),
        compiler_params=pltpu.CompilerParams(
            dimension_semantics=("parallel", "parallel"),
            vmem_limit_bytes=VMEM_LIMIT),
    )


def linear(x, layer, *, relu, out_dtype):
    m, k = x.shape
    kp, np_, n, tn = layer["kp"], layer["np"], layer["n"], layer["tn"]
    tm = min(128, _round_up(m, 8))
    mp = _round_up(m, tm)
    a = x.astype(jnp.bfloat16)
    if (mp, kp) != (m, k):
        a = jnp.pad(a, ((0, mp - m), (0, kp - k)))
    out = _build_mm(mp, kp, np_, tm, tn, bool(relu),
                    jnp.dtype(out_dtype).name)(a, layer["w"], layer["b"])
    return out[:m, :n]


# ----------------------------------------------------------------------------
# Parameter prep (weights padded / transposed / cast to bf16 once at init).
# ----------------------------------------------------------------------------
def _prep_conv(key, cin, cin_p, cout):
    cout_p = _round_up(cout, 128)
    k1, k2 = jax.random.split(key)
    fan_in = cin * 9
    w = jax.random.normal(k1, (cout, cin, 3, 3), jnp.float32) * (2.0 / fan_in) ** 0.5
    b = 0.01 * jax.random.normal(k2, (cout,), jnp.float32)
    # OIHW -> (kh, kw, cin, cout) -> (9, cin, cout); tap t = di*3 + dj.
    wt = jnp.transpose(w, (2, 3, 1, 0)).reshape(9, cin, cout)
    wt = jnp.pad(wt, ((0, 0), (0, cin_p - cin), (0, cout_p - cout))).astype(jnp.bfloat16)
    bp = jnp.pad(b, (0, cout_p - cout)).reshape(1, cout_p).astype(jnp.float32)
    return dict(w=wt, b=bp, cout=cout, coutp=cout_p, cin_p=cin_p,
                tn=min(cout_p, 256))


def _prep_linear_from_mat(wmat, bias):
    """wmat: (K, N) f32, bias: (N,) f32."""
    k, n = wmat.shape
    kp = _round_up(k, 128)
    np_ = _round_up(n, 128)
    tn = 512 if np_ % 512 == 0 else (256 if np_ % 256 == 0 else 128)
    w = jnp.pad(wmat, ((0, kp - k), (0, np_ - n))).astype(jnp.bfloat16)
    b = jnp.pad(bias, (0, np_ - n)).reshape(1, np_).astype(jnp.float32)
    return dict(w=w, b=b, n=n, np=np_, kp=kp, tn=tn)


def _pool_fold_matrix(s, t=7):
    """(t, s) AdaptiveAvgPool averaging matrix (PyTorch window rule)."""
    p = np.zeros((t, s), np.float32)
    for i in range(t):
        lo = (i * s) // t
        hi = -((-(i + 1) * s) // t)
        p[i, lo:hi] = 1.0 / (hi - lo)
    return jnp.asarray(p)


def _prep_fc1_folded(key, s, out_f=4096):
    """Full torchvision fc1 (4096 x 25088) with AdaptiveAvgPool((7,7)) from an
    (s, s) feature map folded into the weight => effective K = 512*s*s."""
    k1, k2 = jax.random.split(key)
    in_f = 512 * 7 * 7
    w = jax.random.normal(k1, (out_f, in_f), jnp.float32) * (1.0 / in_f) ** 0.5
    b = 0.01 * jax.random.normal(k2, (out_f,), jnp.float32)
    p = _pool_fold_matrix(s)                               # (7, s)
    w4 = w.reshape(out_f, 512, 7, 7)
    w_eff = jnp.einsum("ocij,ih,jw->ochw", w4, p, p)       # exact linear fold
    wmat = w_eff.reshape(out_f, 512 * s * s).T             # (512*s*s, 4096)
    return _prep_linear_from_mat(wmat, b)


def init_params(key, num_classes, img_size=64):
    assert img_size % 32 == 0
    params = {"features": []}
    cin, cin_p, idx = 3, 32, 0                 # first conv input padded to 32 ch
    for v in VGG16_CFG:
        if v == "M":
            continue
        layer = _prep_conv(jax.random.fold_in(key, idx), cin, cin_p, v)
        params["features"].append(layer)
        cin, cin_p = v, layer["coutp"]         # carry padded channel dim forward
        idx += 1

    s = img_size // 32                         # final feature-map spatial size
    params["pooled_s"] = s
    params["fc1"] = _prep_fc1_folded(jax.random.fold_in(key, 100), s)

    k2a, k2b = jax.random.split(jax.random.fold_in(key, 101))
    w2 = jax.random.normal(k2a, (4096, 4096), jnp.float32) * (1.0 / 4096) ** 0.5
    b2 = 0.01 * jax.random.normal(k2b, (4096,), jnp.float32)
    params["fc2"] = _prep_linear_from_mat(w2.T, b2)

    k3a, k3b = jax.random.split(jax.random.fold_in(key, 102))
    w3 = jax.random.normal(k3a, (num_classes, 4096), jnp.float32) * (1.0 / 4096) ** 0.5
    b3 = 0.01 * jax.random.normal(k3b, (num_classes,), jnp.float32)
    params["fc3"] = _prep_linear_from_mat(w3.T, b3)
    return params


# ----------------------------------------------------------------------------
# Forward pass (matches torchvision VGG.forward, inference mode)
# ----------------------------------------------------------------------------
def vgg16_forward(params, x_nchw):
    n, c, h, w = x_nchw.shape
    assert c == 3 and h % 32 == 0 and w % 32 == 0
    x = jnp.transpose(x_nchw, (0, 2, 3, 1)).astype(jnp.bfloat16)        # NHWC
    x = jnp.pad(x, ((0, 0), (0, 0), (0, 0),
                    (0, params["features"][0]["cin_p"] - 3)))

    # features: 13 x (3x3 conv + bias + ReLU, one fused kernel each), 5 max-pools
    li = 0
    for v in VGG16_CFG:
        if v == "M":
            x = max_pool_2x2(x)
        else:
            x = conv2d_relu(x, params["features"][li])
            li += 1

    # AdaptiveAvgPool2d((7,7)) + flatten are folded into fc1's weight at init
    # (exact; valid for the fixed feature-map size chosen at init).
    s = params["pooled_s"]
    assert x.shape[1] == s and x.shape[2] == s and x.shape[3] == 512
    feat = jnp.transpose(x, (0, 3, 1, 2)).reshape(n, 512 * s * s)       # torch CHW order

    # classifier: Linear+ReLU, Dropout(id), Linear+ReLU, Dropout(id),
    #             [Dropout(id), Linear(4096, num_classes)]  (custom head)
    y = linear(feat, params["fc1"], relu=True, out_dtype=jnp.bfloat16)
    y = linear(y, params["fc2"], relu=True, out_dtype=jnp.bfloat16)
    logits = linear(y, params["fc3"], relu=False, out_dtype=jnp.float32)
    return logits


# ----------------------------------------------------------------------------
if __name__ == "__main__":
    key = jax.random.PRNGKey(0)
    class_names = ["a", "b", "c", "d", "e"]                 # 5 classes
    params = init_params(jax.random.fold_in(key, 1), len(class_names), img_size=64)

    # Small VGG-style input: batch=2, 3x64x64 (NCHW), like the PyTorch module.
    x = jax.random.normal(jax.random.fold_in(key, 2), (2, 3, 64, 64), jnp.float32)

    out = vgg16_forward(params, x)
    out = jax.block_until_ready(out)
    assert out.shape == (2, len(class_names)), out.shape
    assert bool(jnp.all(jnp.isfinite(out)))
    print("KERNEL_OK")
</pallas_src>

<mosaic_0001>
module attributes {stable_mosaic.version = 11 : i64} {
  func.func @_conv3x3_kernel(%arg0: i32, %arg1: i32, %arg2: i32, %arg3: memref<1x4760x32xbf16, #tpu.memory_space<vmem>>, %arg4: memref<9x32x128xbf16, #tpu.memory_space<vmem>>, %arg5: memref<1x128xf32, #tpu.memory_space<vmem>>, %arg6: memref<1x1152x128xbf16, #tpu.memory_space<vmem>>) attributes {dimension_semantics = [#tpu.dimension_semantics<parallel>, #tpu.dimension_semantics<parallel>, #tpu.dimension_semantics<parallel>], iteration_bounds = array<i64: 1, 2, 4>, scalar_prefetch = 0 : i64, scratch_operands = 0 : i64, tpu.core_type = #tpu.core_type<tc>, window_params = [{transform_indices = @transform_0, window_bounds = array<i64: 1, 4760, 32>}, {transform_indices = @transform_1, window_bounds = array<i64: 9, 32, 128>}, {transform_indices = @transform_2, window_bounds = array<i64: 1, 128>}, {transform_indices = @transform_3, window_bounds = array<i64: 1, 1152, 128>}]} {
    %c1152_i32 = arith.constant 1152 : i32
    %0 = arith.muli %arg2, %c1152_i32 : i32
    %cst = arith.constant 0.000000e+00 : f32
    %1 = vector.broadcast %cst : f32 to vector<1152x128xf32>
    %c0_i32 = arith.constant 0 : i32
    %2 = arith.addi %0, %c0_i32 : i32
    %3 = tpu.assume_multiple %2, 8 : i32
    %c0 = arith.constant 0 : index
    %4 = arith.index_cast %3 : i32 to index
    %c0_0 = arith.constant 0 : index
    %5 = vector.load %arg3[%c0, %4, %c0_0] : memref<1x4760x32xbf16, #tpu.memory_space<vmem>>, vector<1x1160x32xbf16>
    %6 = vector.shape_cast %5 : vector<1x1160x32xbf16> to vector<1160x32xbf16>
    %7 = vector.extract_strided_slice %6 {offsets = [0, 0], sizes = [1152, 32], strides = [1, 1]} : vector<1160x32xbf16> to vector<1152x32xbf16>
    %c0_1 = arith.constant 0 : index
    %c0_2 = arith.constant 0 : index
    %c0_3 = arith.constant 0 : index
    %8 = vector.load %arg4[%c0_1, %c0_2, %c0_3] : memref<9x32x128xbf16, #tpu.memory_space<vmem>>, vector<1x32x128xbf16>
    %9 = vector.shape_cast %8 : vector<1x32x128xbf16> to vector<32x128xbf16>
    %cst_4 = arith.constant dense<0.000000e+00> : vector<1152x128xf32>
    %10 = tpu.matmul %7, %9, %cst_4 {dimension_numbers = #tpu.dot_dimension_numbers<[1], [0], [0], [1], [0, 0, 1, 1], [], []>} : vector<1152x32xbf16>, vector<32x128xbf16>, vector<1152x128xf32> -> vector<1152x128xf32>
    %11 = arith.addf %1, %10 : vector<1152x128xf32>
    %12 = vector.extract_strided_slice %6 {offsets = [1, 0], sizes = [1152, 32], strides = [1, 1]} : vector<1160x32xbf16> to vector<1152x32xbf16>
    %c1 = arith.constant 1 : index
    %c0_5 = arith.constant 0 : index
    %c0_6 = arith.constant 0 : index
    %13 = vector.load %arg4[%c1, %c0_5, %c0_6] : memref<9x32x128xbf16, #tpu.memory_space<vmem>>, vector<1x32x128xbf16>
    %14 = vector.shape_cast %13 : vector<1x32x128xbf16> to vector<32x128xbf16>
    %cst_7 = arith.constant dense<0.000000e+00> : vector<1152x128xf32>
    %15 = tpu.matmul %12, %14, %cst_7 {dimension_numbers = #tpu.dot_dimension_numbers<[1], [0], [0], [1], [0, 0, 1, 1], [], []>} : vector<1152x32xbf16>, vector<32x128xbf16>, vector<1152x128xf32> -> vector<1152x128xf32>
    %16 = arith.addf %11, %15 : vector<1152x128xf32>
    %17 = vector.extract_strided_slice %6 {offsets = [2, 0], sizes = [1152, 32], strides = [1, 1]} : vector<1160x32xbf16> to vector<1152x32xbf16>
    %c2 = arith.constant 2 : index
    %c0_8 = arith.constant 0 : index
    %c0_9 = arith.constant 0 : index
    %18 = vector.load %arg4[%c2, %c0_8, %c0_9] : memref<9x32x128xbf16, #tpu.memory_space<vmem>>, vector<1x32x128xbf16>
    %19 = vector.shape_cast %18 : vector<1x32x128xbf16> to vector<32x128xbf16>
    %cst_10 = arith.constant dense<0.000000e+00> : vector<1152x128xf32>
    %20 = tpu.matmul %17, %19, %cst_10 {dimension_numbers = #tpu.dot_dimension_numbers<[1], [0], [0], [1], [0, 0, 1, 1], [], []>} : vector<1152x32xbf16>, vector<32x128xbf16>, vector<1152x128xf32> -> vector<1152x128xf32>
    %21 = arith.addf %16, %20 : vector<1152x128xf32>
    %c72_i32 = arith.constant 72 : i32
    %22 = arith.addi %0, %c72_i32 : i32
    %23 = tpu.assume_multiple %22, 8 : i32
    %c0_11 = arith.constant 0 : index
    %24 = arith.index_cast %23 : i32 to index
    %c0_12 = arith.constant 0 : index
    %25 = vector.load %arg3[%c0_11, %24, %c0_12] : memref<1x4760x32xbf16, #tpu.memory_space<vmem>>, vector<1x1160x32xbf16>
    %26 = vector.shape_cast %25 : vector<1x1160x32xbf16> to vector<1160x32xbf16>
    %27 = vector.extract_strided_slice %26 {offsets = [0, 0], sizes = [1152, 32], strides = [1, 1]} : vector<1160x32xbf16> to vector<1152x32xbf16>
    %c3 = arith.constant 3 : index
    %c0_13 = arith.constant 0 : index
    %c0_14 = arith.constant 0 : index
    %28 = vector.load %arg4[%c3, %c0_13, %c0_14] : memref<9x32x128xbf16, #tpu.memory_space<vmem>>, vector<1x32x128xbf16>
    %29 = vector.shape_cast %28 : vector<1x32x128xbf16> to vector<32x128xbf16>
    %cst_15 = arith.constant dense<0.000000e+00> : vector<1152x128xf32>
    %30 = tpu.matmul %27, %29, %cst_15 {dimension_numbers = #tpu.dot_dimension_numbers<[1], [0], [0], [1], [0, 0, 1, 1], [], []>} : vector<1152x32xbf16>, vector<32x128xbf16>, vector<1152x128xf32> -> vector<1152x128xf32>
    %31 = arith.addf %21, %30 : vector<1152x128xf32>
    %32 = vector.extract_strided_slice %26 {offsets = [1, 0], sizes = [1152, 32], strides = [1, 1]} : vector<1160x32xbf16> to vector<1152x32xbf16>
    %c4 = arith.constant 4 : index
    %c0_16 = arith.constant 0 : index
    %c0_17 = arith.constant 0 : index
    %33 = vector.load %arg4[%c4, %c0_16, %c0_17] : memref<9x32x128xbf16, #tpu.memory_space<vmem>>, vector<1x32x128xbf16>
    %34 = vector.shape_cast %33 : vector<1x32x128xbf16> to vector<32x128xbf16>
    %cst_18 = arith.constant dense<0.000000e+00> : vector<1152x128xf32>
    %35 = tpu.matmul %32, %34, %cst_18 {dimension_numbers = #tpu.dot_dimension_numbers<[1], [0], [0], [1], [0, 0, 1, 1], [], []>} : vector<1152x32xbf16>, vector<32x128xbf16>, vector<1152x128xf32> -> vector<1152x128xf32>
    %36 = arith.addf %31, %35 : vector<1152x128xf32>
    %37 = vector.extract_strided_slice %26 {offsets = [2, 0], sizes = [1152, 32], strides = [1, 1]} : vector<1160x32xbf16> to vector<1152x32xbf16>
    %c5 = arith.constant 5 : index
    %c0_19 = arith.constant 0 : index
    %c0_20 = arith.constant 0 : index
    %38 = vector.load %arg4[%c5, %c0_19, %c0_20] : memref<9x32x128xbf16, #tpu.memory_space<vmem>>, vector<1x32x128xbf16>
    %39 = vector.shape_cast %38 : vector<1x32x128xbf16> to vector<32x128xbf16>
    %cst_21 = arith.constant dense<0.000000e+00> : vector<1152x128xf32>
    %40 = tpu.matmul %37, %39, %cst_21 {dimension_numbers = #tpu.dot_dimension_numbers<[1], [0], [0], [1], [0, 0, 1, 1], [], []>} : vector<1152x32xbf16>, vector<32x128xbf16>, vector<1152x128xf32> -> vector<1152x128xf32>
    %41 = arith.addf %36, %40 : vector<1152x128xf32>
    %c144_i32 = arith.constant 144 : i32
    %42 = arith.addi %0, %c144_i32 : i32
    %43 = tpu.assume_multiple %42, 8 : i32
    %c0_22 = arith.constant 0 : index
    %44 = arith.index_cast %43 : i32 to index
    %c0_23 = arith.constant 0 : index
    %45 = vector.load %arg3[%c0_22, %44, %c0_23] : memref<1x4760x32xbf16, #tpu.memory_space<vmem>>, vector<1x1160x32xbf16>
    %46 = vector.shape_cast %45 : vector<1x1160x32xbf16> to vector<1160x32xbf16>
    %47 = vector.extract_strided_slice %46 {offsets = [0, 0], sizes = [1152, 32], strides = [1, 1]} : vector<1160x32xbf16> to vector<1152x32xbf16>
    %c6 = arith.constant 6 : index
    %c0_24 = arith.constant 0 : index
    %c0_25 = arith.constant 0 : index
    %48 = vector.load %arg4[%c6, %c0_24, %c0_25] : memref<9x32x128xbf16, #tpu.memory_space<vmem>>, vector<1x32x128xbf16>
    %49 = vector.shape_cast %48 : vector<1x32x128xbf16> to vector<32x128xbf16>
    %cst_26 = arith.constant dense<0.000000e+00> : vector<1152x128xf32>
    %50 = tpu.matmul %47, %49, %cst_26 {dimension_numbers = #tpu.dot_dimension_numbers<[1], [0], [0], [1], [0, 0, 1, 1], [], []>} : vector<1152x32xbf16>, vector<32x128xbf16>, vector<1152x128xf32> -> vector<1152x128xf32>
    %51 = arith.addf %41, %50 : vector<1152x128xf32>
    %52 = vector.extract_strided_slice %46 {offsets = [1, 0], sizes = [1152, 32], strides = [1, 1]} : vector<1160x32xbf16> to vector<1152x32xbf16>
    %c7 = arith.constant 7 : index
    %c0_27 = arith.constant 0 : index
    %c0_28 = arith.constant 0 : index
    %53 = vector.load %arg4[%c7, %c0_27, %c0_28] : memref<9x32x128xbf16, #tpu.memory_space<vmem>>, vector<1x32x128xbf16>
    %54 = vector.shape_cast %53 : vector<1x32x128xbf16> to vector<32x128xbf16>
    %cst_29 = arith.constant dense<0.000000e+00> : vector<1152x128xf32>
    %55 = tpu.matmul %52, %54, %cst_29 {dimension_numbers = #tpu.dot_dimension_numbers<[1], [0], [0], [1], [0, 0, 1, 1], [], []>} : vector<1152x32xbf16>, vector<32x128xbf16>, vector<1152x128xf32> -> vector<1152x128xf32>
    %56 = arith.addf %51, %55 : vector<1152x128xf32>
    %57 = vector.extract_strided_slice %46 {offsets = [2, 0], sizes = [1152, 32], strides = [1, 1]} : vector<1160x32xbf16> to vector<1152x32xbf16>
    %c8 = arith.constant 8 : index
    %c0_30 = arith.constant 0 : index
    %c0_31 = arith.constant 0 : index
    %58 = vector.load %arg4[%c8, %c0_30, %c0_31] : memref<9x32x128xbf16, #tpu.memory_space<vmem>>, vector<1x32x128xbf16>
    %59 = vector.shape_cast %58 : vector<1x32x128xbf16> to vector<32x128xbf16>
    %cst_32 = arith.constant dense<0.000000e+00> : vector<1152x128xf32>
    %60 = tpu.matmul %57, %59, %cst_32 {dimension_numbers = #tpu.dot_dimension_numbers<[1], [0], [0], [1], [0, 0, 1, 1], [], []>} : vector<1152x32xbf16>, vector<32x128xbf16>, vector<1152x128xf32> -> vector<1152x128xf32>
    %61 = arith.addf %56, %60 : vector<1152x128xf32>
    %c0_33 = arith.constant 0 : index
    %c0_34 = arith.constant 0 : index
    %62 = vector.load %arg5[%c0_33, %c0_34] : memref<1x128xf32, #tpu.memory_space<vmem>>, vector<1x128xf32>
    %63 = vector.broadcast %62 : vector<1x128xf32> to vector<1152x128xf32>
    %64 = arith.addf %61, %63 : vector<1152x128xf32>
    %cst_35 = arith.constant 0.000000e+00 : f32
    %65 = vector.broadcast %cst_35 : f32 to vector<1152x128xf32>
    %66 = arith.maximumf %64, %65 : vector<1152x128xf32>
    %67 = arith.truncf %66 : vector<1152x128xf32> to vector<1152x128xbf16>
    %c0_36 = arith.constant 0 : index
    %c0_37 = arith.constant 0 : index
    %c0_38 = arith.constant 0 : index
    %68 = vector.load %arg6[%c0_36, %c0_37, %c0_38] : memref<1x1152x128xbf16, #tpu.memory_space<vmem>>, vector<1x1152x128xbf16>
    %69 = vector.shape_cast %68 : vector<1x1152x128xbf16> to vector<1152x128xbf16>
    %70 = vector.shape_cast %67 : vector<1152x128xbf16> to vector<1x1152x128xbf16>
    tpu.vector_store %arg6[%c0_36, %c0_37, %c0_38], %70 {strides = array<i32>} : memref<1x1152x128xbf16, #tpu.memory_space<vmem>>, vector<1x1152x128xbf16>,
    return
  }
  func.func @transform_0(%arg0: i32, %arg1: i32, %arg2: i32) -> (i32, i32, i32) {
    %c0_i32 = arith.constant 0 : i32
    %c0_i32_0 = arith.constant 0 : i32
    %c0_i32_1 = arith.constant 0 : i32
    return %arg1, %c0_i32, %c0_i32_0 : i32, i32, i32
  }
  func.func @transform_1(%arg0: i32, %arg1: i32, %arg2: i32) -> (i32, i32, i32) {
    %c0_i32 = arith.constant 0 : i32
    %c0_i32_0 = arith.constant 0 : i32
    %c0_i32_1 = arith.constant 0 : i32
    return %c0_i32, %c0_i32_0, %arg0 : i32, i32, i32
  }
  func.func @transform_2(%arg0: i32, %arg1: i32, %arg2: i32) -> (i32, i32) {
    %c0_i32 = arith.constant 0 : i32
    %c0_i32_0 = arith.constant 0 : i32
    return %c0_i32, %arg0 : i32, i32
  }
  func.func @transform_3(%arg0: i32, %arg1: i32, %arg2: i32) -> (i32, i32, i32) {
    %c0_i32 = arith.constant 0 : i32
    return %arg1, %arg2, %arg0 : i32, i32, i32
  }
}

</mosaic_0001>

<llo_original>
// kernel: tpu_custom_call.1
$region0: #{tpu_custom_call.1}
  #allocation0 [shape = 'u32[]', space=smem, size = 0x4, offset = 0x4, fixed_abs, tag = 'smem constant byte address 0x4 - core index']
  #allocation1 [shape = 'u32[72,128]{1,0:T(1,128)}', space=vmem, size = 0x9000, scoped, tag = 'internal scratch']
  %s0 = inlined_call_operand.vmem [shape: bf16[2,4760,32], index: 0, kind: input, shape index: {}]
  %s1 = inlined_call_operand.vmem [shape: bf16[9,32,128], index: 1, kind: input, shape index: {}]
  %s2 = inlined_call_operand.vmem [shape: f32[1,128], index: 2, kind: input, shape index: {}]
  %s3 = inlined_call_operand.hbm [shape: bf16[2,4608,128], index: 3, kind: output, shape index: {}]
  %s4 = sld [smem:[#allocation0]]
  $region45: #{tpu_custom_call.1} parent=0
    _
  %s6 = ssub.s32 1, %s4
  %s7 = scalar_select 0, %s6, %s4
  $region1: #{tpu_custom_call.1} parent=0
    #allocation2 [shape = 'u8[589824]{0}', space=vmem, size = 0x90000, scoped, tag = 'output window, operand 0']
    #allocation3 [shape = 's32[2]{0}', space=sflag, size = 0x8, scoped, tag = 'scoped memory for tpu_custom_call.1']
    %8 = vsyncpa [#allocation3], 0
    %s9 = scalar_lea.sflag [#allocation3], 1
    %10 = vsyncpa %s9, 0
    loop: start=0, step=1, limit=10
    $region2: #{tpu_custom_call.1} parent=1 // loop_pre_header
      _
    $region3: #{tpu_custom_call.1} parent=1 // loop_header
      %s12 = sphi 0, %s16
      %p13 = scmp.ge.s32.totalorder %s12, 10
      %s19 = sphi 0, %s38
      %s20 = sphi 0, %s34
      %s21 = sphi 0, %s30
      %s22 = sphi 0, %s19
      %s23 = sphi 0, %s20
      %s24 = sphi 0, %s21
      %s25 = sphi 0, %s22
      %s26 = sphi 0, %s23
      %s27 = sphi 0, %s24
      %s41 = sphi 0, %s43
      %s44 = sphi 0, %s41
      %s45 = sphi 0, %s44
      %s61 = sphi 0, %s45
      %s67 = sphi 0, %s69
      %s70 = sphi 0, %s67
      %s71 = sphi 0, %s70
      %s87 = sphi 0, %s71
      %s93 = sphi 0, %s95
      %s96 = sphi 0, %s93
      %s97 = sphi 0, %s96
      %s113 = sphi 0, %s97
      %s123 = sphi 0, %s125
      %s126 = sphi 0, %s123
      %s127 = sphi 0, %s126
      %s143 = sphi 0, %s127
    $region4: #{tpu_custom_call.1} parent=1 // loop_header_branch
      %15 = sbr.rel (%p13) target = $region8
    $region5: #{tpu_custom_call.1} parent=1 // loop_body
      %s17 = ssub.s32 %s12, 1
      %s18 = ssub.s32 %s12, 2
      %s28 = sadd.s32 1, %s21
      %p29 = scmp.ge.s32.totalorder %s28, 4
      %s30 = scalar_select %p29, 0, %s28
      %s31 = sadd.s32 1, %s20
      %s32 = scalar_select %p29, %s31, %s20
      %p33 = scmp.ge.s32.totalorder %s32, 2
      %s34 = scalar_select %p33, 0, %s32
      %s35 = sadd.s32 1, %s19
      %s36 = scalar_select %p33, %s35, %s19
      %p37 = scmp.ge.s32.totalorder %s36, 1
      %s38 = scalar_select %p37, 0, %s36
      %s39 = ssub.s32 %s20, %s34
      %p40 = scmp.eq.s32.totalorder %s39, 0
      %s42 = sadd.s32 %s41, 1
      %s43 = scalar_select %p40, %s41, %s42
      %p46 = pneg %p40
      %p47 = scmp.eq.s32.totalorder %s12, 7
      %p48 = por %p46, %p47
      %p49 = scmp.ne.s32.totalorder %s41, %s44
      %p50 = scmp.eq.s32.totalorder %s12, 0
      %p51 = por %p49, %p50
      %p52 = scmp.ne.s32.totalorder %s41, %s44
      %p53 = scmp.eq.s32.totalorder %s17, 7
      %p54 = por %p52, %p53
      %p55 = scmp.ne.s32.totalorder %s44, %s45
      %p56 = scmp.eq.s32.totalorder %s17, 0
      %p57 = por %p55, %p56
      %p58 = scmp.ne.s32.totalorder %s44, %s45
      %p59 = scmp.eq.s32.totalorder %s18, 7
      %p60 = por %p58, %p59
      %p62 = scmp.ne.s32.totalorder %s45, %s61
      %p63 = scmp.eq.s32.totalorder %s18, 0
      %p64 = por %p62, %p63
      %s65 = ssub.s32 %s19, %s38
      %p66 = scmp.eq.s32.totalorder %s65, 0
      %s68 = sadd.s32 %s67, 1
      %s69 = scalar_select %p66, %s67, %s68
      %p72 = pneg %p66
      %p73 = scmp.eq.s32.totalorder %s12, 7
      %p74 = por %p72, %p73
      %p75 = scmp.ne.s32.totalorder %s67, %s70
      %p76 = scmp.eq.s32.totalorder %s12, 0
      %p77 = por %p75, %p76
      %p78 = scmp.ne.s32.totalorder %s67, %s70
      %p79 = scmp.eq.s32.totalorder %s17, 7
      %p80 = por %p78, %p79
      %p81 = scmp.ne.s32.totalorder %s70, %s71
      %p82 = scmp.eq.s32.totalorder %s17, 0
      %p83 = por %p81, %p82
      %p84 = scmp.ne.s32.totalorder %s70, %s71
      %p85 = scmp.eq.s32.totalorder %s18, 7
      %p86 = por %p84, %p85
      %p88 = scmp.ne.s32.totalorder %s71, %s87
      %p89 = scmp.eq.s32.totalorder %s18, 0
      %p90 = por %p88, %p89
      %s91 = ssub.s32 %s19, %s38
      %p92 = scmp.eq.s32.totalorder %s91, 0
      %s94 = sadd.s32 %s93, 1
      %s95 = scalar_select %p92, %s93, %s94
      %p98 = pneg %p92
      %p99 = scmp.eq.s32.totalorder %s12, 7
      %p100 = por %p98, %p99
      %p101 = scmp.ne.s32.totalorder %s93, %s96
      %p102 = scmp.eq.s32.totalorder %s12, 0
      %p103 = por %p101, %p102
      %p104 = scmp.ne.s32.totalorder %s93, %s96
      %p105 = scmp.eq.s32.totalorder %s17, 7
      %p106 = por %p104, %p105
      %p107 = scmp.ne.s32.totalorder %s96, %s97
      %p108 = scmp.eq.s32.totalorder %s17, 0
      %p109 = por %p107, %p108
      %p110 = scmp.ne.s32.totalorder %s96, %s97
      %p111 = scmp.eq.s32.totalorder %s18, 7
      %p112 = por %p110, %p111
      %p114 = scmp.ne.s32.totalorder %s97, %s113
      %p115 = scmp.eq.s32.totalorder %s18, 0
      %p116 = por %p114, %p115
      %s117 = ssub.s32 %s20, %s34
      %s118 = ssub.s32 %s21, %s30
      %s119 = sor.u32 %s117, %s118
      %s120 = ssub.s32 %s19, %s38
      %s121 = sor.u32 %s119, %s120
      %p122 = scmp.eq.s32.totalorder %s121, 0
      %s124 = sadd.s32 %s123, 1
      %s125 = scalar_select %p122, %s123, %s124
      %p128 = pneg %p122
      %p129 = scmp.eq.s32.totalorder %s12, 7
      %p130 = por %p128, %p129
      %p131 = scmp.ne.s32.totalorder %s123, %s126
      %p132 = scmp.eq.s32.totalorder %s12, 0
      %p133 = por %p131, %p132
      %p134 = scmp.ne.s32.totalorder %s123, %s126
      %p135 = scmp.eq.s32.totalorder %s17, 7
      %p136 = por %p134, %p135
      %p137 = scmp.ne.s32.totalorder %s126, %s127
      %p138 = scmp.eq.s32.totalorder %s17, 0
      %p139 = por %p137, %p138
      %p140 = scmp.ne.s32.totalorder %s126, %s127
      %p141 = scmp.eq.s32.totalorder %s18, 7
      %p142 = por %p140, %p141
      %p144 = scmp.ne.s32.totalorder %s127, %s143
      %p145 = scmp.eq.s32.totalorder %s18, 0
      %p146 = por %p144, %p145
      %p147 = scmp.le.s32.totalorder 1, %s12
      %p148 = scmp.lt.s32.totalorder %s12, 9
      %p149 = pnand %p147, %p148
      %p150 = pneg %p149
      // Predicated region
      $region9: #{tpu_custom_call.1} parent=5 // pred_check
        _
      $region10: #{tpu_custom_call.1} parent=5 // pred_check_branch
        %152 = sbr.rel (%p149) target = $region12
      $region11: #{tpu_custom_call.1} parent=5 // pred_region
        %s153 = ssub.s32 %s12, 1
        // Predicated region
        $region13: #{tpu_custom_call.1} parent=11 // pred_check
          %p154 = pneg %p83
        $region14: #{tpu_custom_call.1} parent=11 // pred_check_branch
          %156 = sbr.rel (%p154) target = $region16
        $region15: #{tpu_custom_call.1} parent=11 // pred_region
          %p157 = scmp.lt.s32.totalorder %s22, 0
          %s158 = scalar_select %p157, %s22, 0
          %s159 = smul.addr %s158, 4
          %s160 = scalar_lea.vmem %s1, %s159
        $region16: #{tpu_custom_call.1} parent=11 // pred_fallthru
          _
        // Predicated region
        $region17: #{tpu_custom_call.1} parent=11 // pred_check
          %p161 = pneg %p109
        $region18: #{tpu_custom_call.1} parent=11 // pred_check_branch
          %163 = sbr.rel (%p161) target = $region20
        $region19: #{tpu_custom_call.1} parent=11 // pred_region
          %p164 = scmp.lt.s32.totalorder %s22, 0
          %s165 = scalar_select %p164, %s22, 0
          %s166 = scalar_lea.vmem %s2, %s165
        $region20: #{tpu_custom_call.1} parent=11 // pred_fallthru
          _
      $region12: #{tpu_custom_call.1} parent=5 // pred_fallthru
        _
      %p167 = scmp.lt.s32.totalorder %s12, 8
      // Predicated region
      $region21: #{tpu_custom_call.1} parent=5 // pred_check
        %p168 = pneg %p167
      $region22: #{tpu_custom_call.1} parent=5 // pred_check_branch
        %170 = sbr.rel (%p168) target = $region24
      $region23: #{tpu_custom_call.1} parent=5 // pred_region
        // Predicated region
        $region25: #{tpu_custom_call.1} parent=23 // pred_check
          %p171 = pneg %p51
        $region26: #{tpu_custom_call.1} parent=23 // pred_check_branch
          %173 = sbr.rel (%p171) target = $region28
        $region27: #{tpu_custom_call.1} parent=23 // pred_region
          %p174 = scmp.lt.s32.totalorder %s20, 1
          %s175 = scalar_select %p174, %s20, 1
          %s176 = smul.addr %s175, 595
          %s177 = smul.addr %s176, 4
          %s178 = scalar_lea.vmem %s0, %s177
        $region28: #{tpu_custom_call.1} parent=23 // pred_fallthru
          _
      $region24: #{tpu_custom_call.1} parent=5 // pred_fallthru
        _
      %p179 = scmp.le.s32.totalorder 1, %s12
      %p180 = scmp.lt.s32.totalorder %s12, 9
      %p181 = pnand %p179, %p180
      %p182 = pneg %p181
      // Predicated region
      $region29: #{tpu_custom_call.1} parent=5 // pred_check
        _
      $region30: #{tpu_custom_call.1} parent=5 // pred_check_branch
        %184 = sbr.rel (%p181) target = $region32
      $region31: #{tpu_custom_call.1} parent=5 // pred_region
        %s185 = ssub.s32 %s12, 1
        %p186 = scmp.lt.s32.totalorder %s23, 1
        %s187 = scalar_select %p186, %s23, 1
        %s188 = smul.addr %s187, 595
        %s189 = smul.addr %s188, 4
        %s190 = scalar_lea.vmem %s0, %s189
        %p191 = pneg %p57
        %p192 = pneg %p54
        %p193 = scmp.lt.s32.totalorder %s22, 0
        %s194 = scalar_select %p193, %s22, 0
        %s195 = smul.addr %s194, 4
        %s196 = scalar_lea.vmem %s1, %s195
        %p197 = pneg %p83
        %p198 = pneg %p80
        %p199 = scmp.lt.s32.totalorder %s22, 0
        %s200 = scalar_select %p199, %s22, 0
        %s201 = scalar_lea.vmem %s2, %s200
        %p202 = pneg %p109
        %p203 = pneg %p106
        %p204 = pneg %p139
        %p205 = pneg %p136
        %s206 = sand.u32 %s126, 1
        %s207 = scalar_lea.sflag [#allocation3], %s206
        %s208 = sand.u32 %s126, 1
        %s209 = smul.addr %s208, 576
        %s210 = scalar_lea.vmem [#allocation2], %s209
        %p211 = scmp.lt.s32.totalorder %s23, 1
        %s212 = scalar_select %p211, %s23, 1
        %s213 = smul.addr %s212, 595
        %s214 = smul.addr %s213, 4
        %s215 = scalar_lea.vmem %s0, %s214
        %p216 = scmp.lt.s32.totalorder %s22, 0
        %s217 = scalar_select %p216, %s22, 0
        %s218 = smul.addr %s217, 4
        %s219 = scalar_lea.vmem %s1, %s218
        %p220 = scmp.lt.s32.totalorder %s22, 0
        %s221 = scalar_select %p220, %s22, 0
        %s222 = scalar_lea.vmem %s2, %s221
        %s223 = smul.u32 144, %s24
        %s225 = smul.u32 %s24, 1152
        %s226 = sshra.s32 %s225, 3
        %s227 = sand.u32 %s225, 7
        %s228 = smul.addr %s226, 4
        %s229 = scalar_lea.vmem %s215, %s228
        %v230 = vld [vmem:[%s229] sm:$0xf]
        %v231 = vld [vmem:[%s229 + $0x4] sm:$0xf]
        %v232 = vld [vmem:[%s229 + $0x8] sm:$0xf]
        %v233 = vld [vmem:[%s229 + $0xc] sm:$0xf]
        %v234 = vld [vmem:[%s229 + $0x10] sm:$0xf]
        %v235 = vld [vmem:[%s229 + $0x14] sm:$0xf]
        %v236 = vld [vmem:[%s229 + $0x18] sm:$0xf]
        %v237 = vld [vmem:[%s229 + $0x1c] sm:$0xf]
        %v238 = vld [vmem:[%s229 + $0x20] sm:$0xf]
        %v239 = vld [vmem:[%s229 + $0x24] sm:$0xf]
        %v240 = vld [vmem:[%s229 + $0x28] sm:$0xf]
        %v241 = vld [vmem:[%s229 + $0x2c] sm:$0xf]
        %v242 = vld [vmem:[%s229 + $0x30] sm:$0xf]
        %v243 = vld [vmem:[%s229 + $0x34] sm:$0xf]
        %v244 = vld [vmem:[%s229 + $0x38] sm:$0xf]
        %v245 = vld [vmem:[%s229 + $0x3c] sm:$0xf]
        %v246 = vld [vmem:[%s229 + $0x40] sm:$0xf]
        %v247 = vld [vmem:[%s229 + $0x44] sm:$0xf]
        %v248 = vld [vmem:[%s229 + $0x48] sm:$0xf]
        %v249 = vld [vmem:[%s229 + $0x4c] sm:$0xf]
        %v250 = vld [vmem:[%s229 + $0x50] sm:$0xf]
        %v251 = vld [vmem:[%s229 + $0x54] sm:$0xf]
        %v252 = vld [vmem:[%s229 + $0x58] sm:$0xf]
        %v253 = vld [vmem:[%s229 + $0x5c] sm:$0xf]
        %v254 = vld [vmem:[%s229 + $0x60] sm:$0xf]
        %v255 = vld [vmem:[%s229 + $0x64] sm:$0xf]
        %v256 = vld [vmem:[%s229 + $0x68] sm:$0xf]
        %v257 = vld [vmem:[%s229 + $0x6c] sm:$0xf]
        %v258 = vld [vmem:[%s229 + $0x70] sm:$0xf]
        %v259 = vld [vmem:[%s229 + $0x74] sm:$0xf]
        %v260 = vld [vmem:[%s229 + $0x78] sm:$0xf]
        %v261 = vld [vmem:[%s229 + $0x7c] sm:$0xf]
        %v262 = vld [vmem:[%s229 + $0x80] sm:$0xf]
        %v263 = vld [vmem:[%s229 + $0x84] sm:$0xf]
        %v264 = vld [vmem:[%s229 + $0x88] sm:$0xf]
        %v265 = vld [vmem:[%s229 + $0x8c] sm:$0xf]
        %v266 = vld [vmem:[%s229 + $0x90] sm:$0xf]
        %v267 = vld [vmem:[%s229 + $0x94] sm:$0xf]
        %v268 = vld [vmem:[%s229 + $0x98] sm:$0xf]
        %v269 = vld [vmem:[%s229 + $0x9c] sm:$0xf]
        %v270 = vld [vmem:[%s229 + $0xa0] sm:$0xf]
        %v271 = vld [vmem:[%s229 + $0xa4] sm:$0xf]
        %v272 = vld [vmem:[%s229 + $0xa8] sm:$0xf]
        %v273 = vld [vmem:[%s229 + $0xac] sm:$0xf]
        %v274 = vld [vmem:[%s229 + $0xb0] sm:$0xf]
        %v275 = vld [vmem:[%s229 + $0xb4] sm:$0xf]
        %v276 = vld [vmem:[%s229 + $0xb8] sm:$0xf]
        %v277 = vld [vmem:[%s229 + $0xbc] sm:$0xf]
        %v278 = vld [vmem:[%s229 + $0xc0] sm:$0xf]
        %v279 = vld [vmem:[%s229 + $0xc4] sm:$0xf]
        %v280 = vld [vmem:[%s229 + $0xc8] sm:$0xf]
        %v281 = vld [vmem:[%s229 + $0xcc] sm:$0xf]
        %v282 = vld [vmem:[%s229 + $0xd0] sm:$0xf]
        %v283 = vld [vmem:[%s229 + $0xd4] sm:$0xf]
        %v284 = vld [vmem:[%s229 + $0xd8] sm:$0xf]
        %v285 = vld [vmem:[%s229 + $0xdc] sm:$0xf]
        %v286 = vld [vmem:[%s229 + $0xe0] sm:$0xf]
        %v287 = vld [vmem:[%s229 + $0xe4] sm:$0xf]
        %v288 = vld [vmem:[%s229 + $0xe8] sm:$0xf]
        %v289 = vld [vmem:[%s229 + $0xec] sm:$0xf]
        %v290 = vld [vmem:[%s229 + $0xf0] sm:$0xf]
        %v291 = vld [vmem:[%s229 + $0xf4] sm:$0xf]
        %v292 = vld [vmem:[%s229 + $0xf8] sm:$0xf]
        %v293 = vld [vmem:[%s229 + $0xfc] sm:$0xf]
        %v294 = vld [vmem:[%s229 + $0x100] sm:$0xf]
        %v295 = vld [vmem:[%s229 + $0x104] sm:$0xf]
        %v296 = vld [vmem:[%s229 + $0x108] sm:$0xf]
        %v297 = vld [vmem:[%s229 + $0x10c] sm:$0xf]
        %v298 = vld [vmem:[%s229 + $0x110] sm:$0xf]
        %v299 = vld [vmem:[%s229 + $0x114] sm:$0xf]
        %v300 = vld [vmem:[%s229 + $0x118] sm:$0xf]
        %v301 = vld [vmem:[%s229 + $0x11c] sm:$0xf]
        %v302 = vld [vmem:[%s229 + $0x120] sm:$0xf]
        %v303 = vld [vmem:[%s229 + $0x124] sm:$0xf]
        %v304 = vld [vmem:[%s229 + $0x128] sm:$0xf]
        %v305 = vld [vmem:[%s229 + $0x12c] sm:$0xf]
        %v306 = vld [vmem:[%s229 + $0x130] sm:$0xf]
        %v307 = vld [vmem:[%s229 + $0x134] sm:$0xf]
        %v308 = vld [vmem:[%s229 + $0x138] sm:$0xf]
        %v309 = vld [vmem:[%s229 + $0x13c] sm:$0xf]
        %v310 = vld [vmem:[%s229 + $0x140] sm:$0xf]
        %v311 = vld [vmem:[%s229 + $0x144] sm:$0xf]
        %v312 = vld [vmem:[%s229 + $0x148] sm:$0xf]
        %v313 = vld [vmem:[%s229 + $0x14c] sm:$0xf]
        %v314 = vld [vmem:[%s229 + $0x150] sm:$0xf]
        %v315 = vld [vmem:[%s229 + $0x154] sm:$0xf]
        %v316 = vld [vmem:[%s229 + $0x158] sm:$0xf]
        %v317 = vld [vmem:[%s229 + $0x15c] sm:$0xf]
        %v318 = vld [vmem:[%s229 + $0x160] sm:$0xf]
        %v319 = vld [vmem:[%s229 + $0x164] sm:$0xf]
        %v320 = vld [vmem:[%s229 + $0x168] sm:$0xf]
        %v321 = vld [vmem:[%s229 + $0x16c] sm:$0xf]
        %v322 = vld [vmem:[%s229 + $0x170] sm:$0xf]
        %v323 = vld [vmem:[%s229 + $0x174] sm:$0xf]
        %v324 = vld [vmem:[%s229 + $0x178] sm:$0xf]
        %v325 = vld [vmem:[%s229 + $0x17c] sm:$0xf]
        %v326 = vld [vmem:[%s229 + $0x180] sm:$0xf]
        %v327 = vld [vmem:[%s229 + $0x184] sm:$0xf]
        %v328 = vld [vmem:[%s229 + $0x188] sm:$0xf]
        %v329 = vld [vmem:[%s229 + $0x18c] sm:$0xf]
        %v330 = vld [vmem:[%s229 + $0x190] sm:$0xf]
        %v331 = vld [vmem:[%s229 + $0x194] sm:$0xf]
        %v332 = vld [vmem:[%s229 + $0x198] sm:$0xf]
        %v333 = vld [vmem:[%s229 + $0x19c] sm:$0xf]
        %v334 = vld [vmem:[%s229 + $0x1a0] sm:$0xf]
        %v335 = vld [vmem:[%s229 + $0x1a4] sm:$0xf]
        %v336 = vld [vmem:[%s229 + $0x1a8] sm:$0xf]
        %v337 = vld [vmem:[%s229 + $0x1ac] sm:$0xf]
        %v338 = vld [vmem:[%s229 + $0x1b0] sm:$0xf]
        %v339 = vld [vmem:[%s229 + $0x1b4] sm:$0xf]
        %v340 = vld [vmem:[%s229 + $0x1b8] sm:$0xf]
        %v341 = vld [vmem:[%s229 + $0x1bc] sm:$0xf]
        %v342 = vld [vmem:[%s229 + $0x1c0] sm:$0xf]
        %v343 = vld [vmem:[%s229 + $0x1c4] sm:$0xf]
        %v344 = vld [vmem:[%s229 + $0x1c8] sm:$0xf]
        %v345 = vld [vmem:[%s229 + $0x1cc] sm:$0xf]
        %v346 = vld [vmem:[%s229 + $0x1d0] sm:$0xf]
        %v347 = vld [vmem:[%s229 + $0x1d4] sm:$0xf]
        %v348 = vld [vmem:[%s229 + $0x1d8] sm:$0xf]
        %v349 = vld [vmem:[%s229 + $0x1dc] sm:$0xf]
        %v350 = vld [vmem:[%s229 + $0x1e0] sm:$0xf]
        %v351 = vld [vmem:[%s229 + $0x1e4] sm:$0xf]
        %v352 = vld [vmem:[%s229 + $0x1e8] sm:$0xf]
        %v353 = vld [vmem:[%s229 + $0x1ec] sm:$0xf]
        %v354 = vld [vmem:[%s229 + $0x1f0] sm:$0xf]
        %v355 = vld [vmem:[%s229 + $0x1f4] sm:$0xf]
        %v356 = vld [vmem:[%s229 + $0x1f8] sm:$0xf]
        %v357 = vld [vmem:[%s229 + $0x1fc] sm:$0xf]
        %v358 = vld [vmem:[%s229 + $0x200] sm:$0xf]
        %v359 = vld [vmem:[%s229 + $0x204] sm:$0xf]
        %v360 = vld [vmem:[%s229 + $0x208] sm:$0xf]
        %v361 = vld [vmem:[%s229 + $0x20c] sm:$0xf]
        %v362 = vld [vmem:[%s229 + $0x210] sm:$0xf]
        %v363 = vld [vmem:[%s229 + $0x214] sm:$0xf]
        %v364 = vld [vmem:[%s229 + $0x218] sm:$0xf]
        %v365 = vld [vmem:[%s229 + $0x21c] sm:$0xf]
        %v366 = vld [vmem:[%s229 + $0x220] sm:$0xf]
        %v367 = vld [vmem:[%s229 + $0x224] sm:$0xf]
        %v368 = vld [vmem:[%s229 + $0x228] sm:$0xf]
        %v369 = vld [vmem:[%s229 + $0x22c] sm:$0xf]
        %v370 = vld [vmem:[%s229 + $0x230] sm:$0xf]
        %v371 = vld [vmem:[%s229 + $0x234] sm:$0xf]
        %v372 = vld [vmem:[%s229 + $0x238] sm:$0xf]
        %v373 = vld [vmem:[%s229 + $0x23c] sm:$0xf]
        %v374 = vld [vmem:[%s229 + $0x240] sm:$0xf]
        %v375 = vld [vmem:[%s219] sm:$0xf]
        %v376 = vld [vmem:[%s219 + $0x4] sm:$0xf]
        %v377 = vld [vmem:[%s219 + $0x8] sm:$0xf]
        %v378 = vld [vmem:[%s219 + $0xc] sm:$0xf]
        %s379 = scalar_lea.vmem %s219, 16
        %v380 = vld [vmem:[%s379] sm:$0xf]
        %v381 = vld [vmem:[%s379 + $0x4] sm:$0xf]
        %v382 = vld [vmem:[%s379 + $0x8] sm:$0xf]
        %v383 = vld [vmem:[%s379 + $0xc] sm:$0xf]
        %v529 = vunpack.c.l.b16 %v230
        %v530 = vunpack.c.l.b16 %v231
        %v531 = vunpack.c.l.b16 %v232
        %v532 = vunpack.c.l.b16 %v233
        %v533 = vunpack.c.l.b16 %v234
        %v534 = vunpack.c.l.b16 %v235
        %v535 = vunpack.c.l.b16 %v236
        %v536 = vunpack.c.l.b16 %v237
        %v537 = vunpack.c.l.b16 %v238
        %v538 = vunpack.c.l.b16 %v239
        %v539 = vunpack.c.l.b16 %v240
        %v540 = vunpack.c.l.b16 %v241
        %v541 = vunpack.c.l.b16 %v242
        %v542 = vunpack.c.l.b16 %v243
        %v543 = vunpack.c.l.b16 %v244
        %v544 = vunpack.c.l.b16 %v245
        %v545 = vunpack.c.l.b16 %v246
        %v546 = vunpack.c.l.b16 %v247
        %v547 = vunpack.c.l.b16 %v248
        %v548 = vunpack.c.l.b16 %v249
        %v549 = vunpack.c.l.b16 %v250
        %v550 = vunpack.c.l.b16 %v251
        %v551 = vunpack.c.l.b16 %v252
        %v552 = vunpack.c.l.b16 %v253
        %v553 = vunpack.c.l.b16 %v254
        %v554 = vunpack.c.l.b16 %v255
        %v555 = vunpack.c.l.b16 %v256
        %v556 = vunpack.c.l.b16 %v257
        %v557 = vunpack.c.l.b16 %v258
        %v558 = vunpack.c.l.b16 %v259
        %v559 = vunpack.c.l.b16 %v260
        %v560 = vunpack.c.l.b16 %v261
        %v561 = vunpack.c.l.b16 %v262
        %v562 = vunpack.c.l.b16 %v263
        %v563 = vunpack.c.l.b16 %v264
        %v564 = vunpack.c.l.b16 %v265
        %v565 = vunpack.c.l.b16 %v266
        %v566 = vunpack.c.l.b16 %v267
        %v567 = vunpack.c.l.b16 %v268
        %v568 = vunpack.c.l.b16 %v269
        %v569 = vunpack.c.l.b16 %v270
        %v570 = vunpack.c.l.b16 %v271
        %v571 = vunpack.c.l.b16 %v272
        %v572 = vunpack.c.l.b16 %v273
        %v573 = vunpack.c.l.b16 %v274
        %v574 = vunpack.c.l.b16 %v275
        %v575 = vunpack.c.l.b16 %v276
        %v576 = vunpack.c.l.b16 %v277
        %v577 = vunpack.c.l.b16 %v278
        %v578 = vunpack.c.l.b16 %v279
        %v579 = vunpack.c.l.b16 %v280
        %v580 = vunpack.c.l.b16 %v281
        %v581 = vunpack.c.l.b16 %v282
        %v582 = vunpack.c.l.b16 %v283
        %v583 = vunpack.c.l.b16 %v284
        %v584 = vunpack.c.l.b16 %v285
        %v585 = vunpack.c.l.b16 %v286
        %v586 = vunpack.c.l.b16 %v287
        %v587 = vunpack.c.l.b16 %v288
        %v588 = vunpack.c.l.b16 %v289
        %v589 = vunpack.c.l.b16 %v290
        %v590 = vunpack.c.l.b16 %v291
        %v591 = vunpack.c.l.b16 %v292
        %v592 = vunpack.c.l.b16 %v293
        %v593 = vunpack.c.l.b16 %v294
        %v594 = vunpack.c.l.b16 %v295
        %v595 = vunpack.c.l.b16 %v296
        %v596 = vunpack.c.l.b16 %v297
        %v597 = vunpack.c.l.b16 %v298
        %v598 = vunpack.c.l.b16 %v299
        %v599 = vunpack.c.l.b16 %v300
        %v600 = vunpack.c.l.b16 %v301
        %v601 = vunpack.c.l.b16 %v302
        %v602 = vunpack.c.l.b16 %v303
        %v603 = vunpack.c.l.b16 %v304
        %v604 = vunpack.c.l.b16 %v305
        %v605 = vunpack.c.l.b16 %v306
        %v606 = vunpack.c.l.b16 %v307
        %v607 = vunpack.c.l.b16 %v308
        %v608 = vunpack.c.l.b16 %v309
        %v609 = vunpack.c.l.b16 %v310
        %v610 = vunpack.c.l.b16 %v311
        %v611 = vunpack.c.l.b16 %v312
        %v612 = vunpack.c.l.b16 %v313
        %v613 = vunpack.c.l.b16 %v314
        %v614 = vunpack.c.l.b16 %v315
        %v615 = vunpack.c.l.b16 %v316
        %v616 = vunpack.c.l.b16 %v317
        %v617 = vunpack.c.l.b16 %v318
        %v618 = vunpack.c.l.b16 %v319
        %v619 = vunpack.c.l.b16 %v320
        %v620 = vunpack.c.l.b16 %v321
        %v621 = vunpack.c.l.b16 %v322
        %v622 = vunpack.c.l.b16 %v323
        %v623 = vunpack.c.l.b16 %v324
        %v624 = vunpack.c.l.b16 %v325
        %v625 = vunpack.c.l.b16 %v326
        %v626 = vunpack.c.l.b16 %v327
        %v627 = vunpack.c.l.b16 %v328
        %v628 = vunpack.c.l.b16 %v329
        %v629 = vunpack.c.l.b16 %v330
        %v630 = vunpack.c.l.b16 %v331
        %v631 = vunpack.c.l.b16 %v332
        %v632 = vunpack.c.l.b16 %v333
        %v633 = vunpack.c.l.b16 %v334
        %v634 = vunpack.c.l.b16 %v335
        %v635 = vunpack.c.l.b16 %v336
        %v636 = vunpack.c.l.b16 %v337
        %v637 = vunpack.c.l.b16 %v338
        %v638 = vunpack.c.l.b16 %v339
        %v639 = vunpack.c.l.b16 %v340
        %v640 = vunpack.c.l.b16 %v341
        %v641 = vunpack.c.l.b16 %v342
        %v642 = vunpack.c.l.b16 %v343
        %v643 = vunpack.c.l.b16 %v344
        %v644 = vunpack.c.l.b16 %v345
        %v645 = vunpack.c.l.b16 %v346
        %v646 = vunpack.c.l.b16 %v347
        %v647 = vunpack.c.l.b16 %v348
        %v648 = vunpack.c.l.b16 %v349
        %v649 = vunpack.c.l.b16 %v350
        %v650 = vunpack.c.l.b16 %v351
        %v651 = vunpack.c.l.b16 %v352
        %v652 = vunpack.c.l.b16 %v353
        %v653 = vunpack.c.l.b16 %v354
        %v654 = vunpack.c.l.b16 %v355
        %v655 = vunpack.c.l.b16 %v356
        %v656 = vunpack.c.l.b16 %v357
        %v657 = vunpack.c.l.b16 %v358
        %v658 = vunpack.c.l.b16 %v359
        %v659 = vunpack.c.l.b16 %v360
        %v660 = vunpack.c.l.b16 %v361
        %v661 = vunpack.c.l.b16 %v362
        %v662 = vunpack.c.l.b16 %v363
        %v663 = vunpack.c.l.b16 %v364
        %v664 = vunpack.c.l.b16 %v365
        %v665 = vunpack.c.l.b16 %v366
        %v666 = vunpack.c.l.b16 %v367
        %v667 = vunpack.c.l.b16 %v368
        %v668 = vunpack.c.l.b16 %v369
        %v669 = vunpack.c.l.b16 %v370
        %v670 = vunpack.c.l.b16 %v371
        %v671 = vunpack.c.l.b16 %v372
        %v672 = vunpack.c.l.b16 %v373
        %v673 = vunpack.c.l.b16 %v374
        %v674 = vpack.c.b16 %v530, %v529
        %v675 = vpack.c.b16 %v532, %v531
        %v676 = vpack.c.b16 %v534, %v533
        %v677 = vpack.c.b16 %v536, %v535
        %v678 = vpack.c.b16 %v538, %v537
        %v679 = vpack.c.b16 %v540, %v539
        %v680 = vpack.c.b16 %v542, %v541
        %v681 = vpack.c.b16 %v544, %v543
        %v682 = vpack.c.b16 %v546, %v545
        %v683 = vpack.c.b16 %v548, %v547
        %v684 = vpack.c.b16 %v550, %v549
        %v685 = vpack.c.b16 %v552, %v551
        %v686 = vpack.c.b16 %v554, %v553
        %v687 = vpack.c.b16 %v556, %v555
        %v688 = vpack.c.b16 %v558, %v557
        %v689 = vpack.c.b16 %v560, %v559
        %v690 = vpack.c.b16 %v562, %v561
        %v691 = vpack.c.b16 %v564, %v563
        %v692 = vpack.c.b16 %v566, %v565
        %v693 = vpack.c.b16 %v568, %v567
        %v694 = vpack.c.b16 %v570, %v569
        %v695 = vpack.c.b16 %v572, %v571
        %v696 = vpack.c.b16 %v574, %v573
        %v697 = vpack.c.b16 %v576, %v575
        %v698 = vpack.c.b16 %v578, %v577
        %v699 = vpack.c.b16 %v580, %v579
        %v700 = vpack.c.b16 %v582, %v581
        %v701 = vpack.c.b16 %v584, %v583
        %v702 = vpack.c.b16 %v586, %v585
        %v703 = vpack.c.b16 %v588, %v587
        %v704 = vpack.c.b16 %v590, %v589
        %v705 = vpack.c.b16 %v592, %v591
        %v706 = vpack.c.b16 %v594, %v593
        %v707 = vpack.c.b16 %v596, %v595
        %v708 = vpack.c.b16 %v598, %v597
        %v709 = vpack.c.b16 %v600, %v599
        %v710 = vpack.c.b16 %v602, %v601
        %v711 = vpack.c.b16 %v604, %v603
        %v712 = vpack.c.b16 %v606, %v605
        %v713 = vpack.c.b16 %v608, %v607
        %v714 = vpack.c.b16 %v610, %v609
        %v715 = vpack.c.b16 %v612, %v611
        %v716 = vpack.c.b16 %v614, %v613
        %v717 = vpack.c.b16 %v616, %v615
        %v718 = vpack.c.b16 %v618, %v617
        %v719 = vpack.c.b16 %v620, %v619
        %v720 = vpack.c.b16 %v622, %v621
        %v721 = vpack.c.b16 %v624, %v623
        %v722 = vpack.c.b16 %v626, %v625
        %v723 = vpack.c.b16 %v628, %v627
        %v724 = vpack.c.b16 %v630, %v629
        %v725 = vpack.c.b16 %v632, %v631
        %v726 = vpack.c.b16 %v634, %v633
        %v727 = vpack.c.b16 %v636, %v635
        %v728 = vpack.c.b16 %v638, %v637
        %v729 = vpack.c.b16 %v640, %v639
        %v730 = vpack.c.b16 %v642, %v641
        %v731 = vpack.c.b16 %v644, %v643
        %v732 = vpack.c.b16 %v646, %v645
        %v733 = vpack.c.b16 %v648, %v647
        %v734 = vpack.c.b16 %v650, %v649
        %v735 = vpack.c.b16 %v652, %v651
        %v736 = vpack.c.b16 %v654, %v653
        %v737 = vpack.c.b16 %v656, %v655
        %v738 = vpack.c.b16 %v658, %v657
        %v739 = vpack.c.b16 %v660, %v659
        %v740 = vpack.c.b16 %v662, %v661
        %v741 = vpack.c.b16 %v664, %v663
        %v742 = vpack.c.b16 %v666, %v665
        %v743 = vpack.c.b16 %v668, %v667
        %v744 = vpack.c.b16 %v670, %v669
        %v745 = vpack.c.b16 %v672, %v671
        %v746 = vpack.c.b16 %v673, %v673
        %vm747 = vsmask.f32 7424
        %v749 = vshrl.u32 %v674, 16
        %v751 = vshll.u32 %v674, 16
        %v753 = vrot.slane %v751, 1
        %v754 = vor.u32 %v749, %v753
        %v756 = vshll.u32 %v675, 16
        %v758 = vrot.slane %v756, 1
        %v759 = vsel %vm747, %v754, %v758
        %v760 = vshrl.u32 %v675, 16
        %v762 = vor.u32 %v760, %v758
        %v764 = vshll.u32 %v676, 16
        %v766 = vrot.slane %v764, 1
        %v767 = vsel %vm747, %v762, %v766
        %v768 = vshrl.u32 %v676, 16
        %v770 = vor.u32 %v768, %v766
        %v772 = vshll.u32 %v677, 16
        %v774 = vrot.slane %v772, 1
        %v775 = vsel %vm747, %v770, %v774
        %v776 = vshrl.u32 %v677, 16
        %v778 = vor.u32 %v776, %v774
        %v780 = vshll.u32 %v678, 16
        %v782 = vrot.slane %v780, 1
        %v783 = vsel %vm747, %v778, %v782
        %v784 = vshrl.u32 %v678, 16
        %v786 = vor.u32 %v784, %v782
        %v788 = vshll.u32 %v679, 16
        %v790 = vrot.slane %v788, 1
        %v791 = vsel %vm747, %v786, %v790
        %v792 = vshrl.u32 %v679, 16
        %v794 = vor.u32 %v792, %v790
        %v796 = vshll.u32 %v680, 16
        %v798 = vrot.slane %v796, 1
        %v799 = vsel %vm747, %v794, %v798
        %v800 = vshrl.u32 %v680, 16
        %v802 = vor.u32 %v800, %v798
        %v804 = vshll.u32 %v681, 16
        %v806 = vrot.slane %v804, 1
        %v807 = vsel %vm747, %v802, %v806
        %v808 = vshrl.u32 %v681, 16
        %v810 = vor.u32 %v808, %v806
        %v812 = vshll.u32 %v682, 16
        %v814 = vrot.slane %v812, 1
        %v815 = vsel %vm747, %v810, %v814
        %v816 = vshrl.u32 %v682, 16
        %v818 = vor.u32 %v816, %v814
        %v820 = vshll.u32 %v683, 16
        %v822 = vrot.slane %v820, 1
        %v823 = vsel %vm747, %v818, %v822
        %v824 = vshrl.u32 %v683, 16
        %v826 = vor.u32 %v824, %v822
        %v828 = vshll.u32 %v684, 16
        %v830 = vrot.slane %v828, 1
        %v831 = vsel %vm747, %v826, %v830
        %v832 = vshrl.u32 %v684, 16
        %v834 = vor.u32 %v832, %v830
        %v836 = vshll.u32 %v685, 16
        %v838 = vrot.slane %v836, 1
        %v839 = vsel %vm747, %v834, %v838
        %v840 = vshrl.u32 %v685, 16
        %v842 = vor.u32 %v840, %v838
        %v844 = vshll.u32 %v686, 16
        %v846 = vrot.slane %v844, 1
        %v847 = vsel %vm747, %v842, %v846
        %v848 = vshrl.u32 %v686, 16
        %v850 = vor.u32 %v848, %v846
        %v852 = vshll.u32 %v687, 16
        %v854 = vrot.slane %v852, 1
        %v855 = vsel %vm747, %v850, %v854
        %v856 = vshrl.u32 %v687, 16
        %v858 = vor.u32 %v856, %v854
        %v860 = vshll.u32 %v688, 16
        %v862 = vrot.slane %v860, 1
        %v863 = vsel %vm747, %v858, %v862
        %v864 = vshrl.u32 %v688, 16
        %v866 = vor.u32 %v864, %v862
        %v868 = vshll.u32 %v689, 16
        %v870 = vrot.slane %v868, 1
        %v871 = vsel %vm747, %v866, %v870
        %v872 = vshrl.u32 %v689, 16
        %v874 = vor.u32 %v872, %v870
        %v876 = vshll.u32 %v690, 16
        %v878 = vrot.slane %v876, 1
        %v879 = vsel %vm747, %v874, %v878
        %v880 = vshrl.u32 %v690, 16
        %v882 = vor.u32 %v880, %v878
        %v884 = vshll.u32 %v691, 16
        %v886 = vrot.slane %v884, 1
        %v887 = vsel %vm747, %v882, %v886
        %v888 = vshrl.u32 %v691, 16
        %v890 = vor.u32 %v888, %v886
        %v892 = vshll.u32 %v692, 16
        %v894 = vrot.slane %v892, 1
        %v895 = vsel %vm747, %v890, %v894
        %v896 = vshrl.u32 %v692, 16
        %v898 = vor.u32 %v896, %v894
        %v900 = vshll.u32 %v693, 16
        %v902 = vrot.slane %v900, 1
        %v903 = vsel %vm747, %v898, %v902
        %v904 = vshrl.u32 %v693, 16
        %v906 = vor.u32 %v904, %v902
        %v908 = vshll.u32 %v694, 16
        %v910 = vrot.slane %v908, 1
        %v911 = vsel %vm747, %v906, %v910
        %v912 = vshrl.u32 %v694, 16
        %v914 = vor.u32 %v912, %v910
        %v916 = vshll.u32 %v695, 16
        %v918 = vrot.slane %v916, 1
        %v919 = vsel %vm747, %v914, %v918
        %v920 = vshrl.u32 %v695, 16
        %v922 = vor.u32 %v920, %v918
        %v924 = vshll.u32 %v696, 16
        %v926 = vrot.slane %v924, 1
        %v927 = vsel %vm747, %v922, %v926
        %v928 = vshrl.u32 %v696, 16
        %v930 = vor.u32 %v928, %v926
        %v932 = vshll.u32 %v697, 16
        %v934 = vrot.slane %v932, 1
        %v935 = vsel %vm747, %v930, %v934
        %v936 = vshrl.u32 %v697, 16
        %v938 = vor.u32 %v936, %v934
        %v940 = vshll.u32 %v698, 16
        %v942 = vrot.slane %v940, 1
        %v943 = vsel %vm747, %v938, %v942
        %v944 = vshrl.u32 %v698, 16
        %v946 = vor.u32 %v944, %v942
        %v948 = vshll.u32 %v699, 16
        %v950 = vrot.slane %v948, 1
        %v951 = vsel %vm747, %v946, %v950
        %v952 = vshrl.u32 %v699, 16
        %v954 = vor.u32 %v952, %v950
        %v956 = vshll.u32 %v700, 16
        %v958 = vrot.slane %v956, 1
        %v959 = vsel %vm747, %v954, %v958
        %v960 = vshrl.u32 %v700, 16
        %v962 = vor.u32 %v960, %v958
        %v964 = vshll.u32 %v701, 16
        %v966 = vrot.slane %v964, 1
        %v967 = vsel %vm747, %v962, %v966
        %v968 = vshrl.u32 %v701, 16
        %v970 = vor.u32 %v968, %v966
        %v972 = vshll.u32 %v702, 16
        %v974 = vrot.slane %v972, 1
        %v975 = vsel %vm747, %v970, %v974
        %v976 = vshrl.u32 %v702, 16
        %v978 = vor.u32 %v976, %v974
        %v980 = vshll.u32 %v703, 16
        %v982 = vrot.slane %v980, 1
        %v983 = vsel %vm747, %v978, %v982
        %v984 = vshrl.u32 %v703, 16
        %v986 = vor.u32 %v984, %v982
        %v988 = vshll.u32 %v704, 16
        %v990 = vrot.slane %v988, 1
        %v991 = vsel %vm747, %v986, %v990
        %v992 = vshrl.u32 %v704, 16
        %v994 = vor.u32 %v992, %v990
        %v996 = vshll.u32 %v705, 16
        %v998 = vrot.slane %v996, 1
        %v999 = vsel %vm747, %v994, %v998
        %v1000 = vshrl.u32 %v705, 16
        %v1002 = vor.u32 %v1000, %v998
        %v1004 = vshll.u32 %v706, 16
        %v1006 = vrot.slane %v1004, 1
        %v1007 = vsel %vm747, %v1002, %v1006
        %v1008 = vshrl.u32 %v706, 16
        %v1010 = vor.u32 %v1008, %v1006
        %v1012 = vshll.u32 %v707, 16
        %v1014 = vrot.slane %v1012, 1
        %v1015 = vsel %vm747, %v1010, %v1014
        %v1016 = vshrl.u32 %v707, 16
        %v1018 = vor.u32 %v1016, %v1014
        %v1020 = vshll.u32 %v708, 16
        %v1022 = vrot.slane %v1020, 1
        %v1023 = vsel %vm747, %v1018, %v1022
        %v1024 = vshrl.u32 %v708, 16
        %v1026 = vor.u32 %v1024, %v1022
        %v1028 = vshll.u32 %v709, 16
        %v1030 = vrot.slane %v1028, 1
        %v1031 = vsel %vm747, %v1026, %v1030
        %v1032 = vshrl.u32 %v709, 16
        %v1034 = vor.u32 %v1032, %v1030
        %v1036 = vshll.u32 %v710, 16
        %v1038 = vrot.slane %v1036, 1
        %v1039 = vsel %vm747, %v1034, %v1038
        %v1040 = vshrl.u32 %v710, 16
        %v1042 = vor.u32 %v1040, %v1038
        %v1044 = vshll.u32 %v711, 16
        %v1046 = vrot.slane %v1044, 1
        %v1047 = vsel %vm747, %v1042, %v1046
        %v1048 = vshrl.u32 %v711, 16
        %v1050 = vor.u32 %v1048, %v1046
        %v1052 = vshll.u32 %v712, 16
        %v1054 = vrot.slane %v1052, 1
        %v1055 = vsel %vm747, %v1050, %v1054
        %v1056 = vshrl.u32 %v712, 16
        %v1058 = vor.u32 %v1056, %v1054
        %v1060 = vshll.u32 %v713, 16
        %v1062 = vrot.slane %v1060, 1
        %v1063 = vsel %vm747, %v1058, %v1062
        %v1064 = vshrl.u32 %v713, 16
        %v1066 = vor.u32 %v1064, %v1062
        %v1068 = vshll.u32 %v714, 16
        %v1070 = vrot.slane %v1068, 1
        %v1071 = vsel %vm747, %v1066, %v1070
        %v1072 = vshrl.u32 %v714, 16
        %v1074 = vor.u32 %v1072, %v1070
        %v1076 = vshll.u32 %v715, 16
        %v1078 = vrot.slane %v1076, 1
        %v1079 = vsel %vm747, %v1074, %v1078
        %v1080 = vshrl.u32 %v715, 16
        %v1082 = vor.u32 %v1080, %v1078
        %v1084 = vshll.u32 %v716, 16
        %v1086 = vrot.slane %v1084, 1
        %v1087 = vsel %vm747, %v1082, %v1086
        %v1088 = vshrl.u32 %v716, 16
        %v1090 = vor.u32 %v1088, %v1086
        %v1092 = vshll.u32 %v717, 16
        %v1094 = vrot.slane %v1092, 1
        %v1095 = vsel %vm747, %v1090, %v1094
        %v1096 = vshrl.u32 %v717, 16
        %v1098 = vor.u32 %v1096, %v1094
        %v1100 = vshll.u32 %v718, 16
        %v1102 = vrot.slane %v1100, 1
        %v1103 = vsel %vm747, %v1098, %v1102
        %v1104 = vshrl.u32 %v718, 16
        %v1106 = vor.u32 %v1104, %v1102
        %v1108 = vshll.u32 %v719, 16
        %v1110 = vrot.slane %v1108, 1
        %v1111 = vsel %vm747, %v1106, %v1110
        %v1112 = vshrl.u32 %v719, 16
        %v1114 = vor.u32 %v1112, %v1110
        %v1116 = vshll.u32 %v720, 16
        %v1118 = vrot.slane %v1116, 1
        %v1119 = vsel %vm747, %v1114, %v1118
        %v1120 = vshrl.u32 %v720, 16
        %v1122 = vor.u32 %v1120, %v1118
        %v1124 = vshll.u32 %v721, 16
        %v1126 = vrot.slane %v1124, 1
        %v1127 = vsel %vm747, %v1122, %v1126
        %v1128 = vshrl.u32 %v721, 16
        %v1130 = vor.u32 %v1128, %v1126
        %v1132 = vshll.u32 %v722, 16
        %v1134 = vrot.slane %v1132, 1
        %v1135 = vsel %vm747, %v1130, %v1134
        %v1136 = vshrl.u32 %v722, 16
        %v1138 = vor.u32 %v1136, %v1134
        %v1140 = vshll.u32 %v723, 16
        %v1142 = vrot.slane %v1140, 1
        %v1143 = vsel %vm747, %v1138, %v1142
        %v1144 = vshrl.u32 %v723, 16
        %v1146 = vor.u32 %v1144, %v1142
        %v1148 = vshll.u32 %v724, 16
        %v1150 = vrot.slane %v1148, 1
        %v1151 = vsel %vm747, %v1146, %v1150
        %v1152 = vshrl.u32 %v724, 16
        %v1154 = vor.u32 %v1152, %v1150
        %v1156 = vshll.u32 %v725, 16
        %v1158 = vrot.slane %v1156, 1
        %v1159 = vsel %vm747, %v1154, %v1158
        %v1160 = vshrl.u32 %v725, 16
        %v1162 = vor.u32 %v1160, %v1158
        %v1164 = vshll.u32 %v726, 16
        %v1166 = vrot.slane %v1164, 1
        %v1167 = vsel %vm747, %v1162, %v1166
        %v1168 = vshrl.u32 %v726, 16
        %v1170 = vor.u32 %v1168, %v1166
        %v1172 = vshll.u32 %v727, 16
        %v1174 = vrot.slane %v1172, 1
        %v1175 = vsel %vm747, %v1170, %v1174
        %v1176 = vshrl.u32 %v727, 16
        %v1178 = vor.u32 %v1176, %v1174
        %v1180 = vshll.u32 %v728, 16
        %v1182 = vrot.slane %v1180, 1
        %v1183 = vsel %vm747, %v1178, %v1182
        %v1184 = vshrl.u32 %v728, 16
        %v1186 = vor.u32 %v1184, %v1182
        %v1188 = vshll.u32 %v729, 16
        %v1190 = vrot.slane %v1188, 1
        %v1191 = vsel %vm747, %v1186, %v1190
        %v1192 = vshrl.u32 %v729, 16
        %v1194 = vor.u32 %v1192, %v1190
        %v1196 = vshll.u32 %v730, 16
        %v1198 = vrot.slane %v1196, 1
        %v1199 = vsel %vm747, %v1194, %v1198
        %v1200 = vshrl.u32 %v730, 16
        %v1202 = vor.u32 %v1200, %v1198
        %v1204 = vshll.u32 %v731, 16
        %v1206 = vrot.slane %v1204, 1
        %v1207 = vsel %vm747, %v1202, %v1206
        %v1208 = vshrl.u32 %v731, 16
        %v1210 = vor.u32 %v1208, %v1206
        %v1212 = vshll.u32 %v732, 16
        %v1214 = vrot.slane %v1212, 1
        %v1215 = vsel %vm747, %v1210, %v1214
        %v1216 = vshrl.u32 %v732, 16
        %v1218 = vor.u32 %v1216, %v1214
        %v1220 = vshll.u32 %v733, 16
        %v1222 = vrot.slane %v1220, 1
        %v1223 = vsel %vm747, %v1218, %v1222
        %v1224 = vshrl.u32 %v733, 16
        %v1226 = vor.u32 %v1224, %v1222
        %v1228 = vshll.u32 %v734, 16
        %v1230 = vrot.slane %v1228, 1
        %v1231 = vsel %vm747, %v1226, %v1230
        %v1232 = vshrl.u32 %v734, 16
        %v1234 = vor.u32 %v1232, %v1230
        %v1236 = vshll.u32 %v735, 16
        %v1238 = vrot.slane %v1236, 1
        %v1239 = vsel %vm747, %v1234, %v1238
        %v1240 = vshrl.u32 %v735, 16
        %v1242 = vor.u32 %v1240, %v1238
        %v1244 = vshll.u32 %v736, 16
        %v1246 = vrot.slane %v1244, 1
        %v1247 = vsel %vm747, %v1242, %v1246
        %v1248 = vshrl.u32 %v736, 16
        %v1250 = vor.u32 %v1248, %v1246
        %v1252 = vshll.u32 %v737, 16
        %v1254 = vrot.slane %v1252, 1
        %v1255 = vsel %vm747, %v1250, %v1254
        %v1256 = vshrl.u32 %v737, 16
        %v1258 = vor.u32 %v1256, %v1254
        %v1260 = vshll.u32 %v738, 16
        %v1262 = vrot.slane %v1260, 1
        %v1263 = vsel %vm747, %v1258, %v1262
        %v1264 = vshrl.u32 %v738, 16
        %v1266 = vor.u32 %v1264, %v1262
        %v1268 = vshll.u32 %v739, 16
        %v1270 = vrot.slane %v1268, 1
        %v1271 = vsel %vm747, %v1266, %v1270
        %v1272 = vshrl.u32 %v739, 16
        %v1274 = vor.u32 %v1272, %v1270
        %v1276 = vshll.u32 %v740, 16
        %v1278 = vrot.slane %v1276, 1
        %v1279 = vsel %vm747, %v1274, %v1278
        %v1280 = vshrl.u32 %v740, 16
        %v1282 = vor.u32 %v1280, %v1278
        %v1284 = vshll.u32 %v741, 16
        %v1286 = vrot.slane %v1284, 1
        %v1287 = vsel %vm747, %v1282, %v1286
        %v1288 = vshrl.u32 %v741, 16
        %v1290 = vor.u32 %v1288, %v1286
        %v1292 = vshll.u32 %v742, 16
        %v1294 = vrot.slane %v1292, 1
        %v1295 = vsel %vm747, %v1290, %v1294
        %v1296 = vshrl.u32 %v742, 16
        %v1298 = vor.u32 %v1296, %v1294
        %v1300 = vshll.u32 %v743, 16
        %v1302 = vrot.slane %v1300, 1
        %v1303 = vsel %vm747, %v1298, %v1302
        %v1304 = vshrl.u32 %v743, 16
        %v1306 = vor.u32 %v1304, %v1302
        %v1308 = vshll.u32 %v744, 16
        %v1310 = vrot.slane %v1308, 1
        %v1311 = vsel %vm747, %v1306, %v1310
        %v1312 = vshrl.u32 %v744, 16
        %v1314 = vor.u32 %v1312, %v1310
        %v1316 = vshll.u32 %v745, 16
        %v1318 = vrot.slane %v1316, 1
        %v1319 = vsel %vm747, %v1314, %v1318
        %v1320 = vshrl.u32 %v745, 16
        %v1322 = vor.u32 %v1320, %v1318
        %v1324 = vshll.u32 %v746, 16
        %v1326 = vrot.slane %v1324, 1
        %v1327 = vsel %vm747, %v1322, %v1326
        %v1332 = vunpack.c.l.b16 %v380
        %v1333 = vunpack.c.l.b16 %v381
        %v1334 = vunpack.c.l.b16 %v382
        %v1335 = vunpack.c.l.b16 %v383
        %v1336 = vpack.c.b16 %v1333, %v1332
        %v1337 = vpack.c.b16 %v1335, %v1334
        %vm1340 = vcmask 261120
        %v1342 = vsel %vm1340, %v759, 0
        %v1345 = vsel %vm1340, %v767, 0
        %v1348 = vsel %vm1340, %v775, 0
        %v1351 = vsel %vm1340, %v783, 0
        %v1354 = vsel %vm1340, %v791, 0
        %v1357 = vsel %vm1340, %v799, 0
        %v1360 = vsel %vm1340, %v807, 0
        %v1363 = vsel %vm1340, %v815, 0
        %v1366 = vsel %vm1340, %v823, 0
        %v1369 = vsel %vm1340, %v831, 0
        %v1372 = vsel %vm1340, %v839, 0
        %v1375 = vsel %vm1340, %v847, 0
        %v1378 = vsel %vm1340, %v855, 0
        %v1381 = vsel %vm1340, %v863, 0
        %v1384 = vsel %vm1340, %v871, 0
        %v1387 = vsel %vm1340, %v879, 0
        %v1390 = vsel %vm1340, %v887, 0
        %v1393 = vsel %vm1340, %v895, 0
        %v1396 = vsel %vm1340, %v903, 0
        %v1399 = vsel %vm1340, %v911, 0
        %v1402 = vsel %vm1340, %v919, 0
        %v1405 = vsel %vm1340, %v927, 0
        %v1408 = vsel %vm1340, %v935, 0
        %v1411 = vsel %vm1340, %v943, 0
        %v1414 = vsel %vm1340, %v951, 0
        %v1417 = vsel %vm1340, %v959, 0
        %v1420 = vsel %vm1340, %v967, 0
        %v1423 = vsel %vm1340, %v975, 0
        %v1426 = vsel %vm1340, %v983, 0
        %v1429 = vsel %vm1340, %v991, 0
        %v1432 = vsel %vm1340, %v999, 0
        %v1435 = vsel %vm1340, %v1007, 0
        %v1438 = vsel %vm1340, %v1015, 0
        %v1441 = vsel %vm1340, %v1023, 0
        %v1444 = vsel %vm1340, %v1031, 0
        %v1447 = vsel %vm1340, %v1039, 0
        %v1450 = vsel %vm1340, %v1047, 0
        %v1453 = vsel %vm1340, %v1055, 0
        %v1456 = vsel %vm1340, %v1063, 0
        %v1459 = vsel %vm1340, %v1071, 0
        %v1462 = vsel %vm1340, %v1079, 0
        %v1465 = vsel %vm1340, %v1087, 0
        %v1468 = vsel %vm1340, %v1095, 0
        %v1471 = vsel %vm1340, %v1103, 0
        %v1474 = vsel %vm1340, %v1111, 0
        %v1477 = vsel %vm1340, %v1119, 0
        %v1480 = vsel %vm1340, %v1127, 0
        %v1483 = vsel %vm1340, %v1135, 0
        %v1486 = vsel %vm1340, %v1143, 0
        %v1489 = vsel %vm1340, %v1151, 0
        %v1492 = vsel %vm1340, %v1159, 0
        %v1495 = vsel %vm1340, %v1167, 0
        %v1498 = vsel %vm1340, %v1175, 0
        %v1501 = vsel %vm1340, %v1183, 0
        %v1504 = vsel %vm1340, %v1191, 0
        %v1507 = vsel %vm1340, %v1199, 0
        %v1510 = vsel %vm1340, %v1207, 0
        %v1513 = vsel %vm1340, %v1215, 0
        %v1516 = vsel %vm1340, %v1223, 0
        %v1519 = vsel %vm1340, %v1231, 0
        %v1522 = vsel %vm1340, %v1239, 0
        %v1525 = vsel %vm1340, %v1247, 0
        %v1528 = vsel %vm1340, %v1255, 0
        %v1531 = vsel %vm1340, %v1263, 0
        %v1534 = vsel %vm1340, %v1271, 0
        %v1537 = vsel %vm1340, %v1279, 0
        %v1540 = vsel %vm1340, %v1287, 0
        %v1543 = vsel %vm1340, %v1295, 0
        %v1546 = vsel %vm1340, %v1303, 0
        %v1549 = vsel %vm1340, %v1311, 0
        %v1552 = vsel %vm1340, %v1319, 0
        %v1555 = vsel %vm1340, %v1327, 0
        %1557 = vmatpush.bf16.msra.mxu0 0
        %1558 = vmatpush.bf16.msra.mxu0 0
        %1559 = vmatpush.bf16.msra.mxu0 0
        %1560 = vmatpush.bf16.msra.mxu0 0
        %1561 = vmatpush.bf16.msra.mxu0 0
        %1562 = vmatpush.bf16.msra.mxu0 0
        %1563 = vmatpush.bf16.msra.mxu0 %v1337
        %1564 = vmatpush.bf16.msra.mxu0 %v1336
        %1565 = vmatmul.bf16.gmra.mxu0 %v1342
        %v1566 = vpop.f32.mrf.mxu0
        %v1567 = vadd.f32 0.0, %v1566
        %v1568 = vpop.f32.mrf.mxu0
        %v1569 = vadd.f32 0.0, %v1568
        %1570 = vmatmul.bf16.gmra.mxu0 %v1345
        %v1571 = vpop.f32.mrf.mxu0
        %v1572 = vadd.f32 0.0, %v1571
        %v1573 = vpop.f32.mrf.mxu0
        %v1574 = vadd.f32 0.0, %v1573
        %1575 = vmatmul.bf16.gmra.mxu0 %v1348
        %v1576 = vpop.f32.mrf.mxu0
        %v1577 = vadd.f32 0.0, %v1576
        %v1578 = vpop.f32.mrf.mxu0
        %v1579 = vadd.f32 0.0, %v1578
        %1580 = vmatmul.bf16.gmra.mxu0 %v1351
        %v1581 = vpop.f32.mrf.mxu0
        %v1582 = vadd.f32 0.0, %v1581
        %v1583 = vpop.f32.mrf.mxu0
        %v1584 = vadd.f32 0.0, %v1583
        %1585 = vmatmul.bf16.gmra.mxu0 %v1354
        %v1586 = vpop.f32.mrf.mxu0
        %v1587 = vadd.f32 0.0, %v1586
        %v1588 = vpop.f32.mrf.mxu0
        %v1589 = vadd.f32 0.0, %v1588
        %1590 = vmatmul.bf16.gmra.mxu0 %v1357
        %v1591 = vpop.f32.mrf.mxu0
        %v1592 = vadd.f32 0.0, %v1591
        %v1593 = vpop.f32.mrf.mxu0
        %v1594 = vadd.f32 0.0, %v1593
        %1595 = vmatmul.bf16.gmra.mxu0 %v1360
        %v1596 = vpop.f32.mrf.mxu0
        %v1597 = vadd.f32 0.0, %v1596
        %v1598 = vpop.f32.mrf.mxu0
        %v1599 = vadd.f32 0.0, %v1598
        %1600 = vmatmul.bf16.gmra.mxu0 %v1363
        %v1601 = vpop.f32.mrf.mxu0
        %v1602 = vadd.f32 0.0, %v1601
        %v1603 = vpop.f32.mrf.mxu0
        %v1604 = vadd.f32 0.0, %v1603
        %1605 = vmatmul.bf16.gmra.mxu0 %v1366
        %v1606 = vpop.f32.mrf.mxu0
        %v1607 = vadd.f32 0.0, %v1606
        %v1608 = vpop.f32.mrf.mxu0
        %v1609 = vadd.f32 0.0, %v1608
        %1610 = vmatmul.bf16.gmra.mxu0 %v1369
        %v1611 = vpop.f32.mrf.mxu0
        %v1612 = vadd.f32 0.0, %v1611
        %v1613 = vpop.f32.mrf.mxu0
        %v1614 = vadd.f32 0.0, %v1613
        %1615 = vmatmul.bf16.gmra.mxu0 %v1372
        %v1616 = vpop.f32.mrf.mxu0
        %v1617 = vadd.f32 0.0, %v1616
        %v1618 = vpop.f32.mrf.mxu0
        %v1619 = vadd.f32 0.0, %v1618
        %1620 = vmatmul.bf16.gmra.mxu0 %v1375
        %v1621 = vpop.f32.mrf.mxu0
        %v1622 = vadd.f32 0.0, %v1621
        %v1623 = vpop.f32.mrf.mxu0
        %v1624 = vadd.f32 0.0, %v1623
        %1625 = vmatmul.bf16.gmra.mxu0 %v1378
        %v1626 = vpop.f32.mrf.mxu0
        %v1627 = vadd.f32 0.0, %v1626
        %v1628 = vpop.f32.mrf.mxu0
        %v1629 = vadd.f32 0.0, %v1628
        %1630 = vmatmul.bf16.gmra.mxu0 %v1381
        %v1631 = vpop.f32.mrf.mxu0
        %v1632 = vadd.f32 0.0, %v1631
        %v1633 = vpop.f32.mrf.mxu0
        %v1634 = vadd.f32 0.0, %v1633
        %1635 = vmatmul.bf16.gmra.mxu0 %v1384
        %v1636 = vpop.f32.mrf.mxu0
        %v1637 = vadd.f32 0.0, %v1636
        %v1638 = vpop.f32.mrf.mxu0
        %v1639 = vadd.f32 0.0, %v1638
        %1640 = vmatmul.bf16.gmra.mxu0 %v1387
        %v1641 = vpop.f32.mrf.mxu0
        %v1642 = vadd.f32 0.0, %v1641
        %v1643 = vpop.f32.mrf.mxu0
        %v1644 = vadd.f32 0.0, %v1643
        %1645 = vmatmul.bf16.gmra.mxu0 %v1390
        %v1646 = vpop.f32.mrf.mxu0
        %v1647 = vadd.f32 0.0, %v1646
        %v1648 = vpop.f32.mrf.mxu0
        %v1649 = vadd.f32 0.0, %v1648
        %1650 = vmatmul.bf16.gmra.mxu0 %v1393
        %v1651 = vpop.f32.mrf.mxu0
        %v1652 = vadd.f32 0.0, %v1651
        %v1653 = vpop.f32.mrf.mxu0
        %v1654 = vadd.f32 0.0, %v1653
        %1655 = vmatmul.bf16.gmra.mxu0 %v1396
        %v1656 = vpop.f32.mrf.mxu0
        %v1657 = vadd.f32 0.0, %v1656
        %v1658 = vpop.f32.mrf.mxu0
        %v1659 = vadd.f32 0.0, %v1658
        %1660 = vmatmul.bf16.gmra.mxu0 %v1399
        %v1661 = vpop.f32.mrf.mxu0
        %v1662 = vadd.f32 0.0, %v1661
        %v1663 = vpop.f32.mrf.mxu0
        %v1664 = vadd.f32 0.0, %v1663
        %1665 = vmatmul.bf16.gmra.mxu0 %v1402
        %v1666 = vpop.f32.mrf.mxu0
        %v1667 = vadd.f32 0.0, %v1666
        %v1668 = vpop.f32.mrf.mxu0
        %v1669 = vadd.f32 0.0, %v1668
        %1670 = vmatmul.bf16.gmra.mxu0 %v1405
        %v1671 = vpop.f32.mrf.mxu0
        %v1672 = vadd.f32 0.0, %v1671
        %v1673 = vpop.f32.mrf.mxu0
        %v1674 = vadd.f32 0.0, %v1673
        %1675 = vmatmul.bf16.gmra.mxu0 %v1408
        %v1676 = vpop.f32.mrf.mxu0
        %v1677 = vadd.f32 0.0, %v1676
        %v1678 = vpop.f32.mrf.mxu0
        %v1679 = vadd.f32 0.0, %v1678
        %1680 = vmatmul.bf16.gmra.mxu0 %v1411
        %v1681 = vpop.f32.mrf.mxu0
        %v1682 = vadd.f32 0.0, %v1681
        %v1683 = vpop.f32.mrf.mxu0
        %v1684 = vadd.f32 0.0, %v1683
        %1685 = vmatmul.bf16.gmra.mxu0 %v1414
        %v1686 = vpop.f32.mrf.mxu0
        %v1687 = vadd.f32 0.0, %v1686
        %v1688 = vpop.f32.mrf.mxu0
        %v1689 = vadd.f32 0.0, %v1688
        %1690 = vmatmul.bf16.gmra.mxu0 %v1417
        %v1691 = vpop.f32.mrf.mxu0
        %v1692 = vadd.f32 0.0, %v1691
        %v1693 = vpop.f32.mrf.mxu0
        %v1694 = vadd.f32 0.0, %v1693
        %1695 = vmatmul.bf16.gmra.mxu0 %v1420
        %v1696 = vpop.f32.mrf.mxu0
        %v1697 = vadd.f32 0.0, %v1696
        %v1698 = vpop.f32.mrf.mxu0
        %v1699 = vadd.f32 0.0, %v1698
        %1700 = vmatmul.bf16.gmra.mxu0 %v1423
        %v1701 = vpop.f32.mrf.mxu0
        %v1702 = vadd.f32 0.0, %v1701
        %v1703 = vpop.f32.mrf.mxu0
        %v1704 = vadd.f32 0.0, %v1703
        %1705 = vmatmul.bf16.gmra.mxu0 %v1426
        %v1706 = vpop.f32.mrf.mxu0
        %v1707 = vadd.f32 0.0, %v1706
        %v1708 = vpop.f32.mrf.mxu0
        %v1709 = vadd.f32 0.0, %v1708
        %1710 = vmatmul.bf16.gmra.mxu0 %v1429
        %v1711 = vpop.f32.mrf.mxu0
        %v1712 = vadd.f32 0.0, %v1711
        %v1713 = vpop.f32.mrf.mxu0
        %v1714 = vadd.f32 0.0, %v1713
        %1715 = vmatmul.bf16.gmra.mxu0 %v1432
        %v1716 = vpop.f32.mrf.mxu0
        %v1717 = vadd.f32 0.0, %v1716
        %v1718 = vpop.f32.mrf.mxu0
        %v1719 = vadd.f32 0.0, %v1718
        %1720 = vmatmul.bf16.gmra.mxu0 %v1435
        %v1721 = vpop.f32.mrf.mxu0
        %v1722 = vadd.f32 0.0, %v1721
        %v1723 = vpop.f32.mrf.mxu0
        %v1724 = vadd.f32 0.0, %v1723
        %1725 = vmatmul.bf16.gmra.mxu0 %v1438
        %v1726 = vpop.f32.mrf.mxu0
        %v1727 = vadd.f32 0.0, %v1726
        %v1728 = vpop.f32.mrf.mxu0
        %v1729 = vadd.f32 0.0, %v1728
        %1730 = vmatmul.bf16.gmra.mxu0 %v1441
        %v1731 = vpop.f32.mrf.mxu0
        %v1732 = vadd.f32 0.0, %v1731
        %v1733 = vpop.f32.mrf.mxu0
        %v1734 = vadd.f32 0.0, %v1733
        %1735 = vmatmul.bf16.gmra.mxu0 %v1444
        %v1736 = vpop.f32.mrf.mxu0
        %v1737 = vadd.f32 0.0, %v1736
        %v1738 = vpop.f32.mrf.mxu0
        %v1739 = vadd.f32 0.0, %v1738
        %1740 = vmatmul.bf16.gmra.mxu0 %v1447
        %v1741 = vpop.f32.mrf.mxu0
        %v1742 = vadd.f32 0.0, %v1741
        %v1743 = vpop.f32.mrf.mxu0
        %v1744 = vadd.f32 0.0, %v1743
        %1745 = vmatmul.bf16.gmra.mxu0 %v1450
        %v1746 = vpop.f32.mrf.mxu0
        %v1747 = vadd.f32 0.0, %v1746
        %v1748 = vpop.f32.mrf.mxu0
        %v1749 = vadd.f32 0.0, %v1748
        %1750 = vmatmul.bf16.gmra.mxu0 %v1453
        %v1751 = vpop.f32.mrf.mxu0
        %v1752 = vadd.f32 0.0, %v1751
        %v1753 = vpop.f32.mrf.mxu0
        %v1754 = vadd.f32 0.0, %v1753
        %1755 = vmatmul.bf16.gmra.mxu0 %v1456
        %v1756 = vpop.f32.mrf.mxu0
        %v1757 = vadd.f32 0.0, %v1756
        %v1758 = vpop.f32.mrf.mxu0
        %v1759 = vadd.f32 0.0, %v1758
        %1760 = vmatmul.bf16.gmra.mxu0 %v1459
        %v1761 = vpop.f32.mrf.mxu0
        %v1762 = vadd.f32 0.0, %v1761
        %v1763 = vpop.f32.mrf.mxu0
        %v1764 = vadd.f32 0.0, %v1763
        %1765 = vmatmul.bf16.gmra.mxu0 %v1462
        %v1766 = vpop.f32.mrf.mxu0
        %v1767 = vadd.f32 0.0, %v1766
        %v1768 = vpop.f32.mrf.mxu0
        %v1769 = vadd.f32 0.0, %v1768
        %1770 = vmatmul.bf16.gmra.mxu0 %v1465
        %v1771 = vpop.f32.mrf.mxu0
        %v1772 = vadd.f32 0.0, %v1771
        %v1773 = vpop.f32.mrf.mxu0
        %v1774 = vadd.f32 0.0, %v1773
        %1775 = vmatmul.bf16.gmra.mxu0 %v1468
        %v1776 = vpop.f32.mrf.mxu0
        %v1777 = vadd.f32 0.0, %v1776
        %v1778 = vpop.f32.mrf.mxu0
        %v1779 = vadd.f32 0.0, %v1778
        %1780 = vmatmul.bf16.gmra.mxu0 %v1471
        %v1781 = vpop.f32.mrf.mxu0
        %v1782 = vadd.f32 0.0, %v1781
        %v1783 = vpop.f32.mrf.mxu0
        %v1784 = vadd.f32 0.0, %v1783
        %1785 = vmatmul.bf16.gmra.mxu0 %v1474
        %v1786 = vpop.f32.mrf.mxu0
        %v1787 = vadd.f32 0.0, %v1786
        %v1788 = vpop.f32.mrf.mxu0
        %v1789 = vadd.f32 0.0, %v1788
        %1790 = vmatmul.bf16.gmra.mxu0 %v1477
        %v1791 = vpop.f32.mrf.mxu0
        %v1792 = vadd.f32 0.0, %v1791
        %v1793 = vpop.f32.mrf.mxu0
        %v1794 = vadd.f32 0.0, %v1793
        %1795 = vmatmul.bf16.gmra.mxu0 %v1480
        %v1796 = vpop.f32.mrf.mxu0
        %v1797 = vadd.f32 0.0, %v1796
        %v1798 = vpop.f32.mrf.mxu0
        %v1799 = vadd.f32 0.0, %v1798
        %1800 = vmatmul.bf16.gmra.mxu0 %v1483
        %v1801 = vpop.f32.mrf.mxu0
        %v1802 = vadd.f32 0.0, %v1801
        %v1803 = vpop.f32.mrf.mxu0
        %v1804 = vadd.f32 0.0, %v1803
        %1805 = vmatmul.bf16.gmra.mxu0 %v1486
        %v1806 = vpop.f32.mrf.mxu0
        %v1807 = vadd.f32 0.0, %v1806
        %v1808 = vpop.f32.mrf.mxu0
        %v1809 = vadd.f32 0.0, %v1808
        %1810 = vmatmul.bf16.gmra.mxu0 %v1489
        %v1811 = vpop.f32.mrf.mxu0
        %v1812 = vadd.f32 0.0, %v1811
        %v1813 = vpop.f32.mrf.mxu0
        %v1814 = vadd.f32 0.0, %v1813
        %1815 = vmatmul.bf16.gmra.mxu0 %v1492
        %v1816 = vpop.f32.mrf.mxu0
        %v1817 = vadd.f32 0.0, %v1816
        %v1818 = vpop.f32.mrf.mxu0
        %v1819 = vadd.f32 0.0, %v1818
        %1820 = vmatmul.bf16.gmra.mxu0 %v1495
        %v1821 = vpop.f32.mrf.mxu0
        %v1822 = vadd.f32 0.0, %v1821
        %v1823 = vpop.f32.mrf.mxu0
        %v1824 = vadd.f32 0.0, %v1823
        %1825 = vmatmul.bf16.gmra.mxu0 %v1498
        %v1826 = vpop.f32.mrf.mxu0
        %v1827 = vadd.f32 0.0, %v1826
        %v1828 = vpop.f32.mrf.mxu0
        %v1829 = vadd.f32 0.0, %v1828
        %1830 = vmatmul.bf16.gmra.mxu0 %v1501
        %v1831 = vpop.f32.mrf.mxu0
        %v1832 = vadd.f32 0.0, %v1831
        %v1833 = vpop.f32.mrf.mxu0
        %v1834 = vadd.f32 0.0, %v1833
        %1835 = vmatmul.bf16.gmra.mxu0 %v1504
        %v1836 = vpop.f32.mrf.mxu0
        %v1837 = vadd.f32 0.0, %v1836
        %v1838 = vpop.f32.mrf.mxu0
        %v1839 = vadd.f32 0.0, %v1838
        %1840 = vmatmul.bf16.gmra.mxu0 %v1507
        %v1841 = vpop.f32.mrf.mxu0
        %v1842 = vadd.f32 0.0, %v1841
        %v1843 = vpop.f32.mrf.mxu0
        %v1844 = vadd.f32 0.0, %v1843
        %1845 = vmatmul.bf16.gmra.mxu0 %v1510
        %v1846 = vpop.f32.mrf.mxu0
        %v1847 = vadd.f32 0.0, %v1846
        %v1848 = vpop.f32.mrf.mxu0
        %v1849 = vadd.f32 0.0, %v1848
        %1850 = vmatmul.bf16.gmra.mxu0 %v1513
        %v1851 = vpop.f32.mrf.mxu0
        %v1852 = vadd.f32 0.0, %v1851
        %v1853 = vpop.f32.mrf.mxu0
        %v1854 = vadd.f32 0.0, %v1853
        %1855 = vmatmul.bf16.gmra.mxu0 %v1516
        %v1856 = vpop.f32.mrf.mxu0
        %v1857 = vadd.f32 0.0, %v1856
        %v1858 = vpop.f32.mrf.mxu0
        %v1859 = vadd.f32 0.0, %v1858
        %1860 = vmatmul.bf16.gmra.mxu0 %v1519
        %v1861 = vpop.f32.mrf.mxu0
        %v1862 = vadd.f32 0.0, %v1861
        %v1863 = vpop.f32.mrf.mxu0
        %v1864 = vadd.f32 0.0, %v1863
        %1865 = vmatmul.bf16.gmra.mxu0 %v1522
        %v1866 = vpop.f32.mrf.mxu0
        %v1867 = vadd.f32 0.0, %v1866
        %v1868 = vpop.f32.mrf.mxu0
        %v1869 = vadd.f32 0.0, %v1868
        %1870 = vmatmul.bf16.gmra.mxu0 %v1525
        %v1871 = vpop.f32.mrf.mxu0
        %v1872 = vadd.f32 0.0, %v1871
        %v1873 = vpop.f32.mrf.mxu0
        %v1874 = vadd.f32 0.0, %v1873
        %1875 = vmatmul.bf16.gmra.mxu0 %v1528
        %v1876 = vpop.f32.mrf.mxu0
        %v1877 = vadd.f32 0.0, %v1876
        %v1878 = vpop.f32.mrf.mxu0
        %v1879 = vadd.f32 0.0, %v1878
        %1880 = vmatmul.bf16.gmra.mxu0 %v1531
        %v1881 = vpop.f32.mrf.mxu0
        %v1882 = vadd.f32 0.0, %v1881
        %v1883 = vpop.f32.mrf.mxu0
        %v1884 = vadd.f32 0.0, %v1883
        %1885 = vmatmul.bf16.gmra.mxu0 %v1534
        %v1886 = vpop.f32.mrf.mxu0
        %v1887 = vadd.f32 0.0, %v1886
        %v1888 = vpop.f32.mrf.mxu0
        %v1889 = vadd.f32 0.0, %v1888
        %1890 = vmatmul.bf16.gmra.mxu0 %v1537
        %v1891 = vpop.f32.mrf.mxu0
        %v1892 = vadd.f32 0.0, %v1891
        %v1893 = vpop.f32.mrf.mxu0
        %v1894 = vadd.f32 0.0, %v1893
        %1895 = vmatmul.bf16.gmra.mxu0 %v1540
        %v1896 = vpop.f32.mrf.mxu0
        %v1897 = vadd.f32 0.0, %v1896
        %v1898 = vpop.f32.mrf.mxu0
        %v1899 = vadd.f32 0.0, %v1898
        %1900 = vmatmul.bf16.gmra.mxu0 %v1543
        %v1901 = vpop.f32.mrf.mxu0
        %v1902 = vadd.f32 0.0, %v1901
        %v1903 = vpop.f32.mrf.mxu0
        %v1904 = vadd.f32 0.0, %v1903
        %1905 = vmatmul.bf16.gmra.mxu0 %v1546
        %v1906 = vpop.f32.mrf.mxu0
        %v1907 = vadd.f32 0.0, %v1906
        %v1908 = vpop.f32.mrf.mxu0
        %v1909 = vadd.f32 0.0, %v1908
        %1910 = vmatmul.bf16.gmra.mxu0 %v1549
        %v1911 = vpop.f32.mrf.mxu0
        %v1912 = vadd.f32 0.0, %v1911
        %v1913 = vpop.f32.mrf.mxu0
        %v1914 = vadd.f32 0.0, %v1913
        %1915 = vmatmul.bf16.gmra.mxu0 %v1552
        %v1916 = vpop.f32.mrf.mxu0
        %v1917 = vadd.f32 0.0, %v1916
        %v1918 = vpop.f32.mrf.mxu0
        %v1919 = vadd.f32 0.0, %v1918
        %1920 = vmatmul.bf16.gmra.mxu0 %v1555
        %v1921 = vpop.f32.mrf.mxu0
        %v1922 = vadd.f32 0.0, %v1921
        %v1923 = vpop.f32.mrf.mxu0
        %v1924 = vadd.f32 0.0, %v1923
        %1925 = vdwg.mxu0
        %v1930 = vunpack.c.l.b16 %v375
        %v1931 = vunpack.c.l.b16 %v376
        %v1932 = vunpack.c.l.b16 %v377
        %v1933 = vunpack.c.l.b16 %v378
        %v1934 = vpack.c.b16 %v1931, %v1930
        %v1935 = vpack.c.b16 %v1933, %v1932
        %v1938 = vsel %vm1340, %v674, 0
        %v1940 = vsel %vm1340, %v675, 0
        %v1942 = vsel %vm1340, %v676, 0
        %v1944 = vsel %vm1340, %v677, 0
        %v1946 = vsel %vm1340, %v678, 0
        %v1948 = vsel %vm1340, %v679, 0
        %v1950 = vsel %vm1340, %v680, 0
        %v1952 = vsel %vm1340, %v681, 0
        %v1954 = vsel %vm1340, %v682, 0
        %v1956 = vsel %vm1340, %v683, 0
        %v1958 = vsel %vm1340, %v684, 0
        %v1960 = vsel %vm1340, %v685, 0
        %v1962 = vsel %vm1340, %v686, 0
        %v1964 = vsel %vm1340, %v687, 0
        %v1966 = vsel %vm1340, %v688, 0
        %v1968 = vsel %vm1340, %v689, 0
        %v1970 = vsel %vm1340, %v690, 0
        %v1972 = vsel %vm1340, %v691, 0
        %v1974 = vsel %vm1340, %v692, 0
        %v1976 = vsel %vm1340, %v693, 0
        %v1978 = vsel %vm1340, %v694, 0
        %v1980 = vsel %vm1340, %v695, 0
        %v1982 = vsel %vm1340, %v696, 0
        %v1984 = vsel %vm1340, %v697, 0
        %v1986 = vsel %vm1340, %v698, 0
        %v1988 = vsel %vm1340, %v699, 0
        %v1990 = vsel %vm1340, %v700, 0
        %v1992 = vsel %vm1340, %v701, 0
        %v1994 = vsel %vm1340, %v702, 0
        %v1996 = vsel %vm1340, %v703, 0
        %v1998 = vsel %vm1340, %v704, 0
        %v2000 = vsel %vm1340, %v705, 0
        %v2002 = vsel %vm1340, %v706, 0
        %v2004 = vsel %vm1340, %v707, 0
        %v2006 = vsel %vm1340, %v708, 0
        %v2008 = vsel %vm1340, %v709, 0
        %v2010 = vsel %vm1340, %v710, 0
        %v2012 = vsel %vm1340, %v711, 0
        %v2014 = vsel %vm1340, %v712, 0
        %v2016 = vsel %vm1340, %v713, 0
        %v2018 = vsel %vm1340, %v714, 0
        %v2020 = vsel %vm1340, %v715, 0
        %v2022 = vsel %vm1340, %v716, 0
        %v2024 = vsel %vm1340, %v717, 0
        %v2026 = vsel %vm1340, %v718, 0
        %v2028 = vsel %vm1340, %v719, 0
        %v2030 = vsel %vm1340, %v720, 0
        %v2032 = vsel %vm1340, %v721, 0
        %v2034 = vsel %vm1340, %v722, 0
        %v2036 = vsel %vm1340, %v723, 0
        %v2038 = vsel %vm1340, %v724, 0
        %v2040 = vsel %vm1340, %v725, 0
        %v2042 = vsel %vm1340, %v726, 0
        %v2044 = vsel %vm1340, %v727, 0
        %v2046 = vsel %vm1340, %v728, 0
        %v2048 = vsel %vm1340, %v729, 0
        %v2050 = vsel %vm1340, %v730, 0
        %v2052 = vsel %vm1340, %v731, 0
        %v2054 = vsel %vm1340, %v732, 0
        %v2056 = vsel %vm1340, %v733, 0
        %v2058 = vsel %vm1340, %v734, 0
        %v2060 = vsel %vm1340, %v735, 0
        %v2062 = vsel %vm1340, %v736, 0
        %v2064 = vsel %vm1340, %v737, 0
        %v2066 = vsel %vm1340, %v738, 0
        %v2068 = vsel %vm1340, %v739, 0
        %v2070 = vsel %vm1340, %v740, 0
        %v2072 = vsel %vm1340, %v741, 0
        %v2074 = vsel %vm1340, %v742, 0
        %v2076 = vsel %vm1340, %v743, 0
        %v2078 = vsel %vm1340, %v744, 0
        %v2080 = vsel %vm1340, %v745, 0
        %2082 = vmatpush.bf16.msra.mxu0 0
        %2083 = vmatpush.bf16.msra.mxu0 0
        %2084 = vmatpush.bf16.msra.mxu0 0
        %2085 = vmatpush.bf16.msra.mxu0 0
        %2086 = vmatpush.bf16.msra.mxu0 0
        %2087 = vmatpush.bf16.msra.mxu0 0
        %2088 = vmatpush.bf16.msra.mxu0 %v1935
        %2089 = vmatpush.bf16.msra.mxu0 %v1934
        %2090 = vmatmul.bf16.gmra.mxu0 %v1938
        %v2091 = vpop.f32.mrf.mxu0
        %v2092 = vadd.f32 %v1567, %v2091
        %v2093 = vpop.f32.mrf.mxu0
        %v2094 = vadd.f32 %v1569, %v2093
        %2095 = vmatmul.bf16.gmra.mxu0 %v1940
        %v2096 = vpop.f32.mrf.mxu0
        %v2097 = vadd.f32 %v1572, %v2096
        %v2098 = vpop.f32.mrf.mxu0
        %v2099 = vadd.f32 %v1574, %v2098
        %2100 = vmatmul.bf16.gmra.mxu0 %v1942
        %v2101 = vpop.f32.mrf.mxu0
        %v2102 = vadd.f32 %v1577, %v2101
        %v2103 = vpop.f32.mrf.mxu0
        %v2104 = vadd.f32 %v1579, %v2103
        %2105 = vmatmul.bf16.gmra.mxu0 %v1944
        %v2106 = vpop.f32.mrf.mxu0
        %v2107 = vadd.f32 %v1582, %v2106
        %v2108 = vpop.f32.mrf.mxu0
        %v2109 = vadd.f32 %v1584, %v2108
        %2110 = vmatmul.bf16.gmra.mxu0 %v1946
        %v2111 = vpop.f32.mrf.mxu0
        %v2112 = vadd.f32 %v1587, %v2111
        %v2113 = vpop.f32.mrf.mxu0
        %v2114 = vadd.f32 %v1589, %v2113
        %2115 = vmatmul.bf16.gmra.mxu0 %v1948
        %v2116 = vpop.f32.mrf.mxu0
        %v2117 = vadd.f32 %v1592, %v2116
        %v2118 = vpop.f32.mrf.mxu0
        %v2119 = vadd.f32 %v1594, %v2118
        %2120 = vmatmul.bf16.gmra.mxu0 %v1950
        %v2121 = vpop.f32.mrf.mxu0
        %v2122 = vadd.f32 %v1597, %v2121
        %v2123 = vpop.f32.mrf.mxu0
        %v2124 = vadd.f32 %v1599, %v2123
        %2125 = vmatmul.bf16.gmra.mxu0 %v1952
        %v2126 = vpop.f32.mrf.mxu0
        %v2127 = vadd.f32 %v1602, %v2126
        %v2128 = vpop.f32.mrf.mxu0
        %v2129 = vadd.f32 %v1604, %v2128
        %2130 = vmatmul.bf16.gmra.mxu0 %v1954
        %v2131 = vpop.f32.mrf.mxu0
        %v2132 = vadd.f32 %v1607, %v2131
        %v2133 = vpop.f32.mrf.mxu0
        %v2134 = vadd.f32 %v1609, %v2133
        %2135 = vmatmul.bf16.gmra.mxu0 %v1956
        %v2136 = vpop.f32.mrf.mxu0
        %v2137 = vadd.f32 %v1612, %v2136
        %v2138 = vpop.f32.mrf.mxu0
        %v2139 = vadd.f32 %v1614, %v2138
        %2140 = vmatmul.bf16.gmra.mxu0 %v1958
        %v2141 = vpop.f32.mrf.mxu0
        %v2142 = vadd.f32 %v1617, %v2141
        %v2143 = vpop.f32.mrf.mxu0
        %v2144 = vadd.f32 %v1619, %v2143
        %2145 = vmatmul.bf16.gmra.mxu0 %v1960
        %v2146 = vpop.f32.mrf.mxu0
        %v2147 = vadd.f32 %v1622, %v2146
        %v2148 = vpop.f32.mrf.mxu0
        %v2149 = vadd.f32 %v1624, %v2148
        %2150 = vmatmul.bf16.gmra.mxu0 %v1962
        %v2151 = vpop.f32.mrf.mxu0
        %v2152 = vadd.f32 %v1627, %v2151
        %v2153 = vpop.f32.mrf.mxu0
        %v2154 = vadd.f32 %v1629, %v2153
        %2155 = vmatmul.bf16.gmra.mxu0 %v1964
        %v2156 = vpop.f32.mrf.mxu0
        %v2157 = vadd.f32 %v1632, %v2156
        %v2158 = vpop.f32.mrf.mxu0
        %v2159 = vadd.f32 %v1634, %v2158
        %2160 = vmatmul.bf16.gmra.mxu0 %v1966
        %v2161 = vpop.f32.mrf.mxu0
        %v2162 = vadd.f32 %v1637, %v2161
        %v2163 = vpop.f32.mrf.mxu0
        %v2164 = vadd.f32 %v1639, %v2163
        %2165 = vmatmul.bf16.gmra.mxu0 %v1968
        %v2166 = vpop.f32.mrf.mxu0
        %v2167 = vadd.f32 %v1642, %v2166
        %v2168 = vpop.f32.mrf.mxu0
        %v2169 = vadd.f32 %v1644, %v2168
        %2170 = vmatmul.bf16.gmra.mxu0 %v1970
        %v2171 = vpop.f32.mrf.mxu0
        %v2172 = vadd.f32 %v1647, %v2171
        %v2173 = vpop.f32.mrf.mxu0
        %v2174 = vadd.f32 %v1649, %v2173
        %2175 = vmatmul.bf16.gmra.mxu0 %v1972
        %v2176 = vpop.f32.mrf.mxu0
        %v2177 = vadd.f32 %v1652, %v2176
        %v2178 = vpop.f32.mrf.mxu0
        %v2179 = vadd.f32 %v1654, %v2178
        %2180 = vmatmul.bf16.gmra.mxu0 %v1974
        %v2181 = vpop.f32.mrf.mxu0
        %v2182 = vadd.f32 %v1657, %v2181
        %v2183 = vpop.f32.mrf.mxu0
        %v2184 = vadd.f32 %v1659, %v2183
        %2185 = vmatmul.bf16.gmra.mxu0 %v1976
        %v2186 = vpop.f32.mrf.mxu0
        %v2187 = vadd.f32 %v1662, %v2186
        %v2188 = vpop.f32.mrf.mxu0
        %v2189 = vadd.f32 %v1664, %v2188
        %2190 = vmatmul.bf16.gmra.mxu0 %v1978
        %v2191 = vpop.f32.mrf.mxu0
        %v2192 = vadd.f32 %v1667, %v2191
        %v2193 = vpop.f32.mrf.mxu0
        %v2194 = vadd.f32 %v1669, %v2193
        %2195 = vmatmul.bf16.gmra.mxu0 %v1980
        %v2196 = vpop.f32.mrf.mxu0
        %v2197 = vadd.f32 %v1672, %v2196
        %v2198 = vpop.f32.mrf.mxu0
        %v2199 = vadd.f32 %v1674, %v2198
        %2200 = vmatmul.bf16.gmra.mxu0 %v1982
        %v2201 = vpop.f32.mrf.mxu0
        %v2202 = vadd.f32 %v1677, %v2201
        %v2203 = vpop.f32.mrf.mxu0
        %v2204 = vadd.f32 %v1679, %v2203
        %2205 = vmatmul.bf16.gmra.mxu0 %v1984
        %v2206 = vpop.f32.mrf.mxu0
        %v2207 = vadd.f32 %v1682, %v2206
        %v2208 = vpop.f32.mrf.mxu0
        %v2209 = vadd.f32 %v1684, %v2208
        %2210 = vmatmul.bf16.gmra.mxu0 %v1986
        %v2211 = vpop.f32.mrf.mxu0
        %v2212 = vadd.f32 %v1687, %v2211
        %v2213 = vpop.f32.mrf.mxu0
        %v2214 = vadd.f32 %v1689, %v2213
        %2215 = vmatmul.bf16.gmra.mxu0 %v1988
        %v2216 = vpop.f32.mrf.mxu0
        %v2217 = vadd.f32 %v1692, %v2216
        %v2218 = vpop.f32.mrf.mxu0
        %v2219 = vadd.f32 %v1694, %v2218
        %2220 = vmatmul.bf16.gmra.mxu0 %v1990
        %v2221 = vpop.f32.mrf.mxu0
        %v2222 = vadd.f32 %v1697, %v2221
        %v2223 = vpop.f32.mrf.mxu0
        %v2224 = vadd.f32 %v1699, %v2223
        %2225 = vmatmul.bf16.gmra.mxu0 %v1992
        %v2226 = vpop.f32.mrf.mxu0
        %v2227 = vadd.f32 %v1702, %v2226
        %v2228 = vpop.f32.mrf.mxu0
        %v2229 = vadd.f32 %v1704, %v2228
        %2230 = vmatmul.bf16.gmra.mxu0 %v1994
        %v2231 = vpop.f32.mrf.mxu0
        %v2232 = vadd.f32 %v1707, %v2231
        %v2233 = vpop.f32.mrf.mxu0
        %v2234 = vadd.f32 %v1709, %v2233
        %2235 = vmatmul.bf16.gmra.mxu0 %v1996
        %v2236 = vpop.f32.mrf.mxu0
        %v2237 = vadd.f32 %v1712, %v2236
        %v2238 = vpop.f32.mrf.mxu0
        %v2239 = vadd.f32 %v1714, %v2238
        %2240 = vmatmul.bf16.gmra.mxu0 %v1998
        %v2241 = vpop.f32.mrf.mxu0
        %v2242 = vadd.f32 %v1717, %v2241
        %v2243 = vpop.f32.mrf.mxu0
        %v2244 = vadd.f32 %v1719, %v2243
        %2245 = vmatmul.bf16.gmra.mxu0 %v2000
        %v2246 = vpop.f32.mrf.mxu0
        %v2247 = vadd.f32 %v1722, %v2246
        %v2248 = vpop.f32.mrf.mxu0
        %v2249 = vadd.f32 %v1724, %v2248
        %2250 = vmatmul.bf16.gmra.mxu0 %v2002
        %v2251 = vpop.f32.mrf.mxu0
        %v2252 = vadd.f32 %v1727, %v2251
        %v2253 = vpop.f32.mrf.mxu0
        %v2254 = vadd.f32 %v1729, %v2253
        %2255 = vmatmul.bf16.gmra.mxu0 %v2004
        %v2256 = vpop.f32.mrf.mxu0
        %v2257 = vadd.f32 %v1732, %v2256
        %v2258 = vpop.f32.mrf.mxu0
        %v2259 = vadd.f32 %v1734, %v2258
        %2260 = vmatmul.bf16.gmra.mxu0 %v2006
        %v2261 = vpop.f32.mrf.mxu0
        %v2262 = vadd.f32 %v1737, %v2261
        %v2263 = vpop.f32.mrf.mxu0
        %v2264 = vadd.f32 %v1739, %v2263
        %2265 = vmatmul.bf16.gmra.mxu0 %v2008
        %v2266 = vpop.f32.mrf.mxu0
        %v2267 = vadd.f32 %v1742, %v2266
        %v2268 = vpop.f32.mrf.mxu0
        %v2269 = vadd.f32 %v1744, %v2268
        %2270 = vmatmul.bf16.gmra.mxu0 %v2010
        %v2271 = vpop.f32.mrf.mxu0
        %v2272 = vadd.f32 %v1747, %v2271
        %v2273 = vpop.f32.mrf.mxu0
        %v2274 = vadd.f32 %v1749, %v2273
        %2275 = vmatmul.bf16.gmra.mxu0 %v2012
        %v2276 = vpop.f32.mrf.mxu0
        %v2277 = vadd.f32 %v1752, %v2276
        %v2278 = vpop.f32.mrf.mxu0
        %v2279 = vadd.f32 %v1754, %v2278
        %2280 = vmatmul.bf16.gmra.mxu0 %v2014
        %v2281 = vpop.f32.mrf.mxu0
        %v2282 = vadd.f32 %v1757, %v2281
        %v2283 = vpop.f32.mrf.mxu0
        %v2284 = vadd.f32 %v1759, %v2283
        %2285 = vmatmul.bf16.gmra.mxu0 %v2016
        %v2286 = vpop.f32.mrf.mxu0
        %v2287 = vadd.f32 %v1762, %v2286
        %v2288 = vpop.f32.mrf.mxu0
        %v2289 = vadd.f32 %v1764, %v2288
        %2290 = vmatmul.bf16.gmra.mxu0 %v2018
        %v2291 = vpop.f32.mrf.mxu0
        %v2292 = vadd.f32 %v1767, %v2291
        %v2293 = vpop.f32.mrf.mxu0
        %v2294 = vadd.f32 %v1769, %v2293
        %2295 = vmatmul.bf16.gmra.mxu0 %v2020
        %v2296 = vpop.f32.mrf.mxu0
        %v2297 = vadd.f32 %v1772, %v2296
        %v2298 = vpop.f32.mrf.mxu0
        %v2299 = vadd.f32 %v1774, %v2298
        %2300 = vmatmul.bf16.gmra.mxu0 %v2022
        %v2301 = vpop.f32.mrf.mxu0
        %v2302 = vadd.f32 %v1777, %v2301
        %v2303 = vpop.f32.mrf.mxu0
        %v2304 = vadd.f32 %v1779, %v2303
        %2305 = vmatmul.bf16.gmra.mxu0 %v2024
        %v2306 = vpop.f32.mrf.mxu0
        %v2307 = vadd.f32 %v1782, %v2306
        %v2308 = vpop.f32.mrf.mxu0
        %v2309 = vadd.f32 %v1784, %v2308
        %2310 = vmatmul.bf16.gmra.mxu0 %v2026
        %v2311 = vpop.f32.mrf.mxu0
        %v2312 = vadd.f32 %v1787, %v2311
        %v2313 = vpop.f32.mrf.mxu0
        %v2314 = vadd.f32 %v1789, %v2313
        %2315 = vmatmul.bf16.gmra.mxu0 %v2028
        %v2316 = vpop.f32.mrf.mxu0
        %v2317 = vadd.f32 %v1792, %v2316
        %v2318 = vpop.f32.mrf.mxu0
        %v2319 = vadd.f32 %v1794, %v2318
        %2320 = vmatmul.bf16.gmra.mxu0 %v2030
        %v2321 = vpop.f32.mrf.mxu0
        %v2322 = vadd.f32 %v1797, %v2321
        %v2323 = vpop.f32.mrf.mxu0
        %v2324 = vadd.f32 %v1799, %v2323
        %2325 = vmatmul.bf16.gmra.mxu0 %v2032
        %v2326 = vpop.f32.mrf.mxu0
        %v2327 = vadd.f32 %v1802, %v2326
        %v2328 = vpop.f32.mrf.mxu0
        %v2329 = vadd.f32 %v1804, %v2328
        %2330 = vmatmul.bf16.gmra.mxu0 %v2034
        %v2331 = vpop.f32.mrf.mxu0
        %v2332 = vadd.f32 %v1807, %v2331
        %v2333 = vpop.f32.mrf.mxu0
        %v2334 = vadd.f32 %v1809, %v2333
        %2335 = vmatmul.bf16.gmra.mxu0 %v2036
        %v2336 = vpop.f32.mrf.mxu0
        %v2337 = vadd.f32 %v1812, %v2336
        %v2338 = vpop.f32.mrf.mxu0
        %v2339 = vadd.f32 %v1814, %v2338
        %2340 = vmatmul.bf16.gmra.mxu0 %v2038
        %v2341 = vpop.f32.mrf.mxu0
        %v2342 = vadd.f32 %v1817, %v2341
        %v2343 = vpop.f32.mrf.mxu0
        %v2344 = vadd.f32 %v1819, %v2343
        %2345 = vmatmul.bf16.gmra.mxu0 %v2040
        %v2346 = vpop.f32.mrf.mxu0
        %v2347 = vadd.f32 %v1822, %v2346
        %v2348 = vpop.f32.mrf.mxu0
        %v2349 = vadd.f32 %v1824, %v2348
        %2350 = vmatmul.bf16.gmra.mxu0 %v2042
        %v2351 = vpop.f32.mrf.mxu0
        %v2352 = vadd.f32 %v1827, %v2351
        %v2353 = vpop.f32.mrf.mxu0
        %v2354 = vadd.f32 %v1829, %v2353
        %2355 = vmatmul.bf16.gmra.mxu0 %v2044
        %v2356 = vpop.f32.mrf.mxu0
        %v2357 = vadd.f32 %v1832, %v2356
        %v2358 = vpop.f32.mrf.mxu0
        %v2359 = vadd.f32 %v1834, %v2358
        %2360 = vmatmul.bf16.gmra.mxu0 %v2046
        %v2361 = vpop.f32.mrf.mxu0
        %v2362 = vadd.f32 %v1837, %v2361
        %v2363 = vpop.f32.mrf.mxu0
        %v2364 = vadd.f32 %v1839, %v2363
        %2365 = vmatmul.bf16.gmra.mxu0 %v2048
        %v2366 = vpop.f32.mrf.mxu0
        %v2367 = vadd.f32 %v1842, %v2366
        %v2368 = vpop.f32.mrf.mxu0
        %v2369 = vadd.f32 %v1844, %v2368
        %2370 = vmatmul.bf16.gmra.mxu0 %v2050
        %v2371 = vpop.f32.mrf.mxu0
        %v2372 = vadd.f32 %v1847, %v2371
        %v2373 = vpop.f32.mrf.mxu0
        %v2374 = vadd.f32 %v1849, %v2373
        %2375 = vmatmul.bf16.gmra.mxu0 %v2052
        %v2376 = vpop.f32.mrf.mxu0
        %v2377 = vadd.f32 %v1852, %v2376
        %v2378 = vpop.f32.mrf.mxu0
        %v2379 = vadd.f32 %v1854, %v2378
        %2380 = vmatmul.bf16.gmra.mxu0 %v2054
        %v2381 = vpop.f32.mrf.mxu0
        %v2382 = vadd.f32 %v1857, %v2381
        %v2383 = vpop.f32.mrf.mxu0
        %v2384 = vadd.f32 %v1859, %v2383
        %2385 = vmatmul.bf16.gmra.mxu0 %v2056
        %v2386 = vpop.f32.mrf.mxu0
        %v2387 = vadd.f32 %v1862, %v2386
        %v2388 = vpop.f32.mrf.mxu0
        %v2389 = vadd.f32 %v1864, %v2388
        %2390 = vmatmul.bf16.gmra.mxu0 %v2058
        %v2391 = vpop.f32.mrf.mxu0
        %v2392 = vadd.f32 %v1867, %v2391
        %v2393 = vpop.f32.mrf.mxu0
        %v2394 = vadd.f32 %v1869, %v2393
        %2395 = vmatmul.bf16.gmra.mxu0 %v2060
        %v2396 = vpop.f32.mrf.mxu0
        %v2397 = vadd.f32 %v1872, %v2396
        %v2398 = vpop.f32.mrf.mxu0
        %v2399 = vadd.f32 %v1874, %v2398
        %2400 = vmatmul.bf16.gmra.mxu0 %v2062
        %v2401 = vpop.f32.mrf.mxu0
        %v2402 = vadd.f32 %v1877, %v2401
        %v2403 = vpop.f32.mrf.mxu0
        %v2404 = vadd.f32 %v1879, %v2403
        %2405 = vmatmul.bf16.gmra.mxu0 %v2064
        %v2406 = vpop.f32.mrf.mxu0
        %v2407 = vadd.f32 %v1882, %v2406
        %v2408 = vpop.f32.mrf.mxu0
        %v2409 = vadd.f32 %v1884, %v2408
        %2410 = vmatmul.bf16.gmra.mxu0 %v2066
        %v2411 = vpop.f32.mrf.mxu0
        %v2412 = vadd.f32 %v1887, %v2411
        %v2413 = vpop.f32.mrf.mxu0
        %v2414 = vadd.f32 %v1889, %v2413
        %2415 = vmatmul.bf16.gmra.mxu0 %v2068
        %v2416 = vpop.f32.mrf.mxu0
        %v2417 = vadd.f32 %v1892, %v2416
        %v2418 = vpop.f32.mrf.mxu0
        %v2419 = vadd.f32 %v1894, %v2418
        %2420 = vmatmul.bf16.gmra.mxu0 %v2070
        %v2421 = vpop.f32.mrf.mxu0
        %v2422 = vadd.f32 %v1897, %v2421
        %v2423 = vpop.f32.mrf.mxu0
        %v2424 = vadd.f32 %v1899, %v2423
        %2425 = vmatmul.bf16.gmra.mxu0 %v2072
        %v2426 = vpop.f32.mrf.mxu0
        %v2427 = vadd.f32 %v1902, %v2426
        %v2428 = vpop.f32.mrf.mxu0
        %v2429 = vadd.f32 %v1904, %v2428
        %2430 = vmatmul.bf16.gmra.mxu0 %v2074
        %v2431 = vpop.f32.mrf.mxu0
        %v2432 = vadd.f32 %v1907, %v2431
        %v2433 = vpop.f32.mrf.mxu0
        %v2434 = vadd.f32 %v1909, %v2433
        %2435 = vmatmul.bf16.gmra.mxu0 %v2076
        %v2436 = vpop.f32.mrf.mxu0
        %v2437 = vadd.f32 %v1912, %v2436
        %v2438 = vpop.f32.mrf.mxu0
        %v2439 = vadd.f32 %v1914, %v2438
        %2440 = vmatmul.bf16.gmra.mxu0 %v2078
        %v2441 = vpop.f32.mrf.mxu0
        %v2442 = vadd.f32 %v1917, %v2441
        %v2443 = vpop.f32.mrf.mxu0
        %v2444 = vadd.f32 %v1919, %v2443
        %2445 = vmatmul.bf16.gmra.mxu0 %v2080
        %v2446 = vpop.f32.mrf.mxu0
        %v2447 = vadd.f32 %v1922, %v2446
        %v2448 = vpop.f32.mrf.mxu0
        %v2449 = vadd.f32 %v1924, %v2448
        %2450 = vdwg.mxu0
        %s2451 = scalar_lea.vmem %s219, 32
        %v2452 = vld [vmem:[%s2451] sm:$0xf]
        %v2453 = vld [vmem:[%s2451 + $0x4] sm:$0xf]
        %v2454 = vld [vmem:[%s2451 + $0x8] sm:$0xf]
        %v2455 = vld [vmem:[%s2451 + $0xc] sm:$0xf]
        %vm2456 = vcmask 1046528
        %v2457 = vrot.slane %v674, 1
        %v2458 = vrot.slane %v675, 1
        %v2459 = vsel %vm2456, %v2457, %v2458
        %v2460 = vrot.slane %v676, 1
        %v2461 = vsel %vm2456, %v2458, %v2460
        %v2462 = vrot.slane %v677, 1
        %v2463 = vsel %vm2456, %v2460, %v2462
        %v2464 = vrot.slane %v678, 1
        %v2465 = vsel %vm2456, %v2462, %v2464
        %v2466 = vrot.slane %v679, 1
        %v2467 = vsel %vm2456, %v2464, %v2466
        %v2468 = vrot.slane %v680, 1
        %v2469 = vsel %vm2456, %v2466, %v2468
        %v2470 = vrot.slane %v681, 1
        %v2471 = vsel %vm2456, %v2468, %v2470
        %v2472 = vrot.slane %v682, 1
        %v2473 = vsel %vm2456, %v2470, %v2472
        %v2474 = vrot.slane %v683, 1
        %v2475 = vsel %vm2456, %v2472, %v2474
        %v2476 = vrot.slane %v684, 1
        %v2477 = vsel %vm2456, %v2474, %v2476
        %v2478 = vrot.slane %v685, 1
        %v2479 = vsel %vm2456, %v2476, %v2478
        %v2480 = vrot.slane %v686, 1
        %v2481 = vsel %vm2456, %v2478, %v2480
        %v2482 = vrot.slane %v687, 1
        %v2483 = vsel %vm2456, %v2480, %v2482
        %v2484 = vrot.slane %v688, 1
        %v2485 = vsel %vm2456, %v2482, %v2484
        %v2486 = vrot.slane %v689, 1
        %v2487 = vsel %vm2456, %v2484, %v2486
        %v2488 = vrot.slane %v690, 1
        %v2489 = vsel %vm2456, %v2486, %v2488
        %v2490 = vrot.slane %v691, 1
        %v2491 = vsel %vm2456, %v2488, %v2490
        %v2492 = vrot.slane %v692, 1
        %v2493 = vsel %vm2456, %v2490, %v2492
        %v2494 = vrot.slane %v693, 1
        %v2495 = vsel %vm2456, %v2492, %v2494
        %v2496 = vrot.slane %v694, 1
        %v2497 = vsel %vm2456, %v2494, %v2496
        %v2498 = vrot.slane %v695, 1
        %v2499 = vsel %vm2456, %v2496, %v2498
        %v2500 = vrot.slane %v696, 1
        %v2501 = vsel %vm2456, %v2498, %v2500
        %v2502 = vrot.slane %v697, 1
        %v2503 = vsel %vm2456, %v2500, %v2502
        %v2504 = vrot.slane %v698, 1
        %v2505 = vsel %vm2456, %v2502, %v2504
        %v2506 = vrot.slane %v699, 1
        %v2507 = vsel %vm2456, %v2504, %v2506
        %v2508 = vrot.slane %v700, 1
        %v2509 = vsel %vm2456, %v2506, %v2508
        %v2510 = vrot.slane %v701, 1
        %v2511 = vsel %vm2456, %v2508, %v2510
        %v2512 = vrot.slane %v702, 1
        %v2513 = vsel %vm2456, %v2510, %v2512
        %v2514 = vrot.slane %v703, 1
        %v2515 = vsel %vm2456, %v2512, %v2514
        %v2516 = vrot.slane %v704, 1
        %v2517 = vsel %vm2456, %v2514, %v2516
        %v2518 = vrot.slane %v705, 1
        %v2519 = vsel %vm2456, %v2516, %v2518
        %v2520 = vrot.slane %v706, 1
        %v2521 = vsel %vm2456, %v2518, %v2520
        %v2522 = vrot.slane %v707, 1
        %v2523 = vsel %vm2456, %v2520, %v2522
        %v2524 = vrot.slane %v708, 1
        %v2525 = vsel %vm2456, %v2522, %v2524
        %v2526 = vrot.slane %v709, 1
        %v2527 = vsel %vm2456, %v2524, %v2526
        %v2528 = vrot.slane %v710, 1
        %v2529 = vsel %vm2456, %v2526, %v2528
        %v2530 = vrot.slane %v711, 1
        %v2531 = vsel %vm2456, %v2528, %v2530
        %v2532 = vrot.slane %v712, 1
        %v2533 = vsel %vm2456, %v2530, %v2532
        %v2534 = vrot.slane %v713, 1
        %v2535 = vsel %vm2456, %v2532, %v2534
        %v2536 = vrot.slane %v714, 1
        %v2537 = vsel %vm2456, %v2534, %v2536
        %v2538 = vrot.slane %v715, 1
        %v2539 = vsel %vm2456, %v2536, %v2538
        %v2540 = vrot.slane %v716, 1
        %v2541 = vsel %vm2456, %v2538, %v2540
        %v2542 = vrot.slane %v717, 1
        %v2543 = vsel %vm2456, %v2540, %v2542
        %v2544 = vrot.slane %v718, 1
        %v2545 = vsel %vm2456, %v2542, %v2544
        %v2546 = vrot.slane %v719, 1
        %v2547 = vsel %vm2456, %v2544, %v2546
        %v2548 = vrot.slane %v720, 1
        %v2549 = vsel %vm2456, %v2546, %v2548
        %v2550 = vrot.slane %v721, 1
        %v2551 = vsel %vm2456, %v2548, %v2550
        %v2552 = vrot.slane %v722, 1
        %v2553 = vsel %vm2456, %v2550, %v2552
        %v2554 = vrot.slane %v723, 1
        %v2555 = vsel %vm2456, %v2552, %v2554
        %v2556 = vrot.slane %v724, 1
        %v2557 = vsel %vm2456, %v2554, %v2556
        %v2558 = vrot.slane %v725, 1
        %v2559 = vsel %vm2456, %v2556, %v2558
        %v2560 = vrot.slane %v726, 1
        %v2561 = vsel %vm2456, %v2558, %v2560
        %v2562 = vrot.slane %v727, 1
        %v2563 = vsel %vm2456, %v2560, %v2562
        %v2564 = vrot.slane %v728, 1
        %v2565 = vsel %vm2456, %v2562, %v2564
        %v2566 = vrot.slane %v729, 1
        %v2567 = vsel %vm2456, %v2564, %v2566
        %v2568 = vrot.slane %v730, 1
        %v2569 = vsel %vm2456, %v2566, %v2568
        %v2570 = vrot.slane %v731, 1
        %v2571 = vsel %vm2456, %v2568, %v2570
        %v2572 = vrot.slane %v732, 1
        %v2573 = vsel %vm2456, %v2570, %v2572
        %v2574 = vrot.slane %v733, 1
        %v2575 = vsel %vm2456, %v2572, %v2574
        %v2576 = vrot.slane %v734, 1
        %v2577 = vsel %vm2456, %v2574, %v2576
        %v2578 = vrot.slane %v735, 1
        %v2579 = vsel %vm2456, %v2576, %v2578
        %v2580 = vrot.slane %v736, 1
        %v2581 = vsel %vm2456, %v2578, %v2580
        %v2582 = vrot.slane %v737, 1
        %v2583 = vsel %vm2456, %v2580, %v2582
        %v2584 = vrot.slane %v738, 1
        %v2585 = vsel %vm2456, %v2582, %v2584
        %v2586 = vrot.slane %v739, 1
        %v2587 = vsel %vm2456, %v2584, %v2586
        %v2588 = vrot.slane %v740, 1
        %v2589 = vsel %vm2456, %v2586, %v2588
        %v2590 = vrot.slane %v741, 1
        %v2591 = vsel %vm2456, %v2588, %v2590
        %v2592 = vrot.slane %v742, 1
        %v2593 = vsel %vm2456, %v2590, %v2592
        %v2594 = vrot.slane %v743, 1
        %v2595 = vsel %vm2456, %v2592, %v2594
        %v2596 = vrot.slane %v744, 1
        %v2597 = vsel %vm2456, %v2594, %v2596
        %v2598 = vrot.slane %v745, 1
        %v2599 = vsel %vm2456, %v2596, %v2598
        %v2600 = vrot.slane %v746, 1
        %v2601 = vsel %vm2456, %v2598, %v2600
        %v2606 = vunpack.c.l.b16 %v2452
        %v2607 = vunpack.c.l.b16 %v2453
        %v2608 = vunpack.c.l.b16 %v2454
        %v2609 = vunpack.c.l.b16 %v2455
        %v2610 = vpack.c.b16 %v2607, %v2606
        %v2611 = vpack.c.b16 %v2609, %v2608
        %v2615 = vsel %vm1340, %v2459, 0
        %v2618 = vsel %vm1340, %v2461, 0
        %v2621 = vsel %vm1340, %v2463, 0
        %v2624 = vsel %vm1340, %v2465, 0
        %v2627 = vsel %vm1340, %v2467, 0
        %v2630 = vsel %vm1340, %v2469, 0
        %v2633 = vsel %vm1340, %v2471, 0
        %v2636 = vsel %vm1340, %v2473, 0
        %v2639 = vsel %vm1340, %v2475, 0
        %v2642 = vsel %vm1340, %v2477, 0
        %v2645 = vsel %vm1340, %v2479, 0
        %v2648 = vsel %vm1340, %v2481, 0
        %v2651 = vsel %vm1340, %v2483, 0
        %v2654 = vsel %vm1340, %v2485, 0
        %v2657 = vsel %vm1340, %v2487, 0
        %v2660 = vsel %vm1340, %v2489, 0
        %v2663 = vsel %vm1340, %v2491, 0
        %v2666 = vsel %vm1340, %v2493, 0
        %v2669 = vsel %vm1340, %v2495, 0
        %v2672 = vsel %vm1340, %v2497, 0
        %v2675 = vsel %vm1340, %v2499, 0
        %v2678 = vsel %vm1340, %v2501, 0
        %v2681 = vsel %vm1340, %v2503, 0
        %v2684 = vsel %vm1340, %v2505, 0
        %v2687 = vsel %vm1340, %v2507, 0
        %v2690 = vsel %vm1340, %v2509, 0
        %v2693 = vsel %vm1340, %v2511, 0
        %v2696 = vsel %vm1340, %v2513, 0
        %v2699 = vsel %vm1340, %v2515, 0
        %v2702 = vsel %vm1340, %v2517, 0
        %v2705 = vsel %vm1340, %v2519, 0
        %v2708 = vsel %vm1340, %v2521, 0
        %v2711 = vsel %vm1340, %v2523, 0
        %v2714 = vsel %vm1340, %v2525, 0
        %v2717 = vsel %vm1340, %v2527, 0
        %v2720 = vsel %vm1340, %v2529, 0
        %v2723 = vsel %vm1340, %v2531, 0
        %v2726 = vsel %vm1340, %v2533, 0
        %v2729 = vsel %vm1340, %v2535, 0
        %v2732 = vsel %vm1340, %v2537, 0
        %v2735 = vsel %vm1340, %v2539, 0
        %v2738 = vsel %vm1340, %v2541, 0
        %v2741 = vsel %vm1340, %v2543, 0
        %v2744 = vsel %vm1340, %v2545, 0
        %v2747 = vsel %vm1340, %v2547, 0
        %v2750 = vsel %vm1340, %v2549, 0
        %v2753 = vsel %vm1340, %v2551, 0
        %v2756 = vsel %vm1340, %v2553, 0
        %v2759 = vsel %vm1340, %v2555, 0
        %v2762 = vsel %vm1340, %v2557, 0
        %v2765 = vsel %vm1340, %v2559, 0
        %v2768 = vsel %vm1340, %v2561, 0
        %v2771 = vsel %vm1340, %v2563, 0
        %v2774 = vsel %vm1340, %v2565, 0
        %v2777 = vsel %vm1340, %v2567, 0
        %v2780 = vsel %vm1340, %v2569, 0
        %v2783 = vsel %vm1340, %v2571, 0
        %v2786 = vsel %vm1340, %v2573, 0
        %v2789 = vsel %vm1340, %v2575, 0
        %v2792 = vsel %vm1340, %v2577, 0
        %v2795 = vsel %vm1340, %v2579, 0
        %v2798 = vsel %vm1340, %v2581, 0
        %v2801 = vsel %vm1340, %v2583, 0
        %v2804 = vsel %vm1340, %v2585, 0
        %v2807 = vsel %vm1340, %v2587, 0
        %v2810 = vsel %vm1340, %v2589, 0
        %v2813 = vsel %vm1340, %v2591, 0
        %v2816 = vsel %vm1340, %v2593, 0
        %v2819 = vsel %vm1340, %v2595, 0
        %v2822 = vsel %vm1340, %v2597, 0
        %v2825 = vsel %vm1340, %v2599, 0
        %v2828 = vsel %vm1340, %v2601, 0
        %2830 = vmatpush.bf16.msra.mxu0 0
        %2831 = vmatpush.bf16.msra.mxu0 0
        %2832 = vmatpush.bf16.msra.mxu0 0
        %2833 = vmatpush.bf16.msra.mxu0 0
        %2834 = vmatpush.bf16.msra.mxu0 0
        %2835 = vmatpush.bf16.msra.mxu0 0
        %2836 = vmatpush.bf16.msra.mxu0 %v2611
        %2837 = vmatpush.bf16.msra.mxu0 %v2610
        %2838 = vmatmul.bf16.gmra.mxu0 %v2615
        %v2839 = vpop.f32.mrf.mxu0
        %v2840 = vadd.f32 0.0, %v2839
        %v2841 = vpop.f32.mrf.mxu0
        %v2842 = vadd.f32 0.0, %v2841
        %2843 = vmatmul.bf16.gmra.mxu0 %v2618
        %v2844 = vpop.f32.mrf.mxu0
        %v2845 = vadd.f32 0.0, %v2844
        %v2846 = vpop.f32.mrf.mxu0
        %v2847 = vadd.f32 0.0, %v2846
        %2848 = vmatmul.bf16.gmra.mxu0 %v2621
        %v2849 = vpop.f32.mrf.mxu0
        %v2850 = vadd.f32 0.0, %v2849
        %v2851 = vpop.f32.mrf.mxu0
        %v2852 = vadd.f32 0.0, %v2851
        %2853 = vmatmul.bf16.gmra.mxu0 %v2624
        %v2854 = vpop.f32.mrf.mxu0
        %v2855 = vadd.f32 0.0, %v2854
        %v2856 = vpop.f32.mrf.mxu0
        %v2857 = vadd.f32 0.0, %v2856
        %2858 = vmatmul.bf16.gmra.mxu0 %v2627
        %v2859 = vpop.f32.mrf.mxu0
        %v2860 = vadd.f32 0.0, %v2859
        %v2861 = vpop.f32.mrf.mxu0
        %v2862 = vadd.f32 0.0, %v2861
        %2863 = vmatmul.bf16.gmra.mxu0 %v2630
        %v2864 = vpop.f32.mrf.mxu0
        %v2865 = vadd.f32 0.0, %v2864
        %v2866 = vpop.f32.mrf.mxu0
        %v2867 = vadd.f32 0.0, %v2866
        %2868 = vmatmul.bf16.gmra.mxu0 %v2633
        %v2869 = vpop.f32.mrf.mxu0
        %v2870 = vadd.f32 0.0, %v2869
        %v2871 = vpop.f32.mrf.mxu0
        %v2872 = vadd.f32 0.0, %v2871
        %2873 = vmatmul.bf16.gmra.mxu0 %v2636
        %v2874 = vpop.f32.mrf.mxu0
        %v2875 = vadd.f32 0.0, %v2874
        %v2876 = vpop.f32.mrf.mxu0
        %v2877 = vadd.f32 0.0, %v2876
        %2878 = vmatmul.bf16.gmra.mxu0 %v2639
        %v2879 = vpop.f32.mrf.mxu0
        %v2880 = vadd.f32 0.0, %v2879
        %v2881 = vpop.f32.mrf.mxu0
        %v2882 = vadd.f32 0.0, %v2881
        %2883 = vmatmul.bf16.gmra.mxu0 %v2642
        %v2884 = vpop.f32.mrf.mxu0
        %v2885 = vadd.f32 0.0, %v2884
        %v2886 = vpop.f32.mrf.mxu0
        %v2887 = vadd.f32 0.0, %v2886
        %2888 = vmatmul.bf16.gmra.mxu0 %v2645
        %v2889 = vpop.f32.mrf.mxu0
        %v2890 = vadd.f32 0.0, %v2889
        %v2891 = vpop.f32.mrf.mxu0
        %v2892 = vadd.f32 0.0, %v2891
        %2893 = vmatmul.bf16.gmra.mxu0 %v2648
        %v2894 = vpop.f32.mrf.mxu0
        %v2895 = vadd.f32 0.0, %v2894
        %v2896 = vpop.f32.mrf.mxu0
        %v2897 = vadd.f32 0.0, %v2896
        %2898 = vmatmul.bf16.gmra.mxu0 %v2651
        %v2899 = vpop.f32.mrf.mxu0
        %v2900 = vadd.f32 0.0, %v2899
        %v2901 = vpop.f32.mrf.mxu0
        %v2902 = vadd.f32 0.0, %v2901
        %2903 = vmatmul.bf16.gmra.mxu0 %v2654
        %v2904 = vpop.f32.mrf.mxu0
        %v2905 = vadd.f32 0.0, %v2904
        %v2906 = vpop.f32.mrf.mxu0
        %v2907 = vadd.f32 0.0, %v2906
        %2908 = vmatmul.bf16.gmra.mxu0 %v2657
        %v2909 = vpop.f32.mrf.mxu0
        %v2910 = vadd.f32 0.0, %v2909
        %v2911 = vpop.f32.mrf.mxu0
        %v2912 = vadd.f32 0.0, %v2911
        %2913 = vmatmul.bf16.gmra.mxu0 %v2660
        %v2914 = vpop.f32.mrf.mxu0
        %v2915 = vadd.f32 0.0, %v2914
        %v2916 = vpop.f32.mrf.mxu0
        %v2917 = vadd.f32 0.0, %v2916
        %2918 = vmatmul.bf16.gmra.mxu0 %v2663
        %v2919 = vpop.f32.mrf.mxu0
        %v2920 = vadd.f32 0.0, %v2919
        %v2921 = vpop.f32.mrf.mxu0
        %v2922 = vadd.f32 0.0, %v2921
        %2923 = vmatmul.bf16.gmra.mxu0 %v2666
        %v2924 = vpop.f32.mrf.mxu0
        %v2925 = vadd.f32 0.0, %v2924
        %v2926 = vpop.f32.mrf.mxu0
        %v2927 = vadd.f32 0.0, %v2926
        %2928 = vmatmul.bf16.gmra.mxu0 %v2669
        %v2929 = vpop.f32.mrf.mxu0
        %v2930 = vadd.f32 0.0, %v2929
        %v2931 = vpop.f32.mrf.mxu0
        %v2932 = vadd.f32 0.0, %v2931
        %2933 = vmatmul.bf16.gmra.mxu0 %v2672
        %v2934 = vpop.f32.mrf.mxu0
        %v2935 = vadd.f32 0.0, %v2934
        %v2936 = vpop.f32.mrf.mxu0
        %v2937 = vadd.f32 0.0, %v2936
        %2938 = vmatmul.bf16.gmra.mxu0 %v2675
        %v2939 = vpop.f32.mrf.mxu0
        %v2940 = vadd.f32 0.0, %v2939
        %v2941 = vpop.f32.mrf.mxu0
        %v2942 = vadd.f32 0.0, %v2941
        %2943 = vmatmul.bf16.gmra.mxu0 %v2678
        %v2944 = vpop.f32.mrf.mxu0
        %v2945 = vadd.f32 0.0, %v2944
        %v2946 = vpop.f32.mrf.mxu0
        %v2947 = vadd.f32 0.0, %v2946
        %2948 = vmatmul.bf16.gmra.mxu0 %v2681
        %v2949 = vpop.f32.mrf.mxu0
        %v2950 = vadd.f32 0.0, %v2949
        %v2951 = vpop.f32.mrf.mxu0
        %v2952 = vadd.f32 0.0, %v2951
        %2953 = vmatmul.bf16.gmra.mxu0 %v2684
        %v2954 = vpop.f32.mrf.mxu0
        %v2955 = vadd.f32 0.0, %v2954
        %v2956 = vpop.f32.mrf.mxu0
        %v2957 = vadd.f32 0.0, %v2956
        %2958 = vmatmul.bf16.gmra.mxu0 %v2687
        %v2959 = vpop.f32.mrf.mxu0
        %v2960 = vadd.f32 0.0, %v2959
        %v2961 = vpop.f32.mrf.mxu0
        %v2962 = vadd.f32 0.0, %v2961
        %2963 = vmatmul.bf16.gmra.mxu0 %v2690
        %v2964 = vpop.f32.mrf.mxu0
        %v2965 = vadd.f32 0.0, %v2964
        %v2966 = vpop.f32.mrf.mxu0
        %v2967 = vadd.f32 0.0, %v2966
        %2968 = vmatmul.bf16.gmra.mxu0 %v2693
        %v2969 = vpop.f32.mrf.mxu0
        %v2970 = vadd.f32 0.0, %v2969
        %v2971 = vpop.f32.mrf.mxu0
        %v2972 = vadd.f32 0.0, %v2971
        %2973 = vmatmul.bf16.gmra.mxu0 %v2696
        %v2974 = vpop.f32.mrf.mxu0
        %v2975 = vadd.f32 0.0, %v2974
        %v2976 = vpop.f32.mrf.mxu0
        %v2977 = vadd.f32 0.0, %v2976
        %2978 = vmatmul.bf16.gmra.mxu0 %v2699
        %v2979 = vpop.f32.mrf.mxu0
        %v2980 = vadd.f32 0.0, %v2979
        %v2981 = vpop.f32.mrf.mxu0
        %v2982 = vadd.f32 0.0, %v2981
        %2983 = vmatmul.bf16.gmra.mxu0 %v2702
        %v2984 = vpop.f32.mrf.mxu0
        %v2985 = vadd.f32 0.0, %v2984
        %v2986 = vpop.f32.mrf.mxu0
        %v2987 = vadd.f32 0.0, %v2986
        %2988 = vmatmul.bf16.gmra.mxu0 %v2705
        %v2989 = vpop.f32.mrf.mxu0
        %v2990 = vadd.f32 0.0, %v2989
        %v2991 = vpop.f32.mrf.mxu0
        %v2992 = vadd.f32 0.0, %v2991
        %2993 = vmatmul.bf16.gmra.mxu0 %v2708
        %v2994 = vpop.f32.mrf.mxu0
        %v2995 = vadd.f32 0.0, %v2994
        %v2996 = vpop.f32.mrf.mxu0
        %v2997 = vadd.f32 0.0, %v2996
        %2998 = vmatmul.bf16.gmra.mxu0 %v2711
        %v2999 = vpop.f32.mrf.mxu0
        %v3000 = vadd.f32 0.0, %v2999
        %v3001 = vpop.f32.mrf.mxu0
        %v3002 = vadd.f32 0.0, %v3001
        %3003 = vmatmul.bf16.gmra.mxu0 %v2714
        %v3004 = vpop.f32.mrf.mxu0
        %v3005 = vadd.f32 0.0, %v3004
        %v3006 = vpop.f32.mrf.mxu0
        %v3007 = vadd.f32 0.0, %v3006
        %3008 = vmatmul.bf16.gmra.mxu0 %v2717
        %v3009 = vpop.f32.mrf.mxu0
        %v3010 = vadd.f32 0.0, %v3009
        %v3011 = vpop.f32.mrf.mxu0
        %v3012 = vadd.f32 0.0, %v3011
        %3013 = vmatmul.bf16.gmra.mxu0 %v2720
        %v3014 = vpop.f32.mrf.mxu0
        %v3015 = vadd.f32 0.0, %v3014
        %v3016 = vpop.f32.mrf.mxu0
        %v3017 = vadd.f32 0.0, %v3016
        %3018 = vmatmul.bf16.gmra.mxu0 %v2723
        %v3019 = vpop.f32.mrf.mxu0
        %v3020 = vadd.f32 0.0, %v3019
        %v3021 = vpop.f32.mrf.mxu0
        %v3022 = vadd.f32 0.0, %v3021
        %3023 = vmatmul.bf16.gmra.mxu0 %v2726
        %v3024 = vpop.f32.mrf.mxu0
        %v3025 = vadd.f32 0.0, %v3024
        %v3026 = vpop.f32.mrf.mxu0
        %v3027 = vadd.f32 0.0, %v3026
        %3028 = vmatmul.bf16.gmra.mxu0 %v2729
        %v3029 = vpop.f32.mrf.mxu0
        %v3030 = vadd.f32 0.0, %v3029
        %v3031 = vpop.f32.mrf.mxu0
        %v3032 = vadd.f32 0.0, %v3031
        %3033 = vmatmul.bf16.gmra.mxu0 %v2732
        %v3034 = vpop.f32.mrf.mxu0
        %v3035 = vadd.f32 0.0, %v3034
        %v3036 = vpop.f32.mrf.mxu0
        %v3037 = vadd.f32 0.0, %v3036
        %3038 = vmatmul.bf16.gmra.mxu0 %v2735
        %v3039 = vpop.f32.mrf.mxu0
        %v3040 = vadd.f32 0.0, %v3039
        %v3041 = vpop.f32.mrf.mxu0
        %v3042 = vadd.f32 0.0, %v3041
        %3043 = vmatmul.bf16.gmra.mxu0 %v2738
        %v3044 = vpop.f32.mrf.mxu0
        %v3045 = vadd.f32 0.0, %v3044
        %v3046 = vpop.f32.mrf.mxu0
        %v3047 = vadd.f32 0.0, %v3046
        %3048 = vmatmul.bf16.gmra.mxu0 %v2741
        %v3049 = vpop.f32.mrf.mxu0
        %v3050 = vadd.f32 0.0, %v3049
        %v3051 = vpop.f32.mrf.mxu0
        %v3052 = vadd.f32 0.0, %v3051
        %3053 = vmatmul.bf16.gmra.mxu0 %v2744
        %v3054 = vpop.f32.mrf.mxu0
        %v3055 = vadd.f32 0.0, %v3054
        %v3056 = vpop.f32.mrf.mxu0
        %v3057 = vadd.f32 0.0, %v3056
        %3058 = vmatmul.bf16.gmra.mxu0 %v2747
        %v3059 = vpop.f32.mrf.mxu0
        %v3060 = vadd.f32 0.0, %v3059
        %v3061 = vpop.f32.mrf.mxu0
        %v3062 = vadd.f32 0.0, %v3061
        %3063 = vmatmul.bf16.gmra.mxu0 %v2750
        %v3064 = vpop.f32.mrf.mxu0
        %v3065 = vadd.f32 0.0, %v3064
        %v3066 = vpop.f32.mrf.mxu0
        %v3067 = vadd.f32 0.0, %v3066
        %3068 = vmatmul.bf16.gmra.mxu0 %v2753
        %v3069 = vpop.f32.mrf.mxu0
        %v3070 = vadd.f32 0.0, %v3069
        %v3071 = vpop.f32.mrf.mxu0
        %v3072 = vadd.f32 0.0, %v3071
        %3073 = vmatmul.bf16.gmra.mxu0 %v2756
        %v3074 = vpop.f32.mrf.mxu0
        %v3075 = vadd.f32 0.0, %v3074
        %v3076 = vpop.f32.mrf.mxu0
        %v3077 = vadd.f32 0.0, %v3076
        %3078 = vmatmul.bf16.gmra.mxu0 %v2759
        %v3079 = vpop.f32.mrf.mxu0
        %v3080 = vadd.f32 0.0, %v3079
        %v3081 = vpop.f32.mrf.mxu0
        %v3082 = vadd.f32 0.0, %v3081
        %3083 = vmatmul.bf16.gmra.mxu0 %v2762
        %v3084 = vpop.f32.mrf.mxu0
        %v3085 = vadd.f32 0.0, %v3084
        %v3086 = vpop.f32.mrf.mxu0
        %v3087 = vadd.f32 0.0, %v3086
        %3088 = vmatmul.bf16.gmra.mxu0 %v2765
        %v3089 = vpop.f32.mrf.mxu0
        %v3090 = vadd.f32 0.0, %v3089
        %v3091 = vpop.f32.mrf.mxu0
        %v3092 = vadd.f32 0.0, %v3091
        %3093 = vmatmul.bf16.gmra.mxu0 %v2768
        %v3094 = vpop.f32.mrf.mxu0
        %v3095 = vadd.f32 0.0, %v3094
        %v3096 = vpop.f32.mrf.mxu0
        %v3097 = vadd.f32 0.0, %v3096
        %3098 = vmatmul.bf16.gmra.mxu0 %v2771
        %v3099 = vpop.f32.mrf.mxu0
        %v3100 = vadd.f32 0.0, %v3099
        %v3101 = vpop.f32.mrf.mxu0
        %v3102 = vadd.f32 0.0, %v3101
        %3103 = vmatmul.bf16.gmra.mxu0 %v2774
        %v3104 = vpop.f32.mrf.mxu0
        %v3105 = vadd.f32 0.0, %v3104
        %v3106 = vpop.f32.mrf.mxu0
        %v3107 = vadd.f32 0.0, %v3106
        %3108 = vmatmul.bf16.gmra.mxu0 %v2777
        %v3109 = vpop.f32.mrf.mxu0
        %v3110 = vadd.f32 0.0, %v3109
        %v3111 = vpop.f32.mrf.mxu0
        %v3112 = vadd.f32 0.0, %v3111
        %3113 = vmatmul.bf16.gmra.mxu0 %v2780
        %v3114 = vpop.f32.mrf.mxu0
        %v3115 = vadd.f32 0.0, %v3114
        %v3116 = vpop.f32.mrf.mxu0
        %v3117 = vadd.f32 0.0, %v3116
        %3118 = vmatmul.bf16.gmra.mxu0 %v2783
        %v3119 = vpop.f32.mrf.mxu0
        %v3120 = vadd.f32 0.0, %v3119
        %v3121 = vpop.f32.mrf.mxu0
        %v3122 = vadd.f32 0.0, %v3121
        %3123 = vmatmul.bf16.gmra.mxu0 %v2786
        %v3124 = vpop.f32.mrf.mxu0
        %v3125 = vadd.f32 0.0, %v3124
        %v3126 = vpop.f32.mrf.mxu0
        %v3127 = vadd.f32 0.0, %v3126
        %3128 = vmatmul.bf16.gmra.mxu0 %v2789
        %v3129 = vpop.f32.mrf.mxu0
        %v3130 = vadd.f32 0.0, %v3129
        %v3131 = vpop.f32.mrf.mxu0
        %v3132 = vadd.f32 0.0, %v3131
        %3133 = vmatmul.bf16.gmra.mxu0 %v2792
        %v3134 = vpop.f32.mrf.mxu0
        %v3135 = vadd.f32 0.0, %v3134
        %v3136 = vpop.f32.mrf.mxu0
        %v3137 = vadd.f32 0.0, %v3136
        %3138 = vmatmul.bf16.gmra.mxu0 %v2795
        %v3139 = vpop.f32.mrf.mxu0
        %v3140 = vadd.f32 0.0, %v3139
        %v3141 = vpop.f32.mrf.mxu0
        %v3142 = vadd.f32 0.0, %v3141
        %3143 = vmatmul.bf16.gmra.mxu0 %v2798
        %v3144 = vpop.f32.mrf.mxu0
        %v3145 = vadd.f32 0.0, %v3144
        %v3146 = vpop.f32.mrf.mxu0
        %v3147 = vadd.f32 0.0, %v3146
        %3148 = vmatmul.bf16.gmra.mxu0 %v2801
        %v3149 = vpop.f32.mrf.mxu0
        %v3150 = vadd.f32 0.0, %v3149
        %v3151 = vpop.f32.mrf.mxu0
        %v3152 = vadd.f32 0.0, %v3151
        %3153 = vmatmul.bf16.gmra.mxu0 %v2804
        %v3154 = vpop.f32.mrf.mxu0
        %v3155 = vadd.f32 0.0, %v3154
        %v3156 = vpop.f32.mrf.mxu0
        %v3157 = vadd.f32 0.0, %v3156
        %3158 = vmatmul.bf16.gmra.mxu0 %v2807
        %v3159 = vpop.f32.mrf.mxu0
        %v3160 = vadd.f32 0.0, %v3159
        %v3161 = vpop.f32.mrf.mxu0
        %v3162 = vadd.f32 0.0, %v3161
        %3163 = vmatmul.bf16.gmra.mxu0 %v2810
        %v3164 = vpop.f32.mrf.mxu0
        %v3165 = vadd.f32 0.0, %v3164
        %v3166 = vpop.f32.mrf.mxu0
        %v3167 = vadd.f32 0.0, %v3166
        %3168 = vmatmul.bf16.gmra.mxu0 %v2813
        %v3169 = vpop.f32.mrf.mxu0
        %v3170 = vadd.f32 0.0, %v3169
        %v3171 = vpop.f32.mrf.mxu0
        %v3172 = vadd.f32 0.0, %v3171
        %3173 = vmatmul.bf16.gmra.mxu0 %v2816
        %v3174 = vpop.f32.mrf.mxu0
        %v3175 = vadd.f32 0.0, %v3174
        %v3176 = vpop.f32.mrf.mxu0
        %v3177 = vadd.f32 0.0, %v3176
        %3178 = vmatmul.bf16.gmra.mxu0 %v2819
        %v3179 = vpop.f32.mrf.mxu0
        %v3180 = vadd.f32 0.0, %v3179
        %v3181 = vpop.f32.mrf.mxu0
        %v3182 = vadd.f32 0.0, %v3181
        %3183 = vmatmul.bf16.gmra.mxu0 %v2822
        %v3184 = vpop.f32.mrf.mxu0
        %v3185 = vadd.f32 0.0, %v3184
        %v3186 = vpop.f32.mrf.mxu0
        %v3187 = vadd.f32 0.0, %v3186
        %3188 = vmatmul.bf16.gmra.mxu0 %v2825
        %v3189 = vpop.f32.mrf.mxu0
        %v3190 = vadd.f32 0.0, %v3189
        %v3191 = vpop.f32.mrf.mxu0
        %v3192 = vadd.f32 0.0, %v3191
        %3193 = vmatmul.bf16.gmra.mxu0 %v2828
        %v3194 = vpop.f32.mrf.mxu0
        %v3195 = vadd.f32 0.0, %v3194
        %v3196 = vpop.f32.mrf.mxu0
        %v3197 = vadd.f32 0.0, %v3196
        %3198 = vdwg.mxu0
        %v3199 = vadd.f32 %v2092, %v2840
        %v3200 = vadd.f32 %v2094, %v2842
        %v3201 = vadd.f32 %v2097, %v2845
        %v3202 = vadd.f32 %v2099, %v2847
        %v3203 = vadd.f32 %v2102, %v2850
        %v3204 = vadd.f32 %v2104, %v2852
        %v3205 = vadd.f32 %v2107, %v2855
        %v3206 = vadd.f32 %v2109, %v2857
        %v3207 = vadd.f32 %v2112, %v2860
        %v3208 = vadd.f32 %v2114, %v2862
        %v3209 = vadd.f32 %v2117, %v2865
        %v3210 = vadd.f32 %v2119, %v2867
        %v3211 = vadd.f32 %v2122, %v2870
        %v3212 = vadd.f32 %v2124, %v2872
        %v3213 = vadd.f32 %v2127, %v2875
        %v3214 = vadd.f32 %v2129, %v2877
        %v3215 = vadd.f32 %v2132, %v2880
        %v3216 = vadd.f32 %v2134, %v2882
        %v3217 = vadd.f32 %v2137, %v2885
        %v3218 = vadd.f32 %v2139, %v2887
        %v3219 = vadd.f32 %v2142, %v2890
        %v3220 = vadd.f32 %v2144, %v2892
        %v3221 = vadd.f32 %v2147, %v2895
        %v3222 = vadd.f32 %v2149, %v2897
        %v3223 = vadd.f32 %v2152, %v2900
        %v3224 = vadd.f32 %v2154, %v2902
        %v3225 = vadd.f32 %v2157, %v2905
        %v3226 = vadd.f32 %v2159, %v2907
        %v3227 = vadd.f32 %v2162, %v2910
        %v3228 = vadd.f32 %v2164, %v2912
        %v3229 = vadd.f32 %v2167, %v2915
        %v3230 = vadd.f32 %v2169, %v2917
        %v3231 = vadd.f32 %v2172, %v2920
        %v3232 = vadd.f32 %v2174, %v2922
        %v3233 = vadd.f32 %v2177, %v2925
        %v3234 = vadd.f32 %v2179, %v2927
        %v3235 = vadd.f32 %v2182, %v2930
        %v3236 = vadd.f32 %v2184, %v2932
        %v3237 = vadd.f32 %v2187, %v2935
        %v3238 = vadd.f32 %v2189, %v2937
        %v3239 = vadd.f32 %v2192, %v2940
        %v3240 = vadd.f32 %v2194, %v2942
        %v3241 = vadd.f32 %v2197, %v2945
        %v3242 = vadd.f32 %v2199, %v2947
        %v3243 = vadd.f32 %v2202, %v2950
        %v3244 = vadd.f32 %v2204, %v2952
        %v3245 = vadd.f32 %v2207, %v2955
        %v3246 = vadd.f32 %v2209, %v2957
        %v3247 = vadd.f32 %v2212, %v2960
        %v3248 = vadd.f32 %v2214, %v2962
        %v3249 = vadd.f32 %v2217, %v2965
        %v3250 = vadd.f32 %v2219, %v2967
        %v3251 = vadd.f32 %v2222, %v2970
        %v3252 = vadd.f32 %v2224, %v2972
        %v3253 = vadd.f32 %v2227, %v2975
        %v3254 = vadd.f32 %v2229, %v2977
        %v3255 = vadd.f32 %v2232, %v2980
        %v3256 = vadd.f32 %v2234, %v2982
        %v3257 = vadd.f32 %v2237, %v2985
        %v3258 = vadd.f32 %v2239, %v2987
        %v3259 = vadd.f32 %v2242, %v2990
        %v3260 = vadd.f32 %v2244, %v2992
        %v3261 = vadd.f32 %v2247, %v2995
        %v3262 = vadd.f32 %v2249, %v2997
        %v3263 = vadd.f32 %v2252, %v3000
        %v3264 = vadd.f32 %v2254, %v3002
        %v3265 = vadd.f32 %v2257, %v3005
        %v3266 = vadd.f32 %v2259, %v3007
        %v3267 = vadd.f32 %v2262, %v3010
        %v3268 = vadd.f32 %v2264, %v3012
        %v3269 = vadd.f32 %v2267, %v3015
        %v3270 = vadd.f32 %v2269, %v3017
        %v3271 = vadd.f32 %v2272, %v3020
        %v3272 = vadd.f32 %v2274, %v3022
        %v3273 = vadd.f32 %v2277, %v3025
        %v3274 = vadd.f32 %v2279, %v3027
        %v3275 = vadd.f32 %v2282, %v3030
        %v3276 = vadd.f32 %v2284, %v3032
        %v3277 = vadd.f32 %v2287, %v3035
        %v3278 = vadd.f32 %v2289, %v3037
        %v3279 = vadd.f32 %v2292, %v3040
        %v3280 = vadd.f32 %v2294, %v3042
        %v3281 = vadd.f32 %v2297, %v3045
        %v3282 = vadd.f32 %v2299, %v3047
        %v3283 = vadd.f32 %v2302, %v3050
        %v3284 = vadd.f32 %v2304, %v3052
        %v3285 = vadd.f32 %v2307, %v3055
        %v3286 = vadd.f32 %v2309, %v3057
        %v3287 = vadd.f32 %v2312, %v3060
        %v3288 = vadd.f32 %v2314, %v3062
        %v3289 = vadd.f32 %v2317, %v3065
        %v3290 = vadd.f32 %v2319, %v3067
        %v3291 = vadd.f32 %v2322, %v3070
        %v3292 = vadd.f32 %v2324, %v3072
        %v3293 = vadd.f32 %v2327, %v3075
        %v3294 = vadd.f32 %v2329, %v3077
        %v3295 = vadd.f32 %v2332, %v3080
        %v3296 = vadd.f32 %v2334, %v3082
        %v3297 = vadd.f32 %v2337, %v3085
        %v3298 = vadd.f32 %v2339, %v3087
        %v3299 = vadd.f32 %v2342, %v3090
        %v3300 = vadd.f32 %v2344, %v3092
        %v3301 = vadd.f32 %v2347, %v3095
        %v3302 = vadd.f32 %v2349, %v3097
        %v3303 = vadd.f32 %v2352, %v3100
        %v3304 = vadd.f32 %v2354, %v3102
        %v3305 = vadd.f32 %v2357, %v3105
        %v3306 = vadd.f32 %v2359, %v3107
        %v3307 = vadd.f32 %v2362, %v3110
        %v3308 = vadd.f32 %v2364, %v3112
        %v3309 = vadd.f32 %v2367, %v3115
        %v3310 = vadd.f32 %v2369, %v3117
        %v3311 = vadd.f32 %v2372, %v3120
        %v3312 = vadd.f32 %v2374, %v3122
        %v3313 = vadd.f32 %v2377, %v3125
        %v3314 = vadd.f32 %v2379, %v3127
        %v3315 = vadd.f32 %v2382, %v3130
        %v3316 = vadd.f32 %v2384, %v3132
        %v3317 = vadd.f32 %v2387, %v3135
        %v3318 = vadd.f32 %v2389, %v3137
        %v3319 = vadd.f32 %v2392, %v3140
        %v3320 = vadd.f32 %v2394, %v3142
        %v3321 = vadd.f32 %v2397, %v3145
        %v3322 = vadd.f32 %v2399, %v3147
        %v3323 = vadd.f32 %v2402, %v3150
        %v3324 = vadd.f32 %v2404, %v3152
        %v3325 = vadd.f32 %v2407, %v3155
        %v3326 = vadd.f32 %v2409, %v3157
        %v3327 = vadd.f32 %v2412, %v3160
        %v3328 = vadd.f32 %v2414, %v3162
        %v3329 = vadd.f32 %v2417, %v3165
        %v3330 = vadd.f32 %v2419, %v3167
        %v3331 = vadd.f32 %v2422, %v3170
        %v3332 = vadd.f32 %v2424, %v3172
        %v3333 = vadd.f32 %v2427, %v3175
        %v3334 = vadd.f32 %v2429, %v3177
        %v3335 = vadd.f32 %v2432, %v3180
        %v3336 = vadd.f32 %v2434, %v3182
        %v3337 = vadd.f32 %v2437, %v3185
        %v3338 = vadd.f32 %v2439, %v3187
        %v3339 = vadd.f32 %v2442, %v3190
        %v3340 = vadd.f32 %v2444, %v3192
        %v3341 = vadd.f32 %v2447, %v3195
        %v3342 = vadd.f32 %v2449, %v3197
        %s3343 = sadd.s32 %s225, 72
        %s3344 = sshra.s32 %s3343, 3
        %s3345 = sand.u32 %s3343, 7
        %s3346 = smul.addr %s3344, 4
        %s3347 = scalar_lea.vmem %s215, %s3346
        %v3348 = vld [vmem:[%s3347] sm:$0xf]
        %v3349 = vld [vmem:[%s3347 + $0x4] sm:$0xf]
        %v3350 = vld [vmem:[%s3347 + $0x8] sm:$0xf]
        %v3351 = vld [vmem:[%s3347 + $0xc] sm:$0xf]
        %v3352 = vld [vmem:[%s3347 + $0x10] sm:$0xf]
        %v3353 = vld [vmem:[%s3347 + $0x14] sm:$0xf]
        %v3354 = vld [vmem:[%s3347 + $0x18] sm:$0xf]
        %v3355 = vld [vmem:[%s3347 + $0x1c] sm:$0xf]
        %v3356 = vld [vmem:[%s3347 + $0x20] sm:$0xf]
        %v3357 = vld [vmem:[%s3347 + $0x24] sm:$0xf]
        %v3358 = vld [vmem:[%s3347 + $0x28] sm:$0xf]
        %v3359 = vld [vmem:[%s3347 + $0x2c] sm:$0xf]
        %v3360 = vld [vmem:[%s3347 + $0x30] sm:$0xf]
        %v3361 = vld [vmem:[%s3347 + $0x34] sm:$0xf]
        %v3362 = vld [vmem:[%s3347 + $0x38] sm:$0xf]
        %v3363 = vld [vmem:[%s3347 + $0x3c] sm:$0xf]
        %v3364 = vld [vmem:[%s3347 + $0x40] sm:$0xf]
        %v3365 = vld [vmem:[%s3347 + $0x44] sm:$0xf]
        %v3366 = vld [vmem:[%s3347 + $0x48] sm:$0xf]
        %v3367 = vld [vmem:[%s3347 + $0x4c] sm:$0xf]
        %v3368 = vld [vmem:[%s3347 + $0x50] sm:$0xf]
        %v3369 = vld [vmem:[%s3347 + $0x54] sm:$0xf]
        %v3370 = vld [vmem:[%s3347 + $0x58] sm:$0xf]
        %v3371 = vld [vmem:[%s3347 + $0x5c] sm:$0xf]
        %v3372 = vld [vmem:[%s3347 + $0x60] sm:$0xf]
        %v3373 = vld [vmem:[%s3347 + $0x64] sm:$0xf]
        %v3374 = vld [vmem:[%s3347 + $0x68] sm:$0xf]
        %v3375 = vld [vmem:[%s3347 + $0x6c] sm:$0xf]
        %v3376 = vld [vmem:[%s3347 + $0x70] sm:$0xf]
        %v3377 = vld [vmem:[%s3347 + $0x74] sm:$0xf]
        %v3378 = vld [vmem:[%s3347 + $0x78] sm:$0xf]
        %v3379 = vld [vmem:[%s3347 + $0x7c] sm:$0xf]
        %v3380 = vld [vmem:[%s3347 + $0x80] sm:$0xf]
        %v3381 = vld [vmem:[%s3347 + $0x84] sm:$0xf]
        %v3382 = vld [vmem:[%s3347 + $0x88] sm:$0xf]
        %v3383 = vld [vmem:[%s3347 + $0x8c] sm:$0xf]
        %v3384 = vld [vmem:[%s3347 + $0x90] sm:$0xf]
        %v3385 = vld [vmem:[%s3347 + $0x94] sm:$0xf]
        %v3386 = vld [vmem:[%s3347 + $0x98] sm:$0xf]
        %v3387 = vld [vmem:[%s3347 + $0x9c] sm:$0xf]
        %v3388 = vld [vmem:[%s3347 + $0xa0] sm:$0xf]
        %v3389 = vld [vmem:[%s3347 + $0xa4] sm:$0xf]
        %v3390 = vld [vmem:[%s3347 + $0xa8] sm:$0xf]
        %v3391 = vld [vmem:[%s3347 + $0xac] sm:$0xf]
        %v3392 = vld [vmem:[%s3347 + $0xb0] sm:$0xf]
        %v3393 = vld [vmem:[%s3347 + $0xb4] sm:$0xf]
        %v3394 = vld [vmem:[%s3347 + $0xb8] sm:$0xf]
        %v3395 = vld [vmem:[%s3347 + $0xbc] sm:$0xf]
        %v3396 = vld [vmem:[%s3347 + $0xc0] sm:$0xf]
        %v3397 = vld [vmem:[%s3347 + $0xc4] sm:$0xf]
        %v3398 = vld [vmem:[%s3347 + $0xc8] sm:$0xf]
        %v3399 = vld [vmem:[%s3347 + $0xcc] sm:$0xf]
        %v3400 = vld [vmem:[%s3347 + $0xd0] sm:$0xf]
        %v3401 = vld [vmem:[%s3347 + $0xd4] sm:$0xf]
        %v3402 = vld [vmem:[%s3347 + $0xd8] sm:$0xf]
        %v3403 = vld [vmem:[%s3347 + $0xdc] sm:$0xf]
        %v3404 = vld [vmem:[%s3347 + $0xe0] sm:$0xf]
        %v3405 = vld [vmem:[%s3347 + $0xe4] sm:$0xf]
        %v3406 = vld [vmem:[%s3347 + $0xe8] sm:$0xf]
        %v3407 = vld [vmem:[%s3347 + $0xec] sm:$0xf]
        %v3408 = vld [vmem:[%s3347 + $0xf0] sm:$0xf]
        %v3409 = vld [vmem:[%s3347 + $0xf4] sm:$0xf]
        %v3410 = vld [vmem:[%s3347 + $0xf8] sm:$0xf]
        %v3411 = vld [vmem:[%s3347 + $0xfc] sm:$0xf]
        %v3412 = vld [vmem:[%s3347 + $0x100] sm:$0xf]
        %v3413 = vld [vmem:[%s3347 + $0x104] sm:$0xf]
        %v3414 = vld [vmem:[%s3347 + $0x108] sm:$0xf]
        %v3415 = vld [vmem:[%s3347 + $0x10c] sm:$0xf]
        %v3416 = vld [vmem:[%s3347 + $0x110] sm:$0xf]
        %v3417 = vld [vmem:[%s3347 + $0x114] sm:$0xf]
        %v3418 = vld [vmem:[%s3347 + $0x118] sm:$0xf]
        %v3419 = vld [vmem:[%s3347 + $0x11c] sm:$0xf]
        %v3420 = vld [vmem:[%s3347 + $0x120] sm:$0xf]
        %v3421 = vld [vmem:[%s3347 + $0x124] sm:$0xf]
        %v3422 = vld [vmem:[%s3347 + $0x128] sm:$0xf]
        %v3423 = vld [vmem:[%s3347 + $0x12c] sm:$0xf]
        %v3424 = vld [vmem:[%s3347 + $0x130] sm:$0xf]
        %v3425 = vld [vmem:[%s3347 + $0x134] sm:$0xf]
        %v3426 = vld [vmem:[%s3347 + $0x138] sm:$0xf]
        %v3427 = vld [vmem:[%s3347 + $0x13c] sm:$0xf]
        %v3428 = vld [vmem:[%s3347 + $0x140] sm:$0xf]
        %v3429 = vld [vmem:[%s3347 + $0x144] sm:$0xf]
        %v3430 = vld [vmem:[%s3347 + $0x148] sm:$0xf]
        %v3431 = vld [vmem:[%s3347 + $0x14c] sm:$0xf]
        %v3432 = vld [vmem:[%s3347 + $0x150] sm:$0xf]
        %v3433 = vld [vmem:[%s3347 + $0x154] sm:$0xf]
        %v3434 = vld [vmem:[%s3347 + $0x158] sm:$0xf]
        %v3435 = vld [vmem:[%s3347 + $0x15c] sm:$0xf]
        %v3436 = vld [vmem:[%s3347 + $0x160] sm:$0xf]
        %v3437 = vld [vmem:[%s3347 + $0x164] sm:$0xf]
        %v3438 = vld [vmem:[%s3347 + $0x168] sm:$0xf]
        %v3439 = vld [vmem:[%s3347 + $0x16c] sm:$0xf]
        %v3440 = vld [vmem:[%s3347 + $0x170] sm:$0xf]
        %v3441 = vld [vmem:[%s3347 + $0x174] sm:$0xf]
        %v3442 = vld [vmem:[%s3347 + $0x178] sm:$0xf]
        %v3443 = vld [vmem:[%s3347 + $0x17c] sm:$0xf]
        %v3444 = vld [vmem:[%s3347 + $0x180] sm:$0xf]
        %v3445 = vld [vmem:[%s3347 + $0x184] sm:$0xf]
        %v3446 = vld [vmem:[%s3347 + $0x188] sm:$0xf]
        %v3447 = vld [vmem:[%s3347 + $0x18c] sm:$0xf]
        %v3448 = vld [vmem:[%s3347 + $0x190] sm:$0xf]
        %v3449 = vld [vmem:[%s3347 + $0x194] sm:$0xf]
        %v3450 = vld [vmem:[%s3347 + $0x198] sm:$0xf]
        %v3451 = vld [vmem:[%s3347 + $0x19c] sm:$0xf]
        %v3452 = vld [vmem:[%s3347 + $0x1a0] sm:$0xf]
        %v3453 = vld [vmem:[%s3347 + $0x1a4] sm:$0xf]
        %v3454 = vld [vmem:[%s3347 + $0x1a8] sm:$0xf]
        %v3455 = vld [vmem:[%s3347 + $0x1ac] sm:$0xf]
        %v3456 = vld [vmem:[%s3347 + $0x1b0] sm:$0xf]
        %v3457 = vld [vmem:[%s3347 + $0x1b4] sm:$0xf]
        %v3458 = vld [vmem:[%s3347 + $0x1b8] sm:$0xf]
        %v3459 = vld [vmem:[%s3347 + $0x1bc] sm:$0xf]
        %v3460 = vld [vmem:[%s3347 + $0x1c0] sm:$0xf]
        %v3461 = vld [vmem:[%s3347 + $0x1c4] sm:$0xf]
        %v3462 = vld [vmem:[%s3347 + $0x1c8] sm:$0xf]
        %v3463 = vld [vmem:[%s3347 + $0x1cc] sm:$0xf]
        %v3464 = vld [vmem:[%s3347 + $0x1d0] sm:$0xf]
        %v3465 = vld [vmem:[%s3347 + $0x1d4] sm:$0xf]
        %v3466 = vld [vmem:[%s3347 + $0x1d8] sm:$0xf]
        %v3467 = vld [vmem:[%s3347 + $0x1dc] sm:$0xf]
        %v3468 = vld [vmem:[%s3347 + $0x1e0] sm:$0xf]
        %v3469 = vld [vmem:[%s3347 + $0x1e4] sm:$0xf]
        %v3470 = vld [vmem:[%s3347 + $0x1e8] sm:$0xf]
        %v3471 = vld [vmem:[%s3347 + $0x1ec] sm:$0xf]
        %v3472 = vld [vmem:[%s3347 + $0x1f0] sm:$0xf]
        %v3473 = vld [vmem:[%s3347 + $0x1f4] sm:$0xf]
        %v3474 = vld [vmem:[%s3347 + $0x1f8] sm:$0xf]
        %v3475 = vld [vmem:[%s3347 + $0x1fc] sm:$0xf]
        %v3476 = vld [vmem:[%s3347 + $0x200] sm:$0xf]
        %v3477 = vld [vmem:[%s3347 + $0x204] sm:$0xf]
        %v3478 = vld [vmem:[%s3347 + $0x208] sm:$0xf]
        %v3479 = vld [vmem:[%s3347 + $0x20c] sm:$0xf]
        %v3480 = vld [vmem:[%s3347 + $0x210] sm:$0xf]
        %v3481 = vld [vmem:[%s3347 + $0x214] sm:$0xf]
        %v3482 = vld [vmem:[%s3347 + $0x218] sm:$0xf]
        %v3483 = vld [vmem:[%s3347 + $0x21c] sm:$0xf]
        %v3484 = vld [vmem:[%s3347 + $0x220] sm:$0xf]
        %v3485 = vld [vmem:[%s3347 + $0x224] sm:$0xf]
        %v3486 = vld [vmem:[%s3347 + $0x228] sm:$0xf]
        %v3487 = vld [vmem:[%s3347 + $0x22c] sm:$0xf]
        %v3488 = vld [vmem:[%s3347 + $0x230] sm:$0xf]
        %v3489 = vld [vmem:[%s3347 + $0x234] sm:$0xf]
        %v3490 = vld [vmem:[%s3347 + $0x238] sm:$0xf]
        %v3491 = vld [vmem:[%s3347 + $0x23c] sm:$0xf]
        %v3492 = vld [vmem:[%s3347 + $0x240] sm:$0xf]
        %s3493 = scalar_lea.vmem %s219, 48
        %v3494 = vld [vmem:[%s3493] sm:$0xf]
        %v3495 = vld [vmem:[%s3493 + $0x4] sm:$0xf]
        %v3496 = vld [vmem:[%s3493 + $0x8] sm:$0xf]
        %v3497 = vld [vmem:[%s3493 + $0xc] sm:$0xf]
        %v3642 = vunpack.c.l.b16 %v3348
        %v3643 = vunpack.c.l.b16 %v3349
        %v3644 = vunpack.c.l.b16 %v3350
        %v3645 = vunpack.c.l.b16 %v3351
        %v3646 = vunpack.c.l.b16 %v3352
        %v3647 = vunpack.c.l.b16 %v3353
        %v3648 = vunpack.c.l.b16 %v3354
        %v3649 = vunpack.c.l.b16 %v3355
        %v3650 = vunpack.c.l.b16 %v3356
        %v3651 = vunpack.c.l.b16 %v3357
        %v3652 = vunpack.c.l.b16 %v3358
        %v3653 = vunpack.c.l.b16 %v3359
        %v3654 = vunpack.c.l.b16 %v3360
        %v3655 = vunpack.c.l.b16 %v3361
        %v3656 = vunpack.c.l.b16 %v3362
        %v3657 = vunpack.c.l.b16 %v3363
        %v3658 = vunpack.c.l.b16 %v3364
        %v3659 = vunpack.c.l.b16 %v3365
        %v3660 = vunpack.c.l.b16 %v3366
        %v3661 = vunpack.c.l.b16 %v3367
        %v3662 = vunpack.c.l.b16 %v3368
        %v3663 = vunpack.c.l.b16 %v3369
        %v3664 = vunpack.c.l.b16 %v3370
        %v3665 = vunpack.c.l.b16 %v3371
        %v3666 = vunpack.c.l.b16 %v3372
        %v3667 = vunpack.c.l.b16 %v3373
        %v3668 = vunpack.c.l.b16 %v3374
        %v3669 = vunpack.c.l.b16 %v3375
        %v3670 = vunpack.c.l.b16 %v3376
        %v3671 = vunpack.c.l.b16 %v3377
        %v3672 = vunpack.c.l.b16 %v3378
        %v3673 = vunpack.c.l.b16 %v3379
        %v3674 = vunpack.c.l.b16 %v3380
        %v3675 = vunpack.c.l.b16 %v3381
        %v3676 = vunpack.c.l.b16 %v3382
        %v3677 = vunpack.c.l.b16 %v3383
        %v3678 = vunpack.c.l.b16 %v3384
        %v3679 = vunpack.c.l.b16 %v3385
        %v3680 = vunpack.c.l.b16 %v3386
        %v3681 = vunpack.c.l.b16 %v3387
        %v3682 = vunpack.c.l.b16 %v3388
        %v3683 = vunpack.c.l.b16 %v3389
        %v3684 = vunpack.c.l.b16 %v3390
        %v3685 = vunpack.c.l.b16 %v3391
        %v3686 = vunpack.c.l.b16 %v3392
        %v3687 = vunpack.c.l.b16 %v3393
        %v3688 = vunpack.c.l.b16 %v3394
        %v3689 = vunpack.c.l.b16 %v3395
        %v3690 = vunpack.c.l.b16 %v3396
        %v3691 = vunpack.c.l.b16 %v3397
        %v3692 = vunpack.c.l.b16 %v3398
        %v3693 = vunpack.c.l.b16 %v3399
        %v3694 = vunpack.c.l.b16 %v3400
        %v3695 = vunpack.c.l.b16 %v3401
        %v3696 = vunpack.c.l.b16 %v3402
        %v3697 = vunpack.c.l.b16 %v3403
        %v3698 = vunpack.c.l.b16 %v3404
        %v3699 = vunpack.c.l.b16 %v3405
        %v3700 = vunpack.c.l.b16 %v3406
        %v3701 = vunpack.c.l.b16 %v3407
        %v3702 = vunpack.c.l.b16 %v3408
        %v3703 = vunpack.c.l.b16 %v3409
        %v3704 = vunpack.c.l.b16 %v3410
        %v3705 = vunpack.c.l.b16 %v3411
        %v3706 = vunpack.c.l.b16 %v3412
        %v3707 = vunpack.c.l.b16 %v3413
        %v3708 = vunpack.c.l.b16 %v3414
        %v3709 = vunpack.c.l.b16 %v3415
        %v3710 = vunpack.c.l.b16 %v3416
        %v3711 = vunpack.c.l.b16 %v3417
        %v3712 = vunpack.c.l.b16 %v3418
        %v3713 = vunpack.c.l.b16 %v3419
        %v3714 = vunpack.c.l.b16 %v3420
        %v3715 = vunpack.c.l.b16 %v3421
        %v3716 = vunpack.c.l.b16 %v3422
        %v3717 = vunpack.c.l.b16 %v3423
        %v3718 = vunpack.c.l.b16 %v3424
        %v3719 = vunpack.c.l.b16 %v3425
        %v3720 = vunpack.c.l.b16 %v3426
        %v3721 = vunpack.c.l.b16 %v3427
        %v3722 = vunpack.c.l.b16 %v3428
        %v3723 = vunpack.c.l.b16 %v3429
        %v3724 = vunpack.c.l.b16 %v3430
        %v3725 = vunpack.c.l.b16 %v3431
        %v3726 = vunpack.c.l.b16 %v3432
        %v3727 = vunpack.c.l.b16 %v3433
        %v3728 = vunpack.c.l.b16 %v3434
        %v3729 = vunpack.c.l.b16 %v3435
        %v3730 = vunpack.c.l.b16 %v3436
        %v3731 = vunpack.c.l.b16 %v3437
        %v3732 = vunpack.c.l.b16 %v3438
        %v3733 = vunpack.c.l.b16 %v3439
        %v3734 = vunpack.c.l.b16 %v3440
        %v3735 = vunpack.c.l.b16 %v3441
        %v3736 = vunpack.c.l.b16 %v3442
        %v3737 = vunpack.c.l.b16 %v3443
        %v3738 = vunpack.c.l.b16 %v3444
        %v3739 = vunpack.c.l.b16 %v3445
        %v3740 = vunpack.c.l.b16 %v3446
        %v3741 = vunpack.c.l.b16 %v3447
        %v3742 = vunpack.c.l.b16 %v3448
        %v3743 = vunpack.c.l.b16 %v3449
        %v3744 = vunpack.c.l.b16 %v3450
        %v3745 = vunpack.c.l.b16 %v3451
        %v3746 = vunpack.c.l.b16 %v3452
        %v3747 = vunpack.c.l.b16 %v3453
        %v3748 = vunpack.c.l.b16 %v3454
        %v3749 = vunpack.c.l.b16 %v3455
        %v3750 = vunpack.c.l.b16 %v3456
        %v3751 = vunpack.c.l.b16 %v3457
        %v3752 = vunpack.c.l.b16 %v3458
        %v3753 = vunpack.c.l.b16 %v3459
        %v3754 = vunpack.c.l.b16 %v3460
        %v3755 = vunpack.c.l.b16 %v3461
        %v3756 = vunpack.c.l.b16 %v3462
        %v3757 = vunpack.c.l.b16 %v3463
        %v3758 = vunpack.c.l.b16 %v3464
        %v3759 = vunpack.c.l.b16 %v3465
        %v3760 = vunpack.c.l.b16 %v3466
        %v3761 = vunpack.c.l.b16 %v3467
        %v3762 = vunpack.c.l.b16 %v3468
        %v3763 = vunpack.c.l.b16 %v3469
        %v3764 = vunpack.c.l.b16 %v3470
        %v3765 = vunpack.c.l.b16 %v3471
        %v3766 = vunpack.c.l.b16 %v3472
        %v3767 = vunpack.c.l.b16 %v3473
        %v3768 = vunpack.c.l.b16 %v3474
        %v3769 = vunpack.c.l.b16 %v3475
        %v3770 = vunpack.c.l.b16 %v3476
        %v3771 = vunpack.c.l.b16 %v3477
        %v3772 = vunpack.c.l.b16 %v3478
        %v3773 = vunpack.c.l.b16 %v3479
        %v3774 = vunpack.c.l.b16 %v3480
        %v3775 = vunpack.c.l.b16 %v3481
        %v3776 = vunpack.c.l.b16 %v3482
        %v3777 = vunpack.c.l.b16 %v3483
        %v3778 = vunpack.c.l.b16 %v3484
        %v3779 = vunpack.c.l.b16 %v3485
        %v3780 = vunpack.c.l.b16 %v3486
        %v3781 = vunpack.c.l.b16 %v3487
        %v3782 = vunpack.c.l.b16 %v3488
        %v3783 = vunpack.c.l.b16 %v3489
        %v3784 = vunpack.c.l.b16 %v3490
        %v3785 = vunpack.c.l.b16 %v3491
        %v3786 = vpack.c.b16 %v3643, %v3642
        %v3787 = vpack.c.b16 %v3645, %v3644
        %v3788 = vpack.c.b16 %v3647, %v3646
        %v3789 = vpack.c.b16 %v3649, %v3648
        %v3790 = vpack.c.b16 %v3651, %v3650
        %v3791 = vpack.c.b16 %v3653, %v3652
        %v3792 = vpack.c.b16 %v3655, %v3654
        %v3793 = vpack.c.b16 %v3657, %v3656
        %v3794 = vpack.c.b16 %v3659, %v3658
        %v3795 = vpack.c.b16 %v3661, %v3660
        %v3796 = vpack.c.b16 %v3663, %v3662
        %v3797 = vpack.c.b16 %v3665, %v3664
        %v3798 = vpack.c.b16 %v3667, %v3666
        %v3799 = vpack.c.b16 %v3669, %v3668
        %v3800 = vpack.c.b16 %v3671, %v3670
        %v3801 = vpack.c.b16 %v3673, %v3672
        %v3802 = vpack.c.b16 %v3675, %v3674
        %v3803 = vpack.c.b16 %v3677, %v3676
        %v3804 = vpack.c.b16 %v3679, %v3678
        %v3805 = vpack.c.b16 %v3681, %v3680
        %v3806 = vpack.c.b16 %v3683, %v3682
        %v3807 = vpack.c.b16 %v3685, %v3684
        %v3808 = vpack.c.b16 %v3687, %v3686
        %v3809 = vpack.c.b16 %v3689, %v3688
        %v3810 = vpack.c.b16 %v3691, %v3690
        %v3811 = vpack.c.b16 %v3693, %v3692
        %v3812 = vpack.c.b16 %v3695, %v3694
        %v3813 = vpack.c.b16 %v3697, %v3696
        %v3814 = vpack.c.b16 %v3699, %v3698
        %v3815 = vpack.c.b16 %v3701, %v3700
        %v3816 = vpack.c.b16 %v3703, %v3702
        %v3817 = vpack.c.b16 %v3705, %v3704
        %v3818 = vpack.c.b16 %v3707, %v3706
        %v3819 = vpack.c.b16 %v3709, %v3708
        %v3820 = vpack.c.b16 %v3711, %v3710
        %v3821 = vpack.c.b16 %v3713, %v3712
        %v3822 = vpack.c.b16 %v3715, %v3714
        %v3823 = vpack.c.b16 %v3717, %v3716
        %v3824 = vpack.c.b16 %v3719, %v3718
        %v3825 = vpack.c.b16 %v3721, %v3720
        %v3826 = vpack.c.b16 %v3723, %v3722
        %v3827 = vpack.c.b16 %v3725, %v3724
        %v3828 = vpack.c.b16 %v3727, %v3726
        %v3829 = vpack.c.b16 %v3729, %v3728
        %v3830 = vpack.c.b16 %v3731, %v3730
        %v3831 = vpack.c.b16 %v3733, %v3732
        %v3832 = vpack.c.b16 %v3735, %v3734
        %v3833 = vpack.c.b16 %v3737, %v3736
        %v3834 = vpack.c.b16 %v3739, %v3738
        %v3835 = vpack.c.b16 %v3741, %v3740
        %v3836 = vpack.c.b16 %v3743, %v3742
        %v3837 = vpack.c.b16 %v3745, %v3744
        %v3838 = vpack.c.b16 %v3747, %v3746
        %v3839 = vpack.c.b16 %v3749, %v3748
        %v3840 = vpack.c.b16 %v3751, %v3750
        %v3841 = vpack.c.b16 %v3753, %v3752
        %v3842 = vpack.c.b16 %v3755, %v3754
        %v3843 = vpack.c.b16 %v3757, %v3756
        %v3844 = vpack.c.b16 %v3759, %v3758
        %v3845 = vpack.c.b16 %v3761, %v3760
        %v3846 = vpack.c.b16 %v3763, %v3762
        %v3847 = vpack.c.b16 %v3765, %v3764
        %v3848 = vpack.c.b16 %v3767, %v3766
        %v3849 = vpack.c.b16 %v3769, %v3768
        %v3850 = vpack.c.b16 %v3771, %v3770
        %v3851 = vpack.c.b16 %v3773, %v3772
        %v3852 = vpack.c.b16 %v3775, %v3774
        %v3853 = vpack.c.b16 %v3777, %v3776
        %v3854 = vpack.c.b16 %v3779, %v3778
        %v3855 = vpack.c.b16 %v3781, %v3780
        %v3856 = vpack.c.b16 %v3783, %v3782
        %v3857 = vpack.c.b16 %v3785, %v3784
        %v3862 = vunpack.c.l.b16 %v3494
        %v3863 = vunpack.c.l.b16 %v3495
        %v3864 = vunpack.c.l.b16 %v3496
        %v3865 = vunpack.c.l.b16 %v3497
        %v3866 = vpack.c.b16 %v3863, %v3862
        %v3867 = vpack.c.b16 %v3865, %v3864
        %v3871 = vsel %vm1340, %v3786, 0
        %v3874 = vsel %vm1340, %v3787, 0
        %v3877 = vsel %vm1340, %v3788, 0
        %v3880 = vsel %vm1340, %v3789, 0
        %v3883 = vsel %vm1340, %v3790, 0
        %v3886 = vsel %vm1340, %v3791, 0
        %v3889 = vsel %vm1340, %v3792, 0
        %v3892 = vsel %vm1340, %v3793, 0
        %v3895 = vsel %vm1340, %v3794, 0
        %v3898 = vsel %vm1340, %v3795, 0
        %v3901 = vsel %vm1340, %v3796, 0
        %v3904 = vsel %vm1340, %v3797, 0
        %v3907 = vsel %vm1340, %v3798, 0
        %v3910 = vsel %vm1340, %v3799, 0
        %v3913 = vsel %vm1340, %v3800, 0
        %v3916 = vsel %vm1340, %v3801, 0
        %v3919 = vsel %vm1340, %v3802, 0
        %v3922 = vsel %vm1340, %v3803, 0
        %v3925 = vsel %vm1340, %v3804, 0
        %v3928 = vsel %vm1340, %v3805, 0
        %v3931 = vsel %vm1340, %v3806, 0
        %v3934 = vsel %vm1340, %v3807, 0
        %v3937 = vsel %vm1340, %v3808, 0
        %v3940 = vsel %vm1340, %v3809, 0
        %v3943 = vsel %vm1340, %v3810, 0
        %v3946 = vsel %vm1340, %v3811, 0
        %v3949 = vsel %vm1340, %v3812, 0
        %v3952 = vsel %vm1340, %v3813, 0
        %v3955 = vsel %vm1340, %v3814, 0
        %v3958 = vsel %vm1340, %v3815, 0
        %v3961 = vsel %vm1340, %v3816, 0
        %v3964 = vsel %vm1340, %v3817, 0
        %v3967 = vsel %vm1340, %v3818, 0
        %v3970 = vsel %vm1340, %v3819, 0
        %v3973 = vsel %vm1340, %v3820, 0
        %v3976 = vsel %vm1340, %v3821, 0
        %v3979 = vsel %vm1340, %v3822, 0
        %v3982 = vsel %vm1340, %v3823, 0
        %v3985 = vsel %vm1340, %v3824, 0
        %v3988 = vsel %vm1340, %v3825, 0
        %v3991 = vsel %vm1340, %v3826, 0
        %v3994 = vsel %vm1340, %v3827, 0
        %v3997 = vsel %vm1340, %v3828, 0
        %v4000 = vsel %vm1340, %v3829, 0
        %v4003 = vsel %vm1340, %v3830, 0
        %v4006 = vsel %vm1340, %v3831, 0
        %v4009 = vsel %vm1340, %v3832, 0
        %v4012 = vsel %vm1340, %v3833, 0
        %v4015 = vsel %vm1340, %v3834, 0
        %v4018 = vsel %vm1340, %v3835, 0
        %v4021 = vsel %vm1340, %v3836, 0
        %v4024 = vsel %vm1340, %v3837, 0
        %v4027 = vsel %vm1340, %v3838, 0
        %v4030 = vsel %vm1340, %v3839, 0
        %v4033 = vsel %vm1340, %v3840, 0
        %v4036 = vsel %vm1340, %v3841, 0
        %v4039 = vsel %vm1340, %v3842, 0
        %v4042 = vsel %vm1340, %v3843, 0
        %v4045 = vsel %vm1340, %v3844, 0
        %v4048 = vsel %vm1340, %v3845, 0
        %v4051 = vsel %vm1340, %v3846, 0
        %v4054 = vsel %vm1340, %v3847, 0
        %v4057 = vsel %vm1340, %v3848, 0
        %v4060 = vsel %vm1340, %v3849, 0
        %v4063 = vsel %vm1340, %v3850, 0
        %v4066 = vsel %vm1340, %v3851, 0
        %v4069 = vsel %vm1340, %v3852, 0
        %v4072 = vsel %vm1340, %v3853, 0
        %v4075 = vsel %vm1340, %v3854, 0
        %v4078 = vsel %vm1340, %v3855, 0
        %v4081 = vsel %vm1340, %v3856, 0
        %v4084 = vsel %vm1340, %v3857, 0
        %4086 = vmatpush.bf16.msra.mxu0 0
        %4087 = vmatpush.bf16.msra.mxu0 0
        %4088 = vmatpush.bf16.msra.mxu0 0
        %4089 = vmatpush.bf16.msra.mxu0 0
        %4090 = vmatpush.bf16.msra.mxu0 0
        %4091 = vmatpush.bf16.msra.mxu0 0
        %4092 = vmatpush.bf16.msra.mxu0 %v3867
        %4093 = vmatpush.bf16.msra.mxu0 %v3866
        %4094 = vmatmul.bf16.gmra.mxu0 %v3871
        %v4095 = vpop.f32.mrf.mxu0
        %v4096 = vadd.f32 0.0, %v4095
        %v4097 = vpop.f32.mrf.mxu0
        %v4098 = vadd.f32 0.0, %v4097
        %4099 = vmatmul.bf16.gmra.mxu0 %v3874
        %v4100 = vpop.f32.mrf.mxu0
        %v4101 = vadd.f32 0.0, %v4100
        %v4102 = vpop.f32.mrf.mxu0
        %v4103 = vadd.f32 0.0, %v4102
        %4104 = vmatmul.bf16.gmra.mxu0 %v3877
        %v4105 = vpop.f32.mrf.mxu0
        %v4106 = vadd.f32 0.0, %v4105
        %v4107 = vpop.f32.mrf.mxu0
        %v4108 = vadd.f32 0.0, %v4107
        %4109 = vmatmul.bf16.gmra.mxu0 %v3880
        %v4110 = vpop.f32.mrf.mxu0
        %v4111 = vadd.f32 0.0, %v4110
        %v4112 = vpop.f32.mrf.mxu0
        %v4113 = vadd.f32 0.0, %v4112
        %4114 = vmatmul.bf16.gmra.mxu0 %v3883
        %v4115 = vpop.f32.mrf.mxu0
        %v4116 = vadd.f32 0.0, %v4115
        %v4117 = vpop.f32.mrf.mxu0
        %v4118 = vadd.f32 0.0, %v4117
        %4119 = vmatmul.bf16.gmra.mxu0 %v3886
        %v4120 = vpop.f32.mrf.mxu0
        %v4121 = vadd.f32 0.0, %v4120
        %v4122 = vpop.f32.mrf.mxu0
        %v4123 = vadd.f32 0.0, %v4122
        %4124 = vmatmul.bf16.gmra.mxu0 %v3889
        %v4125 = vpop.f32.mrf.mxu0
        %v4126 = vadd.f32 0.0, %v4125
        %v4127 = vpop.f32.mrf.mxu0
        %v4128 = vadd.f32 0.0, %v4127
        %4129 = vmatmul.bf16.gmra.mxu0 %v3892
        %v4130 = vpop.f32.mrf.mxu0
        %v4131 = vadd.f32 0.0, %v4130
        %v4132 = vpop.f32.mrf.mxu0
        %v4133 = vadd.f32 0.0, %v4132
        %4134 = vmatmul.bf16.gmra.mxu0 %v3895
        %v4135 = vpop.f32.mrf.mxu0
        %v4136 = vadd.f32 0.0, %v4135
        %v4137 = vpop.f32.mrf.mxu0
        %v4138 = vadd.f32 0.0, %v4137
        %4139 = vmatmul.bf16.gmra.mxu0 %v3898
        %v4140 = vpop.f32.mrf.mxu0
        %v4141 = vadd.f32 0.0, %v4140
        %v4142 = vpop.f32.mrf.mxu0
        %v4143 = vadd.f32 0.0, %v4142
        %4144 = vmatmul.bf16.gmra.mxu0 %v3901
        %v4145 = vpop.f32.mrf.mxu0
        %v4146 = vadd.f32 0.0, %v4145
        %v4147 = vpop.f32.mrf.mxu0
        %v4148 = vadd.f32 0.0, %v4147
        %4149 = vmatmul.bf16.gmra.mxu0 %v3904
        %v4150 = vpop.f32.mrf.mxu0
        %v4151 = vadd.f32 0.0, %v4150
        %v4152 = vpop.f32.mrf.mxu0
        %v4153 = vadd.f32 0.0, %v4152
        %4154 = vmatmul.bf16.gmra.mxu0 %v3907
        %v4155 = vpop.f32.mrf.mxu0
        %v4156 = vadd.f32 0.0, %v4155
        %v4157 = vpop.f32.mrf.mxu0
        %v4158 = vadd.f32 0.0, %v4157
        %4159 = vmatmul.bf16.gmra.mxu0 %v3910
        %v4160 = vpop.f32.mrf.mxu0
        %v4161 = vadd.f32 0.0, %v4160
        %v4162 = vpop.f32.mrf.mxu0
        %v4163 = vadd.f32 0.0, %v4162
        %4164 = vmatmul.bf16.gmra.mxu0 %v3913
        %v4165 = vpop.f32.mrf.mxu0
        %v4166 = vadd.f32 0.0, %v4165
        %v4167 = vpop.f32.mrf.mxu0
        %v4168 = vadd.f32 0.0, %v4167
        %4169 = vmatmul.bf16.gmra.mxu0 %v3916
        %v4170 = vpop.f32.mrf.mxu0
        %v4171 = vadd.f32 0.0, %v4170
        %v4172 = vpop.f32.mrf.mxu0
        %v4173 = vadd.f32 0.0, %v4172
        %4174 = vmatmul.bf16.gmra.mxu0 %v3919
        %v4175 = vpop.f32.mrf.mxu0
        %v4176 = vadd.f32 0.0, %v4175
        %v4177 = vpop.f32.mrf.mxu0
        %v4178 = vadd.f32 0.0, %v4177
        %4179 = vmatmul.bf16.gmra.mxu0 %v3922
        %v4180 = vpop.f32.mrf.mxu0
        %v4181 = vadd.f32 0.0, %v4180
        %v4182 = vpop.f32.mrf.mxu0
        %v4183 = vadd.f32 0.0, %v4182
        %4184 = vmatmul.bf16.gmra.mxu0 %v3925
        %v4185 = vpop.f32.mrf.mxu0
        %v4186 = vadd.f32 0.0, %v4185
        %v4187 = vpop.f32.mrf.mxu0
        %v4188 = vadd.f32 0.0, %v4187
        %4189 = vmatmul.bf16.gmra.mxu0 %v3928
        %v4190 = vpop.f32.mrf.mxu0
        %v4191 = vadd.f32 0.0, %v4190
        %v4192 = vpop.f32.mrf.mxu0
        %v4193 = vadd.f32 0.0, %v4192
        %4194 = vmatmul.bf16.gmra.mxu0 %v3931
        %v4195 = vpop.f32.mrf.mxu0
        %v4196 = vadd.f32 0.0, %v4195
        %v4197 = vpop.f32.mrf.mxu0
        %v4198 = vadd.f32 0.0, %v4197
        %4199 = vmatmul.bf16.gmra.mxu0 %v3934
        %v4200 = vpop.f32.mrf.mxu0
        %v4201 = vadd.f32 0.0, %v4200
        %v4202 = vpop.f32.mrf.mxu0
        %v4203 = vadd.f32 0.0, %v4202
        %4204 = vmatmul.bf16.gmra.mxu0 %v3937
        %v4205 = vpop.f32.mrf.mxu0
        %v4206 = vadd.f32 0.0, %v4205
        %v4207 = vpop.f32.mrf.mxu0
        %v4208 = vadd.f32 0.0, %v4207
        %4209 = vmatmul.bf16.gmra.mxu0 %v3940
        %v4210 = vpop.f32.mrf.mxu0
        %v4211 = vadd.f32 0.0, %v4210
        %v4212 = vpop.f32.mrf.mxu0
        %v4213 = vadd.f32 0.0, %v4212
        %4214 = vmatmul.bf16.gmra.mxu0 %v3943
        %v4215 = vpop.f32.mrf.mxu0
        %v4216 = vadd.f32 0.0, %v4215
        %v4217 = vpop.f32.mrf.mxu0
        %v4218 = vadd.f32 0.0, %v4217
        %4219 = vmatmul.bf16.gmra.mxu0 %v3946
        %v4220 = vpop.f32.mrf.mxu0
        %v4221 = vadd.f32 0.0, %v4220
        %v4222 = vpop.f32.mrf.mxu0
        %v4223 = vadd.f32 0.0, %v4222
        %4224 = vmatmul.bf16.gmra.mxu0 %v3949
        %v4225 = vpop.f32.mrf.mxu0
        %v4226 = vadd.f32 0.0, %v4225
        %v4227 = vpop.f32.mrf.mxu0
        %v4228 = vadd.f32 0.0, %v4227
        %4229 = vmatmul.bf16.gmra.mxu0 %v3952
        %v4230 = vpop.f32.mrf.mxu0
        %v4231 = vadd.f32 0.0, %v4230
        %v4232 = vpop.f32.mrf.mxu0
        %v4233 = vadd.f32 0.0, %v4232
        %4234 = vmatmul.bf16.gmra.mxu0 %v3955
        %v4235 = vpop.f32.mrf.mxu0
        %v4236 = vadd.f32 0.0, %v4235
        %v4237 = vpop.f32.mrf.mxu0
        %v4238 = vadd.f32 0.0, %v4237
        %4239 = vmatmul.bf16.gmra.mxu0 %v3958
        %v4240 = vpop.f32.mrf.mxu0
        %v4241 = vadd.f32 0.0, %v4240
        %v4242 = vpop.f32.mrf.mxu0
        %v4243 = vadd.f32 0.0, %v4242
        %4244 = vmatmul.bf16.gmra.mxu0 %v3961
        %v4245 = vpop.f32.mrf.mxu0
        %v4246 = vadd.f32 0.0, %v4245
        %v4247 = vpop.f32.mrf.mxu0
        %v4248 = vadd.f32 0.0, %v4247
        %4249 = vmatmul.bf16.gmra.mxu0 %v3964
        %v4250 = vpop.f32.mrf.mxu0
        %v4251 = vadd.f32 0.0, %v4250
        %v4252 = vpop.f32.mrf.mxu0
        %v4253 = vadd.f32 0.0, %v4252
        %4254 = vmatmul.bf16.gmra.mxu0 %v3967
        %v4255 = vpop.f32.mrf.mxu0
        %v4256 = vadd.f32 0.0, %v4255
        %v4257 = vpop.f32.mrf.mxu0
        %v4258 = vadd.f32 0.0, %v4257
        %4259 = vmatmul.bf16.gmra.mxu0 %v3970
        %v4260 = vpop.f32.mrf.mxu0
        %v4261 = vadd.f32 0.0, %v4260
        %v4262 = vpop.f32.mrf.mxu0
        %v4263 = vadd.f32 0.0, %v4262
        %4264 = vmatmul.bf16.gmra.mxu0 %v3973
        %v4265 = vpop.f32.mrf.mxu0
        %v4266 = vadd.f32 0.0, %v4265
        %v4267 = vpop.f32.mrf.mxu0
        %v4268 = vadd.f32 0.0, %v4267
        %4269 = vmatmul.bf16.gmra.mxu0 %v3976
        %v4270 = vpop.f32.mrf.mxu0
        %v4271 = vadd.f32 0.0, %v4270
        %v4272 = vpop.f32.mrf.mxu0
        %v4273 = vadd.f32 0.0, %v4272
        %4274 = vmatmul.bf16.gmra.mxu0 %v3979
        %v4275 = vpop.f32.mrf.mxu0
        %v4276 = vadd.f32 0.0, %v4275
        %v4277 = vpop.f32.mrf.mxu0
        %v4278 = vadd.f32 0.0, %v4277
        %4279 = vmatmul.bf16.gmra.mxu0 %v3982
        %v4280 = vpop.f32.mrf.mxu0
        %v4281 = vadd.f32 0.0, %v4280
        %v4282 = vpop.f32.mrf.mxu0
        %v4283 = vadd.f32 0.0, %v4282
        %4284 = vmatmul.bf16.gmra.mxu0 %v3985
        %v4285 = vpop.f32.mrf.mxu0
        %v4286 = vadd.f32 0.0, %v4285
        %v4287 = vpop.f32.mrf.mxu0
        %v4288 = vadd.f32 0.0, %v4287
        %4289 = vmatmul.bf16.gmra.mxu0 %v3988
        %v4290 = vpop.f32.mrf.mxu0
        %v4291 = vadd.f32 0.0, %v4290
        %v4292 = vpop.f32.mrf.mxu0
        %v4293 = vadd.f32 0.0, %v4292
        %4294 = vmatmul.bf16.gmra.mxu0 %v3991
        %v4295 = vpop.f32.mrf.mxu0
        %v4296 = vadd.f32 0.0, %v4295
        %v4297 = vpop.f32.mrf.mxu0
        %v4298 = vadd.f32 0.0, %v4297
        %4299 = vmatmul.bf16.gmra.mxu0 %v3994
        %v4300 = vpop.f32.mrf.mxu0
        %v4301 = vadd.f32 0.0, %v4300
        %v4302 = vpop.f32.mrf.mxu0
        %v4303 = vadd.f32 0.0, %v4302
        %4304 = vmatmul.bf16.gmra.mxu0 %v3997
        %v4305 = vpop.f32.mrf.mxu0
        %v4306 = vadd.f32 0.0, %v4305
        %v4307 = vpop.f32.mrf.mxu0
        %v4308 = vadd.f32 0.0, %v4307
        %4309 = vmatmul.bf16.gmra.mxu0 %v4000
        %v4310 = vpop.f32.mrf.mxu0
        %v4311 = vadd.f32 0.0, %v4310
        %v4312 = vpop.f32.mrf.mxu0
        %v4313 = vadd.f32 0.0, %v4312
        %4314 = vmatmul.bf16.gmra.mxu0 %v4003
        %v4315 = vpop.f32.mrf.mxu0
        %v4316 = vadd.f32 0.0, %v4315
        %v4317 = vpop.f32.mrf.mxu0
        %v4318 = vadd.f32 0.0, %v4317
        %4319 = vmatmul.bf16.gmra.mxu0 %v4006
        %v4320 = vpop.f32.mrf.mxu0
        %v4321 = vadd.f32 0.0, %v4320
        %v4322 = vpop.f32.mrf.mxu0
        %v4323 = vadd.f32 0.0, %v4322
        %4324 = vmatmul.bf16.gmra.mxu0 %v4009
        %v4325 = vpop.f32.mrf.mxu0
        %v4326 = vadd.f32 0.0, %v4325
        %v4327 = vpop.f32.mrf.mxu0
        %v4328 = vadd.f32 0.0, %v4327
        %4329 = vmatmul.bf16.gmra.mxu0 %v4012
        %v4330 = vpop.f32.mrf.mxu0
        %v4331 = vadd.f32 0.0, %v4330
        %v4332 = vpop.f32.mrf.mxu0
        %v4333 = vadd.f32 0.0, %v4332
        %4334 = vmatmul.bf16.gmra.mxu0 %v4015
        %v4335 = vpop.f32.mrf.mxu0
        %v4336 = vadd.f32 0.0, %v4335
        %v4337 = vpop.f32.mrf.mxu0
        %v4338 = vadd.f32 0.0, %v4337
        %4339 = vmatmul.bf16.gmra.mxu0 %v4018
        %v4340 = vpop.f32.mrf.mxu0
        %v4341 = vadd.f32 0.0, %v4340
        %v4342 = vpop.f32.mrf.mxu0
        %v4343 = vadd.f32 0.0, %v4342
        %4344 = vmatmul.bf16.gmra.mxu0 %v4021
        %v4345 = vpop.f32.mrf.mxu0
        %v4346 = vadd.f32 0.0, %v4345
        %v4347 = vpop.f32.mrf.mxu0
        %v4348 = vadd.f32 0.0, %v4347
        %4349 = vmatmul.bf16.gmra.mxu0 %v4024
        %v4350 = vpop.f32.mrf.mxu0
        %v4351 = vadd.f32 0.0, %v4350
        %v4352 = vpop.f32.mrf.mxu0
        %v4353 = vadd.f32 0.0, %v4352
        %4354 = vmatmul.bf16.gmra.mxu0 %v4027
        %v4355 = vpop.f32.mrf.mxu0
        %v4356 = vadd.f32 0.0, %v4355
        %v4357 = vpop.f32.mrf.mxu0
        %v4358 = vadd.f32 0.0, %v4357
        %4359 = vmatmul.bf16.gmra.mxu0 %v4030
        %v4360 = vpop.f32.mrf.mxu0
        %v4361 = vadd.f32 0.0, %v4360
        %v4362 = vpop.f32.mrf.mxu0
        %v4363 = vadd.f32 0.0, %v4362
        %4364 = vmatmul.bf16.gmra.mxu0 %v4033
        %v4365 = vpop.f32.mrf.mxu0
        %v4366 = vadd.f32 0.0, %v4365
        %v4367 = vpop.f32.mrf.mxu0
        %v4368 = vadd.f32 0.0, %v4367
        %4369 = vmatmul.bf16.gmra.mxu0 %v4036
        %v4370 = vpop.f32.mrf.mxu0
        %v4371 = vadd.f32 0.0, %v4370
        %v4372 = vpop.f32.mrf.mxu0
        %v4373 = vadd.f32 0.0, %v4372
        %4374 = vmatmul.bf16.gmra.mxu0 %v4039
        %v4375 = vpop.f32.mrf.mxu0
        %v4376 = vadd.f32 0.0, %v4375
        %v4377 = vpop.f32.mrf.mxu0
        %v4378 = vadd.f32 0.0, %v4377
        %4379 = vmatmul.bf16.gmra.mxu0 %v4042
        %v4380 = vpop.f32.mrf.mxu0
        %v4381 = vadd.f32 0.0, %v4380
        %v4382 = vpop.f32.mrf.mxu0
        %v4383 = vadd.f32 0.0, %v4382
        %4384 = vmatmul.bf16.gmra.mxu0 %v4045
        %v4385 = vpop.f32.mrf.mxu0
        %v4386 = vadd.f32 0.0, %v4385
        %v4387 = vpop.f32.mrf.mxu0
        %v4388 = vadd.f32 0.0, %v4387
        %4389 = vmatmul.bf16.gmra.mxu0 %v4048
        %v4390 = vpop.f32.mrf.mxu0
        %v4391 = vadd.f32 0.0, %v4390
        %v4392 = vpop.f32.mrf.mxu0
        %v4393 = vadd.f32 0.0, %v4392
        %4394 = vmatmul.bf16.gmra.mxu0 %v4051
        %v4395 = vpop.f32.mrf.mxu0
        %v4396 = vadd.f32 0.0, %v4395
        %v4397 = vpop.f32.mrf.mxu0
        %v4398 = vadd.f32 0.0, %v4397
        %4399 = vmatmul.bf16.gmra.mxu0 %v4054
        %v4400 = vpop.f32.mrf.mxu0
        %v4401 = vadd.f32 0.0, %v4400
        %v4402 = vpop.f32.mrf.mxu0
        %v4403 = vadd.f32 0.0, %v4402
        %4404 = vmatmul.bf16.gmra.mxu0 %v4057
        %v4405 = vpop.f32.mrf.mxu0
        %v4406 = vadd.f32 0.0, %v4405
        %v4407 = vpop.f32.mrf.mxu0
        %v4408 = vadd.f32 0.0, %v4407
        %4409 = vmatmul.bf16.gmra.mxu0 %v4060
        %v4410 = vpop.f32.mrf.mxu0
        %v4411 = vadd.f32 0.0, %v4410
        %v4412 = vpop.f32.mrf.mxu0
        %v4413 = vadd.f32 0.0, %v4412
        %4414 = vmatmul.bf16.gmra.mxu0 %v4063
        %v4415 = vpop.f32.mrf.mxu0
        %v4416 = vadd.f32 0.0, %v4415
        %v4417 = vpop.f32.mrf.mxu0
        %v4418 = vadd.f32 0.0, %v4417
        %4419 = vmatmul.bf16.gmra.mxu0 %v4066
        %v4420 = vpop.f32.mrf.mxu0
        %v4421 = vadd.f32 0.0, %v4420
        %v4422 = vpop.f32.mrf.mxu0
        %v4423 = vadd.f32 0.0, %v4422
        %4424 = vmatmul.bf16.gmra.mxu0 %v4069
        %v4425 = vpop.f32.mrf.mxu0
        %v4426 = vadd.f32 0.0, %v4425
        %v4427 = vpop.f32.mrf.mxu0
        %v4428 = vadd.f32 0.0, %v4427
        %4429 = vmatmul.bf16.gmra.mxu0 %v4072
        %v4430 = vpop.f32.mrf.mxu0
        %v4431 = vadd.f32 0.0, %v4430
        %v4432 = vpop.f32.mrf.mxu0
        %v4433 = vadd.f32 0.0, %v4432
        %4434 = vmatmul.bf16.gmra.mxu0 %v4075
        %v4435 = vpop.f32.mrf.mxu0
        %v4436 = vadd.f32 0.0, %v4435
        %v4437 = vpop.f32.mrf.mxu0
        %v4438 = vadd.f32 0.0, %v4437
        %4439 = vmatmul.bf16.gmra.mxu0 %v4078
        %v4440 = vpop.f32.mrf.mxu0
        %v4441 = vadd.f32 0.0, %v4440
        %v4442 = vpop.f32.mrf.mxu0
        %v4443 = vadd.f32 0.0, %v4442
        %4444 = vmatmul.bf16.gmra.mxu0 %v4081
        %v4445 = vpop.f32.mrf.mxu0
        %v4446 = vadd.f32 0.0, %v4445
        %v4447 = vpop.f32.mrf.mxu0
        %v4448 = vadd.f32 0.0, %v4447
        %4449 = vmatmul.bf16.gmra.mxu0 %v4084
        %v4450 = vpop.f32.mrf.mxu0
        %v4451 = vadd.f32 0.0, %v4450
        %v4452 = vpop.f32.mrf.mxu0
        %v4453 = vadd.f32 0.0, %v4452
        %4454 = vdwg.mxu0
        %v4455 = vadd.f32 %v3199, %v4096
        %v4456 = vadd.f32 %v3200, %v4098
        %v4457 = vadd.f32 %v3201, %v4101
        %v4458 = vadd.f32 %v3202, %v4103
        %v4459 = vadd.f32 %v3203, %v4106
        %v4460 = vadd.f32 %v3204, %v4108
        %v4461 = vadd.f32 %v3205, %v4111
        %v4462 = vadd.f32 %v3206, %v4113
        %v4463 = vadd.f32 %v3207, %v4116
        %v4464 = vadd.f32 %v3208, %v4118
        %v4465 = vadd.f32 %v3209, %v4121
        %v4466 = vadd.f32 %v3210, %v4123
        %v4467 = vadd.f32 %v3211, %v4126
        %v4468 = vadd.f32 %v3212, %v4128
        %v4469 = vadd.f32 %v3213, %v4131
        %v4470 = vadd.f32 %v3214, %v4133
        %v4471 = vadd.f32 %v3215, %v4136
        %v4472 = vadd.f32 %v3216, %v4138
        %v4473 = vadd.f32 %v3217, %v4141
        %v4474 = vadd.f32 %v3218, %v4143
        %v4475 = vadd.f32 %v3219, %v4146
        %v4476 = vadd.f32 %v3220, %v4148
        %v4477 = vadd.f32 %v3221, %v4151
        %v4478 = vadd.f32 %v3222, %v4153
        %v4479 = vadd.f32 %v3223, %v4156
        %v4480 = vadd.f32 %v3224, %v4158
        %v4481 = vadd.f32 %v3225, %v4161
        %v4482 = vadd.f32 %v3226, %v4163
        %v4483 = vadd.f32 %v3227, %v4166
        %v4484 = vadd.f32 %v3228, %v4168
        %v4485 = vadd.f32 %v3229, %v4171
        %v4486 = vadd.f32 %v3230, %v4173
        %v4487 = vadd.f32 %v3231, %v4176
        %v4488 = vadd.f32 %v3232, %v4178
        %v4489 = vadd.f32 %v3233, %v4181
        %v4490 = vadd.f32 %v3234, %v4183
        %v4491 = vadd.f32 %v3235, %v4186
        %v4492 = vadd.f32 %v3236, %v4188
        %v4493 = vadd.f32 %v3237, %v4191
        %v4494 = vadd.f32 %v3238, %v4193
        %v4495 = vadd.f32 %v3239, %v4196
        %v4496 = vadd.f32 %v3240, %v4198
        %v4497 = vadd.f32 %v3241, %v4201
        %v4498 = vadd.f32 %v3242, %v4203
        %v4499 = vadd.f32 %v3243, %v4206
        %v4500 = vadd.f32 %v3244, %v4208
        %v4501 = vadd.f32 %v3245, %v4211
        %v4502 = vadd.f32 %v3246, %v4213
        %v4503 = vadd.f32 %v3247, %v4216
        %v4504 = vadd.f32 %v3248, %v4218
        %v4505 = vadd.f32 %v3249, %v4221
        %v4506 = vadd.f32 %v3250, %v4223
        %v4507 = vadd.f32 %v3251, %v4226
        %v4508 = vadd.f32 %v3252, %v4228
        %v4509 = vadd.f32 %v3253, %v4231
        %v4510 = vadd.f32 %v3254, %v4233
        %v4511 = vadd.f32 %v3255, %v4236
        %v4512 = vadd.f32 %v3256, %v4238
        %v4513 = vadd.f32 %v3257, %v4241
        %v4514 = vadd.f32 %v3258, %v4243
        %v4515 = vadd.f32 %v3259, %v4246
        %v4516 = vadd.f32 %v3260, %v4248
        %v4517 = vadd.f32 %v3261, %v4251
        %v4518 = vadd.f32 %v3262, %v4253
        %v4519 = vadd.f32 %v3263, %v4256
        %v4520 = vadd.f32 %v3264, %v4258
        %v4521 = vadd.f32 %v3265, %v4261
        %v4522 = vadd.f32 %v3266, %v4263
        %v4523 = vadd.f32 %v3267, %v4266
        %v4524 = vadd.f32 %v3268, %v4268
        %v4525 = vadd.f32 %v3269, %v4271
        %v4526 = vadd.f32 %v3270, %v4273
        %v4527 = vadd.f32 %v3271, %v4276
        %v4528 = vadd.f32 %v3272, %v4278
        %v4529 = vadd.f32 %v3273, %v4281
        %v4530 = vadd.f32 %v3274, %v4283
        %v4531 = vadd.f32 %v3275, %v4286
        %v4532 = vadd.f32 %v3276, %v4288
        %v4533 = vadd.f32 %v3277, %v4291
        %v4534 = vadd.f32 %v3278, %v4293
        %v4535 = vadd.f32 %v3279, %v4296
        %v4536 = vadd.f32 %v3280, %v4298
        %v4537 = vadd.f32 %v3281, %v4301
        %v4538 = vadd.f32 %v3282, %v4303
        %v4539 = vadd.f32 %v3283, %v4306
        %v4540 = vadd.f32 %v3284, %v4308
        %v4541 = vadd.f32 %v3285, %v4311
        %v4542 = vadd.f32 %v3286, %v4313
        %v4543 = vadd.f32 %v3287, %v4316
        %v4544 = vadd.f32 %v3288, %v4318
        %v4545 = vadd.f32 %v3289, %v4321
        %v4546 = vadd.f32 %v3290, %v4323
        %v4547 = vadd.f32 %v3291, %v4326
        %v4548 = vadd.f32 %v3292, %v4328
        %v4549 = vadd.f32 %v3293, %v4331
        %v4550 = vadd.f32 %v3294, %v4333
        %v4551 = vadd.f32 %v3295, %v4336
        %v4552 = vadd.f32 %v3296, %v4338
        %v4553 = vadd.f32 %v3297, %v4341
        %v4554 = vadd.f32 %v3298, %v4343
        %v4555 = vadd.f32 %v3299, %v4346
        %v4556 = vadd.f32 %v3300, %v4348
        %v4557 = vadd.f32 %v3301, %v4351
        %v4558 = vadd.f32 %v3302, %v4353
        %v4559 = vadd.f32 %v3303, %v4356
        %v4560 = vadd.f32 %v3304, %v4358
        %v4561 = vadd.f32 %v3305, %v4361
        %v4562 = vadd.f32 %v3306, %v4363
        %v4563 = vadd.f32 %v3307, %v4366
        %v4564 = vadd.f32 %v3308, %v4368
        %v4565 = vadd.f32 %v3309, %v4371
        %v4566 = vadd.f32 %v3310, %v4373
        %v4567 = vadd.f32 %v3311, %v4376
        %v4568 = vadd.f32 %v3312, %v4378
        %v4569 = vadd.f32 %v3313, %v4381
        %v4570 = vadd.f32 %v3314, %v4383
        %v4571 = vadd.f32 %v3315, %v4386
        %v4572 = vadd.f32 %v3316, %v4388
        %v4573 = vadd.f32 %v3317, %v4391
        %v4574 = vadd.f32 %v3318, %v4393
        %v4575 = vadd.f32 %v3319, %v4396
        %v4576 = vadd.f32 %v3320, %v4398
        %v4577 = vadd.f32 %v3321, %v4401
        %v4578 = vadd.f32 %v3322, %v4403
        %v4579 = vadd.f32 %v3323, %v4406
        %v4580 = vadd.f32 %v3324, %v4408
        %v4581 = vadd.f32 %v3325, %v4411
        %v4582 = vadd.f32 %v3326, %v4413
        %v4583 = vadd.f32 %v3327, %v4416
        %v4584 = vadd.f32 %v3328, %v4418
        %v4585 = vadd.f32 %v3329, %v4421
        %v4586 = vadd.f32 %v3330, %v4423
        %v4587 = vadd.f32 %v3331, %v4426
        %v4588 = vadd.f32 %v3332, %v4428
        %v4589 = vadd.f32 %v3333, %v4431
        %v4590 = vadd.f32 %v3334, %v4433
        %v4591 = vadd.f32 %v3335, %v4436
        %v4592 = vadd.f32 %v3336, %v4438
        %v4593 = vadd.f32 %v3337, %v4441
        %v4594 = vadd.f32 %v3338, %v4443
        %v4595 = vadd.f32 %v3339, %v4446
        %v4596 = vadd.f32 %v3340, %v4448
        %v4597 = vadd.f32 %v3341, %v4451
        %v4598 = vadd.f32 %v3342, %v4453
        %s4599 = scalar_lea.vmem %s219, 64
        %v4600 = vld [vmem:[%s4599] sm:$0xf]
        %v4601 = vld [vmem:[%s4599 + $0x4] sm:$0xf]
        %v4602 = vld [vmem:[%s4599 + $0x8] sm:$0xf]
        %v4603 = vld [vmem:[%s4599 + $0xc] sm:$0xf]
        %v4605 = vunpack.c.l.b16 %v3492
        %v4606 = vpack.c.b16 %v4605, %v4605
        %v4607 = vshrl.u32 %v3786, 16
        %v4609 = vshll.u32 %v3786, 16
        %v4611 = vrot.slane %v4609, 1
        %v4612 = vor.u32 %v4607, %v4611
        %v4613 = vshll.u32 %v3787, 16
        %v4615 = vrot.slane %v4613, 1
        %v4616 = vsel %vm747, %v4612, %v4615
        %v4617 = vshrl.u32 %v3787, 16
        %v4619 = vor.u32 %v4617, %v4615
        %v4620 = vshll.u32 %v3788, 16
        %v4622 = vrot.slane %v4620, 1
        %v4623 = vsel %vm747, %v4619, %v4622
        %v4624 = vshrl.u32 %v3788, 16
        %v4626 = vor.u32 %v4624, %v4622
        %v4627 = vshll.u32 %v3789, 16
        %v4629 = vrot.slane %v4627, 1
        %v4630 = vsel %vm747, %v4626, %v4629
        %v4631 = vshrl.u32 %v3789, 16
        %v4633 = vor.u32 %v4631, %v4629
        %v4634 = vshll.u32 %v3790, 16
        %v4636 = vrot.slane %v4634, 1
        %v4637 = vsel %vm747, %v4633, %v4636
        %v4638 = vshrl.u32 %v3790, 16
        %v4640 = vor.u32 %v4638, %v4636
        %v4641 = vshll.u32 %v3791, 16
        %v4643 = vrot.slane %v4641, 1
        %v4644 = vsel %vm747, %v4640, %v4643
        %v4645 = vshrl.u32 %v3791, 16
        %v4647 = vor.u32 %v4645, %v4643
        %v4648 = vshll.u32 %v3792, 16
        %v4650 = vrot.slane %v4648, 1
        %v4651 = vsel %vm747, %v4647, %v4650
        %v4652 = vshrl.u32 %v3792, 16
        %v4654 = vor.u32 %v4652, %v4650
        %v4655 = vshll.u32 %v3793, 16
        %v4657 = vrot.slane %v4655, 1
        %v4658 = vsel %vm747, %v4654, %v4657
        %v4659 = vshrl.u32 %v3793, 16
        %v4661 = vor.u32 %v4659, %v4657
        %v4662 = vshll.u32 %v3794, 16
        %v4664 = vrot.slane %v4662, 1
        %v4665 = vsel %vm747, %v4661, %v4664
        %v4666 = vshrl.u32 %v3794, 16
        %v4668 = vor.u32 %v4666, %v4664
        %v4669 = vshll.u32 %v3795, 16
        %v4671 = vrot.slane %v4669, 1
        %v4672 = vsel %vm747, %v4668, %v4671
        %v4673 = vshrl.u32 %v3795, 16
        %v4675 = vor.u32 %v4673, %v4671
        %v4676 = vshll.u32 %v3796, 16
        %v4678 = vrot.slane %v4676, 1
        %v4679 = vsel %vm747, %v4675, %v4678
        %v4680 = vshrl.u32 %v3796, 16
        %v4682 = vor.u32 %v4680, %v4678
        %v4683 = vshll.u32 %v3797, 16
        %v4685 = vrot.slane %v4683, 1
        %v4686 = vsel %vm747, %v4682, %v4685
        %v4687 = vshrl.u32 %v3797, 16
        %v4689 = vor.u32 %v4687, %v4685
        %v4690 = vshll.u32 %v3798, 16
        %v4692 = vrot.slane %v4690, 1
        %v4693 = vsel %vm747, %v4689, %v4692
        %v4694 = vshrl.u32 %v3798, 16
        %v4696 = vor.u32 %v4694, %v4692
        %v4697 = vshll.u32 %v3799, 16
        %v4699 = vrot.slane %v4697, 1
        %v4700 = vsel %vm747, %v4696, %v4699
        %v4701 = vshrl.u32 %v3799, 16
        %v4703 = vor.u32 %v4701, %v4699
        %v4704 = vshll.u32 %v3800, 16
        %v4706 = vrot.slane %v4704, 1
        %v4707 = vsel %vm747, %v4703, %v4706
        %v4708 = vshrl.u32 %v3800, 16
        %v4710 = vor.u32 %v4708, %v4706
        %v4711 = vshll.u32 %v3801, 16
        %v4713 = vrot.slane %v4711, 1
        %v4714 = vsel %vm747, %v4710, %v4713
        %v4715 = vshrl.u32 %v3801, 16
        %v4717 = vor.u32 %v4715, %v4713
        %v4718 = vshll.u32 %v3802, 16
        %v4720 = vrot.slane %v4718, 1
        %v4721 = vsel %vm747, %v4717, %v4720
        %v4722 = vshrl.u32 %v3802, 16
        %v4724 = vor.u32 %v4722, %v4720
        %v4725 = vshll.u32 %v3803, 16
        %v4727 = vrot.slane %v4725, 1
        %v4728 = vsel %vm747, %v4724, %v4727
        %v4729 = vshrl.u32 %v3803, 16
        %v4731 = vor.u32 %v4729, %v4727
        %v4732 = vshll.u32 %v3804, 16
        %v4734 = vrot.slane %v4732, 1
        %v4735 = vsel %vm747, %v4731, %v4734
        %v4736 = vshrl.u32 %v3804, 16
        %v4738 = vor.u32 %v4736, %v4734
        %v4739 = vshll.u32 %v3805, 16
        %v4741 = vrot.slane %v4739, 1
        %v4742 = vsel %vm747, %v4738, %v4741
        %v4743 = vshrl.u32 %v3805, 16
        %v4745 = vor.u32 %v4743, %v4741
        %v4746 = vshll.u32 %v3806, 16
        %v4748 = vrot.slane %v4746, 1
        %v4749 = vsel %vm747, %v4745, %v4748
        %v4750 = vshrl.u32 %v3806, 16
        %v4752 = vor.u32 %v4750, %v4748
        %v4753 = vshll.u32 %v3807, 16
        %v4755 = vrot.slane %v4753, 1
        %v4756 = vsel %vm747, %v4752, %v4755
        %v4757 = vshrl.u32 %v3807, 16
        %v4759 = vor.u32 %v4757, %v4755
        %v4760 = vshll.u32 %v3808, 16
        %v4762 = vrot.slane %v4760, 1
        %v4763 = vsel %vm747, %v4759, %v4762
        %v4764 = vshrl.u32 %v3808, 16
        %v4766 = vor.u32 %v4764, %v4762
        %v4767 = vshll.u32 %v3809, 16
        %v4769 = vrot.slane %v4767, 1
        %v4770 = vsel %vm747, %v4766, %v4769
        %v4771 = vshrl.u32 %v3809, 16
        %v4773 = vor.u32 %v4771, %v4769
        %v4774 = vshll.u32 %v3810, 16
        %v4776 = vrot.slane %v4774, 1
        %v4777 = vsel %vm747, %v4773, %v4776
        %v4778 = vshrl.u32 %v3810, 16
        %v4780 = vor.u32 %v4778, %v4776
        %v4781 = vshll.u32 %v3811, 16
        %v4783 = vrot.slane %v4781, 1
        %v4784 = vsel %vm747, %v4780, %v4783
        %v4785 = vshrl.u32 %v3811, 16
        %v4787 = vor.u32 %v4785, %v4783
        %v4788 = vshll.u32 %v3812, 16
        %v4790 = vrot.slane %v4788, 1
        %v4791 = vsel %vm747, %v4787, %v4790
        %v4792 = vshrl.u32 %v3812, 16
        %v4794 = vor.u32 %v4792, %v4790
        %v4795 = vshll.u32 %v3813, 16
        %v4797 = vrot.slane %v4795, 1
        %v4798 = vsel %vm747, %v4794, %v4797
        %v4799 = vshrl.u32 %v3813, 16
        %v4801 = vor.u32 %v4799, %v4797
        %v4802 = vshll.u32 %v3814, 16
        %v4804 = vrot.slane %v4802, 1
        %v4805 = vsel %vm747, %v4801, %v4804
        %v4806 = vshrl.u32 %v3814, 16
        %v4808 = vor.u32 %v4806, %v4804
        %v4809 = vshll.u32 %v3815, 16
        %v4811 = vrot.slane %v4809, 1
        %v4812 = vsel %vm747, %v4808, %v4811
        %v4813 = vshrl.u32 %v3815, 16
        %v4815 = vor.u32 %v4813, %v4811
        %v4816 = vshll.u32 %v3816, 16
        %v4818 = vrot.slane %v4816, 1
        %v4819 = vsel %vm747, %v4815, %v4818
        %v4820 = vshrl.u32 %v3816, 16
        %v4822 = vor.u32 %v4820, %v4818
        %v4823 = vshll.u32 %v3817, 16
        %v4825 = vrot.slane %v4823, 1
        %v4826 = vsel %vm747, %v4822, %v4825
        %v4827 = vshrl.u32 %v3817, 16
        %v4829 = vor.u32 %v4827, %v4825
        %v4830 = vshll.u32 %v3818, 16
        %v4832 = vrot.slane %v4830, 1
        %v4833 = vsel %vm747, %v4829, %v4832
        %v4834 = vshrl.u32 %v3818, 16
        %v4836 = vor.u32 %v4834, %v4832
        %v4837 = vshll.u32 %v3819, 16
        %v4839 = vrot.slane %v4837, 1
        %v4840 = vsel %vm747, %v4836, %v4839
        %v4841 = vshrl.u32 %v3819, 16
        %v4843 = vor.u32 %v4841, %v4839
        %v4844 = vshll.u32 %v3820, 16
        %v4846 = vrot.slane %v4844, 1
        %v4847 = vsel %vm747, %v4843, %v4846
        %v4848 = vshrl.u32 %v3820, 16
        %v4850 = vor.u32 %v4848, %v4846
        %v4851 = vshll.u32 %v3821, 16
        %v4853 = vrot.slane %v4851, 1
        %v4854 = vsel %vm747, %v4850, %v4853
        %v4855 = vshrl.u32 %v3821, 16
        %v4857 = vor.u32 %v4855, %v4853
        %v4858 = vshll.u32 %v3822, 16
        %v4860 = vrot.slane %v4858, 1
        %v4861 = vsel %vm747, %v4857, %v4860
        %v4862 = vshrl.u32 %v3822, 16
        %v4864 = vor.u32 %v4862, %v4860
        %v4865 = vshll.u32 %v3823, 16
        %v4867 = vrot.slane %v4865, 1
        %v4868 = vsel %vm747, %v4864, %v4867
        %v4869 = vshrl.u32 %v3823, 16
        %v4871 = vor.u32 %v4869, %v4867
        %v4872 = vshll.u32 %v3824, 16
        %v4874 = vrot.slane %v4872, 1
        %v4875 = vsel %vm747, %v4871, %v4874
        %v4876 = vshrl.u32 %v3824, 16
        %v4878 = vor.u32 %v4876, %v4874
        %v4879 = vshll.u32 %v3825, 16
        %v4881 = vrot.slane %v4879, 1
        %v4882 = vsel %vm747, %v4878, %v4881
        %v4883 = vshrl.u32 %v3825, 16
        %v4885 = vor.u32 %v4883, %v4881
        %v4886 = vshll.u32 %v3826, 16
        %v4888 = vrot.slane %v4886, 1
        %v4889 = vsel %vm747, %v4885, %v4888
        %v4890 = vshrl.u32 %v3826, 16
        %v4892 = vor.u32 %v4890, %v4888
        %v4893 = vshll.u32 %v3827, 16
        %v4895 = vrot.slane %v4893, 1
        %v4896 = vsel %vm747, %v4892, %v4895
        %v4897 = vshrl.u32 %v3827, 16
        %v4899 = vor.u32 %v4897, %v4895
        %v4900 = vshll.u32 %v3828, 16
        %v4902 = vrot.slane %v4900, 1
        %v4903 = vsel %vm747, %v4899, %v4902
        %v4904 = vshrl.u32 %v3828, 16
        %v4906 = vor.u32 %v4904, %v4902
        %v4907 = vshll.u32 %v3829, 16
        %v4909 = vrot.slane %v4907, 1
        %v4910 = vsel %vm747, %v4906, %v4909
        %v4911 = vshrl.u32 %v3829, 16
        %v4913 = vor.u32 %v4911, %v4909
        %v4914 = vshll.u32 %v3830, 16
        %v4916 = vrot.slane %v4914, 1
        %v4917 = vsel %vm747, %v4913, %v4916
        %v4918 = vshrl.u32 %v3830, 16
        %v4920 = vor.u32 %v4918, %v4916
        %v4921 = vshll.u32 %v3831, 16
        %v4923 = vrot.slane %v4921, 1
        %v4924 = vsel %vm747, %v4920, %v4923
        %v4925 = vshrl.u32 %v3831, 16
        %v4927 = vor.u32 %v4925, %v4923
        %v4928 = vshll.u32 %v3832, 16
        %v4930 = vrot.slane %v4928, 1
        %v4931 = vsel %vm747, %v4927, %v4930
        %v4932 = vshrl.u32 %v3832, 16
        %v4934 = vor.u32 %v4932, %v4930
        %v4935 = vshll.u32 %v3833, 16
        %v4937 = vrot.slane %v4935, 1
        %v4938 = vsel %vm747, %v4934, %v4937
        %v4939 = vshrl.u32 %v3833, 16
        %v4941 = vor.u32 %v4939, %v4937
        %v4942 = vshll.u32 %v3834, 16
        %v4944 = vrot.slane %v4942, 1
        %v4945 = vsel %vm747, %v4941, %v4944
        %v4946 = vshrl.u32 %v3834, 16
        %v4948 = vor.u32 %v4946, %v4944
        %v4949 = vshll.u32 %v3835, 16
        %v4951 = vrot.slane %v4949, 1
        %v4952 = vsel %vm747, %v4948, %v4951
        %v4953 = vshrl.u32 %v3835, 16
        %v4955 = vor.u32 %v4953, %v4951
        %v4956 = vshll.u32 %v3836, 16
        %v4958 = vrot.slane %v4956, 1
        %v4959 = vsel %vm747, %v4955, %v4958
        %v4960 = vshrl.u32 %v3836, 16
        %v4962 = vor.u32 %v4960, %v4958
        %v4963 = vshll.u32 %v3837, 16
        %v4965 = vrot.slane %v4963, 1
        %v4966 = vsel %vm747, %v4962, %v4965
        %v4967 = vshrl.u32 %v3837, 16
        %v4969 = vor.u32 %v4967, %v4965
        %v4970 = vshll.u32 %v3838, 16
        %v4972 = vrot.slane %v4970, 1
        %v4973 = vsel %vm747, %v4969, %v4972
        %v4974 = vshrl.u32 %v3838, 16
        %v4976 = vor.u32 %v4974, %v4972
        %v4977 = vshll.u32 %v3839, 16
        %v4979 = vrot.slane %v4977, 1
        %v4980 = vsel %vm747, %v4976, %v4979
        %v4981 = vshrl.u32 %v3839, 16
        %v4983 = vor.u32 %v4981, %v4979
        %v4984 = vshll.u32 %v3840, 16
        %v4986 = vrot.slane %v4984, 1
        %v4987 = vsel %vm747, %v4983, %v4986
        %v4988 = vshrl.u32 %v3840, 16
        %v4990 = vor.u32 %v4988, %v4986
        %v4991 = vshll.u32 %v3841, 16
        %v4993 = vrot.slane %v4991, 1
        %v4994 = vsel %vm747, %v4990, %v4993
        %v4995 = vshrl.u32 %v3841, 16
        %v4997 = vor.u32 %v4995, %v4993
        %v4998 = vshll.u32 %v3842, 16
        %v5000 = vrot.slane %v4998, 1
        %v5001 = vsel %vm747, %v4997, %v5000
        %v5002 = vshrl.u32 %v3842, 16
        %v5004 = vor.u32 %v5002, %v5000
        %v5005 = vshll.u32 %v3843, 16
        %v5007 = vrot.slane %v5005, 1
        %v5008 = vsel %vm747, %v5004, %v5007
        %v5009 = vshrl.u32 %v3843, 16
        %v5011 = vor.u32 %v5009, %v5007
        %v5012 = vshll.u32 %v3844, 16
        %v5014 = vrot.slane %v5012, 1
        %v5015 = vsel %vm747, %v5011, %v5014
        %v5016 = vshrl.u32 %v3844, 16
        %v5018 = vor.u32 %v5016, %v5014
        %v5019 = vshll.u32 %v3845, 16
        %v5021 = vrot.slane %v5019, 1
        %v5022 = vsel %vm747, %v5018, %v5021
        %v5023 = vshrl.u32 %v3845, 16
        %v5025 = vor.u32 %v5023, %v5021
        %v5026 = vshll.u32 %v3846, 16
        %v5028 = vrot.slane %v5026, 1
        %v5029 = vsel %vm747, %v5025, %v5028
        %v5030 = vshrl.u32 %v3846, 16
        %v5032 = vor.u32 %v5030, %v5028
        %v5033 = vshll.u32 %v3847, 16
        %v5035 = vrot.slane %v5033, 1
        %v5036 = vsel %vm747, %v5032, %v5035
        %v5037 = vshrl.u32 %v3847, 16
        %v5039 = vor.u32 %v5037, %v5035
        %v5040 = vshll.u32 %v3848, 16
        %v5042 = vrot.slane %v5040, 1
        %v5043 = vsel %vm747, %v5039, %v5042
        %v5044 = vshrl.u32 %v3848, 16
        %v5046 = vor.u32 %v5044, %v5042
        %v5047 = vshll.u32 %v3849, 16
        %v5049 = vrot.slane %v5047, 1
        %v5050 = vsel %vm747, %v5046, %v5049
        %v5051 = vshrl.u32 %v3849, 16
        %v5053 = vor.u32 %v5051, %v5049
        %v5054 = vshll.u32 %v3850, 16
        %v5056 = vrot.slane %v5054, 1
        %v5057 = vsel %vm747, %v5053, %v5056
        %v5058 = vshrl.u32 %v3850, 16
        %v5060 = vor.u32 %v5058, %v5056
        %v5061 = vshll.u32 %v3851, 16
        %v5063 = vrot.slane %v5061, 1
        %v5064 = vsel %vm747, %v5060, %v5063
        %v5065 = vshrl.u32 %v3851, 16
        %v5067 = vor.u32 %v5065, %v5063
        %v5068 = vshll.u32 %v3852, 16
        %v5070 = vrot.slane %v5068, 1
        %v5071 = vsel %vm747, %v5067, %v5070
        %v5072 = vshrl.u32 %v3852, 16
        %v5074 = vor.u32 %v5072, %v5070
        %v5075 = vshll.u32 %v3853, 16
        %v5077 = vrot.slane %v5075, 1
        %v5078 = vsel %vm747, %v5074, %v5077
        %v5079 = vshrl.u32 %v3853, 16
        %v5081 = vor.u32 %v5079, %v5077
        %v5082 = vshll.u32 %v3854, 16
        %v5084 = vrot.slane %v5082, 1
        %v5085 = vsel %vm747, %v5081, %v5084
        %v5086 = vshrl.u32 %v3854, 16
        %v5088 = vor.u32 %v5086, %v5084
        %v5089 = vshll.u32 %v3855, 16
        %v5091 = vrot.slane %v5089, 1
        %v5092 = vsel %vm747, %v5088, %v5091
        %v5093 = vshrl.u32 %v3855, 16
        %v5095 = vor.u32 %v5093, %v5091
        %v5096 = vshll.u32 %v3856, 16
        %v5098 = vrot.slane %v5096, 1
        %v5099 = vsel %vm747, %v5095, %v5098
        %v5100 = vshrl.u32 %v3856, 16
        %v5102 = vor.u32 %v5100, %v5098
        %v5103 = vshll.u32 %v3857, 16
        %v5105 = vrot.slane %v5103, 1
        %v5106 = vsel %vm747, %v5102, %v5105
        %v5107 = vshrl.u32 %v3857, 16
        %v5109 = vor.u32 %v5107, %v5105
        %v5111 = vshll.u32 %v4606, 16
        %v5113 = vrot.slane %v5111, 1
        %v5114 = vsel %vm747, %v5109, %v5113
        %v5119 = vunpack.c.l.b16 %v4600
        %v5120 = vunpack.c.l.b16 %v4601
        %v5121 = vunpack.c.l.b16 %v4602
        %v5122 = vunpack.c.l.b16 %v4603
        %v5123 = vpack.c.b16 %v5120, %v5119
        %v5124 = vpack.c.b16 %v5122, %v5121
        %v5128 = vsel %vm1340, %v4616, 0
        %v5131 = vsel %vm1340, %v4623, 0
        %v5134 = vsel %vm1340, %v4630, 0
        %v5137 = vsel %vm1340, %v4637, 0
        %v5140 = vsel %vm1340, %v4644, 0
        %v5143 = vsel %vm1340, %v4651, 0
        %v5146 = vsel %vm1340, %v4658, 0
        %v5149 = vsel %vm1340, %v4665, 0
        %v5152 = vsel %vm1340, %v4672, 0
        %v5155 = vsel %vm1340, %v4679, 0
        %v5158 = vsel %vm1340, %v4686, 0
        %v5161 = vsel %vm1340, %v4693, 0
        %v5164 = vsel %vm1340, %v4700, 0
        %v5167 = vsel %vm1340, %v4707, 0
        %v5170 = vsel %vm1340, %v4714, 0
        %v5173 = vsel %vm1340, %v4721, 0
        %v5176 = vsel %vm1340, %v4728, 0
        %v5179 = vsel %vm1340, %v4735, 0
        %v5182 = vsel %vm1340, %v4742, 0
        %v5185 = vsel %vm1340, %v4749, 0
        %v5188 = vsel %vm1340, %v4756, 0
        %v5191 = vsel %vm1340, %v4763, 0
        %v5194 = vsel %vm1340, %v4770, 0
        %v5197 = vsel %vm1340, %v4777, 0
        %v5200 = vsel %vm1340, %v4784, 0
        %v5203 = vsel %vm1340, %v4791, 0
        %v5206 = vsel %vm1340, %v4798, 0
        %v5209 = vsel %vm1340, %v4805, 0
        %v5212 = vsel %vm1340, %v4812, 0
        %v5215 = vsel %vm1340, %v4819, 0
        %v5218 = vsel %vm1340, %v4826, 0
        %v5221 = vsel %vm1340, %v4833, 0
        %v5224 = vsel %vm1340, %v4840, 0
        %v5227 = vsel %vm1340, %v4847, 0
        %v5230 = vsel %vm1340, %v4854, 0
        %v5233 = vsel %vm1340, %v4861, 0
        %v5236 = vsel %vm1340, %v4868, 0
        %v5239 = vsel %vm1340, %v4875, 0
        %v5242 = vsel %vm1340, %v4882, 0
        %v5245 = vsel %vm1340, %v4889, 0
        %v5248 = vsel %vm1340, %v4896, 0
        %v5251 = vsel %vm1340, %v4903, 0
        %v5254 = vsel %vm1340, %v4910, 0
        %v5257 = vsel %vm1340, %v4917, 0
        %v5260 = vsel %vm1340, %v4924, 0
        %v5263 = vsel %vm1340, %v4931, 0
        %v5266 = vsel %vm1340, %v4938, 0
        %v5269 = vsel %vm1340, %v4945, 0
        %v5272 = vsel %vm1340, %v4952, 0
        %v5275 = vsel %vm1340, %v4959, 0
        %v5278 = vsel %vm1340, %v4966, 0
        %v5281 = vsel %vm1340, %v4973, 0
        %v5284 = vsel %vm1340, %v4980, 0
        %v5287 = vsel %vm1340, %v4987, 0
        %v5290 = vsel %vm1340, %v4994, 0
        %v5293 = vsel %vm1340, %v5001, 0
        %v5296 = vsel %vm1340, %v5008, 0
        %v5299 = vsel %vm1340, %v5015, 0
        %v5302 = vsel %vm1340, %v5022, 0
        %v5305 = vsel %vm1340, %v5029, 0
        %v5308 = vsel %vm1340, %v5036, 0
        %v5311 = vsel %vm1340, %v5043, 0
        %v5314 = vsel %vm1340, %v5050, 0
        %v5317 = vsel %vm1340, %v5057, 0
        %v5320 = vsel %vm1340, %v5064, 0
        %v5323 = vsel %vm1340, %v5071, 0
        %v5326 = vsel %vm1340, %v5078, 0
        %v5329 = vsel %vm1340, %v5085, 0
        %v5332 = vsel %vm1340, %v5092, 0
        %v5335 = vsel %vm1340, %v5099, 0
        %v5338 = vsel %vm1340, %v5106, 0
        %v5341 = vsel %vm1340, %v5114, 0
        %5343 = vmatpush.bf16.msra.mxu0 0
        %5344 = vmatpush.bf16.msra.mxu0 0
        %5345 = vmatpush.bf16.msra.mxu0 0
        %5346 = vmatpush.bf16.msra.mxu0 0
        %5347 = vmatpush.bf16.msra.mxu0 0
        %5348 = vmatpush.bf16.msra.mxu0 0
        %5349 = vmatpush.bf16.msra.mxu0 %v5124
        %5350 = vmatpush.bf16.msra.mxu0 %v5123
        %5351 = vmatmul.bf16.gmra.mxu0 %v5128
        %v5352 = vpop.f32.mrf.mxu0
        %v5353 = vadd.f32 0.0, %v5352
        %v5354 = vpop.f32.mrf.mxu0
        %v5355 = vadd.f32 0.0, %v5354
        %5356 = vmatmul.bf16.gmra.mxu0 %v5131
        %v5357 = vpop.f32.mrf.mxu0
        %v5358 = vadd.f32 0.0, %v5357
        %v5359 = vpop.f32.mrf.mxu0
        %v5360 = vadd.f32 0.0, %v5359
        %5361 = vmatmul.bf16.gmra.mxu0 %v5134
        %v5362 = vpop.f32.mrf.mxu0
        %v5363 = vadd.f32 0.0, %v5362
        %v5364 = vpop.f32.mrf.mxu0
        %v5365 = vadd.f32 0.0, %v5364
        %5366 = vmatmul.bf16.gmra.mxu0 %v5137
        %v5367 = vpop.f32.mrf.mxu0
        %v5368 = vadd.f32 0.0, %v5367
        %v5369 = vpop.f32.mrf.mxu0
        %v5370 = vadd.f32 0.0, %v5369
        %5371 = vmatmul.bf16.gmra.mxu0 %v5140
        %v5372 = vpop.f32.mrf.mxu0
        %v5373 = vadd.f32 0.0, %v5372
        %v5374 = vpop.f32.mrf.mxu0
        %v5375 = vadd.f32 0.0, %v5374
        %5376 = vmatmul.bf16.gmra.mxu0 %v5143
        %v5377 = vpop.f32.mrf.mxu0
        %v5378 = vadd.f32 0.0, %v5377
        %v5379 = vpop.f32.mrf.mxu0
        %v5380 = vadd.f32 0.0, %v5379
        %5381 = vmatmul.bf16.gmra.mxu0 %v5146
        %v5382 = vpop.f32.mrf.mxu0
        %v5383 = vadd.f32 0.0, %v5382
        %v5384 = vpop.f32.mrf.mxu0
        %v5385 = vadd.f32 0.0, %v5384
        %5386 = vmatmul.bf16.gmra.mxu0 %v5149
        %v5387 = vpop.f32.mrf.mxu0
        %v5388 = vadd.f32 0.0, %v5387
        %v5389 = vpop.f32.mrf.mxu0
        %v5390 = vadd.f32 0.0, %v5389
        %5391 = vmatmul.bf16.gmra.mxu0 %v5152
        %v5392 = vpop.f32.mrf.mxu0
        %v5393 = vadd.f32 0.0, %v5392
        %v5394 = vpop.f32.mrf.mxu0
        %v5395 = vadd.f32 0.0, %v5394
        %5396 = vmatmul.bf16.gmra.mxu0 %v5155
        %v5397 = vpop.f32.mrf.mxu0
        %v5398 = vadd.f32 0.0, %v5397
        %v5399 = vpop.f32.mrf.mxu0
        %v5400 = vadd.f32 0.0, %v5399
        %5401 = vmatmul.bf16.gmra.mxu0 %v5158
        %v5402 = vpop.f32.mrf.mxu0
        %v5403 = vadd.f32 0.0, %v5402
        %v5404 = vpop.f32.mrf.mxu0
        %v5405 = vadd.f32 0.0, %v5404
        %5406 = vmatmul.bf16.gmra.mxu0 %v5161
        %v5407 = vpop.f32.mrf.mxu0
        %v5408 = vadd.f32 0.0, %v5407
        %v5409 = vpop.f32.mrf.mxu0
        %v5410 = vadd.f32 0.0, %v5409
        %5411 = vmatmul.bf16.gmra.mxu0 %v5164
        %v5412 = vpop.f32.mrf.mxu0
        %v5413 = vadd.f32 0.0, %v5412
        %v5414 = vpop.f32.mrf.mxu0
        %v5415 = vadd.f32 0.0, %v5414
        %5416 = vmatmul.bf16.gmra.mxu0 %v5167
        %v5417 = vpop.f32.mrf.mxu0
        %v5418 = vadd.f32 0.0, %v5417
        %v5419 = vpop.f32.mrf.mxu0
        %v5420 = vadd.f32 0.0, %v5419
        %5421 = vmatmul.bf16.gmra.mxu0 %v5170
        %v5422 = vpop.f32.mrf.mxu0
        %v5423 = vadd.f32 0.0, %v5422
        %v5424 = vpop.f32.mrf.mxu0
        %v5425 = vadd.f32 0.0, %v5424
        %5426 = vmatmul.bf16.gmra.mxu0 %v5173
        %v5427 = vpop.f32.mrf.mxu0
        %v5428 = vadd.f32 0.0, %v5427
        %v5429 = vpop.f32.mrf.mxu0
        %v5430 = vadd.f32 0.0, %v5429
        %5431 = vmatmul.bf16.gmra.mxu0 %v5176
        %v5432 = vpop.f32.mrf.mxu0
        %v5433 = vadd.f32 0.0, %v5432
        %v5434 = vpop.f32.mrf.mxu0
        %v5435 = vadd.f32 0.0, %v5434
        %5436 = vmatmul.bf16.gmra.mxu0 %v5179
        %v5437 = vpop.f32.mrf.mxu0
        %v5438 = vadd.f32 0.0, %v5437
        %v5439 = vpop.f32.mrf.mxu0
        %v5440 = vadd.f32 0.0, %v5439
        %5441 = vmatmul.bf16.gmra.mxu0 %v5182
        %v5442 = vpop.f32.mrf.mxu0
        %v5443 = vadd.f32 0.0, %v5442
        %v5444 = vpop.f32.mrf.mxu0
        %v5445 = vadd.f32 0.0, %v5444
        %5446 = vmatmul.bf16.gmra.mxu0 %v5185
        %v5447 = vpop.f32.mrf.mxu0
        %v5448 = vadd.f32 0.0, %v5447
        %v5449 = vpop.f32.mrf.mxu0
        %v5450 = vadd.f32 0.0, %v5449
        %5451 = vmatmul.bf16.gmra.mxu0 %v5188
        %v5452 = vpop.f32.mrf.mxu0
        %v5453 = vadd.f32 0.0, %v5452
        %v5454 = vpop.f32.mrf.mxu0
        %v5455 = vadd.f32 0.0, %v5454
        %5456 = vmatmul.bf16.gmra.mxu0 %v5191
        %v5457 = vpop.f32.mrf.mxu0
        %v5458 = vadd.f32 0.0, %v5457
        %v5459 = vpop.f32.mrf.mxu0
        %v5460 = vadd.f32 0.0, %v5459
        %5461 = vmatmul.bf16.gmra.mxu0 %v5194
        %v5462 = vpop.f32.mrf.mxu0
        %v5463 = vadd.f32 0.0, %v5462
        %v5464 = vpop.f32.mrf.mxu0
        %v5465 = vadd.f32 0.0, %v5464
        %5466 = vmatmul.bf16.gmra.mxu0 %v5197
        %v5467 = vpop.f32.mrf.mxu0
        %v5468 = vadd.f32 0.0, %v5467
        %v5469 = vpop.f32.mrf.mxu0
        %v5470 = vadd.f32 0.0, %v5469
        %5471 = vmatmul.bf16.gmra.mxu0 %v5200
        %v5472 = vpop.f32.mrf.mxu0
        %v5473 = vadd.f32 0.0, %v5472
        %v5474 = vpop.f32.mrf.mxu0
        %v5475 = vadd.f32 0.0, %v5474
        %5476 = vmatmul.bf16.gmra.mxu0 %v5203
        %v5477 = vpop.f32.mrf.mxu0
        %v5478 = vadd.f32 0.0, %v5477
        %v5479 = vpop.f32.mrf.mxu0
        %v5480 = vadd.f32 0.0, %v5479
        %5481 = vmatmul.bf16.gmra.mxu0 %v5206
        %v5482 = vpop.f32.mrf.mxu0
        %v5483 = vadd.f32 0.0, %v5482
        %v5484 = vpop.f32.mrf.mxu0
        %v5485 = vadd.f32 0.0, %v5484
        %5486 = vmatmul.bf16.gmra.mxu0 %v5209
        %v5487 = vpop.f32.mrf.mxu0
        %v5488 = vadd.f32 0.0, %v5487
        %v5489 = vpop.f32.mrf.mxu0
        %v5490 = vadd.f32 0.0, %v5489
        %5491 = vmatmul.bf16.gmra.mxu0 %v5212
        %v5492 = vpop.f32.mrf.mxu0
        %v5493 = vadd.f32 0.0, %v5492
        %v5494 = vpop.f32.mrf.mxu0
        %v5495 = vadd.f32 0.0, %v5494
        %5496 = vmatmul.bf16.gmra.mxu0 %v5215
        %v5497 = vpop.f32.mrf.mxu0
        %v5498 = vadd.f32 0.0, %v5497
        %v5499 = vpop.f32.mrf.mxu0
        %v5500 = vadd.f32 0.0, %v5499
        %5501 = vmatmul.bf16.gmra.mxu0 %v5218
        %v5502 = vpop.f32.mrf.mxu0
        %v5503 = vadd.f32 0.0, %v5502
        %v5504 = vpop.f32.mrf.mxu0
        %v5505 = vadd.f32 0.0, %v5504
        %5506 = vmatmul.bf16.gmra.mxu0 %v5221
        %v5507 = vpop.f32.mrf.mxu0
        %v5508 = vadd.f32 0.0, %v5507
        %v5509 = vpop.f32.mrf.mxu0
        %v5510 = vadd.f32 0.0, %v5509
        %5511 = vmatmul.bf16.gmra.mxu0 %v5224
        %v5512 = vpop.f32.mrf.mxu0
        %v5513 = vadd.f32 0.0, %v5512
        %v5514 = vpop.f32.mrf.mxu0
        %v5515 = vadd.f32 0.0, %v5514
        %5516 = vmatmul.bf16.gmra.mxu0 %v5227
        %v5517 = vpop.f32.mrf.mxu0
        %v5518 = vadd.f32 0.0, %v5517
        %v5519 = vpop.f32.mrf.mxu0
        %v5520 = vadd.f32 0.0, %v5519
        %5521 = vmatmul.bf16.gmra.mxu0 %v5230
        %v5522 = vpop.f32.mrf.mxu0
        %v5523 = vadd.f32 0.0, %v5522
        %v5524 = vpop.f32.mrf.mxu0
        %v5525 = vadd.f32 0.0, %v5524
        %5526 = vmatmul.bf16.gmra.mxu0 %v5233
        %v5527 = vpop.f32.mrf.mxu0
        %v5528 = vadd.f32 0.0, %v5527
        %v5529 = vpop.f32.mrf.mxu0
        %v5530 = vadd.f32 0.0, %v5529
        %5531 = vmatmul.bf16.gmra.mxu0 %v5236
        %v5532 = vpop.f32.mrf.mxu0
        %v5533 = vadd.f32 0.0, %v5532
        %v5534 = vpop.f32.mrf.mxu0
        %v5535 = vadd.f32 0.0, %v5534
        %5536 = vmatmul.bf16.gmra.mxu0 %v5239
        %v5537 = vpop.f32.mrf.mxu0
        %v5538 = vadd.f32 0.0, %v5537
        %v5539 = vpop.f32.mrf.mxu0
        %v5540 = vadd.f32 0.0, %v5539
        %5541 = vmatmul.bf16.gmra.mxu0 %v5242
        %v5542 = vpop.f32.mrf.mxu0
        %v5543 = vadd.f32 0.0, %v5542
        %v5544 = vpop.f32.mrf.mxu0
        %v5545 = vadd.f32 0.0, %v5544
        %5546 = vmatmul.bf16.gmra.mxu0 %v5245
        %v5547 = vpop.f32.mrf.mxu0
        %v5548 = vadd.f32 0.0, %v5547
        %v5549 = vpop.f32.mrf.mxu0
        %v5550 = vadd.f32 0.0, %v5549
        %5551 = vmatmul.bf16.gmra.mxu0 %v5248
        %v5552 = vpop.f32.mrf.mxu0
        %v5553 = vadd.f32 0.0, %v5552
        %v5554 = vpop.f32.mrf.mxu0
        %v5555 = vadd.f32 0.0, %v5554
        %5556 = vmatmul.bf16.gmra.mxu0 %v5251
        %v5557 = vpop.f32.mrf.mxu0
        %v5558 = vadd.f32 0.0, %v5557
        %v5559 = vpop.f32.mrf.mxu0
        %v5560 = vadd.f32 0.0, %v5559
        %5561 = vmatmul.bf16.gmra.mxu0 %v5254
        %v5562 = vpop.f32.mrf.mxu0
        %v5563 = vadd.f32 0.0, %v5562
        %v5564 = vpop.f32.mrf.mxu0
        %v5565 = vadd.f32 0.0, %v5564
        %5566 = vmatmul.bf16.gmra.mxu0 %v5257
        %v5567 = vpop.f32.mrf.mxu0
        %v5568 = vadd.f32 0.0, %v5567
        %v5569 = vpop.f32.mrf.mxu0
        %v5570 = vadd.f32 0.0, %v5569
        %5571 = vmatmul.bf16.gmra.mxu0 %v5260
        %v5572 = vpop.f32.mrf.mxu0
        %v5573 = vadd.f32 0.0, %v5572
        %v5574 = vpop.f32.mrf.mxu0
        %v5575 = vadd.f32 0.0, %v5574
        %5576 = vmatmul.bf16.gmra.mxu0 %v5263
        %v5577 = vpop.f32.mrf.mxu0
        %v5578 = vadd.f32 0.0, %v5577
        %v5579 = vpop.f32.mrf.mxu0
        %v5580 = vadd.f32 0.0, %v5579
        %5581 = vmatmul.bf16.gmra.mxu0 %v5266
        %v5582 = vpop.f32.mrf.mxu0
        %v5583 = vadd.f32 0.0, %v5582
        %v5584 = vpop.f32.mrf.mxu0
        %v5585 = vadd.f32 0.0, %v5584
        %5586 = vmatmul.bf16.gmra.mxu0 %v5269
        %v5587 = vpop.f32.mrf.mxu0
        %v5588 = vadd.f32 0.0, %v5587
        %v5589 = vpop.f32.mrf.mxu0
        %v5590 = vadd.f32 0.0, %v5589
        %5591 = vmatmul.bf16.gmra.mxu0 %v5272
        %v5592 = vpop.f32.mrf.mxu0
        %v5593 = vadd.f32 0.0, %v5592
        %v5594 = vpop.f32.mrf.mxu0
        %v5595 = vadd.f32 0.0, %v5594
        %5596 = vmatmul.bf16.gmra.mxu0 %v5275
        %v5597 = vpop.f32.mrf.mxu0
        %v5598 = vadd.f32 0.0, %v5597
        %v5599 = vpop.f32.mrf.mxu0
        %v5600 = vadd.f32 0.0, %v5599
        %5601 = vmatmul.bf16.gmra.mxu0 %v5278
        %v5602 = vpop.f32.mrf.mxu0
        %v5603 = vadd.f32 0.0, %v5602
        %v5604 = vpop.f32.mrf.mxu0
        %v5605 = vadd.f32 0.0, %v5604
        %5606 = vmatmul.bf16.gmra.mxu0 %v5281
        %v5607 = vpop.f32.mrf.mxu0
        %v5608 = vadd.f32 0.0, %v5607
        %v5609 = vpop.f32.mrf.mxu0
        %v5610 = vadd.f32 0.0, %v5609
        %5611 = vmatmul.bf16.gmra.mxu0 %v5284
        %v5612 = vpop.f32.mrf.mxu0
        %v5613 = vadd.f32 0.0, %v5612
        %v5614 = vpop.f32.mrf.mxu0
        %v5615 = vadd.f32 0.0, %v5614
        %5616 = vmatmul.bf16.gmra.mxu0 %v5287
        %v5617 = vpop.f32.mrf.mxu0
        %v5618 = vadd.f32 0.0, %v5617
        %v5619 = vpop.f32.mrf.mxu0
        %v5620 = vadd.f32 0.0, %v5619
        %5621 = vmatmul.bf16.gmra.mxu0 %v5290
        %v5622 = vpop.f32.mrf.mxu0
        %v5623 = vadd.f32 0.0, %v5622
        %v5624 = vpop.f32.mrf.mxu0
        %v5625 = vadd.f32 0.0, %v5624
        %5626 = vmatmul.bf16.gmra.mxu0 %v5293
        %v5627 = vpop.f32.mrf.mxu0
        %v5628 = vadd.f32 0.0, %v5627
        %v5629 = vpop.f32.mrf.mxu0
        %v5630 = vadd.f32 0.0, %v5629
        %5631 = vmatmul.bf16.gmra.mxu0 %v5296
        %v5632 = vpop.f32.mrf.mxu0
        %v5633 = vadd.f32 0.0, %v5632
        %v5634 = vpop.f32.mrf.mxu0
        %v5635 = vadd.f32 0.0, %v5634
        %5636 = vmatmul.bf16.gmra.mxu0 %v5299
        %v5637 = vpop.f32.mrf.mxu0
        %v5638 = vadd.f32 0.0, %v5637
        %v5639 = vpop.f32.mrf.mxu0
        %v5640 = vadd.f32 0.0, %v5639
        %5641 = vmatmul.bf16.gmra.mxu0 %v5302
        %v5642 = vpop.f32.mrf.mxu0
        %v5643 = vadd.f32 0.0, %v5642
        %v5644 = vpop.f32.mrf.mxu0
        %v5645 = vadd.f32 0.0, %v5644
        %5646 = vmatmul.bf16.gmra.mxu0 %v5305
        %v5647 = vpop.f32.mrf.mxu0
        %v5648 = vadd.f32 0.0, %v5647
        %v5649 = vpop.f32.mrf.mxu0
        %v5650 = vadd.f32 0.0, %v5649
        %5651 = vmatmul.bf16.gmra.mxu0 %v5308
        %v5652 = vpop.f32.mrf.mxu0
        %v5653 = vadd.f32 0.0, %v5652
        %v5654 = vpop.f32.mrf.mxu0
        %v5655 = vadd.f32 0.0, %v5654
        %5656 = vmatmul.bf16.gmra.mxu0 %v5311
        %v5657 = vpop.f32.mrf.mxu0
        %v5658 = vadd.f32 0.0, %v5657
        %v5659 = vpop.f32.mrf.mxu0
        %v5660 = vadd.f32 0.0, %v5659
        %5661 = vmatmul.bf16.gmra.mxu0 %v5314
        %v5662 = vpop.f32.mrf.mxu0
        %v5663 = vadd.f32 0.0, %v5662
        %v5664 = vpop.f32.mrf.mxu0
        %v5665 = vadd.f32 0.0, %v5664
        %5666 = vmatmul.bf16.gmra.mxu0 %v5317
        %v5667 = vpop.f32.mrf.mxu0
        %v5668 = vadd.f32 0.0, %v5667
        %v5669 = vpop.f32.mrf.mxu0
        %v5670 = vadd.f32 0.0, %v5669
        %5671 = vmatmul.bf16.gmra.mxu0 %v5320
        %v5672 = vpop.f32.mrf.mxu0
        %v5673 = vadd.f32 0.0, %v5672
        %v5674 = vpop.f32.mrf.mxu0
        %v5675 = vadd.f32 0.0, %v5674
        %5676 = vmatmul.bf16.gmra.mxu0 %v5323
        %v5677 = vpop.f32.mrf.mxu0
        %v5678 = vadd.f32 0.0, %v5677
        %v5679 = vpop.f32.mrf.mxu0
        %v5680 = vadd.f32 0.0, %v5679
        %5681 = vmatmul.bf16.gmra.mxu0 %v5326
        %v5682 = vpop.f32.mrf.mxu0
        %v5683 = vadd.f32 0.0, %v5682
        %v5684 = vpop.f32.mrf.mxu0
        %v5685 = vadd.f32 0.0, %v5684
        %5686 = vmatmul.bf16.gmra.mxu0 %v5329
        %v5687 = vpop.f32.mrf.mxu0
        %v5688 = vadd.f32 0.0, %v5687
        %v5689 = vpop.f32.mrf.mxu0
        %v5690 = vadd.f32 0.0, %v5689
        %5691 = vmatmul.bf16.gmra.mxu0 %v5332
        %v5692 = vpop.f32.mrf.mxu0
        %v5693 = vadd.f32 0.0, %v5692
        %v5694 = vpop.f32.mrf.mxu0
        %v5695 = vadd.f32 0.0, %v5694
        %5696 = vmatmul.bf16.gmra.mxu0 %v5335
        %v5697 = vpop.f32.mrf.mxu0
        %v5698 = vadd.f32 0.0, %v5697
        %v5699 = vpop.f32.mrf.mxu0
        %v5700 = vadd.f32 0.0, %v5699
        %5701 = vmatmul.bf16.gmra.mxu0 %v5338
        %v5702 = vpop.f32.mrf.mxu0
        %v5703 = vadd.f32 0.0, %v5702
        %v5704 = vpop.f32.mrf.mxu0
        %v5705 = vadd.f32 0.0, %v5704
        %5706 = vmatmul.bf16.gmra.mxu0 %v5341
        %v5707 = vpop.f32.mrf.mxu0
        %v5708 = vadd.f32 0.0, %v5707
        %v5709 = vpop.f32.mrf.mxu0
        %v5710 = vadd.f32 0.0, %v5709
        %5711 = vdwg.mxu0
        %v5712 = vadd.f32 %v4455, %v5353
        %v5713 = vadd.f32 %v4456, %v5355
        %v5714 = vadd.f32 %v4457, %v5358
        %v5715 = vadd.f32 %v4458, %v5360
        %v5716 = vadd.f32 %v4459, %v5363
        %v5717 = vadd.f32 %v4460, %v5365
        %v5718 = vadd.f32 %v4461, %v5368
        %v5719 = vadd.f32 %v4462, %v5370
        %v5720 = vadd.f32 %v4463, %v5373
        %v5721 = vadd.f32 %v4464, %v5375
        %v5722 = vadd.f32 %v4465, %v5378
        %v5723 = vadd.f32 %v4466, %v5380
        %v5724 = vadd.f32 %v4467, %v5383
        %v5725 = vadd.f32 %v4468, %v5385
        %v5726 = vadd.f32 %v4469, %v5388
        %v5727 = vadd.f32 %v4470, %v5390
        %v5728 = vadd.f32 %v4471, %v5393
        %v5729 = vadd.f32 %v4472, %v5395
        %v5730 = vadd.f32 %v4473, %v5398
        %v5731 = vadd.f32 %v4474, %v5400
        %v5732 = vadd.f32 %v4475, %v5403
        %v5733 = vadd.f32 %v4476, %v5405
        %v5734 = vadd.f32 %v4477, %v5408
        %v5735 = vadd.f32 %v4478, %v5410
        %v5736 = vadd.f32 %v4479, %v5413
        %v5737 = vadd.f32 %v4480, %v5415
        %v5738 = vadd.f32 %v4481, %v5418
        %v5739 = vadd.f32 %v4482, %v5420
        %v5740 = vadd.f32 %v4483, %v5423
        %v5741 = vadd.f32 %v4484, %v5425
        %v5742 = vadd.f32 %v4485, %v5428
        %v5743 = vadd.f32 %v4486, %v5430
        %v5744 = vadd.f32 %v4487, %v5433
        %v5745 = vadd.f32 %v4488, %v5435
        %v5746 = vadd.f32 %v4489, %v5438
        %v5747 = vadd.f32 %v4490, %v5440
        %v5748 = vadd.f32 %v4491, %v5443
        %v5749 = vadd.f32 %v4492, %v5445
        %v5750 = vadd.f32 %v4493, %v5448
        %v5751 = vadd.f32 %v4494, %v5450
        %v5752 = vadd.f32 %v4495, %v5453
        %v5753 = vadd.f32 %v4496, %v5455
        %v5754 = vadd.f32 %v4497, %v5458
        %v5755 = vadd.f32 %v4498, %v5460
        %v5756 = vadd.f32 %v4499, %v5463
        %v5757 = vadd.f32 %v4500, %v5465
        %v5758 = vadd.f32 %v4501, %v5468
        %v5759 = vadd.f32 %v4502, %v5470
        %v5760 = vadd.f32 %v4503, %v5473
        %v5761 = vadd.f32 %v4504, %v5475
        %v5762 = vadd.f32 %v4505, %v5478
        %v5763 = vadd.f32 %v4506, %v5480
        %v5764 = vadd.f32 %v4507, %v5483
        %v5765 = vadd.f32 %v4508, %v5485
        %v5766 = vadd.f32 %v4509, %v5488
        %v5767 = vadd.f32 %v4510, %v5490
        %v5768 = vadd.f32 %v4511, %v5493
        %v5769 = vadd.f32 %v4512, %v5495
        %v5770 = vadd.f32 %v4513, %v5498
        %v5771 = vadd.f32 %v4514, %v5500
        %v5772 = vadd.f32 %v4515, %v5503
        %v5773 = vadd.f32 %v4516, %v5505
        %v5774 = vadd.f32 %v4517, %v5508
        %v5775 = vadd.f32 %v4518, %v5510
        %v5776 = vadd.f32 %v4519, %v5513
        %v5777 = vadd.f32 %v4520, %v5515
        %v5778 = vadd.f32 %v4521, %v5518
        %v5779 = vadd.f32 %v4522, %v5520
        %v5780 = vadd.f32 %v4523, %v5523
        %v5781 = vadd.f32 %v4524, %v5525
        %v5782 = vadd.f32 %v4525, %v5528
        %v5783 = vadd.f32 %v4526, %v5530
        %v5784 = vadd.f32 %v4527, %v5533
        %v5785 = vadd.f32 %v4528, %v5535
        %v5786 = vadd.f32 %v4529, %v5538
        %v5787 = vadd.f32 %v4530, %v5540
        %v5788 = vadd.f32 %v4531, %v5543
        %v5789 = vadd.f32 %v4532, %v5545
        %v5790 = vadd.f32 %v4533, %v5548
        %v5791 = vadd.f32 %v4534, %v5550
        %v5792 = vadd.f32 %v4535, %v5553
        %v5793 = vadd.f32 %v4536, %v5555
        %v5794 = vadd.f32 %v4537, %v5558
        %v5795 = vadd.f32 %v4538, %v5560
        %v5796 = vadd.f32 %v4539, %v5563
        %v5797 = vadd.f32 %v4540, %v5565
        %v5798 = vadd.f32 %v4541, %v5568
        %v5799 = vadd.f32 %v4542, %v5570
        %v5800 = vadd.f32 %v4543, %v5573
        %v5801 = vadd.f32 %v4544, %v5575
        %v5802 = vadd.f32 %v4545, %v5578
        %v5803 = vadd.f32 %v4546, %v5580
        %v5804 = vadd.f32 %v4547, %v5583
        %v5805 = vadd.f32 %v4548, %v5585
        %v5806 = vadd.f32 %v4549, %v5588
        %v5807 = vadd.f32 %v4550, %v5590
        %v5808 = vadd.f32 %v4551, %v5593
        %v5809 = vadd.f32 %v4552, %v5595
        %v5810 = vadd.f32 %v4553, %v5598
        %v5811 = vadd.f32 %v4554, %v5600
        %v5812 = vadd.f32 %v4555, %v5603
        %v5813 = vadd.f32 %v4556, %v5605
        %v5814 = vadd.f32 %v4557, %v5608
        %v5815 = vadd.f32 %v4558, %v5610
        %v5816 = vadd.f32 %v4559, %v5613
        %v5817 = vadd.f32 %v4560, %v5615
        %v5818 = vadd.f32 %v4561, %v5618
        %v5819 = vadd.f32 %v4562, %v5620
        %v5820 = vadd.f32 %v4563, %v5623
        %v5821 = vadd.f32 %v4564, %v5625
        %v5822 = vadd.f32 %v4565, %v5628
        %v5823 = vadd.f32 %v4566, %v5630
        %v5824 = vadd.f32 %v4567, %v5633
        %v5825 = vadd.f32 %v4568, %v5635
        %v5826 = vadd.f32 %v4569, %v5638
        %v5827 = vadd.f32 %v4570, %v5640
        %v5828 = vadd.f32 %v4571, %v5643
        %v5829 = vadd.f32 %v4572, %v5645
        %v5830 = vadd.f32 %v4573, %v5648
        %v5831 = vadd.f32 %v4574, %v5650
        %v5832 = vadd.f32 %v4575, %v5653
        %v5833 = vadd.f32 %v4576, %v5655
        %v5834 = vadd.f32 %v4577, %v5658
        %v5835 = vadd.f32 %v4578, %v5660
        %v5836 = vadd.f32 %v4579, %v5663
        %v5837 = vadd.f32 %v4580, %v5665
        %v5838 = vadd.f32 %v4581, %v5668
        %v5839 = vadd.f32 %v4582, %v5670
        %v5840 = vadd.f32 %v4583, %v5673
        %v5841 = vadd.f32 %v4584, %v5675
        %v5842 = vadd.f32 %v4585, %v5678
        %v5843 = vadd.f32 %v4586, %v5680
        %v5844 = vadd.f32 %v4587, %v5683
        %v5845 = vadd.f32 %v4588, %v5685
        %v5846 = vadd.f32 %v4589, %v5688
        %v5847 = vadd.f32 %v4590, %v5690
        %v5848 = vadd.f32 %v4591, %v5693
        %v5849 = vadd.f32 %v4592, %v5695
        %v5850 = vadd.f32 %v4593, %v5698
        %v5851 = vadd.f32 %v4594, %v5700
        %v5852 = vadd.f32 %v4595, %v5703
        %v5853 = vadd.f32 %v4596, %v5705
        %v5854 = vadd.f32 %v4597, %v5708
        %v5855 = vadd.f32 %v4598, %v5710
        %s5856 = scalar_lea.vmem %s219, 80
        %v5857 = vld [vmem:[%s5856] sm:$0xf]
        %v5858 = vld [vmem:[%s5856 + $0x4] sm:$0xf]
        %v5859 = vld [vmem:[%s5856 + $0x8] sm:$0xf]
        %v5860 = vld [vmem:[%s5856 + $0xc] sm:$0xf]
        %v5861 = vrot.slane %v3786, 1
        %v5862 = vrot.slane %v3787, 1
        %v5863 = vsel %vm2456, %v5861, %v5862
        %v5864 = vrot.slane %v3788, 1
        %v5865 = vsel %vm2456, %v5862, %v5864
        %v5866 = vrot.slane %v3789, 1
        %v5867 = vsel %vm2456, %v5864, %v5866
        %v5868 = vrot.slane %v3790, 1
        %v5869 = vsel %vm2456, %v5866, %v5868
        %v5870 = vrot.slane %v3791, 1
        %v5871 = vsel %vm2456, %v5868, %v5870
        %v5872 = vrot.slane %v3792, 1
        %v5873 = vsel %vm2456, %v5870, %v5872
        %v5874 = vrot.slane %v3793, 1
        %v5875 = vsel %vm2456, %v5872, %v5874
        %v5876 = vrot.slane %v3794, 1
        %v5877 = vsel %vm2456, %v5874, %v5876
        %v5878 = vrot.slane %v3795, 1
        %v5879 = vsel %vm2456, %v5876, %v5878
        %v5880 = vrot.slane %v3796, 1
        %v5881 = vsel %vm2456, %v5878, %v5880
        %v5882 = vrot.slane %v3797, 1
        %v5883 = vsel %vm2456, %v5880, %v5882
        %v5884 = vrot.slane %v3798, 1
        %v5885 = vsel %vm2456, %v5882, %v5884
        %v5886 = vrot.slane %v3799, 1
        %v5887 = vsel %vm2456, %v5884, %v5886
        %v5888 = vrot.slane %v3800, 1
        %v5889 = vsel %vm2456, %v5886, %v5888
        %v5890 = vrot.slane %v3801, 1
        %v5891 = vsel %vm2456, %v5888, %v5890
        %v5892 = vrot.slane %v3802, 1
        %v5893 = vsel %vm2456, %v5890, %v5892
        %v5894 = vrot.slane %v3803, 1
        %v5895 = vsel %vm2456, %v5892, %v5894
        %v5896 = vrot.slane %v3804, 1
        %v5897 = vsel %vm2456, %v5894, %v5896
        %v5898 = vrot.slane %v3805, 1
        %v5899 = vsel %vm2456, %v5896, %v5898
        %v5900 = vrot.slane %v3806, 1
        %v5901 = vsel %vm2456, %v5898, %v5900
        %v5902 = vrot.slane %v3807, 1
        %v5903 = vsel %vm2456, %v5900, %v5902
        %v5904 = vrot.slane %v3808, 1
        %v5905 = vsel %vm2456, %v5902, %v5904
        %v5906 = vrot.slane %v3809, 1
        %v5907 = vsel %vm2456, %v5904, %v5906
        %v5908 = vrot.slane %v3810, 1
        %v5909 = vsel %vm2456, %v5906, %v5908
        %v5910 = vrot.slane %v3811, 1
        %v5911 = vsel %vm2456, %v5908, %v5910
        %v5912 = vrot.slane %v3812, 1
        %v5913 = vsel %vm2456, %v5910, %v5912
        %v5914 = vrot.slane %v3813, 1
        %v5915 = vsel %vm2456, %v5912, %v5914
        %v5916 = vrot.slane %v3814, 1
        %v5917 = vsel %vm2456, %v5914, %v5916
        %v5918 = vrot.slane %v3815, 1
        %v5919 = vsel %vm2456, %v5916, %v5918
        %v5920 = vrot.slane %v3816, 1
        %v5921 = vsel %vm2456, %v5918, %v5920
        %v5922 = vrot.slane %v3817, 1
        %v5923 = vsel %vm2456, %v5920, %v5922
        %v5924 = vrot.slane %v3818, 1
        %v5925 = vsel %vm2456, %v5922, %v5924
        %v5926 = vrot.slane %v3819, 1
        %v5927 = vsel %vm2456, %v5924, %v5926
        %v5928 = vrot.slane %v3820, 1
        %v5929 = vsel %vm2456, %v5926, %v5928
        %v5930 = vrot.slane %v3821, 1
        %v5931 = vsel %vm2456, %v5928, %v5930
        %v5932 = vrot.slane %v3822, 1
        %v5933 = vsel %vm2456, %v5930, %v5932
        %v5934 = vrot.slane %v3823, 1
        %v5935 = vsel %vm2456, %v5932, %v5934
        %v5936 = vrot.slane %v3824, 1
        %v5937 = vsel %vm2456, %v5934, %v5936
        %v5938 = vrot.slane %v3825, 1
        %v5939 = vsel %vm2456, %v5936, %v5938
        %v5940 = vrot.slane %v3826, 1
        %v5941 = vsel %vm2456, %v5938, %v5940
        %v5942 = vrot.slane %v3827, 1
        %v5943 = vsel %vm2456, %v5940, %v5942
        %v5944 = vrot.slane %v3828, 1
        %v5945 = vsel %vm2456, %v5942, %v5944
        %v5946 = vrot.slane %v3829, 1
        %v5947 = vsel %vm2456, %v5944, %v5946
        %v5948 = vrot.slane %v3830, 1
        %v5949 = vsel %vm2456, %v5946, %v5948
        %v5950 = vrot.slane %v3831, 1
        %v5951 = vsel %vm2456, %v5948, %v5950
        %v5952 = vrot.slane %v3832, 1
        %v5953 = vsel %vm2456, %v5950, %v5952
        %v5954 = vrot.slane %v3833, 1
        %v5955 = vsel %vm2456, %v5952, %v5954
        %v5956 = vrot.slane %v3834, 1
        %v5957 = vsel %vm2456, %v5954, %v5956
        %v5958 = vrot.slane %v3835, 1
        %v5959 = vsel %vm2456, %v5956, %v5958
        %v5960 = vrot.slane %v3836, 1
        %v5961 = vsel %vm2456, %v5958, %v5960
        %v5962 = vrot.slane %v3837, 1
        %v5963 = vsel %vm2456, %v5960, %v5962
        %v5964 = vrot.slane %v3838, 1
        %v5965 = vsel %vm2456, %v5962, %v5964
        %v5966 = vrot.slane %v3839, 1
        %v5967 = vsel %vm2456, %v5964, %v5966
        %v5968 = vrot.slane %v3840, 1
        %v5969 = vsel %vm2456, %v5966, %v5968
        %v5970 = vrot.slane %v3841, 1
        %v5971 = vsel %vm2456, %v5968, %v5970
        %v5972 = vrot.slane %v3842, 1
        %v5973 = vsel %vm2456, %v5970, %v5972
        %v5974 = vrot.slane %v3843, 1
        %v5975 = vsel %vm2456, %v5972, %v5974
        %v5976 = vrot.slane %v3844, 1
        %v5977 = vsel %vm2456, %v5974, %v5976
        %v5978 = vrot.slane %v3845, 1
        %v5979 = vsel %vm2456, %v5976, %v5978
        %v5980 = vrot.slane %v3846, 1
        %v5981 = vsel %vm2456, %v5978, %v5980
        %v5982 = vrot.slane %v3847, 1
        %v5983 = vsel %vm2456, %v5980, %v5982
        %v5984 = vrot.slane %v3848, 1
        %v5985 = vsel %vm2456, %v5982, %v5984
        %v5986 = vrot.slane %v3849, 1
        %v5987 = vsel %vm2456, %v5984, %v5986
        %v5988 = vrot.slane %v3850, 1
        %v5989 = vsel %vm2456, %v5986, %v5988
        %v5990 = vrot.slane %v3851, 1
        %v5991 = vsel %vm2456, %v5988, %v5990
        %v5992 = vrot.slane %v3852, 1
        %v5993 = vsel %vm2456, %v5990, %v5992
        %v5994 = vrot.slane %v3853, 1
        %v5995 = vsel %vm2456, %v5992, %v5994
        %v5996 = vrot.slane %v3854, 1
        %v5997 = vsel %vm2456, %v5994, %v5996
        %v5998 = vrot.slane %v3855, 1
        %v5999 = vsel %vm2456, %v5996, %v5998
        %v6000 = vrot.slane %v3856, 1
        %v6001 = vsel %vm2456, %v5998, %v6000
        %v6002 = vrot.slane %v3857, 1
        %v6003 = vsel %vm2456, %v6000, %v6002
        %v6004 = vrot.slane %v4606, 1
        %v6005 = vsel %vm2456, %v6002, %v6004
        %v6010 = vunpack.c.l.b16 %v5857
        %v6011 = vunpack.c.l.b16 %v5858
        %v6012 = vunpack.c.l.b16 %v5859
        %v6013 = vunpack.c.l.b16 %v5860
        %v6014 = vpack.c.b16 %v6011, %v6010
        %v6015 = vpack.c.b16 %v6013, %v6012
        %v6019 = vsel %vm1340, %v5863, 0
        %v6022 = vsel %vm1340, %v5865, 0
        %v6025 = vsel %vm1340, %v5867, 0
        %v6028 = vsel %vm1340, %v5869, 0
        %v6031 = vsel %vm1340, %v5871, 0
        %v6034 = vsel %vm1340, %v5873, 0
        %v6037 = vsel %vm1340, %v5875, 0
        %v6040 = vsel %vm1340, %v5877, 0
        %v6043 = vsel %vm1340, %v5879, 0
        %v6046 = vsel %vm1340, %v5881, 0
        %v6049 = vsel %vm1340, %v5883, 0
        %v6052 = vsel %vm1340, %v5885, 0
        %v6055 = vsel %vm1340, %v5887, 0
        %v6058 = vsel %vm1340, %v5889, 0
        %v6061 = vsel %vm1340, %v5891, 0
        %v6064 = vsel %vm1340, %v5893, 0
        %v6067 = vsel %vm1340, %v5895, 0
        %v6070 = vsel %vm1340, %v5897, 0
        %v6073 = vsel %vm1340, %v5899, 0
        %v6076 = vsel %vm1340, %v5901, 0
        %v6079 = vsel %vm1340, %v5903, 0
        %v6082 = vsel %vm1340, %v5905, 0
        %v6085 = vsel %vm1340, %v5907, 0
        %v6088 = vsel %vm1340, %v5909, 0
        %v6091 = vsel %vm1340, %v5911, 0
        %v6094 = vsel %vm1340, %v5913, 0
        %v6097 = vsel %vm1340, %v5915, 0
        %v6100 = vsel %vm1340, %v5917, 0
        %v6103 = vsel %vm1340, %v5919, 0
        %v6106 = vsel %vm1340, %v5921, 0
        %v6109 = vsel %vm1340, %v5923, 0
        %v6112 = vsel %vm1340, %v5925, 0
        %v6115 = vsel %vm1340, %v5927, 0
        %v6118 = vsel %vm1340, %v5929, 0
        %v6121 = vsel %vm1340, %v5931, 0
        %v6124 = vsel %vm1340, %v5933, 0
        %v6127 = vsel %vm1340, %v5935, 0
        %v6130 = vsel %vm1340, %v5937, 0
        %v6133 = vsel %vm1340, %v5939, 0
        %v6136 = vsel %vm1340, %v5941, 0
        %v6139 = vsel %vm1340, %v5943, 0
        %v6142 = vsel %vm1340, %v5945, 0
        %v6145 = vsel %vm1340, %v5947, 0
        %v6148 = vsel %vm1340, %v5949, 0
        %v6151 = vsel %vm1340, %v5951, 0
        %v6154 = vsel %vm1340, %v5953, 0
        %v6157 = vsel %vm1340, %v5955, 0
        %v6160 = vsel %vm1340, %v5957, 0
        %v6163 = vsel %vm1340, %v5959, 0
        %v6166 = vsel %vm1340, %v5961, 0
        %v6169 = vsel %vm1340, %v5963, 0
        %v6172 = vsel %vm1340, %v5965, 0
        %v6175 = vsel %vm1340, %v5967, 0
        %v6178 = vsel %vm1340, %v5969, 0
        %v6181 = vsel %vm1340, %v5971, 0
        %v6184 = vsel %vm1340, %v5973, 0
        %v6187 = vsel %vm1340, %v5975, 0
        %v6190 = vsel %vm1340, %v5977, 0
        %v6193 = vsel %vm1340, %v5979, 0
        %v6196 = vsel %vm1340, %v5981, 0
        %v6199 = vsel %vm1340, %v5983, 0
        %v6202 = vsel %vm1340, %v5985, 0
        %v6205 = vsel %vm1340, %v5987, 0
        %v6208 = vsel %vm1340, %v5989, 0
        %v6211 = vsel %vm1340, %v5991, 0
        %v6214 = vsel %vm1340, %v5993, 0
        %v6217 = vsel %vm1340, %v5995, 0
        %v6220 = vsel %vm1340, %v5997, 0
        %v6223 = vsel %vm1340, %v5999, 0
        %v6226 = vsel %vm1340, %v6001, 0
        %v6229 = vsel %vm1340, %v6003, 0
        %v6232 = vsel %vm1340, %v6005, 0
        %6234 = vmatpush.bf16.msra.mxu0 0
        %6235 = vmatpush.bf16.msra.mxu0 0
        %6236 = vmatpush.bf16.msra.mxu0 0
        %6237 = vmatpush.bf16.msra.mxu0 0
        %6238 = vmatpush.bf16.msra.mxu0 0
        %6239 = vmatpush.bf16.msra.mxu0 0
        %6240 = vmatpush.bf16.msra.mxu0 %v6015
        %6241 = vmatpush.bf16.msra.mxu0 %v6014
        %6242 = vmatmul.bf16.gmra.mxu0 %v6019
        %v6243 = vpop.f32.mrf.mxu0
        %v6244 = vadd.f32 0.0, %v6243
        %v6245 = vpop.f32.mrf.mxu0
        %v6246 = vadd.f32 0.0, %v6245
        %6247 = vmatmul.bf16.gmra.mxu0 %v6022
        %v6248 = vpop.f32.mrf.mxu0
        %v6249 = vadd.f32 0.0, %v6248
        %v6250 = vpop.f32.mrf.mxu0
        %v6251 = vadd.f32 0.0, %v6250
        %6252 = vmatmul.bf16.gmra.mxu0 %v6025
        %v6253 = vpop.f32.mrf.mxu0
        %v6254 = vadd.f32 0.0, %v6253
        %v6255 = vpop.f32.mrf.mxu0
        %v6256 = vadd.f32 0.0, %v6255
        %6257 = vmatmul.bf16.gmra.mxu0 %v6028
        %v6258 = vpop.f32.mrf.mxu0
        %v6259 = vadd.f32 0.0, %v6258
        %v6260 = vpop.f32.mrf.mxu0
        %v6261 = vadd.f32 0.0, %v6260
        %6262 = vmatmul.bf16.gmra.mxu0 %v6031
        %v6263 = vpop.f32.mrf.mxu0
        %v6264 = vadd.f32 0.0, %v6263
        %v6265 = vpop.f32.mrf.mxu0
        %v6266 = vadd.f32 0.0, %v6265
        %6267 = vmatmul.bf16.gmra.mxu0 %v6034
        %v6268 = vpop.f32.mrf.mxu0
        %v6269 = vadd.f32 0.0, %v6268
        %v6270 = vpop.f32.mrf.mxu0
        %v6271 = vadd.f32 0.0, %v6270
        %6272 = vmatmul.bf16.gmra.mxu0 %v6037
        %v6273 = vpop.f32.mrf.mxu0
        %v6274 = vadd.f32 0.0, %v6273
        %v6275 = vpop.f32.mrf.mxu0
        %v6276 = vadd.f32 0.0, %v6275
        %6277 = vmatmul.bf16.gmra.mxu0 %v6040
        %v6278 = vpop.f32.mrf.mxu0
        %v6279 = vadd.f32 0.0, %v6278
        %v6280 = vpop.f32.mrf.mxu0
        %v6281 = vadd.f32 0.0, %v6280
        %6282 = vmatmul.bf16.gmra.mxu0 %v6043
        %v6283 = vpop.f32.mrf.mxu0
        %v6284 = vadd.f32 0.0, %v6283
        %v6285 = vpop.f32.mrf.mxu0
        %v6286 = vadd.f32 0.0, %v6285
        %6287 = vmatmul.bf16.gmra.mxu0 %v6046
        %v6288 = vpop.f32.mrf.mxu0
        %v6289 = vadd.f32 0.0, %v6288
        %v6290 = vpop.f32.mrf.mxu0
        %v6291 = vadd.f32 0.0, %v6290
        %6292 = vmatmul.bf16.gmra.mxu0 %v6049
        %v6293 = vpop.f32.mrf.mxu0
        %v6294 = vadd.f32 0.0, %v6293
        %v6295 = vpop.f32.mrf.mxu0
        %v6296 = vadd.f32 0.0, %v6295
        %6297 = vmatmul.bf16.gmra.mxu0 %v6052
        %v6298 = vpop.f32.mrf.mxu0
        %v6299 = vadd.f32 0.0, %v6298
        %v6300 = vpop.f32.mrf.mxu0
        %v6301 = vadd.f32 0.0, %v6300
        %6302 = vmatmul.bf16.gmra.mxu0 %v6055
        %v6303 = vpop.f32.mrf.mxu0
        %v6304 = vadd.f32 0.0, %v6303
        %v6305 = vpop.f32.mrf.mxu0
        %v6306 = vadd.f32 0.0, %v6305
        %6307 = vmatmul.bf16.gmra.mxu0 %v6058
        %v6308 = vpop.f32.mrf.mxu0
        %v6309 = vadd.f32 0.0, %v6308
        %v6310 = vpop.f32.mrf.mxu0
        %v6311 = vadd.f32 0.0, %v6310
        %6312 = vmatmul.bf16.gmra.mxu0 %v6061
        %v6313 = vpop.f32.mrf.mxu0
        %v6314 = vadd.f32 0.0, %v6313
        %v6315 = vpop.f32.mrf.mxu0
        %v6316 = vadd.f32 0.0, %v6315
        %6317 = vmatmul.bf16.gmra.mxu0 %v6064
        %v6318 = vpop.f32.mrf.mxu0
        %v6319 = vadd.f32 0.0, %v6318
        %v6320 = vpop.f32.mrf.mxu0
        %v6321 = vadd.f32 0.0, %v6320
        %6322 = vmatmul.bf16.gmra.mxu0 %v6067
        %v6323 = vpop.f32.mrf.mxu0
        %v6324 = vadd.f32 0.0, %v6323
        %v6325 = vpop.f32.mrf.mxu0
        %v6326 = vadd.f32 0.0, %v6325
        %6327 = vmatmul.bf16.gmra.mxu0 %v6070
        %v6328 = vpop.f32.mrf.mxu0
        %v6329 = vadd.f32 0.0, %v6328
        %v6330 = vpop.f32.mrf.mxu0
        %v6331 = vadd.f32 0.0, %v6330
        %6332 = vmatmul.bf16.gmra.mxu0 %v6073
        %v6333 = vpop.f32.mrf.mxu0
        %v6334 = vadd.f32 0.0, %v6333
        %v6335 = vpop.f32.mrf.mxu0
        %v6336 = vadd.f32 0.0, %v6335
        %6337 = vmatmul.bf16.gmra.mxu0 %v6076
        %v6338 = vpop.f32.mrf.mxu0
        %v6339 = vadd.f32 0.0, %v6338
        %v6340 = vpop.f32.mrf.mxu0
        %v6341 = vadd.f32 0.0, %v6340
        %6342 = vmatmul.bf16.gmra.mxu0 %v6079
        %v6343 = vpop.f32.mrf.mxu0
        %v6344 = vadd.f32 0.0, %v6343
        %v6345 = vpop.f32.mrf.mxu0
        %v6346 = vadd.f32 0.0, %v6345
        %6347 = vmatmul.bf16.gmra.mxu0 %v6082
        %v6348 = vpop.f32.mrf.mxu0
        %v6349 = vadd.f32 0.0, %v6348
        %v6350 = vpop.f32.mrf.mxu0
        %v6351 = vadd.f32 0.0, %v6350
        %6352 = vmatmul.bf16.gmra.mxu0 %v6085
        %v6353 = vpop.f32.mrf.mxu0
        %v6354 = vadd.f32 0.0, %v6353
        %v6355 = vpop.f32.mrf.mxu0
        %v6356 = vadd.f32 0.0, %v6355
        %6357 = vmatmul.bf16.gmra.mxu0 %v6088
        %v6358 = vpop.f32.mrf.mxu0
        %v6359 = vadd.f32 0.0, %v6358
        %v6360 = vpop.f32.mrf.mxu0
        %v6361 = vadd.f32 0.0, %v6360
        %6362 = vmatmul.bf16.gmra.mxu0 %v6091
        %v6363 = vpop.f32.mrf.mxu0
        %v6364 = vadd.f32 0.0, %v6363
        %v6365 = vpop.f32.mrf.mxu0
        %v6366 = vadd.f32 0.0, %v6365
        %6367 = vmatmul.bf16.gmra.mxu0 %v6094
        %v6368 = vpop.f32.mrf.mxu0
        %v6369 = vadd.f32 0.0, %v6368
        %v6370 = vpop.f32.mrf.mxu0
        %v6371 = vadd.f32 0.0, %v6370
        %6372 = vmatmul.bf16.gmra.mxu0 %v6097
        %v6373 = vpop.f32.mrf.mxu0
        %v6374 = vadd.f32 0.0, %v6373
        %v6375 = vpop.f32.mrf.mxu0
        %v6376 = vadd.f32 0.0, %v6375
        %6377 = vmatmul.bf16.gmra.mxu0 %v6100
        %v6378 = vpop.f32.mrf.mxu0
        %v6379 = vadd.f32 0.0, %v6378
        %v6380 = vpop.f32.mrf.mxu0
        %v6381 = vadd.f32 0.0, %v6380
        %6382 = vmatmul.bf16.gmra.mxu0 %v6103
        %v6383 = vpop.f32.mrf.mxu0
        %v6384 = vadd.f32 0.0, %v6383
        %v6385 = vpop.f32.mrf.mxu0
        %v6386 = vadd.f32 0.0, %v6385
        %6387 = vmatmul.bf16.gmra.mxu0 %v6106
        %v6388 = vpop.f32.mrf.mxu0
        %v6389 = vadd.f32 0.0, %v6388
        %v6390 = vpop.f32.mrf.mxu0
        %v6391 = vadd.f32 0.0, %v6390
        %6392 = vmatmul.bf16.gmra.mxu0 %v6109
        %v6393 = vpop.f32.mrf.mxu0
        %v6394 = vadd.f32 0.0, %v6393
        %v6395 = vpop.f32.mrf.mxu0
        %v6396 = vadd.f32 0.0, %v6395
        %6397 = vmatmul.bf16.gmra.mxu0 %v6112
        %v6398 = vpop.f32.mrf.mxu0
        %v6399 = vadd.f32 0.0, %v6398
        %v6400 = vpop.f32.mrf.mxu0
        %v6401 = vadd.f32 0.0, %v6400
        %6402 = vmatmul.bf16.gmra.mxu0 %v6115
        %v6403 = vpop.f32.mrf.mxu0
        %v6404 = vadd.f32 0.0, %v6403
        %v6405 = vpop.f32.mrf.mxu0
        %v6406 = vadd.f32 0.0, %v6405
        %6407 = vmatmul.bf16.gmra.mxu0 %v6118
        %v6408 = vpop.f32.mrf.mxu0
        %v6409 = vadd.f32 0.0, %v6408
        %v6410 = vpop.f32.mrf.mxu0
        %v6411 = vadd.f32 0.0, %v6410
        %6412 = vmatmul.bf16.gmra.mxu0 %v6121
        %v6413 = vpop.f32.mrf.mxu0
        %v6414 = vadd.f32 0.0, %v6413
        %v6415 = vpop.f32.mrf.mxu0
        %v6416 = vadd.f32 0.0, %v6415
        %6417 = vmatmul.bf16.gmra.mxu0 %v6124
        %v6418 = vpop.f32.mrf.mxu0
        %v6419 = vadd.f32 0.0, %v6418
        %v6420 = vpop.f32.mrf.mxu0
        %v6421 = vadd.f32 0.0, %v6420
        %6422 = vmatmul.bf16.gmra.mxu0 %v6127
        %v6423 = vpop.f32.mrf.mxu0
        %v6424 = vadd.f32 0.0, %v6423
        %v6425 = vpop.f32.mrf.mxu0
        %v6426 = vadd.f32 0.0, %v6425
        %6427 = vmatmul.bf16.gmra.mxu0 %v6130
        %v6428 = vpop.f32.mrf.mxu0
        %v6429 = vadd.f32 0.0, %v6428
        %v6430 = vpop.f32.mrf.mxu0
        %v6431 = vadd.f32 0.0, %v6430
        %6432 = vmatmul.bf16.gmra.mxu0 %v6133
        %v6433 = vpop.f32.mrf.mxu0
        %v6434 = vadd.f32 0.0, %v6433
        %v6435 = vpop.f32.mrf.mxu0
        %v6436 = vadd.f32 0.0, %v6435
        %6437 = vmatmul.bf16.gmra.mxu0 %v6136
        %v6438 = vpop.f32.mrf.mxu0
        %v6439 = vadd.f32 0.0, %v6438
        %v6440 = vpop.f32.mrf.mxu0
        %v6441 = vadd.f32 0.0, %v6440
        %6442 = vmatmul.bf16.gmra.mxu0 %v6139
        %v6443 = vpop.f32.mrf.mxu0
        %v6444 = vadd.f32 0.0, %v6443
        %v6445 = vpop.f32.mrf.mxu0
        %v6446 = vadd.f32 0.0, %v6445
        %6447 = vmatmul.bf16.gmra.mxu0 %v6142
        %v6448 = vpop.f32.mrf.mxu0
        %v6449 = vadd.f32 0.0, %v6448
        %v6450 = vpop.f32.mrf.mxu0
        %v6451 = vadd.f32 0.0, %v6450
        %6452 = vmatmul.bf16.gmra.mxu0 %v6145
        %v6453 = vpop.f32.mrf.mxu0
        %v6454 = vadd.f32 0.0, %v6453
        %v6455 = vpop.f32.mrf.mxu0
        %v6456 = vadd.f32 0.0, %v6455
        %6457 = vmatmul.bf16.gmra.mxu0 %v6148
        %v6458 = vpop.f32.mrf.mxu0
        %v6459 = vadd.f32 0.0, %v6458
        %v6460 = vpop.f32.mrf.mxu0
        %v6461 = vadd.f32 0.0, %v6460
        %6462 = vmatmul.bf16.gmra.mxu0 %v6151
        %v6463 = vpop.f32.mrf.mxu0
        %v6464 = vadd.f32 0.0, %v6463
        %v6465 = vpop.f32.mrf.mxu0
        %v6466 = vadd.f32 0.0, %v6465
        %6467 = vmatmul.bf16.gmra.mxu0 %v6154
        %v6468 = vpop.f32.mrf.mxu0
        %v6469 = vadd.f32 0.0, %v6468
        %v6470 = vpop.f32.mrf.mxu0
        %v6471 = vadd.f32 0.0, %v6470
        %6472 = vmatmul.bf16.gmra.mxu0 %v6157
        %v6473 = vpop.f32.mrf.mxu0
        %v6474 = vadd.f32 0.0, %v6473
        %v6475 = vpop.f32.mrf.mxu0
        %v6476 = vadd.f32 0.0, %v6475
        %6477 = vmatmul.bf16.gmra.mxu0 %v6160
        %v6478 = vpop.f32.mrf.mxu0
        %v6479 = vadd.f32 0.0, %v6478
        %v6480 = vpop.f32.mrf.mxu0
        %v6481 = vadd.f32 0.0, %v6480
        %6482 = vmatmul.bf16.gmra.mxu0 %v6163
        %v6483 = vpop.f32.mrf.mxu0
        %v6484 = vadd.f32 0.0, %v6483
        %v6485 = vpop.f32.mrf.mxu0
        %v6486 = vadd.f32 0.0, %v6485
        %6487 = vmatmul.bf16.gmra.mxu0 %v6166
        %v6488 = vpop.f32.mrf.mxu0
        %v6489 = vadd.f32 0.0, %v6488
        %v6490 = vpop.f32.mrf.mxu0
        %v6491 = vadd.f32 0.0, %v6490
        %6492 = vmatmul.bf16.gmra.mxu0 %v6169
        %v6493 = vpop.f32.mrf.mxu0
        %v6494 = vadd.f32 0.0, %v6493
        %v6495 = vpop.f32.mrf.mxu0
        %v6496 = vadd.f32 0.0, %v6495
        %6497 = vmatmul.bf16.gmra.mxu0 %v6172
        %v6498 = vpop.f32.mrf.mxu0
        %v6499 = vadd.f32 0.0, %v6498
        %v6500 = vpop.f32.mrf.mxu0
        %v6501 = vadd.f32 0.0, %v6500
        %6502 = vmatmul.bf16.gmra.mxu0 %v6175
        %v6503 = vpop.f32.mrf.mxu0
        %v6504 = vadd.f32 0.0, %v6503
        %v6505 = vpop.f32.mrf.mxu0
        %v6506 = vadd.f32 0.0, %v6505
        %6507 = vmatmul.bf16.gmra.mxu0 %v6178
        %v6508 = vpop.f32.mrf.mxu0
        %v6509 = vadd.f32 0.0, %v6508
        %v6510 = vpop.f32.mrf.mxu0
        %v6511 = vadd.f32 0.0, %v6510
        %6512 = vmatmul.bf16.gmra.mxu0 %v6181
        %v6513 = vpop.f32.mrf.mxu0
        %v6514 = vadd.f32 0.0, %v6513
        %v6515 = vpop.f32.mrf.mxu0
        %v6516 = vadd.f32 0.0, %v6515
        %6517 = vmatmul.bf16.gmra.mxu0 %v6184
        %v6518 = vpop.f32.mrf.mxu0
        %v6519 = vadd.f32 0.0, %v6518
        %v6520 = vpop.f32.mrf.mxu0
        %v6521 = vadd.f32 0.0, %v6520
        %6522 = vmatmul.bf16.gmra.mxu0 %v6187
        %v6523 = vpop.f32.mrf.mxu0
        %v6524 = vadd.f32 0.0, %v6523
        %v6525 = vpop.f32.mrf.mxu0
        %v6526 = vadd.f32 0.0, %v6525
        %6527 = vmatmul.bf16.gmra.mxu0 %v6190
        %v6528 = vpop.f32.mrf.mxu0
        %v6529 = vadd.f32 0.0, %v6528
        %v6530 = vpop.f32.mrf.mxu0
        %v6531 = vadd.f32 0.0, %v6530
        %6532 = vmatmul.bf16.gmra.mxu0 %v6193
        %v6533 = vpop.f32.mrf.mxu0
        %v6534 = vadd.f32 0.0, %v6533
        %v6535 = vpop.f32.mrf.mxu0
        %v6536 = vadd.f32 0.0, %v6535
        %6537 = vmatmul.bf16.gmra.mxu0 %v6196
        %v6538 = vpop.f32.mrf.mxu0
        %v6539 = vadd.f32 0.0, %v6538
        %v6540 = vpop.f32.mrf.mxu0
        %v6541 = vadd.f32 0.0, %v6540
        %6542 = vmatmul.bf16.gmra.mxu0 %v6199
        %v6543 = vpop.f32.mrf.mxu0
        %v6544 = vadd.f32 0.0, %v6543
        %v6545 = vpop.f32.mrf.mxu0
        %v6546 = vadd.f32 0.0, %v6545
        %6547 = vmatmul.bf16.gmra.mxu0 %v6202
        %v6548 = vpop.f32.mrf.mxu0
        %v6549 = vadd.f32 0.0, %v6548
        %v6550 = vpop.f32.mrf.mxu0
        %v6551 = vadd.f32 0.0, %v6550
        %6552 = vmatmul.bf16.gmra.mxu0 %v6205
        %v6553 = vpop.f32.mrf.mxu0
        %v6554 = vadd.f32 0.0, %v6553
        %v6555 = vpop.f32.mrf.mxu0
        %v6556 = vadd.f32 0.0, %v6555
        %6557 = vmatmul.bf16.gmra.mxu0 %v6208
        %v6558 = vpop.f32.mrf.mxu0
        %v6559 = vadd.f32 0.0, %v6558
        %v6560 = vpop.f32.mrf.mxu0
        %v6561 = vadd.f32 0.0, %v6560
        %6562 = vmatmul.bf16.gmra.mxu0 %v6211
        %v6563 = vpop.f32.mrf.mxu0
        %v6564 = vadd.f32 0.0, %v6563
        %v6565 = vpop.f32.mrf.mxu0
        %v6566 = vadd.f32 0.0, %v6565
        %6567 = vmatmul.bf16.gmra.mxu0 %v6214
        %v6568 = vpop.f32.mrf.mxu0
        %v6569 = vadd.f32 0.0, %v6568
        %v6570 = vpop.f32.mrf.mxu0
        %v6571 = vadd.f32 0.0, %v6570
        %6572 = vmatmul.bf16.gmra.mxu0 %v6217
        %v6573 = vpop.f32.mrf.mxu0
        %v6574 = vadd.f32 0.0, %v6573
        %v6575 = vpop.f32.mrf.mxu0
        %v6576 = vadd.f32 0.0, %v6575
        %6577 = vmatmul.bf16.gmra.mxu0 %v6220
        %v6578 = vpop.f32.mrf.mxu0
        %v6579 = vadd.f32 0.0, %v6578
        %v6580 = vpop.f32.mrf.mxu0
        %v6581 = vadd.f32 0.0, %v6580
        %6582 = vmatmul.bf16.gmra.mxu0 %v6223
        %v6583 = vpop.f32.mrf.mxu0
        %v6584 = vadd.f32 0.0, %v6583
        %v6585 = vpop.f32.mrf.mxu0
        %v6586 = vadd.f32 0.0, %v6585
        %6587 = vmatmul.bf16.gmra.mxu0 %v6226
        %v6588 = vpop.f32.mrf.mxu0
        %v6589 = vadd.f32 0.0, %v6588
        %v6590 = vpop.f32.mrf.mxu0
        %v6591 = vadd.f32 0.0, %v6590
        %6592 = vmatmul.bf16.gmra.mxu0 %v6229
        %v6593 = vpop.f32.mrf.mxu0
        %v6594 = vadd.f32 0.0, %v6593
        %v6595 = vpop.f32.mrf.mxu0
        %v6596 = vadd.f32 0.0, %v6595
        %6597 = vmatmul.bf16.gmra.mxu0 %v6232
        %v6598 = vpop.f32.mrf.mxu0
        %v6599 = vadd.f32 0.0, %v6598
        %v6600 = vpop.f32.mrf.mxu0
        %v6601 = vadd.f32 0.0, %v6600
        %6602 = vdwg.mxu0
        %v6603 = vadd.f32 %v5712, %v6244
        %v6604 = vadd.f32 %v5713, %v6246
        %v6605 = vadd.f32 %v5714, %v6249
        %v6606 = vadd.f32 %v5715, %v6251
        %v6607 = vadd.f32 %v5716, %v6254
        %v6608 = vadd.f32 %v5717, %v6256
        %v6609 = vadd.f32 %v5718, %v6259
        %v6610 = vadd.f32 %v5719, %v6261
        %v6611 = vadd.f32 %v5720, %v6264
        %v6612 = vadd.f32 %v5721, %v6266
        %v6613 = vadd.f32 %v5722, %v6269
        %v6614 = vadd.f32 %v5723, %v6271
        %v6615 = vadd.f32 %v5724, %v6274
        %v6616 = vadd.f32 %v5725, %v6276
        %v6617 = vadd.f32 %v5726, %v6279
        %v6618 = vadd.f32 %v5727, %v6281
        %v6619 = vadd.f32 %v5728, %v6284
        %v6620 = vadd.f32 %v5729, %v6286
        %v6621 = vadd.f32 %v5730, %v6289
        %v6622 = vadd.f32 %v5731, %v6291
        %v6623 = vadd.f32 %v5732, %v6294
        %v6624 = vadd.f32 %v5733, %v6296
        %v6625 = vadd.f32 %v5734, %v6299
        %v6626 = vadd.f32 %v5735, %v6301
        %v6627 = vadd.f32 %v5736, %v6304
        %v6628 = vadd.f32 %v5737, %v6306
        %v6629 = vadd.f32 %v5738, %v6309
        %v6630 = vadd.f32 %v5739, %v6311
        %v6631 = vadd.f32 %v5740, %v6314
        %v6632 = vadd.f32 %v5741, %v6316
        %v6633 = vadd.f32 %v5742, %v6319
        %v6634 = vadd.f32 %v5743, %v6321
        %v6635 = vadd.f32 %v5744, %v6324
        %v6636 = vadd.f32 %v5745, %v6326
        %v6637 = vadd.f32 %v5746, %v6329
        %v6638 = vadd.f32 %v5747, %v6331
        %v6639 = vadd.f32 %v5748, %v6334
        %v6640 = vadd.f32 %v5749, %v6336
        %v6641 = vadd.f32 %v5750, %v6339
        %v6642 = vadd.f32 %v5751, %v6341
        %v6643 = vadd.f32 %v5752, %v6344
        %v6644 = vadd.f32 %v5753, %v6346
        %v6645 = vadd.f32 %v5754, %v6349
        %v6646 = vadd.f32 %v5755, %v6351
        %v6647 = vadd.f32 %v5756, %v6354
        %v6648 = vadd.f32 %v5757, %v6356
        %v6649 = vadd.f32 %v5758, %v6359
        %v6650 = vadd.f32 %v5759, %v6361
        %v6651 = vadd.f32 %v5760, %v6364
        %v6652 = vadd.f32 %v5761, %v6366
        %v6653 = vadd.f32 %v5762, %v6369
        %v6654 = vadd.f32 %v5763, %v6371
        %v6655 = vadd.f32 %v5764, %v6374
        %v6656 = vadd.f32 %v5765, %v6376
        %v6657 = vadd.f32 %v5766, %v6379
        %v6658 = vadd.f32 %v5767, %v6381
        %v6659 = vadd.f32 %v5768, %v6384
        %v6660 = vadd.f32 %v5769, %v6386
        %v6661 = vadd.f32 %v5770, %v6389
        %v6662 = vadd.f32 %v5771, %v6391
        %v6663 = vadd.f32 %v5772, %v6394
        %v6664 = vadd.f32 %v5773, %v6396
        %v6665 = vadd.f32 %v5774, %v6399
        %v6666 = vadd.f32 %v5775, %v6401
        %v6667 = vadd.f32 %v5776, %v6404
        %v6668 = vadd.f32 %v5777, %v6406
        %v6669 = vadd.f32 %v5778, %v6409
        %v6670 = vadd.f32 %v5779, %v6411
        %v6671 = vadd.f32 %v5780, %v6414
        %v6672 = vadd.f32 %v5781, %v6416
        %v6673 = vadd.f32 %v5782, %v6419
        %v6674 = vadd.f32 %v5783, %v6421
        %v6675 = vadd.f32 %v5784, %v6424
        %v6676 = vadd.f32 %v5785, %v6426
        %v6677 = vadd.f32 %v5786, %v6429
        %v6678 = vadd.f32 %v5787, %v6431
        %v6679 = vadd.f32 %v5788, %v6434
        %v6680 = vadd.f32 %v5789, %v6436
        %v6681 = vadd.f32 %v5790, %v6439
        %v6682 = vadd.f32 %v5791, %v6441
        %v6683 = vadd.f32 %v5792, %v6444
        %v6684 = vadd.f32 %v5793, %v6446
        %v6685 = vadd.f32 %v5794, %v6449
        %v6686 = vadd.f32 %v5795, %v6451
        %v6687 = vadd.f32 %v5796, %v6454
        %v6688 = vadd.f32 %v5797, %v6456
        %v6689 = vadd.f32 %v5798, %v6459
        %v6690 = vadd.f32 %v5799, %v6461
        %v6691 = vadd.f32 %v5800, %v6464
        %v6692 = vadd.f32 %v5801, %v6466
        %v6693 = vadd.f32 %v5802, %v6469
        %v6694 = vadd.f32 %v5803, %v6471
        %v6695 = vadd.f32 %v5804, %v6474
        %v6696 = vadd.f32 %v5805, %v6476
        %v6697 = vadd.f32 %v5806, %v6479
        %v6698 = vadd.f32 %v5807, %v6481
        %v6699 = vadd.f32 %v5808, %v6484
        %v6700 = vadd.f32 %v5809, %v6486
        %v6701 = vadd.f32 %v5810, %v6489
        %v6702 = vadd.f32 %v5811, %v6491
        %v6703 = vadd.f32 %v5812, %v6494
        %v6704 = vadd.f32 %v5813, %v6496
        %v6705 = vadd.f32 %v5814, %v6499
        %v6706 = vadd.f32 %v5815, %v6501
        %v6707 = vadd.f32 %v5816, %v6504
        %v6708 = vadd.f32 %v5817, %v6506
        %v6709 = vadd.f32 %v5818, %v6509
        %v6710 = vadd.f32 %v5819, %v6511
        %v6711 = vadd.f32 %v5820, %v6514
        %v6712 = vadd.f32 %v5821, %v6516
        %v6713 = vadd.f32 %v5822, %v6519
        %v6714 = vadd.f32 %v5823, %v6521
        %v6715 = vadd.f32 %v5824, %v6524
        %v6716 = vadd.f32 %v5825, %v6526
        %v6717 = vadd.f32 %v5826, %v6529
        %v6718 = vadd.f32 %v5827, %v6531
        %v6719 = vadd.f32 %v5828, %v6534
        %v6720 = vadd.f32 %v5829, %v6536
        %v6721 = vadd.f32 %v5830, %v6539
        %v6722 = vadd.f32 %v5831, %v6541
        %v6723 = vadd.f32 %v5832, %v6544
        %v6724 = vadd.f32 %v5833, %v6546
        %v6725 = vadd.f32 %v5834, %v6549
        %v6726 = vadd.f32 %v5835, %v6551
        %v6727 = vadd.f32 %v5836, %v6554
        %v6728 = vadd.f32 %v5837, %v6556
        %v6729 = vadd.f32 %v5838, %v6559
        %v6730 = vadd.f32 %v5839, %v6561
        %v6731 = vadd.f32 %v5840, %v6564
        %v6732 = vadd.f32 %v5841, %v6566
        %v6733 = vadd.f32 %v5842, %v6569
        %v6734 = vadd.f32 %v5843, %v6571
        %v6735 = vadd.f32 %v5844, %v6574
        %v6736 = vadd.f32 %v5845, %v6576
        %v6737 = vadd.f32 %v5846, %v6579
        %v6738 = vadd.f32 %v5847, %v6581
        %v6739 = vadd.f32 %v5848, %v6584
        %v6740 = vadd.f32 %v5849, %v6586
        %v6741 = vadd.f32 %v5850, %v6589
        %v6742 = vadd.f32 %v5851, %v6591
        %v6743 = vadd.f32 %v5852, %v6594
        %v6744 = vadd.f32 %v5853, %v6596
        %v6745 = vadd.f32 %v5854, %v6599
        %v6746 = vadd.f32 %v5855, %v6601
        %s6747 = sadd.s32 %s225, 144
        %s6748 = sshra.s32 %s6747, 3
        %s6749 = sand.u32 %s6747, 7
        %s6750 = smul.addr %s6748, 4
        %s6751 = scalar_lea.vmem %s215, %s6750
        %v6752 = vld [vmem:[%s6751] sm:$0xf]
        %v6753 = vld [vmem:[%s6751 + $0x4] sm:$0xf]
        %v6754 = vld [vmem:[%s6751 + $0x8] sm:$0xf]
        %v6755 = vld [vmem:[%s6751 + $0xc] sm:$0xf]
        %v6756 = vld [vmem:[%s6751 + $0x10] sm:$0xf]
        %v6757 = vld [vmem:[%s6751 + $0x14] sm:$0xf]
        %v6758 = vld [vmem:[%s6751 + $0x18] sm:$0xf]
        %v6759 = vld [vmem:[%s6751 + $0x1c] sm:$0xf]
        %v6760 = vld [vmem:[%s6751 + $0x20] sm:$0xf]
        %v6761 = vld [vmem:[%s6751 + $0x24] sm:$0xf]
        %v6762 = vld [vmem:[%s6751 + $0x28] sm:$0xf]
        %v6763 = vld [vmem:[%s6751 + $0x2c] sm:$0xf]
        %v6764 = vld [vmem:[%s6751 + $0x30] sm:$0xf]
        %v6765 = vld [vmem:[%s6751 + $0x34] sm:$0xf]
        %v6766 = vld [vmem:[%s6751 + $0x38] sm:$0xf]
        %v6767 = vld [vmem:[%s6751 + $0x3c] sm:$0xf]
        %v6768 = vld [vmem:[%s6751 + $0x40] sm:$0xf]
        %v6769 = vld [vmem:[%s6751 + $0x44] sm:$0xf]
        %v6770 = vld [vmem:[%s6751 + $0x48] sm:$0xf]
        %v6771 = vld [vmem:[%s6751 + $0x4c] sm:$0xf]
        %v6772 = vld [vmem:[%s6751 + $0x50] sm:$0xf]
        %v6773 = vld [vmem:[%s6751 + $0x54] sm:$0xf]
        %v6774 = vld [vmem:[%s6751 + $0x58] sm:$0xf]
        %v6775 = vld [vmem:[%s6751 + $0x5c] sm:$0xf]
        %v6776 = vld [vmem:[%s6751 + $0x60] sm:$0xf]
        %v6777 = vld [vmem:[%s6751 + $0x64] sm:$0xf]
        %v6778 = vld [vmem:[%s6751 + $0x68] sm:$0xf]
        %v6779 = vld [vmem:[%s6751 + $0x6c] sm:$0xf]
        %v6780 = vld [vmem:[%s6751 + $0x70] sm:$0xf]
        %v6781 = vld [vmem:[%s6751 + $0x74] sm:$0xf]
        %v6782 = vld [vmem:[%s6751 + $0x78] sm:$0xf]
        %v6783 = vld [vmem:[%s6751 + $0x7c] sm:$0xf]
        %v6784 = vld [vmem:[%s6751 + $0x80] sm:$0xf]
        %v6785 = vld [vmem:[%s6751 + $0x84] sm:$0xf]
        %v6786 = vld [vmem:[%s6751 + $0x88] sm:$0xf]
        %v6787 = vld [vmem:[%s6751 + $0x8c] sm:$0xf]
        %v6788 = vld [vmem:[%s6751 + $0x90] sm:$0xf]
        %v6789 = vld [vmem:[%s6751 + $0x94] sm:$0xf]
        %v6790 = vld [vmem:[%s6751 + $0x98] sm:$0xf]
        %v6791 = vld [vmem:[%s6751 + $0x9c] sm:$0xf]
        %v6792 = vld [vmem:[%s6751 + $0xa0] sm:$0xf]
        %v6793 = vld [vmem:[%s6751 + $0xa4] sm:$0xf]
        %v6794 = vld [vmem:[%s6751 + $0xa8] sm:$0xf]
        %v6795 = vld [vmem:[%s6751 + $0xac] sm:$0xf]
        %v6796 = vld [vmem:[%s6751 + $0xb0] sm:$0xf]
        %v6797 = vld [vmem:[%s6751 + $0xb4] sm:$0xf]
        %v6798 = vld [vmem:[%s6751 + $0xb8] sm:$0xf]
        %v6799 = vld [vmem:[%s6751 + $0xbc] sm:$0xf]
        %v6800 = vld [vmem:[%s6751 + $0xc0] sm:$0xf]
        %v6801 = vld [vmem:[%s6751 + $0xc4] sm:$0xf]
        %v6802 = vld [vmem:[%s6751 + $0xc8] sm:$0xf]
        %v6803 = vld [vmem:[%s6751 + $0xcc] sm:$0xf]
        %v6804 = vld [vmem:[%s6751 + $0xd0] sm:$0xf]
        %v6805 = vld [vmem:[%s6751 + $0xd4] sm:$0xf]
        %v6806 = vld [vmem:[%s6751 + $0xd8] sm:$0xf]
        %v6807 = vld [vmem:[%s6751 + $0xdc] sm:$0xf]
        %v6808 = vld [vmem:[%s6751 + $0xe0] sm:$0xf]
        %v6809 = vld [vmem:[%s6751 + $0xe4] sm:$0xf]
        %v6810 = vld [vmem:[%s6751 + $0xe8] sm:$0xf]
        %v6811 = vld [vmem:[%s6751 + $0xec] sm:$0xf]
        %v6812 = vld [vmem:[%s6751 + $0xf0] sm:$0xf]
        %v6813 = vld [vmem:[%s6751 + $0xf4] sm:$0xf]
        %v6814 = vld [vmem:[%s6751 + $0xf8] sm:$0xf]
        %v6815 = vld [vmem:[%s6751 + $0xfc] sm:$0xf]
        %v6816 = vld [vmem:[%s6751 + $0x100] sm:$0xf]
        %v6817 = vld [vmem:[%s6751 + $0x104] sm:$0xf]
        %v6818 = vld [vmem:[%s6751 + $0x108] sm:$0xf]
        %v6819 = vld [vmem:[%s6751 + $0x10c] sm:$0xf]
        %v6820 = vld [vmem:[%s6751 + $0x110] sm:$0xf]
        %v6821 = vld [vmem:[%s6751 + $0x114] sm:$0xf]
        %v6822 = vld [vmem:[%s6751 + $0x118] sm:$0xf]
        %v6823 = vld [vmem:[%s6751 + $0x11c] sm:$0xf]
        %v6824 = vld [vmem:[%s6751 + $0x120] sm:$0xf]
        %v6825 = vld [vmem:[%s6751 + $0x124] sm:$0xf]
        %v6826 = vld [vmem:[%s6751 + $0x128] sm:$0xf]
        %v6827 = vld [vmem:[%s6751 + $0x12c] sm:$0xf]
        %v6828 = vld [vmem:[%s6751 + $0x130] sm:$0xf]
        %v6829 = vld [vmem:[%s6751 + $0x134] sm:$0xf]
        %v6830 = vld [vmem:[%s6751 + $0x138] sm:$0xf]
        %v6831 = vld [vmem:[%s6751 + $0x13c] sm:$0xf]
        %v6832 = vld [vmem:[%s6751 + $0x140] sm:$0xf]
        %v6833 = vld [vmem:[%s6751 + $0x144] sm:$0xf]
        %v6834 = vld [vmem:[%s6751 + $0x148] sm:$0xf]
        %v6835 = vld [vmem:[%s6751 + $0x14c] sm:$0xf]
        %v6836 = vld [vmem:[%s6751 + $0x150] sm:$0xf]
        %v6837 = vld [vmem:[%s6751 + $0x154] sm:$0xf]
        %v6838 = vld [vmem:[%s6751 + $0x158] sm:$0xf]
        %v6839 = vld [vmem:[%s6751 + $0x15c] sm:$0xf]
        %v6840 = vld [vmem:[%s6751 + $0x160] sm:$0xf]
        %v6841 = vld [vmem:[%s6751 + $0x164] sm:$0xf]
        %v6842 = vld [vmem:[%s6751 + $0x168] sm:$0xf]
        %v6843 = vld [vmem:[%s6751 + $0x16c] sm:$0xf]
        %v6844 = vld [vmem:[%s6751 + $0x170] sm:$0xf]
        %v6845 = vld [vmem:[%s6751 + $0x174] sm:$0xf]
        %v6846 = vld [vmem:[%s6751 + $0x178] sm:$0xf]
        %v6847 = vld [vmem:[%s6751 + $0x17c] sm:$0xf]
        %v6848 = vld [vmem:[%s6751 + $0x180] sm:$0xf]
        %v6849 = vld [vmem:[%s6751 + $0x184] sm:$0xf]
        %v6850 = vld [vmem:[%s6751 + $0x188] sm:$0xf]
        %v6851 = vld [vmem:[%s6751 + $0x18c] sm:$0xf]
        %v6852 = vld [vmem:[%s6751 + $0x190] sm:$0xf]
        %v6853 = vld [vmem:[%s6751 + $0x194] sm:$0xf]
        %v6854 = vld [vmem:[%s6751 + $0x198] sm:$0xf]
        %v6855 = vld [vmem:[%s6751 + $0x19c] sm:$0xf]
        %v6856 = vld [vmem:[%s6751 + $0x1a0] sm:$0xf]
        %v6857 = vld [vmem:[%s6751 + $0x1a4] sm:$0xf]
        %v6858 = vld [vmem:[%s6751 + $0x1a8] sm:$0xf]
        %v6859 = vld [vmem:[%s6751 + $0x1ac] sm:$0xf]
        %v6860 = vld [vmem:[%s6751 + $0x1b0] sm:$0xf]
        %v6861 = vld [vmem:[%s6751 + $0x1b4] sm:$0xf]
        %v6862 = vld [vmem:[%s6751 + $0x1b8] sm:$0xf]
        %v6863 = vld [vmem:[%s6751 + $0x1bc] sm:$0xf]
        %v6864 = vld [vmem:[%s6751 + $0x1c0] sm:$0xf]
        %v6865 = vld [vmem:[%s6751 + $0x1c4] sm:$0xf]
        %v6866 = vld [vmem:[%s6751 + $0x1c8] sm:$0xf]
        %v6867 = vld [vmem:[%s6751 + $0x1cc] sm:$0xf]
        %v6868 = vld [vmem:[%s6751 + $0x1d0] sm:$0xf]
        %v6869 = vld [vmem:[%s6751 + $0x1d4] sm:$0xf]
        %v6870 = vld [vmem:[%s6751 + $0x1d8] sm:$0xf]
        %v6871 = vld [vmem:[%s6751 + $0x1dc] sm:$0xf]
        %v6872 = vld [vmem:[%s6751 + $0x1e0] sm:$0xf]
        %v6873 = vld [vmem:[%s6751 + $0x1e4] sm:$0xf]
        %v6874 = vld [vmem:[%s6751 + $0x1e8] sm:$0xf]
        %v6875 = vld [vmem:[%s6751 + $0x1ec] sm:$0xf]
        %v6876 = vld [vmem:[%s6751 + $0x1f0] sm:$0xf]
        %v6877 = vld [vmem:[%s6751 + $0x1f4] sm:$0xf]
        %v6878 = vld [vmem:[%s6751 + $0x1f8] sm:$0xf]
        %v6879 = vld [vmem:[%s6751 + $0x1fc] sm:$0xf]
        %v6880 = vld [vmem:[%s6751 + $0x200] sm:$0xf]
        %v6881 = vld [vmem:[%s6751 + $0x204] sm:$0xf]
        %v6882 = vld [vmem:[%s6751 + $0x208] sm:$0xf]
        %v6883 = vld [vmem:[%s6751 + $0x20c] sm:$0xf]
        %v6884 = vld [vmem:[%s6751 + $0x210] sm:$0xf]
        %v6885 = vld [vmem:[%s6751 + $0x214] sm:$0xf]
        %v6886 = vld [vmem:[%s6751 + $0x218] sm:$0xf]
        %v6887 = vld [vmem:[%s6751 + $0x21c] sm:$0xf]
        %v6888 = vld [vmem:[%s6751 + $0x220] sm:$0xf]
        %v6889 = vld [vmem:[%s6751 + $0x224] sm:$0xf]
        %v6890 = vld [vmem:[%s6751 + $0x228] sm:$0xf]
        %v6891 = vld [vmem:[%s6751 + $0x22c] sm:$0xf]
        %v6892 = vld [vmem:[%s6751 + $0x230] sm:$0xf]
        %v6893 = vld [vmem:[%s6751 + $0x234] sm:$0xf]
        %v6894 = vld [vmem:[%s6751 + $0x238] sm:$0xf]
        %v6895 = vld [vmem:[%s6751 + $0x23c] sm:$0xf]
        %v6896 = vld [vmem:[%s6751 + $0x240] sm:$0xf]
        %s6897 = scalar_lea.vmem %s219, 96
        %v6898 = vld [vmem:[%s6897] sm:$0xf]
        %v6899 = vld [vmem:[%s6897 + $0x4] sm:$0xf]
        %v6900 = vld [vmem:[%s6897 + $0x8] sm:$0xf]
        %v6901 = vld [vmem:[%s6897 + $0xc] sm:$0xf]
        %v7046 = vunpack.c.l.b16 %v6752
        %v7047 = vunpack.c.l.b16 %v6753
        %v7048 = vunpack.c.l.b16 %v6754
        %v7049 = vunpack.c.l.b16 %v6755
        %v7050 = vunpack.c.l.b16 %v6756
        %v7051 = vunpack.c.l.b16 %v6757
        %v7052 = vunpack.c.l.b16 %v6758
        %v7053 = vunpack.c.l.b16 %v6759
        %v7054 = vunpack.c.l.b16 %v6760
        %v7055 = vunpack.c.l.b16 %v6761
        %v7056 = vunpack.c.l.b16 %v6762
        %v7057 = vunpack.c.l.b16 %v6763
        %v7058 = vunpack.c.l.b16 %v6764
        %v7059 = vunpack.c.l.b16 %v6765
        %v7060 = vunpack.c.l.b16 %v6766
        %v7061 = vunpack.c.l.b16 %v6767
        %v7062 = vunpack.c.l.b16 %v6768
        %v7063 = vunpack.c.l.b16 %v6769
        %v7064 = vunpack.c.l.b16 %v6770
        %v7065 = vunpack.c.l.b16 %v6771
        %v7066 = vunpack.c.l.b16 %v6772
        %v7067 = vunpack.c.l.b16 %v6773
        %v7068 = vunpack.c.l.b16 %v6774
        %v7069 = vunpack.c.l.b16 %v6775
        %v7070 = vunpack.c.l.b16 %v6776
        %v7071 = vunpack.c.l.b16 %v6777
        %v7072 = vunpack.c.l.b16 %v6778
        %v7073 = vunpack.c.l.b16 %v6779
        %v7074 = vunpack.c.l.b16 %v6780
        %v7075 = vunpack.c.l.b16 %v6781
        %v7076 = vunpack.c.l.b16 %v6782
        %v7077 = vunpack.c.l.b16 %v6783
        %v7078 = vunpack.c.l.b16 %v6784
        %v7079 = vunpack.c.l.b16 %v6785
        %v7080 = vunpack.c.l.b16 %v6786
        %v7081 = vunpack.c.l.b16 %v6787
        %v7082 = vunpack.c.l.b16 %v6788
        %v7083 = vunpack.c.l.b16 %v6789
        %v7084 = vunpack.c.l.b16 %v6790
        %v7085 = vunpack.c.l.b16 %v6791
        %v7086 = vunpack.c.l.b16 %v6792
        %v7087 = vunpack.c.l.b16 %v6793
        %v7088 = vunpack.c.l.b16 %v6794
        %v7089 = vunpack.c.l.b16 %v6795
        %v7090 = vunpack.c.l.b16 %v6796
        %v7091 = vunpack.c.l.b16 %v6797
        %v7092 = vunpack.c.l.b16 %v6798
        %v7093 = vunpack.c.l.b16 %v6799
        %v7094 = vunpack.c.l.b16 %v6800
        %v7095 = vunpack.c.l.b16 %v6801
        %v7096 = vunpack.c.l.b16 %v6802
        %v7097 = vunpack.c.l.b16 %v6803
        %v7098 = vunpack.c.l.b16 %v6804
        %v7099 = vunpack.c.l.b16 %v6805
        %v7100 = vunpack.c.l.b16 %v6806
        %v7101 = vunpack.c.l.b16 %v6807
        %v7102 = vunpack.c.l.b16 %v6808
        %v7103 = vunpack.c.l.b16 %v6809
        %v7104 = vunpack.c.l.b16 %v6810
        %v7105 = vunpack.c.l.b16 %v6811
        %v7106 = vunpack.c.l.b16 %v6812
        %v7107 = vunpack.c.l.b16 %v6813
        %v7108 = vunpack.c.l.b16 %v6814
        %v7109 = vunpack.c.l.b16 %v6815
        %v7110 = vunpack.c.l.b16 %v6816
        %v7111 = vunpack.c.l.b16 %v6817
        %v7112 = vunpack.c.l.b16 %v6818
        %v7113 = vunpack.c.l.b16 %v6819
        %v7114 = vunpack.c.l.b16 %v6820
        %v7115 = vunpack.c.l.b16 %v6821
        %v7116 = vunpack.c.l.b16 %v6822
        %v7117 = vunpack.c.l.b16 %v6823
        %v7118 = vunpack.c.l.b16 %v6824
        %v7119 = vunpack.c.l.b16 %v6825
        %v7120 = vunpack.c.l.b16 %v6826
        %v7121 = vunpack.c.l.b16 %v6827
        %v7122 = vunpack.c.l.b16 %v6828
        %v7123 = vunpack.c.l.b16 %v6829
        %v7124 = vunpack.c.l.b16 %v6830
        %v7125 = vunpack.c.l.b16 %v6831
        %v7126 = vunpack.c.l.b16 %v6832
        %v7127 = vunpack.c.l.b16 %v6833
        %v7128 = vunpack.c.l.b16 %v6834
        %v7129 = vunpack.c.l.b16 %v6835
        %v7130 = vunpack.c.l.b16 %v6836
        %v7131 = vunpack.c.l.b16 %v6837
        %v7132 = vunpack.c.l.b16 %v6838
        %v7133 = vunpack.c.l.b16 %v6839
        %v7134 = vunpack.c.l.b16 %v6840
        %v7135 = vunpack.c.l.b16 %v6841
        %v7136 = vunpack.c.l.b16 %v6842
        %v7137 = vunpack.c.l.b16 %v6843
        %v7138 = vunpack.c.l.b16 %v6844
        %v7139 = vunpack.c.l.b16 %v6845
        %v7140 = vunpack.c.l.b16 %v6846
        %v7141 = vunpack.c.l.b16 %v6847
        %v7142 = vunpack.c.l.b16 %v6848
        %v7143 = vunpack.c.l.b16 %v6849
        %v7144 = vunpack.c.l.b16 %v6850
        %v7145 = vunpack.c.l.b16 %v6851
        %v7146 = vunpack.c.l.b16 %v6852
        %v7147 = vunpack.c.l.b16 %v6853
        %v7148 = vunpack.c.l.b16 %v6854
        %v7149 = vunpack.c.l.b16 %v6855
        %v7150 = vunpack.c.l.b16 %v6856
        %v7151 = vunpack.c.l.b16 %v6857
        %v7152 = vunpack.c.l.b16 %v6858
        %v7153 = vunpack.c.l.b16 %v6859
        %v7154 = vunpack.c.l.b16 %v6860
        %v7155 = vunpack.c.l.b16 %v6861
        %v7156 = vunpack.c.l.b16 %v6862
        %v7157 = vunpack.c.l.b16 %v6863
        %v7158 = vunpack.c.l.b16 %v6864
        %v7159 = vunpack.c.l.b16 %v6865
        %v7160 = vunpack.c.l.b16 %v6866
        %v7161 = vunpack.c.l.b16 %v6867
        %v7162 = vunpack.c.l.b16 %v6868
        %v7163 = vunpack.c.l.b16 %v6869
        %v7164 = vunpack.c.l.b16 %v6870
        %v7165 = vunpack.c.l.b16 %v6871
        %v7166 = vunpack.c.l.b16 %v6872
        %v7167 = vunpack.c.l.b16 %v6873
        %v7168 = vunpack.c.l.b16 %v6874
        %v7169 = vunpack.c.l.b16 %v6875
        %v7170 = vunpack.c.l.b16 %v6876
        %v7171 = vunpack.c.l.b16 %v6877
        %v7172 = vunpack.c.l.b16 %v6878
        %v7173 = vunpack.c.l.b16 %v6879
        %v7174 = vunpack.c.l.b16 %v6880
        %v7175 = vunpack.c.l.b16 %v6881
        %v7176 = vunpack.c.l.b16 %v6882
        %v7177 = vunpack.c.l.b16 %v6883
        %v7178 = vunpack.c.l.b16 %v6884
        %v7179 = vunpack.c.l.b16 %v6885
        %v7180 = vunpack.c.l.b16 %v6886
        %v7181 = vunpack.c.l.b16 %v6887
        %v7182 = vunpack.c.l.b16 %v6888
        %v7183 = vunpack.c.l.b16 %v6889
        %v7184 = vunpack.c.l.b16 %v6890
        %v7185 = vunpack.c.l.b16 %v6891
        %v7186 = vunpack.c.l.b16 %v6892
        %v7187 = vunpack.c.l.b16 %v6893
        %v7188 = vunpack.c.l.b16 %v6894
        %v7189 = vunpack.c.l.b16 %v6895
        %v7190 = vpack.c.b16 %v7047, %v7046
        %v7191 = vpack.c.b16 %v7049, %v7048
        %v7192 = vpack.c.b16 %v7051, %v7050
        %v7193 = vpack.c.b16 %v7053, %v7052
        %v7194 = vpack.c.b16 %v7055, %v7054
        %v7195 = vpack.c.b16 %v7057, %v7056
        %v7196 = vpack.c.b16 %v7059, %v7058
        %v7197 = vpack.c.b16 %v7061, %v7060
        %v7198 = vpack.c.b16 %v7063, %v7062
        %v7199 = vpack.c.b16 %v7065, %v7064
        %v7200 = vpack.c.b16 %v7067, %v7066
        %v7201 = vpack.c.b16 %v7069, %v7068
        %v7202 = vpack.c.b16 %v7071, %v7070
        %v7203 = vpack.c.b16 %v7073, %v7072
        %v7204 = vpack.c.b16 %v7075, %v7074
        %v7205 = vpack.c.b16 %v7077, %v7076
        %v7206 = vpack.c.b16 %v7079, %v7078
        %v7207 = vpack.c.b16 %v7081, %v7080
        %v7208 = vpack.c.b16 %v7083, %v7082
        %v7209 = vpack.c.b16 %v7085, %v7084
        %v7210 = vpack.c.b16 %v7087, %v7086
        %v7211 = vpack.c.b16 %v7089, %v7088
        %v7212 = vpack.c.b16 %v7091, %v7090
        %v7213 = vpack.c.b16 %v7093, %v7092
        %v7214 = vpack.c.b16 %v7095, %v7094
        %v7215 = vpack.c.b16 %v7097, %v7096
        %v7216 = vpack.c.b16 %v7099, %v7098
        %v7217 = vpack.c.b16 %v7101, %v7100
        %v7218 = vpack.c.b16 %v7103, %v7102
        %v7219 = vpack.c.b16 %v7105, %v7104
        %v7220 = vpack.c.b16 %v7107, %v7106
        %v7221 = vpack.c.b16 %v7109, %v7108
        %v7222 = vpack.c.b16 %v7111, %v7110
        %v7223 = vpack.c.b16 %v7113, %v7112
        %v7224 = vpack.c.b16 %v7115, %v7114
        %v7225 = vpack.c.b16 %v7117, %v7116
        %v7226 = vpack.c.b16 %v7119, %v7118
        %v7227 = vpack.c.b16 %v7121, %v7120
        %v7228 = vpack.c.b16 %v7123, %v7122
        %v7229 = vpack.c.b16 %v7125, %v7124
        %v7230 = vpack.c.b16 %v7127, %v7126
        %v7231 = vpack.c.b16 %v7129, %v7128
        %v7232 = vpack.c.b16 %v7131, %v7130
        %v7233 = vpack.c.b16 %v7133, %v7132
        %v7234 = vpack.c.b16 %v7135, %v7134
        %v7235 = vpack.c.b16 %v7137, %v7136
        %v7236 = vpack.c.b16 %v7139, %v7138
        %v7237 = vpack.c.b16 %v7141, %v7140
        %v7238 = vpack.c.b16 %v7143, %v7142
        %v7239 = vpack.c.b16 %v7145, %v7144
        %v7240 = vpack.c.b16 %v7147, %v7146
        %v7241 = vpack.c.b16 %v7149, %v7148
        %v7242 = vpack.c.b16 %v7151, %v7150
        %v7243 = vpack.c.b16 %v7153, %v7152
        %v7244 = vpack.c.b16 %v7155, %v7154
        %v7245 = vpack.c.b16 %v7157, %v7156
        %v7246 = vpack.c.b16 %v7159, %v7158
        %v7247 = vpack.c.b16 %v7161, %v7160
        %v7248 = vpack.c.b16 %v7163, %v7162
        %v7249 = vpack.c.b16 %v7165, %v7164
        %v7250 = vpack.c.b16 %v7167, %v7166
        %v7251 = vpack.c.b16 %v7169, %v7168
        %v7252 = vpack.c.b16 %v7171, %v7170
        %v7253 = vpack.c.b16 %v7173, %v7172
        %v7254 = vpack.c.b16 %v7175, %v7174
        %v7255 = vpack.c.b16 %v7177, %v7176
        %v7256 = vpack.c.b16 %v7179, %v7178
        %v7257 = vpack.c.b16 %v7181, %v7180
        %v7258 = vpack.c.b16 %v7183, %v7182
        %v7259 = vpack.c.b16 %v7185, %v7184
        %v7260 = vpack.c.b16 %v7187, %v7186
        %v7261 = vpack.c.b16 %v7189, %v7188
        %v7266 = vunpack.c.l.b16 %v6898
        %v7267 = vunpack.c.l.b16 %v6899
        %v7268 = vunpack.c.l.b16 %v6900
        %v7269 = vunpack.c.l.b16 %v6901
        %v7270 = vpack.c.b16 %v7267, %v7266
        %v7271 = vpack.c.b16 %v7269, %v7268
        %v7275 = vsel %vm1340, %v7190, 0
        %v7278 = vsel %vm1340, %v7191, 0
        %v7281 = vsel %vm1340, %v7192, 0
        %v7284 = vsel %vm1340, %v7193, 0
        %v7287 = vsel %vm1340, %v7194, 0
        %v7290 = vsel %vm1340, %v7195, 0
        %v7293 = vsel %vm1340, %v7196, 0
        %v7296 = vsel %vm1340, %v7197, 0
        %v7299 = vsel %vm1340, %v7198, 0
        %v7302 = vsel %vm1340, %v7199, 0
        %v7305 = vsel %vm1340, %v7200, 0
        %v7308 = vsel %vm1340, %v7201, 0
        %v7311 = vsel %vm1340, %v7202, 0
        %v7314 = vsel %vm1340, %v7203, 0
        %v7317 = vsel %vm1340, %v7204, 0
        %v7320 = vsel %vm1340, %v7205, 0
        %v7323 = vsel %vm1340, %v7206, 0
        %v7326 = vsel %vm1340, %v7207, 0
        %v7329 = vsel %vm1340, %v7208, 0
        %v7332 = vsel %vm1340, %v7209, 0
        %v7335 = vsel %vm1340, %v7210, 0
        %v7338 = vsel %vm1340, %v7211, 0
        %v7341 = vsel %vm1340, %v7212, 0
        %v7344 = vsel %vm1340, %v7213, 0
        %v7347 = vsel %vm1340, %v7214, 0
        %v7350 = vsel %vm1340, %v7215, 0
        %v7353 = vsel %vm1340, %v7216, 0
        %v7356 = vsel %vm1340, %v7217, 0
        %v7359 = vsel %vm1340, %v7218, 0
        %v7362 = vsel %vm1340, %v7219, 0
        %v7365 = vsel %vm1340, %v7220, 0
        %v7368 = vsel %vm1340, %v7221, 0
        %v7371 = vsel %vm1340, %v7222, 0
        %v7374 = vsel %vm1340, %v7223, 0
        %v7377 = vsel %vm1340, %v7224, 0
        %v7380 = vsel %vm1340, %v7225, 0
        %v7383 = vsel %vm1340, %v7226, 0
        %v7386 = vsel %vm1340, %v7227, 0
        %v7389 = vsel %vm1340, %v7228, 0
        %v7392 = vsel %vm1340, %v7229, 0
        %v7395 = vsel %vm1340, %v7230, 0
        %v7398 = vsel %vm1340, %v7231, 0
        %v7401 = vsel %vm1340, %v7232, 0
        %v7404 = vsel %vm1340, %v7233, 0
        %v7407 = vsel %vm1340, %v7234, 0
        %v7410 = vsel %vm1340, %v7235, 0
        %v7413 = vsel %vm1340, %v7236, 0
        %v7416 = vsel %vm1340, %v7237, 0
        %v7419 = vsel %vm1340, %v7238, 0
        %v7422 = vsel %vm1340, %v7239, 0
        %v7425 = vsel %vm1340, %v7240, 0
        %v7428 = vsel %vm1340, %v7241, 0
        %v7431 = vsel %vm1340, %v7242, 0
        %v7434 = vsel %vm1340, %v7243, 0
        %v7437 = vsel %vm1340, %v7244, 0
        %v7440 = vsel %vm1340, %v7245, 0
        %v7443 = vsel %vm1340, %v7246, 0
        %v7446 = vsel %vm1340, %v7247, 0
        %v7449 = vsel %vm1340, %v7248, 0
        %v7452 = vsel %vm1340, %v7249, 0
        %v7455 = vsel %vm1340, %v7250, 0
        %v7458 = vsel %vm1340, %v7251, 0
        %v7461 = vsel %vm1340, %v7252, 0
        %v7464 = vsel %vm1340, %v7253, 0
        %v7467 = vsel %vm1340, %v7254, 0
        %v7470 = vsel %vm1340, %v7255, 0
        %v7473 = vsel %vm1340, %v7256, 0
        %v7476 = vsel %vm1340, %v7257, 0
        %v7479 = vsel %vm1340, %v7258, 0
        %v7482 = vsel %vm1340, %v7259, 0
        %v7485 = vsel %vm1340, %v7260, 0
        %v7488 = vsel %vm1340, %v7261, 0
        %7490 = vmatpush.bf16.msra.mxu0 0
        %7491 = vmatpush.bf16.msra.mxu0 0
        %7492 = vmatpush.bf16.msra.mxu0 0
        %7493 = vmatpush.bf16.msra.mxu0 0
        %7494 = vmatpush.bf16.msra.mxu0 0
        %7495 = vmatpush.bf16.msra.mxu0 0
        %7496 = vmatpush.bf16.msra.mxu0 %v7271
        %7497 = vmatpush.bf16.msra.mxu0 %v7270
        %7498 = vmatmul.bf16.gmra.mxu0 %v7275
        %v7499 = vpop.f32.mrf.mxu0
        %v7500 = vadd.f32 0.0, %v7499
        %v7501 = vpop.f32.mrf.mxu0
        %v7502 = vadd.f32 0.0, %v7501
        %7503 = vmatmul.bf16.gmra.mxu0 %v7278
        %v7504 = vpop.f32.mrf.mxu0
        %v7505 = vadd.f32 0.0, %v7504
        %v7506 = vpop.f32.mrf.mxu0
        %v7507 = vadd.f32 0.0, %v7506
        %7508 = vmatmul.bf16.gmra.mxu0 %v7281
        %v7509 = vpop.f32.mrf.mxu0
        %v7510 = vadd.f32 0.0, %v7509
        %v7511 = vpop.f32.mrf.mxu0
        %v7512 = vadd.f32 0.0, %v7511
        %7513 = vmatmul.bf16.gmra.mxu0 %v7284
        %v7514 = vpop.f32.mrf.mxu0
        %v7515 = vadd.f32 0.0, %v7514
        %v7516 = vpop.f32.mrf.mxu0
        %v7517 = vadd.f32 0.0, %v7516
        %7518 = vmatmul.bf16.gmra.mxu0 %v7287
        %v7519 = vpop.f32.mrf.mxu0
        %v7520 = vadd.f32 0.0, %v7519
        %v7521 = vpop.f32.mrf.mxu0
        %v7522 = vadd.f32 0.0, %v7521
        %7523 = vmatmul.bf16.gmra.mxu0 %v7290
        %v7524 = vpop.f32.mrf.mxu0
        %v7525 = vadd.f32 0.0, %v7524
        %v7526 = vpop.f32.mrf.mxu0
        %v7527 = vadd.f32 0.0, %v7526
        %7528 = vmatmul.bf16.gmra.mxu0 %v7293
        %v7529 = vpop.f32.mrf.mxu0
        %v7530 = vadd.f32 0.0, %v7529
        %v7531 = vpop.f32.mrf.mxu0
        %v7532 = vadd.f32 0.0, %v7531
        %7533 = vmatmul.bf16.gmra.mxu0 %v7296
        %v7534 = vpop.f32.mrf.mxu0
        %v7535 = vadd.f32 0.0, %v7534
        %v7536 = vpop.f32.mrf.mxu0
        %v7537 = vadd.f32 0.0, %v7536
        %7538 = vmatmul.bf16.gmra.mxu0 %v7299
        %v7539 = vpop.f32.mrf.mxu0
        %v7540 = vadd.f32 0.0, %v7539
        %v7541 = vpop.f32.mrf.mxu0
        %v7542 = vadd.f32 0.0, %v7541
        %7543 = vmatmul.bf16.gmra.mxu0 %v7302
        %v7544 = vpop.f32.mrf.mxu0
        %v7545 = vadd.f32 0.0, %v7544
        %v7546 = vpop.f32.mrf.mxu0
        %v7547 = vadd.f32 0.0, %v7546
        %7548 = vmatmul.bf16.gmra.mxu0 %v7305
        %v7549 = vpop.f32.mrf.mxu0
        %v7550 = vadd.f32 0.0, %v7549
        %v7551 = vpop.f32.mrf.mxu0
        %v7552 = vadd.f32 0.0, %v7551
        %7553 = vmatmul.bf16.gmra.mxu0 %v7308
        %v7554 = vpop.f32.mrf.mxu0
        %v7555 = vadd.f32 0.0, %v7554
        %v7556 = vpop.f32.mrf.mxu0
        %v7557 = vadd.f32 0.0, %v7556
        %7558 = vmatmul.bf16.gmra.mxu0 %v7311
        %v7559 = vpop.f32.mrf.mxu0
        %v7560 = vadd.f32 0.0, %v7559
        %v7561 = vpop.f32.mrf.mxu0
        %v7562 = vadd.f32 0.0, %v7561
        %7563 = vmatmul.bf16.gmra.mxu0 %v7314
        %v7564 = vpop.f32.mrf.mxu0
        %v7565 = vadd.f32 0.0, %v7564
        %v7566 = vpop.f32.mrf.mxu0
        %v7567 = vadd.f32 0.0, %v7566
        %7568 = vmatmul.bf16.gmra.mxu0 %v7317
        %v7569 = vpop.f32.mrf.mxu0
        %v7570 = vadd.f32 0.0, %v7569
        %v7571 = vpop.f32.mrf.mxu0
        %v7572 = vadd.f32 0.0, %v7571
        %7573 = vmatmul.bf16.gmra.mxu0 %v7320
        %v7574 = vpop.f32.mrf.mxu0
        %v7575 = vadd.f32 0.0, %v7574
        %v7576 = vpop.f32.mrf.mxu0
        %v7577 = vadd.f32 0.0, %v7576
        %7578 = vmatmul.bf16.gmra.mxu0 %v7323
        %v7579 = vpop.f32.mrf.mxu0
        %v7580 = vadd.f32 0.0, %v7579
        %v7581 = vpop.f32.mrf.mxu0
        %v7582 = vadd.f32 0.0, %v7581
        %7583 = vmatmul.bf16.gmra.mxu0 %v7326
        %v7584 = vpop.f32.mrf.mxu0
        %v7585 = vadd.f32 0.0, %v7584
        %v7586 = vpop.f32.mrf.mxu0
        %v7587 = vadd.f32 0.0, %v7586
        %7588 = vmatmul.bf16.gmra.mxu0 %v7329
        %v7589 = vpop.f32.mrf.mxu0
        %v7590 = vadd.f32 0.0, %v7589
        %v7591 = vpop.f32.mrf.mxu0
        %v7592 = vadd.f32 0.0, %v7591
        %7593 = vmatmul.bf16.gmra.mxu0 %v7332
        %v7594 = vpop.f32.mrf.mxu0
        %v7595 = vadd.f32 0.0, %v7594
        %v7596 = vpop.f32.mrf.mxu0
        %v7597 = vadd.f32 0.0, %v7596
        %7598 = vmatmul.bf16.gmra.mxu0 %v7335
        %v7599 = vpop.f32.mrf.mxu0
        %v7600 = vadd.f32 0.0, %v7599
        %v7601 = vpop.f32.mrf.mxu0
        %v7602 = vadd.f32 0.0, %v7601
        %7603 = vmatmul.bf16.gmra.mxu0 %v7338
        %v7604 = vpop.f32.mrf.mxu0
        %v7605 = vadd.f32 0.0, %v7604
        %v7606 = vpop.f32.mrf.mxu0
        %v7607 = vadd.f32 0.0, %v7606
        %7608 = vmatmul.bf16.gmra.mxu0 %v7341
        %v7609 = vpop.f32.mrf.mxu0
        %v7610 = vadd.f32 0.0, %v7609
        %v7611 = vpop.f32.mrf.mxu0
        %v7612 = vadd.f32 0.0, %v7611
        %7613 = vmatmul.bf16.gmra.mxu0 %v7344
        %v7614 = vpop.f32.mrf.mxu0
        %v7615 = vadd.f32 0.0, %v7614
        %v7616 = vpop.f32.mrf.mxu0
        %v7617 = vadd.f32 0.0, %v7616
        %7618 = vmatmul.bf16.gmra.mxu0 %v7347
        %v7619 = vpop.f32.mrf.mxu0
        %v7620 = vadd.f32 0.0, %v7619
        %v7621 = vpop.f32.mrf.mxu0
        %v7622 = vadd.f32 0.0, %v7621
        %7623 = vmatmul.bf16.gmra.mxu0 %v7350
        %v7624 = vpop.f32.mrf.mxu0
        %v7625 = vadd.f32 0.0, %v7624
        %v7626 = vpop.f32.mrf.mxu0
        %v7627 = vadd.f32 0.0, %v7626
        %7628 = vmatmul.bf16.gmra.mxu0 %v7353
        %v7629 = vpop.f32.mrf.mxu0
        %v7630 = vadd.f32 0.0, %v7629
        %v7631 = vpop.f32.mrf.mxu0
        %v7632 = vadd.f32 0.0, %v7631
        %7633 = vmatmul.bf16.gmra.mxu0 %v7356
        %v7634 = vpop.f32.mrf.mxu0
        %v7635 = vadd.f32 0.0, %v7634
        %v7636 = vpop.f32.mrf.mxu0
        %v7637 = vadd.f32 0.0, %v7636
        %7638 = vmatmul.bf16.gmra.mxu0 %v7359
        %v7639 = vpop.f32.mrf.mxu0
        %v7640 = vadd.f32 0.0, %v7639
        %v7641 = vpop.f32.mrf.mxu0
        %v7642 = vadd.f32 0.0, %v7641
        %7643 = vmatmul.bf16.gmra.mxu0 %v7362
        %v7644 = vpop.f32.mrf.mxu0
        %v7645 = vadd.f32 0.0, %v7644
        %v7646 = vpop.f32.mrf.mxu0
        %v7647 = vadd.f32 0.0, %v7646
        %7648 = vmatmul.bf16.gmra.mxu0 %v7365
        %v7649 = vpop.f32.mrf.mxu0
        %v7650 = vadd.f32 0.0, %v7649
        %v7651 = vpop.f32.mrf.mxu0
        %v7652 = vadd.f32 0.0, %v7651
        %7653 = vmatmul.bf16.gmra.mxu0 %v7368
        %v7654 = vpop.f32.mrf.mxu0
        %v7655 = vadd.f32 0.0, %v7654
        %v7656 = vpop.f32.mrf.mxu0
        %v7657 = vadd.f32 0.0, %v7656
        %7658 = vmatmul.bf16.gmra.mxu0 %v7371
        %v7659 = vpop.f32.mrf.mxu0
        %v7660 = vadd.f32 0.0, %v7659
        %v7661 = vpop.f32.mrf.mxu0
        %v7662 = vadd.f32 0.0, %v7661
        %7663 = vmatmul.bf16.gmra.mxu0 %v7374
        %v7664 = vpop.f32.mrf.mxu0
        %v7665 = vadd.f32 0.0, %v7664
        %v7666 = vpop.f32.mrf.mxu0
        %v7667 = vadd.f32 0.0, %v7666
        %7668 = vmatmul.bf16.gmra.mxu0 %v7377
        %v7669 = vpop.f32.mrf.mxu0
        %v7670 = vadd.f32 0.0, %v7669
        %v7671 = vpop.f32.mrf.mxu0
        %v7672 = vadd.f32 0.0, %v7671
        %7673 = vmatmul.bf16.gmra.mxu0 %v7380
        %v7674 = vpop.f32.mrf.mxu0
        %v7675 = vadd.f32 0.0, %v7674
        %v7676 = vpop.f32.mrf.mxu0
        %v7677 = vadd.f32 0.0, %v7676
        %7678 = vmatmul.bf16.gmra.mxu0 %v7383
        %v7679 = vpop.f32.mrf.mxu0
        %v7680 = vadd.f32 0.0, %v7679
        %v7681 = vpop.f32.mrf.mxu0
        %v7682 = vadd.f32 0.0, %v7681
        %7683 = vmatmul.bf16.gmra.mxu0 %v7386
        %v7684 = vpop.f32.mrf.mxu0
        %v7685 = vadd.f32 0.0, %v7684
        %v7686 = vpop.f32.mrf.mxu0
        %v7687 = vadd.f32 0.0, %v7686
        %7688 = vmatmul.bf16.gmra.mxu0 %v7389
        %v7689 = vpop.f32.mrf.mxu0
        %v7690 = vadd.f32 0.0, %v7689
        %v7691 = vpop.f32.mrf.mxu0
        %v7692 = vadd.f32 0.0, %v7691
        %7693 = vmatmul.bf16.gmra.mxu0 %v7392
        %v7694 = vpop.f32.mrf.mxu0
        %v7695 = vadd.f32 0.0, %v7694
        %v7696 = vpop.f32.mrf.mxu0
        %v7697 = vadd.f32 0.0, %v7696
        %7698 = vmatmul.bf16.gmra.mxu0 %v7395
        %v7699 = vpop.f32.mrf.mxu0
        %v7700 = vadd.f32 0.0, %v7699
        %v7701 = vpop.f32.mrf.mxu0
        %v7702 = vadd.f32 0.0, %v7701
        %7703 = vmatmul.bf16.gmra.mxu0 %v7398
        %v7704 = vpop.f32.mrf.mxu0
        %v7705 = vadd.f32 0.0, %v7704
        %v7706 = vpop.f32.mrf.mxu0
        %v7707 = vadd.f32 0.0, %v7706
        %7708 = vmatmul.bf16.gmra.mxu0 %v7401
        %v7709 = vpop.f32.mrf.mxu0
        %v7710 = vadd.f32 0.0, %v7709
        %v7711 = vpop.f32.mrf.mxu0
        %v7712 = vadd.f32 0.0, %v7711
        %7713 = vmatmul.bf16.gmra.mxu0 %v7404
        %v7714 = vpop.f32.mrf.mxu0
        %v7715 = vadd.f32 0.0, %v7714
        %v7716 = vpop.f32.mrf.mxu0
        %v7717 = vadd.f32 0.0, %v7716
        %7718 = vmatmul.bf16.gmra.mxu0 %v7407
        %v7719 = vpop.f32.mrf.mxu0
        %v7720 = vadd.f32 0.0, %v7719
        %v7721 = vpop.f32.mrf.mxu0
        %v7722 = vadd.f32 0.0, %v7721
        %7723 = vmatmul.bf16.gmra.mxu0 %v7410
        %v7724 = vpop.f32.mrf.mxu0
        %v7725 = vadd.f32 0.0, %v7724
        %v7726 = vpop.f32.mrf.mxu0
        %v7727 = vadd.f32 0.0, %v7726
        %7728 = vmatmul.bf16.gmra.mxu0 %v7413
        %v7729 = vpop.f32.mrf.mxu0
        %v7730 = vadd.f32 0.0, %v7729
        %v7731 = vpop.f32.mrf.mxu0
        %v7732 = vadd.f32 0.0, %v7731
        %7733 = vmatmul.bf16.gmra.mxu0 %v7416
        %v7734 = vpop.f32.mrf.mxu0
        %v7735 = vadd.f32 0.0, %v7734
        %v7736 = vpop.f32.mrf.mxu0
        %v7737 = vadd.f32 0.0, %v7736
        %7738 = vmatmul.bf16.gmra.mxu0 %v7419
        %v7739 = vpop.f32.mrf.mxu0
        %v7740 = vadd.f32 0.0, %v7739
        %v7741 = vpop.f32.mrf.mxu0
        %v7742 = vadd.f32 0.0, %v7741
        %7743 = vmatmul.bf16.gmra.mxu0 %v7422
        %v7744 = vpop.f32.mrf.mxu0
        %v7745 = vadd.f32 0.0, %v7744
        %v7746 = vpop.f32.mrf.mxu0
        %v7747 = vadd.f32 0.0, %v7746
        %7748 = vmatmul.bf16.gmra.mxu0 %v7425
        %v7749 = vpop.f32.mrf.mxu0
        %v7750 = vadd.f32 0.0, %v7749
        %v7751 = vpop.f32.mrf.mxu0
        %v7752 = vadd.f32 0.0, %v7751
        %7753 = vmatmul.bf16.gmra.mxu0 %v7428
        %v7754 = vpop.f32.mrf.mxu0
        %v7755 = vadd.f32 0.0, %v7754
        %v7756 = vpop.f32.mrf.mxu0
        %v7757 = vadd.f32 0.0, %v7756
        %7758 = vmatmul.bf16.gmra.mxu0 %v7431
        %v7759 = vpop.f32.mrf.mxu0
        %v7760 = vadd.f32 0.0, %v7759
        %v7761 = vpop.f32.mrf.mxu0
        %v7762 = vadd.f32 0.0, %v7761
        %7763 = vmatmul.bf16.gmra.mxu0 %v7434
        %v7764 = vpop.f32.mrf.mxu0
        %v7765 = vadd.f32 0.0, %v7764
        %v7766 = vpop.f32.mrf.mxu0
        %v7767 = vadd.f32 0.0, %v7766
        %7768 = vmatmul.bf16.gmra.mxu0 %v7437
        %v7769 = vpop.f32.mrf.mxu0
        %v7770 = vadd.f32 0.0, %v7769
        %v7771 = vpop.f32.mrf.mxu0
        %v7772 = vadd.f32 0.0, %v7771
        %7773 = vmatmul.bf16.gmra.mxu0 %v7440
        %v7774 = vpop.f32.mrf.mxu0
        %v7775 = vadd.f32 0.0, %v7774
        %v7776 = vpop.f32.mrf.mxu0
        %v7777 = vadd.f32 0.0, %v7776
        %7778 = vmatmul.bf16.gmra.mxu0 %v7443
        %v7779 = vpop.f32.mrf.mxu0
        %v7780 = vadd.f32 0.0, %v7779
        %v7781 = vpop.f32.mrf.mxu0
        %v7782 = vadd.f32 0.0, %v7781
        %7783 = vmatmul.bf16.gmra.mxu0 %v7446
        %v7784 = vpop.f32.mrf.mxu0
        %v7785 = vadd.f32 0.0, %v7784
        %v7786 = vpop.f32.mrf.mxu0
        %v7787 = vadd.f32 0.0, %v7786
        %7788 = vmatmul.bf16.gmra.mxu0 %v7449
        %v7789 = vpop.f32.mrf.mxu0
        %v7790 = vadd.f32 0.0, %v7789
        %v7791 = vpop.f32.mrf.mxu0
        %v7792 = vadd.f32 0.0, %v7791
        %7793 = vmatmul.bf16.gmra.mxu0 %v7452
        %v7794 = vpop.f32.mrf.mxu0
        %v7795 = vadd.f32 0.0, %v7794
        %v7796 = vpop.f32.mrf.mxu0
        %v7797 = vadd.f32 0.0, %v7796
        %7798 = vmatmul.bf16.gmra.mxu0 %v7455
        %v7799 = vpop.f32.mrf.mxu0
        %v7800 = vadd.f32 0.0, %v7799
        %v7801 = vpop.f32.mrf.mxu0
        %v7802 = vadd.f32 0.0, %v7801
        %7803 = vmatmul.bf16.gmra.mxu0 %v7458
        %v7804 = vpop.f32.mrf.mxu0
        %v7805 = vadd.f32 0.0, %v7804
        %v7806 = vpop.f32.mrf.mxu0
        %v7807 = vadd.f32 0.0, %v7806
        %7808 = vmatmul.bf16.gmra.mxu0 %v7461
        %v7809 = vpop.f32.mrf.mxu0
        %v7810 = vadd.f32 0.0, %v7809
        %v7811 = vpop.f32.mrf.mxu0
        %v7812 = vadd.f32 0.0, %v7811
        %7813 = vmatmul.bf16.gmra.mxu0 %v7464
        %v7814 = vpop.f32.mrf.mxu0
        %v7815 = vadd.f32 0.0, %v7814
        %v7816 = vpop.f32.mrf.mxu0
        %v7817 = vadd.f32 0.0, %v7816
        %7818 = vmatmul.bf16.gmra.mxu0 %v7467
        %v7819 = vpop.f32.mrf.mxu0
        %v7820 = vadd.f32 0.0, %v7819
        %v7821 = vpop.f32.mrf.mxu0
        %v7822 = vadd.f32 0.0, %v7821
        %7823 = vmatmul.bf16.gmra.mxu0 %v7470
        %v7824 = vpop.f32.mrf.mxu0
        %v7825 = vadd.f32 0.0, %v7824
        %v7826 = vpop.f32.mrf.mxu0
        %v7827 = vadd.f32 0.0, %v7826
        %7828 = vmatmul.bf16.gmra.mxu0 %v7473
        %v7829 = vpop.f32.mrf.mxu0
        %v7830 = vadd.f32 0.0, %v7829
        %v7831 = vpop.f32.mrf.mxu0
        %v7832 = vadd.f32 0.0, %v7831
        %7833 = vmatmul.bf16.gmra.mxu0 %v7476
        %v7834 = vpop.f32.mrf.mxu0
        %v7835 = vadd.f32 0.0, %v7834
        %v7836 = vpop.f32.mrf.mxu0
        %v7837 = vadd.f32 0.0, %v7836
        %7838 = vmatmul.bf16.gmra.mxu0 %v7479
        %v7839 = vpop.f32.mrf.mxu0
        %v7840 = vadd.f32 0.0, %v7839
        %v7841 = vpop.f32.mrf.mxu0
        %v7842 = vadd.f32 0.0, %v7841
        %7843 = vmatmul.bf16.gmra.mxu0 %v7482
        %v7844 = vpop.f32.mrf.mxu0
        %v7845 = vadd.f32 0.0, %v7844
        %v7846 = vpop.f32.mrf.mxu0
        %v7847 = vadd.f32 0.0, %v7846
        %7848 = vmatmul.bf16.gmra.mxu0 %v7485
        %v7849 = vpop.f32.mrf.mxu0
        %v7850 = vadd.f32 0.0, %v7849
        %v7851 = vpop.f32.mrf.mxu0
        %v7852 = vadd.f32 0.0, %v7851
        %7853 = vmatmul.bf16.gmra.mxu0 %v7488
        %v7854 = vpop.f32.mrf.mxu0
        %v7855 = vadd.f32 0.0, %v7854
        %v7856 = vpop.f32.mrf.mxu0
        %v7857 = vadd.f32 0.0, %v7856
        %7858 = vdwg.mxu0
        %v7859 = vadd.f32 %v6603, %v7500
        %v7860 = vadd.f32 %v6604, %v7502
        %v7861 = vadd.f32 %v6605, %v7505
        %v7862 = vadd.f32 %v6606, %v7507
        %v7863 = vadd.f32 %v6607, %v7510
        %v7864 = vadd.f32 %v6608, %v7512
        %v7865 = vadd.f32 %v6609, %v7515
        %v7866 = vadd.f32 %v6610, %v7517
        %v7867 = vadd.f32 %v6611, %v7520
        %v7868 = vadd.f32 %v6612, %v7522
        %v7869 = vadd.f32 %v6613, %v7525
        %v7870 = vadd.f32 %v6614, %v7527
        %v7871 = vadd.f32 %v6615, %v7530
        %v7872 = vadd.f32 %v6616, %v7532
        %v7873 = vadd.f32 %v6617, %v7535
        %v7874 = vadd.f32 %v6618, %v7537
        %v7875 = vadd.f32 %v6619, %v7540
        %v7876 = vadd.f32 %v6620, %v7542
        %v7877 = vadd.f32 %v6621, %v7545
        %v7878 = vadd.f32 %v6622, %v7547
        %v7879 = vadd.f32 %v6623, %v7550
        %v7880 = vadd.f32 %v6624, %v7552
        %v7881 = vadd.f32 %v6625, %v7555
        %v7882 = vadd.f32 %v6626, %v7557
        %v7883 = vadd.f32 %v6627, %v7560
        %v7884 = vadd.f32 %v6628, %v7562
        %v7885 = vadd.f32 %v6629, %v7565
        %v7886 = vadd.f32 %v6630, %v7567
        %v7887 = vadd.f32 %v6631, %v7570
        %v7888 = vadd.f32 %v6632, %v7572
        %v7889 = vadd.f32 %v6633, %v7575
        %v7890 = vadd.f32 %v6634, %v7577
        %v7891 = vadd.f32 %v6635, %v7580
        %v7892 = vadd.f32 %v6636, %v7582
        %v7893 = vadd.f32 %v6637, %v7585
        %v7894 = vadd.f32 %v6638, %v7587
        %v7895 = vadd.f32 %v6639, %v7590
        %v7896 = vadd.f32 %v6640, %v7592
        %v7897 = vadd.f32 %v6641, %v7595
        %v7898 = vadd.f32 %v6642, %v7597
        %v7899 = vadd.f32 %v6643, %v7600
        %v7900 = vadd.f32 %v6644, %v7602
        %v7901 = vadd.f32 %v6645, %v7605
        %v7902 = vadd.f32 %v6646, %v7607
        %v7903 = vadd.f32 %v6647, %v7610
        %v7904 = vadd.f32 %v6648, %v7612
        %v7905 = vadd.f32 %v6649, %v7615
        %v7906 = vadd.f32 %v6650, %v7617
        %v7907 = vadd.f32 %v6651, %v7620
        %v7908 = vadd.f32 %v6652, %v7622
        %v7909 = vadd.f32 %v6653, %v7625
        %v7910 = vadd.f32 %v6654, %v7627
        %v7911 = vadd.f32 %v6655, %v7630
        %v7912 = vadd.f32 %v6656, %v7632
        %v7913 = vadd.f32 %v6657, %v7635
        %v7914 = vadd.f32 %v6658, %v7637
        %v7915 = vadd.f32 %v6659, %v7640
        %v7916 = vadd.f32 %v6660, %v7642
        %v7917 = vadd.f32 %v6661, %v7645
        %v7918 = vadd.f32 %v6662, %v7647
        %v7919 = vadd.f32 %v6663, %v7650
        %v7920 = vadd.f32 %v6664, %v7652
        %v7921 = vadd.f32 %v6665, %v7655
        %v7922 = vadd.f32 %v6666, %v7657
        %v7923 = vadd.f32 %v6667, %v7660
        %v7924 = vadd.f32 %v6668, %v7662
        %v7925 = vadd.f32 %v6669, %v7665
        %v7926 = vadd.f32 %v6670, %v7667
        %v7927 = vadd.f32 %v6671, %v7670
        %v7928 = vadd.f32 %v6672, %v7672
        %v7929 = vadd.f32 %v6673, %v7675
        %v7930 = vadd.f32 %v6674, %v7677
        %v7931 = vadd.f32 %v6675, %v7680
        %v7932 = vadd.f32 %v6676, %v7682
        %v7933 = vadd.f32 %v6677, %v7685
        %v7934 = vadd.f32 %v6678, %v7687
        %v7935 = vadd.f32 %v6679, %v7690
        %v7936 = vadd.f32 %v6680, %v7692
        %v7937 = vadd.f32 %v6681, %v7695
        %v7938 = vadd.f32 %v6682, %v7697
        %v7939 = vadd.f32 %v6683, %v7700
        %v7940 = vadd.f32 %v6684, %v7702
        %v7941 = vadd.f32 %v6685, %v7705
        %v7942 = vadd.f32 %v6686, %v7707
        %v7943 = vadd.f32 %v6687, %v7710
        %v7944 = vadd.f32 %v6688, %v7712
        %v7945 = vadd.f32 %v6689, %v7715
        %v7946 = vadd.f32 %v6690, %v7717
        %v7947 = vadd.f32 %v6691, %v7720
        %v7948 = vadd.f32 %v6692, %v7722
        %v7949 = vadd.f32 %v6693, %v7725
        %v7950 = vadd.f32 %v6694, %v7727
        %v7951 = vadd.f32 %v6695, %v7730
        %v7952 = vadd.f32 %v6696, %v7732
        %v7953 = vadd.f32 %v6697, %v7735
        %v7954 = vadd.f32 %v6698, %v7737
        %v7955 = vadd.f32 %v6699, %v7740
        %v7956 = vadd.f32 %v6700, %v7742
        %v7957 = vadd.f32 %v6701, %v7745
        %v7958 = vadd.f32 %v6702, %v7747
        %v7959 = vadd.f32 %v6703, %v7750
        %v7960 = vadd.f32 %v6704, %v7752
        %v7961 = vadd.f32 %v6705, %v7755
        %v7962 = vadd.f32 %v6706, %v7757
        %v7963 = vadd.f32 %v6707, %v7760
        %v7964 = vadd.f32 %v6708, %v7762
        %v7965 = vadd.f32 %v6709, %v7765
        %v7966 = vadd.f32 %v6710, %v7767
        %v7967 = vadd.f32 %v6711, %v7770
        %v7968 = vadd.f32 %v6712, %v7772
        %v7969 = vadd.f32 %v6713, %v7775
        %v7970 = vadd.f32 %v6714, %v7777
        %v7971 = vadd.f32 %v6715, %v7780
        %v7972 = vadd.f32 %v6716, %v7782
        %v7973 = vadd.f32 %v6717, %v7785
        %v7974 = vadd.f32 %v6718, %v7787
        %v7975 = vadd.f32 %v6719, %v7790
        %v7976 = vadd.f32 %v6720, %v7792
        %v7977 = vadd.f32 %v6721, %v7795
        %v7978 = vadd.f32 %v6722, %v7797
        %v7979 = vadd.f32 %v6723, %v7800
        %v7980 = vadd.f32 %v6724, %v7802
        %v7981 = vadd.f32 %v6725, %v7805
        %v7982 = vadd.f32 %v6726, %v7807
        %v7983 = vadd.f32 %v6727, %v7810
        %v7984 = vadd.f32 %v6728, %v7812
        %v7985 = vadd.f32 %v6729, %v7815
        %v7986 = vadd.f32 %v6730, %v7817
        %v7987 = vadd.f32 %v6731, %v7820
        %v7988 = vadd.f32 %v6732, %v7822
        %v7989 = vadd.f32 %v6733, %v7825
        %v7990 = vadd.f32 %v6734, %v7827
        %v7991 = vadd.f32 %v6735, %v7830
        %v7992 = vadd.f32 %v6736, %v7832
        %v7993 = vadd.f32 %v6737, %v7835
        %v7994 = vadd.f32 %v6738, %v7837
        %v7995 = vadd.f32 %v6739, %v7840
        %v7996 = vadd.f32 %v6740, %v7842
        %v7997 = vadd.f32 %v6741, %v7845
        %v7998 = vadd.f32 %v6742, %v7847
        %v7999 = vadd.f32 %v6743, %v7850
        %v8000 = vadd.f32 %v6744, %v7852
        %v8001 = vadd.f32 %v6745, %v7855
        %v8002 = vadd.f32 %v6746, %v7857
        %s8003 = scalar_lea.vmem %s219, 112
        %v8004 = vld [vmem:[%s8003] sm:$0xf]
        %v8005 = vld [vmem:[%s8003 + $0x4] sm:$0xf]
        %v8006 = vld [vmem:[%s8003 + $0x8] sm:$0xf]
        %v8007 = vld [vmem:[%s8003 + $0xc] sm:$0xf]
        %v8009 = vunpack.c.l.b16 %v6896
        %v8010 = vpack.c.b16 %v8009, %v8009
        %v8011 = vshrl.u32 %v7190, 16
        %v8013 = vshll.u32 %v7190, 16
        %v8015 = vrot.slane %v8013, 1
        %v8016 = vor.u32 %v8011, %v8015
        %v8017 = vshll.u32 %v7191, 16
        %v8019 = vrot.slane %v8017, 1
        %v8020 = vsel %vm747, %v8016, %v8019
        %v8021 = vshrl.u32 %v7191, 16
        %v8023 = vor.u32 %v8021, %v8019
        %v8024 = vshll.u32 %v7192, 16
        %v8026 = vrot.slane %v8024, 1
        %v8027 = vsel %vm747, %v8023, %v8026
        %v8028 = vshrl.u32 %v7192, 16
        %v8030 = vor.u32 %v8028, %v8026
        %v8031 = vshll.u32 %v7193, 16
        %v8033 = vrot.slane %v8031, 1
        %v8034 = vsel %vm747, %v8030, %v8033
        %v8035 = vshrl.u32 %v7193, 16
        %v8037 = vor.u32 %v8035, %v8033
        %v8038 = vshll.u32 %v7194, 16
        %v8040 = vrot.slane %v8038, 1
        %v8041 = vsel %vm747, %v8037, %v8040
        %v8042 = vshrl.u32 %v7194, 16
        %v8044 = vor.u32 %v8042, %v8040
        %v8045 = vshll.u32 %v7195, 16
        %v8047 = vrot.slane %v8045, 1
        %v8048 = vsel %vm747, %v8044, %v8047
        %v8049 = vshrl.u32 %v7195, 16
        %v8051 = vor.u32 %v8049, %v8047
        %v8052 = vshll.u32 %v7196, 16
        %v8054 = vrot.slane %v8052, 1
        %v8055 = vsel %vm747, %v8051, %v8054
        %v8056 = vshrl.u32 %v7196, 16
        %v8058 = vor.u32 %v8056, %v8054
        %v8059 = vshll.u32 %v7197, 16
        %v8061 = vrot.slane %v8059, 1
        %v8062 = vsel %vm747, %v8058, %v8061
        %v8063 = vshrl.u32 %v7197, 16
        %v8065 = vor.u32 %v8063, %v8061
        %v8066 = vshll.u32 %v7198, 16
        %v8068 = vrot.slane %v8066, 1
        %v8069 = vsel %vm747, %v8065, %v8068
        %v8070 = vshrl.u32 %v7198, 16
        %v8072 = vor.u32 %v8070, %v8068
        %v8073 = vshll.u32 %v7199, 16
        %v8075 = vrot.slane %v8073, 1
        %v8076 = vsel %vm747, %v8072, %v8075
        %v8077 = vshrl.u32 %v7199, 16
        %v8079 = vor.u32 %v8077, %v8075
        %v8080 = vshll.u32 %v7200, 16
        %v8082 = vrot.slane %v8080, 1
        %v8083 = vsel %vm747, %v8079, %v8082
        %v8084 = vshrl.u32 %v7200, 16
        %v8086 = vor.u32 %v8084, %v8082
        %v8087 = vshll.u32 %v7201, 16
        %v8089 = vrot.slane %v8087, 1
        %v8090 = vsel %vm747, %v8086, %v8089
        %v8091 = vshrl.u32 %v7201, 16
        %v8093 = vor.u32 %v8091, %v8089
        %v8094 = vshll.u32 %v7202, 16
        %v8096 = vrot.slane %v8094, 1
        %v8097 = vsel %vm747, %v8093, %v8096
        %v8098 = vshrl.u32 %v7202, 16
        %v8100 = vor.u32 %v8098, %v8096
        %v8101 = vshll.u32 %v7203, 16
        %v8103 = vrot.slane %v8101, 1
        %v8104 = vsel %vm747, %v8100, %v8103
        %v8105 = vshrl.u32 %v7203, 16
        %v8107 = vor.u32 %v8105, %v8103
        %v8108 = vshll.u32 %v7204, 16
        %v8110 = vrot.slane %v8108, 1
        %v8111 = vsel %vm747, %v8107, %v8110
        %v8112 = vshrl.u32 %v7204, 16
        %v8114 = vor.u32 %v8112, %v8110
        %v8115 = vshll.u32 %v7205, 16
        %v8117 = vrot.slane %v8115, 1
        %v8118 = vsel %vm747, %v8114, %v8117
        %v8119 = vshrl.u32 %v7205, 16
        %v8121 = vor.u32 %v8119, %v8117
        %v8122 = vshll.u32 %v7206, 16
        %v8124 = vrot.slane %v8122, 1
        %v8125 = vsel %vm747, %v8121, %v8124
        %v8126 = vshrl.u32 %v7206, 16
        %v8128 = vor.u32 %v8126, %v8124
        %v8129 = vshll.u32 %v7207, 16
        %v8131 = vrot.slane %v8129, 1
        %v8132 = vsel %vm747, %v8128, %v8131
        %v8133 = vshrl.u32 %v7207, 16
        %v8135 = vor.u32 %v8133, %v8131
        %v8136 = vshll.u32 %v7208, 16
        %v8138 = vrot.slane %v8136, 1
        %v8139 = vsel %vm747, %v8135, %v8138
        %v8140 = vshrl.u32 %v7208, 16
        %v8142 = vor.u32 %v8140, %v8138
        %v8143 = vshll.u32 %v7209, 16
        %v8145 = vrot.slane %v8143, 1
        %v8146 = vsel %vm747, %v8142, %v8145
        %v8147 = vshrl.u32 %v7209, 16
        %v8149 = vor.u32 %v8147, %v8145
        %v8150 = vshll.u32 %v7210, 16
        %v8152 = vrot.slane %v8150, 1
        %v8153 = vsel %vm747, %v8149, %v8152
        %v8154 = vshrl.u32 %v7210, 16
        %v8156 = vor.u32 %v8154, %v8152
        %v8157 = vshll.u32 %v7211, 16
        %v8159 = vrot.slane %v8157, 1
        %v8160 = vsel %vm747, %v8156, %v8159
        %v8161 = vshrl.u32 %v7211, 16
        %v8163 = vor.u32 %v8161, %v8159
        %v8164 = vshll.u32 %v7212, 16
        %v8166 = vrot.slane %v8164, 1
        %v8167 = vsel %vm747, %v8163, %v8166
        %v8168 = vshrl.u32 %v7212, 16
        %v8170 = vor.u32 %v8168, %v8166
        %v8171 = vshll.u32 %v7213, 16
        %v8173 = vrot.slane %v8171, 1
        %v8174 = vsel %vm747, %v8170, %v8173
        %v8175 = vshrl.u32 %v7213, 16
        %v8177 = vor.u32 %v8175, %v8173
        %v8178 = vshll.u32 %v7214, 16
        %v8180 = vrot.slane %v8178, 1
        %v8181 = vsel %vm747, %v8177, %v8180
        %v8182 = vshrl.u32 %v7214, 16
        %v8184 = vor.u32 %v8182, %v8180
        %v8185 = vshll.u32 %v7215, 16
        %v8187 = vrot.slane %v8185, 1
        %v8188 = vsel %vm747, %v8184, %v8187
        %v8189 = vshrl.u32 %v7215, 16
        %v8191 = vor.u32 %v8189, %v8187
        %v8192 = vshll.u32 %v7216, 16
        %v8194 = vrot.slane %v8192, 1
        %v8195 = vsel %vm747, %v8191, %v8194
        %v8196 = vshrl.u32 %v7216, 16
        %v8198 = vor.u32 %v8196, %v8194
        %v8199 = vshll.u32 %v7217, 16
        %v8201 = vrot.slane %v8199, 1
        %v8202 = vsel %vm747, %v8198, %v8201
        %v8203 = vshrl.u32 %v7217, 16
        %v8205 = vor.u32 %v8203, %v8201
        %v8206 = vshll.u32 %v7218, 16
        %v8208 = vrot.slane %v8206, 1
        %v8209 = vsel %vm747, %v8205, %v8208
        %v8210 = vshrl.u32 %v7218, 16
        %v8212 = vor.u32 %v8210, %v8208
        %v8213 = vshll.u32 %v7219, 16
        %v8215 = vrot.slane %v8213, 1
        %v8216 = vsel %vm747, %v8212, %v8215
        %v8217 = vshrl.u32 %v7219, 16
        %v8219 = vor.u32 %v8217, %v8215
        %v8220 = vshll.u32 %v7220, 16
        %v8222 = vrot.slane %v8220, 1
        %v8223 = vsel %vm747, %v8219, %v8222
        %v8224 = vshrl.u32 %v7220, 16
        %v8226 = vor.u32 %v8224, %v8222
        %v8227 = vshll.u32 %v7221, 16
        %v8229 = vrot.slane %v8227, 1
        %v8230 = vsel %vm747, %v8226, %v8229
        %v8231 = vshrl.u32 %v7221, 16
        %v8233 = vor.u32 %v8231, %v8229
        %v8234 = vshll.u32 %v7222, 16
        %v8236 = vrot.slane %v8234, 1
        %v8237 = vsel %vm747, %v8233, %v8236
        %v8238 = vshrl.u32 %v7222, 16
        %v8240 = vor.u32 %v8238, %v8236
        %v8241 = vshll.u32 %v7223, 16
        %v8243 = vrot.slane %v8241, 1
        %v8244 = vsel %vm747, %v8240, %v8243
        %v8245 = vshrl.u32 %v7223, 16
        %v8247 = vor.u32 %v8245, %v8243
        %v8248 = vshll.u32 %v7224, 16
        %v8250 = vrot.slane %v8248, 1
        %v8251 = vsel %vm747, %v8247, %v8250
        %v8252 = vshrl.u32 %v7224, 16
        %v8254 = vor.u32 %v8252, %v8250
        %v8255 = vshll.u32 %v7225, 16
        %v8257 = vrot.slane %v8255, 1
        %v8258 = vsel %vm747, %v8254, %v8257
        %v8259 = vshrl.u32 %v7225, 16
        %v8261 = vor.u32 %v8259, %v8257
        %v8262 = vshll.u32 %v7226, 16
        %v8264 = vrot.slane %v8262, 1
        %v8265 = vsel %vm747, %v8261, %v8264
        %v8266 = vshrl.u32 %v7226, 16
        %v8268 = vor.u32 %v8266, %v8264
        %v8269 = vshll.u32 %v7227, 16
        %v8271 = vrot.slane %v8269, 1
        %v8272 = vsel %vm747, %v8268, %v8271
        %v8273 = vshrl.u32 %v7227, 16
        %v8275 = vor.u32 %v8273, %v8271
        %v8276 = vshll.u32 %v7228, 16
        %v8278 = vrot.slane %v8276, 1
        %v8279 = vsel %vm747, %v8275, %v8278
        %v8280 = vshrl.u32 %v7228, 16
        %v8282 = vor.u32 %v8280, %v8278
        %v8283 = vshll.u32 %v7229, 16
        %v8285 = vrot.slane %v8283, 1
        %v8286 = vsel %vm747, %v8282, %v8285
        %v8287 = vshrl.u32 %v7229, 16
        %v8289 = vor.u32 %v8287, %v8285
        %v8290 = vshll.u32 %v7230, 16
        %v8292 = vrot.slane %v8290, 1
        %v8293 = vsel %vm747, %v8289, %v8292
        %v8294 = vshrl.u32 %v7230, 16
        %v8296 = vor.u32 %v8294, %v8292
        %v8297 = vshll.u32 %v7231, 16
        %v8299 = vrot.slane %v8297, 1
        %v8300 = vsel %vm747, %v8296, %v8299
        %v8301 = vshrl.u32 %v7231, 16
        %v8303 = vor.u32 %v8301, %v8299
        %v8304 = vshll.u32 %v7232, 16
        %v8306 = vrot.slane %v8304, 1
        %v8307 = vsel %vm747, %v8303, %v8306
        %v8308 = vshrl.u32 %v7232, 16
        %v8310 = vor.u32 %v8308, %v8306
        %v8311 = vshll.u32 %v7233, 16
        %v8313 = vrot.slane %v8311, 1
        %v8314 = vsel %vm747, %v8310, %v8313
        %v8315 = vshrl.u32 %v7233, 16
        %v8317 = vor.u32 %v8315, %v8313
        %v8318 = vshll.u32 %v7234, 16
        %v8320 = vrot.slane %v8318, 1
        %v8321 = vsel %vm747, %v8317, %v8320
        %v8322 = vshrl.u32 %v7234, 16
        %v8324 = vor.u32 %v8322, %v8320
        %v8325 = vshll.u32 %v7235, 16
        %v8327 = vrot.slane %v8325, 1
        %v8328 = vsel %vm747, %v8324, %v8327
        %v8329 = vshrl.u32 %v7235, 16
        %v8331 = vor.u32 %v8329, %v8327
        %v8332 = vshll.u32 %v7236, 16
        %v8334 = vrot.slane %v8332, 1
        %v8335 = vsel %vm747, %v8331, %v8334
        %v8336 = vshrl.u32 %v7236, 16
        %v8338 = vor.u32 %v8336, %v8334
        %v8339 = vshll.u32 %v7237, 16
        %v8341 = vrot.slane %v8339, 1
        %v8342 = vsel %vm747, %v8338, %v8341
        %v8343 = vshrl.u32 %v7237, 16
        %v8345 = vor.u32 %v8343, %v8341
        %v8346 = vshll.u32 %v7238, 16
        %v8348 = vrot.slane %v8346, 1
        %v8349 = vsel %vm747, %v8345, %v8348
        %v8350 = vshrl.u32 %v7238, 16
        %v8352 = vor.u32 %v8350, %v8348
        %v8353 = vshll.u32 %v7239, 16
        %v8355 = vrot.slane %v8353, 1
        %v8356 = vsel %vm747, %v8352, %v8355
        %v8357 = vshrl.u32 %v7239, 16
        %v8359 = vor.u32 %v8357, %v8355
        %v8360 = vshll.u32 %v7240, 16
        %v8362 = vrot.slane %v8360, 1
        %v8363 = vsel %vm747, %v8359, %v8362
        %v8364 = vshrl.u32 %v7240, 16
        %v8366 = vor.u32 %v8364, %v8362
        %v8367 = vshll.u32 %v7241, 16
        %v8369 = vrot.slane %v8367, 1
        %v8370 = vsel %vm747, %v8366, %v8369
        %v8371 = vshrl.u32 %v7241, 16
        %v8373 = vor.u32 %v8371, %v8369
        %v8374 = vshll.u32 %v7242, 16
        %v8376 = vrot.slane %v8374, 1
        %v8377 = vsel %vm747, %v8373, %v8376
        %v8378 = vshrl.u32 %v7242, 16
        %v8380 = vor.u32 %v8378, %v8376
        %v8381 = vshll.u32 %v7243, 16
        %v8383 = vrot.slane %v8381, 1
        %v8384 = vsel %vm747, %v8380, %v8383
        %v8385 = vshrl.u32 %v7243, 16
        %v8387 = vor.u32 %v8385, %v8383
        %v8388 = vshll.u32 %v7244, 16
        %v8390 = vrot.slane %v8388, 1
        %v8391 = vsel %vm747, %v8387, %v8390
        %v8392 = vshrl.u32 %v7244, 16
        %v8394 = vor.u32 %v8392, %v8390
        %v8395 = vshll.u32 %v7245, 16
        %v8397 = vrot.slane %v8395, 1
        %v8398 = vsel %vm747, %v8394, %v8397
        %v8399 = vshrl.u32 %v7245, 16
        %v8401 = vor.u32 %v8399, %v8397
        %v8402 = vshll.u32 %v7246, 16
        %v8404 = vrot.slane %v8402, 1
        %v8405 = vsel %vm747, %v8401, %v8404
        %v8406 = vshrl.u32 %v7246, 16
        %v8408 = vor.u32 %v8406, %v8404
        %v8409 = vshll.u32 %v7247, 16
        %v8411 = vrot.slane %v8409, 1
        %v8412 = vsel %vm747, %v8408, %v8411
        %v8413 = vshrl.u32 %v7247, 16
        %v8415 = vor.u32 %v8413, %v8411
        %v8416 = vshll.u32 %v7248, 16
        %v8418 = vrot.slane %v8416, 1
        %v8419 = vsel %vm747, %v8415, %v8418
        %v8420 = vshrl.u32 %v7248, 16
        %v8422 = vor.u32 %v8420, %v8418
        %v8423 = vshll.u32 %v7249, 16
        %v8425 = vrot.slane %v8423, 1
        %v8426 = vsel %vm747, %v8422, %v8425
        %v8427 = vshrl.u32 %v7249, 16
        %v8429 = vor.u32 %v8427, %v8425
        %v8430 = vshll.u32 %v7250, 16
        %v8432 = vrot.slane %v8430, 1
        %v8433 = vsel %vm747, %v8429, %v8432
        %v8434 = vshrl.u32 %v7250, 16
        %v8436 = vor.u32 %v8434, %v8432
        %v8437 = vshll.u32 %v7251, 16
        %v8439 = vrot.slane %v8437, 1
        %v8440 = vsel %vm747, %v8436, %v8439
        %v8441 = vshrl.u32 %v7251, 16
        %v8443 = vor.u32 %v8441, %v8439
        %v8444 = vshll.u32 %v7252, 16
        %v8446 = vrot.slane %v8444, 1
        %v8447 = vsel %vm747, %v8443, %v8446
        %v8448 = vshrl.u32 %v7252, 16
        %v8450 = vor.u32 %v8448, %v8446
        %v8451 = vshll.u32 %v7253, 16
        %v8453 = vrot.slane %v8451, 1
        %v8454 = vsel %vm747, %v8450, %v8453
        %v8455 = vshrl.u32 %v7253, 16
        %v8457 = vor.u32 %v8455, %v8453
        %v8458 = vshll.u32 %v7254, 16
        %v8460 = vrot.slane %v8458, 1
        %v8461 = vsel %vm747, %v8457, %v8460
        %v8462 = vshrl.u32 %v7254, 16
        %v8464 = vor.u32 %v8462, %v8460
        %v8465 = vshll.u32 %v7255, 16
        %v8467 = vrot.slane %v8465, 1
        %v8468 = vsel %vm747, %v8464, %v8467
        %v8469 = vshrl.u32 %v7255, 16
        %v8471 = vor.u32 %v8469, %v8467
        %v8472 = vshll.u32 %v7256, 16
        %v8474 = vrot.slane %v8472, 1
        %v8475 = vsel %vm747, %v8471, %v8474
        %v8476 = vshrl.u32 %v7256, 16
        %v8478 = vor.u32 %v8476, %v8474
        %v8479 = vshll.u32 %v7257, 16
        %v8481 = vrot.slane %v8479, 1
        %v8482 = vsel %vm747, %v8478, %v8481
        %v8483 = vshrl.u32 %v7257, 16
        %v8485 = vor.u32 %v8483, %v8481
        %v8486 = vshll.u32 %v7258, 16
        %v8488 = vrot.slane %v8486, 1
        %v8489 = vsel %vm747, %v8485, %v8488
        %v8490 = vshrl.u32 %v7258, 16
        %v8492 = vor.u32 %v8490, %v8488
        %v8493 = vshll.u32 %v7259, 16
        %v8495 = vrot.slane %v8493, 1
        %v8496 = vsel %vm747, %v8492, %v8495
        %v8497 = vshrl.u32 %v7259, 16
        %v8499 = vor.u32 %v8497, %v8495
        %v8500 = vshll.u32 %v7260, 16
        %v8502 = vrot.slane %v8500, 1
        %v8503 = vsel %vm747, %v8499, %v8502
        %v8504 = vshrl.u32 %v7260, 16
        %v8506 = vor.u32 %v8504, %v8502
        %v8507 = vshll.u32 %v7261, 16
        %v8509 = vrot.slane %v8507, 1
        %v8510 = vsel %vm747, %v8506, %v8509
        %v8511 = vshrl.u32 %v7261, 16
        %v8513 = vor.u32 %v8511, %v8509
        %v8515 = vshll.u32 %v8010, 16
        %v8517 = vrot.slane %v8515, 1
        %v8518 = vsel %vm747, %v8513, %v8517
        %v8523 = vunpack.c.l.b16 %v8004
        %v8524 = vunpack.c.l.b16 %v8005
        %v8525 = vunpack.c.l.b16 %v8006
        %v8526 = vunpack.c.l.b16 %v8007
        %v8527 = vpack.c.b16 %v8524, %v8523
        %v8528 = vpack.c.b16 %v8526, %v8525
        %v8532 = vsel %vm1340, %v8020, 0
        %v8535 = vsel %vm1340, %v8027, 0
        %v8538 = vsel %vm1340, %v8034, 0
        %v8541 = vsel %vm1340, %v8041, 0
        %v8544 = vsel %vm1340, %v8048, 0
        %v8547 = vsel %vm1340, %v8055, 0
        %v8550 = vsel %vm1340, %v8062, 0
        %v8553 = vsel %vm1340, %v8069, 0
        %v8556 = vsel %vm1340, %v8076, 0
        %v8559 = vsel %vm1340, %v8083, 0
        %v8562 = vsel %vm1340, %v8090, 0
        %v8565 = vsel %vm1340, %v8097, 0
        %v8568 = vsel %vm1340, %v8104, 0
        %v8571 = vsel %vm1340, %v8111, 0
        %v8574 = vsel %vm1340, %v8118, 0
        %v8577 = vsel %vm1340, %v8125, 0
        %v8580 = vsel %vm1340, %v8132, 0
        %v8583 = vsel %vm1340, %v8139, 0
        %v8586 = vsel %vm1340, %v8146, 0
        %v8589 = vsel %vm1340, %v8153, 0
        %v8592 = vsel %vm1340, %v8160, 0
        %v8595 = vsel %vm1340, %v8167, 0
        %v8598 = vsel %vm1340, %v8174, 0
        %v8601 = vsel %vm1340, %v8181, 0
        %v8604 = vsel %vm1340, %v8188, 0
        %v8607 = vsel %vm1340, %v8195, 0
        %v8610 = vsel %vm1340, %v8202, 0
        %v8613 = vsel %vm1340, %v8209, 0
        %v8616 = vsel %vm1340, %v8216, 0
        %v8619 = vsel %vm1340, %v8223, 0
        %v8622 = vsel %vm1340, %v8230, 0
        %v8625 = vsel %vm1340, %v8237, 0
        %v8628 = vsel %vm1340, %v8244, 0
        %v8631 = vsel %vm1340, %v8251, 0
        %v8634 = vsel %vm1340, %v8258, 0
        %v8637 = vsel %vm1340, %v8265, 0
        %v8640 = vsel %vm1340, %v8272, 0
        %v8643 = vsel %vm1340, %v8279, 0
        %v8646 = vsel %vm1340, %v8286, 0
        %v8649 = vsel %vm1340, %v8293, 0
        %v8652 = vsel %vm1340, %v8300, 0
        %v8655 = vsel %vm1340, %v8307, 0
        %v8658 = vsel %vm1340, %v8314, 0
        %v8661 = vsel %vm1340, %v8321, 0
        %v8664 = vsel %vm1340, %v8328, 0
        %v8667 = vsel %vm1340, %v8335, 0
        %v8670 = vsel %vm1340, %v8342, 0
        %v8673 = vsel %vm1340, %v8349, 0
        %v8676 = vsel %vm1340, %v8356, 0
        %v8679 = vsel %vm1340, %v8363, 0
        %v8682 = vsel %vm1340, %v8370, 0
        %v8685 = vsel %vm1340, %v8377, 0
        %v8688 = vsel %vm1340, %v8384, 0
        %v8691 = vsel %vm1340, %v8391, 0
        %v8694 = vsel %vm1340, %v8398, 0
        %v8697 = vsel %vm1340, %v8405, 0
        %v8700 = vsel %vm1340, %v8412, 0
        %v8703 = vsel %vm1340, %v8419, 0
        %v8706 = vsel %vm1340, %v8426, 0
        %v8709 = vsel %vm1340, %v8433, 0
        %v8712 = vsel %vm1340, %v8440, 0
        %v8715 = vsel %vm1340, %v8447, 0
        %v8718 = vsel %vm1340, %v8454, 0
        %v8721 = vsel %vm1340, %v8461, 0
        %v8724 = vsel %vm1340, %v8468, 0
        %v8727 = vsel %vm1340, %v8475, 0
        %v8730 = vsel %vm1340, %v8482, 0
        %v8733 = vsel %vm1340, %v8489, 0
        %v8736 = vsel %vm1340, %v8496, 0
        %v8739 = vsel %vm1340, %v8503, 0
        %v8742 = vsel %vm1340, %v8510, 0
        %v8745 = vsel %vm1340, %v8518, 0
        %8747 = vmatpush.bf16.msra.mxu0 0
        %8748 = vmatpush.bf16.msra.mxu0 0
        %8749 = vmatpush.bf16.msra.mxu0 0
        %8750 = vmatpush.bf16.msra.mxu0 0
        %8751 = vmatpush.bf16.msra.mxu0 0
        %8752 = vmatpush.bf16.msra.mxu0 0
        %8753 = vmatpush.bf16.msra.mxu0 %v8528
        %8754 = vmatpush.bf16.msra.mxu0 %v8527
        %8755 = vmatmul.bf16.gmra.mxu0 %v8532
        %v8756 = vpop.f32.mrf.mxu0
        %v8757 = vadd.f32 0.0, %v8756
        %v8758 = vpop.f32.mrf.mxu0
        %v8759 = vadd.f32 0.0, %v8758
        %8760 = vmatmul.bf16.gmra.mxu0 %v8535
        %v8761 = vpop.f32.mrf.mxu0
        %v8762 = vadd.f32 0.0, %v8761
        %v8763 = vpop.f32.mrf.mxu0
        %v8764 = vadd.f32 0.0, %v8763
        %8765 = vmatmul.bf16.gmra.mxu0 %v8538
        %v8766 = vpop.f32.mrf.mxu0
        %v8767 = vadd.f32 0.0, %v8766
        %v8768 = vpop.f32.mrf.mxu0
        %v8769 = vadd.f32 0.0, %v8768
        %8770 = vmatmul.bf16.gmra.mxu0 %v8541
        %v8771 = vpop.f32.mrf.mxu0
        %v8772 = vadd.f32 0.0, %v8771
        %v8773 = vpop.f32.mrf.mxu0
        %v8774 = vadd.f32 0.0, %v8773
        %8775 = vmatmul.bf16.gmra.mxu0 %v8544
        %v8776 = vpop.f32.mrf.mxu0
        %v8777 = vadd.f32 0.0, %v8776
        %v8778 = vpop.f32.mrf.mxu0
        %v8779 = vadd.f32 0.0, %v8778
        %8780 = vmatmul.bf16.gmra.mxu0 %v8547
        %v8781 = vpop.f32.mrf.mxu0
        %v8782 = vadd.f32 0.0, %v8781
        %v8783 = vpop.f32.mrf.mxu0
        %v8784 = vadd.f32 0.0, %v8783
        %8785 = vmatmul.bf16.gmra.mxu0 %v8550
        %v8786 = vpop.f32.mrf.mxu0
        %v8787 = vadd.f32 0.0, %v8786
        %v8788 = vpop.f32.mrf.mxu0
        %v8789 = vadd.f32 0.0, %v8788
        %8790 = vmatmul.bf16.gmra.mxu0 %v8553
        %v8791 = vpop.f32.mrf.mxu0
        %v8792 = vadd.f32 0.0, %v8791
        %v8793 = vpop.f32.mrf.mxu0
        %v8794 = vadd.f32 0.0, %v8793
        %8795 = vmatmul.bf16.gmra.mxu0 %v8556
        %v8796 = vpop.f32.mrf.mxu0
        %v8797 = vadd.f32 0.0, %v8796
        %v8798 = vpop.f32.mrf.mxu0
        %v8799 = vadd.f32 0.0, %v8798
        %8800 = vmatmul.bf16.gmra.mxu0 %v8559
        %v8801 = vpop.f32.mrf.mxu0
        %v8802 = vadd.f32 0.0, %v8801
        %v8803 = vpop.f32.mrf.mxu0
        %v8804 = vadd.f32 0.0, %v8803
        %8805 = vmatmul.bf16.gmra.mxu0 %v8562
        %v8806 = vpop.f32.mrf.mxu0
        %v8807 = vadd.f32 0.0, %v8806
        %v8808 = vpop.f32.mrf.mxu0
        %v8809 = vadd.f32 0.0, %v8808
        %8810 = vmatmul.bf16.gmra.mxu0 %v8565
        %v8811 = vpop.f32.mrf.mxu0
        %v8812 = vadd.f32 0.0, %v8811
        %v8813 = vpop.f32.mrf.mxu0
        %v8814 = vadd.f32 0.0, %v8813
        %8815 = vmatmul.bf16.gmra.mxu0 %v8568
        %v8816 = vpop.f32.mrf.mxu0
        %v8817 = vadd.f32 0.0, %v8816
        %v8818 = vpop.f32.mrf.mxu0
        %v8819 = vadd.f32 0.0, %v8818
        %8820 = vmatmul.bf16.gmra.mxu0 %v8571
        %v8821 = vpop.f32.mrf.mxu0
        %v8822 = vadd.f32 0.0, %v8821
        %v8823 = vpop.f32.mrf.mxu0
        %v8824 = vadd.f32 0.0, %v8823
        %8825 = vmatmul.bf16.gmra.mxu0 %v8574
        %v8826 = vpop.f32.mrf.mxu0
        %v8827 = vadd.f32 0.0, %v8826
        %v8828 = vpop.f32.mrf.mxu0
        %v8829 = vadd.f32 0.0, %v8828
        %8830 = vmatmul.bf16.gmra.mxu0 %v8577
        %v8831 = vpop.f32.mrf.mxu0
        %v8832 = vadd.f32 0.0, %v8831
        %v8833 = vpop.f32.mrf.mxu0
        %v8834 = vadd.f32 0.0, %v8833
        %8835 = vmatmul.bf16.gmra.mxu0 %v8580
        %v8836 = vpop.f32.mrf.mxu0
        %v8837 = vadd.f32 0.0, %v8836
        %v8838 = vpop.f32.mrf.mxu0
        %v8839 = vadd.f32 0.0, %v8838
        %8840 = vmatmul.bf16.gmra.mxu0 %v8583
        %v8841 = vpop.f32.mrf.mxu0
        %v8842 = vadd.f32 0.0, %v8841
        %v8843 = vpop.f32.mrf.mxu0
        %v8844 = vadd.f32 0.0, %v8843
        %8845 = vmatmul.bf16.gmra.mxu0 %v8586
        %v8846 = vpop.f32.mrf.mxu0
        %v8847 = vadd.f32 0.0, %v8846
        %v8848 = vpop.f32.mrf.mxu0
        %v8849 = vadd.f32 0.0, %v8848
        %8850 = vmatmul.bf16.gmra.mxu0 %v8589
        %v8851 = vpop.f32.mrf.mxu0
        %v8852 = vadd.f32 0.0, %v8851
        %v8853 = vpop.f32.mrf.mxu0
        %v8854 = vadd.f32 0.0, %v8853
        %8855 = vmatmul.bf16.gmra.mxu0 %v8592
        %v8856 = vpop.f32.mrf.mxu0
        %v8857 = vadd.f32 0.0, %v8856
        %v8858 = vpop.f32.mrf.mxu0
        %v8859 = vadd.f32 0.0, %v8858
        %8860 = vmatmul.bf16.gmra.mxu0 %v8595
        %v8861 = vpop.f32.mrf.mxu0
        %v8862 = vadd.f32 0.0, %v8861
        %v8863 = vpop.f32.mrf.mxu0
        %v8864 = vadd.f32 0.0, %v8863
        %8865 = vmatmul.bf16.gmra.mxu0 %v8598
        %v8866 = vpop.f32.mrf.mxu0
        %v8867 = vadd.f32 0.0, %v8866
        %v8868 = vpop.f32.mrf.mxu0
        %v8869 = vadd.f32 0.0, %v8868
        %8870 = vmatmul.bf16.gmra.mxu0 %v8601
        %v8871 = vpop.f32.mrf.mxu0
        %v8872 = vadd.f32 0.0, %v8871
        %v8873 = vpop.f32.mrf.mxu0
        %v8874 = vadd.f32 0.0, %v8873
        %8875 = vmatmul.bf16.gmra.mxu0 %v8604
        %v8876 = vpop.f32.mrf.mxu0
        %v8877 = vadd.f32 0.0, %v8876
        %v8878 = vpop.f32.mrf.mxu0
        %v8879 = vadd.f32 0.0, %v8878
        %8880 = vmatmul.bf16.gmra.mxu0 %v8607
        %v8881 = vpop.f32.mrf.mxu0
        %v8882 = vadd.f32 0.0, %v8881
        %v8883 = vpop.f32.mrf.mxu0
        %v8884 = vadd.f32 0.0, %v8883
        %8885 = vmatmul.bf16.gmra.mxu0 %v8610
        %v8886 = vpop.f32.mrf.mxu0
        %v8887 = vadd.f32 0.0, %v8886
        %v8888 = vpop.f32.mrf.mxu0
        %v8889 = vadd.f32 0.0, %v8888
        %8890 = vmatmul.bf16.gmra.mxu0 %v8613
        %v8891 = vpop.f32.mrf.mxu0
        %v8892 = vadd.f32 0.0, %v8891
        %v8893 = vpop.f32.mrf.mxu0
        %v8894 = vadd.f32 0.0, %v8893
        %8895 = vmatmul.bf16.gmra.mxu0 %v8616
        %v8896 = vpop.f32.mrf.mxu0
        %v8897 = vadd.f32 0.0, %v8896
        %v8898 = vpop.f32.mrf.mxu0
        %v8899 = vadd.f32 0.0, %v8898
        %8900 = vmatmul.bf16.gmra.mxu0 %v8619
        %v8901 = vpop.f32.mrf.mxu0
        %v8902 = vadd.f32 0.0, %v8901
        %v8903 = vpop.f32.mrf.mxu0
        %v8904 = vadd.f32 0.0, %v8903
        %8905 = vmatmul.bf16.gmra.mxu0 %v8622
        %v8906 = vpop.f32.mrf.mxu0
        %v8907 = vadd.f32 0.0, %v8906
        %v8908 = vpop.f32.mrf.mxu0
        %v8909 = vadd.f32 0.0, %v8908
        %8910 = vmatmul.bf16.gmra.mxu0 %v8625
        %v8911 = vpop.f32.mrf.mxu0
        %v8912 = vadd.f32 0.0, %v8911
        %v8913 = vpop.f32.mrf.mxu0
        %v8914 = vadd.f32 0.0, %v8913
        %8915 = vmatmul.bf16.gmra.mxu0 %v8628
        %v8916 = vpop.f32.mrf.mxu0
        %v8917 = vadd.f32 0.0, %v8916
        %v8918 = vpop.f32.mrf.mxu0
        %v8919 = vadd.f32 0.0, %v8918
        %8920 = vmatmul.bf16.gmra.mxu0 %v8631
        %v8921 = vpop.f32.mrf.mxu0
        %v8922 = vadd.f32 0.0, %v8921
        %v8923 = vpop.f32.mrf.mxu0
        %v8924 = vadd.f32 0.0, %v8923
        %8925 = vmatmul.bf16.gmra.mxu0 %v8634
        %v8926 = vpop.f32.mrf.mxu0
        %v8927 = vadd.f32 0.0, %v8926
        %v8928 = vpop.f32.mrf.mxu0
        %v8929 = vadd.f32 0.0, %v8928
        %8930 = vmatmul.bf16.gmra.mxu0 %v8637
        %v8931 = vpop.f32.mrf.mxu0
        %v8932 = vadd.f32 0.0, %v8931
        %v8933 = vpop.f32.mrf.mxu0
        %v8934 = vadd.f32 0.0, %v8933
        %8935 = vmatmul.bf16.gmra.mxu0 %v8640
        %v8936 = vpop.f32.mrf.mxu0
        %v8937 = vadd.f32 0.0, %v8936
        %v8938 = vpop.f32.mrf.mxu0
        %v8939 = vadd.f32 0.0, %v8938
        %8940 = vmatmul.bf16.gmra.mxu0 %v8643
        %v8941 = vpop.f32.mrf.mxu0
        %v8942 = vadd.f32 0.0, %v8941
        %v8943 = vpop.f32.mrf.mxu0
        %v8944 = vadd.f32 0.0, %v8943
        %8945 = vmatmul.bf16.gmra.mxu0 %v8646
        %v8946 = vpop.f32.mrf.mxu0
        %v8947 = vadd.f32 0.0, %v8946
        %v8948 = vpop.f32.mrf.mxu0
        %v8949 = vadd.f32 0.0, %v8948
        %8950 = vmatmul.bf16.gmra.mxu0 %v8649
        %v8951 = vpop.f32.mrf.mxu0
        %v8952 = vadd.f32 0.0, %v8951
        %v8953 = vpop.f32.mrf.mxu0
        %v8954 = vadd.f32 0.0, %v8953
        %8955 = vmatmul.bf16.gmra.mxu0 %v8652
        %v8956 = vpop.f32.mrf.mxu0
        %v8957 = vadd.f32 0.0, %v8956
        %v8958 = vpop.f32.mrf.mxu0
        %v8959 = vadd.f32 0.0, %v8958
        %8960 = vmatmul.bf16.gmra.mxu0 %v8655
        %v8961 = vpop.f32.mrf.mxu0
        %v8962 = vadd.f32 0.0, %v8961
        %v8963 = vpop.f32.mrf.mxu0
        %v8964 = vadd.f32 0.0, %v8963
        %8965 = vmatmul.bf16.gmra.mxu0 %v8658
        %v8966 = vpop.f32.mrf.mxu0
        %v8967 = vadd.f32 0.0, %v8966
        %v8968 = vpop.f32.mrf.mxu0
        %v8969 = vadd.f32 0.0, %v8968
        %8970 = vmatmul.bf16.gmra.mxu0 %v8661
        %v8971 = vpop.f32.mrf.mxu0
        %v8972 = vadd.f32 0.0, %v8971
        %v8973 = vpop.f32.mrf.mxu0
        %v8974 = vadd.f32 0.0, %v8973
        %8975 = vmatmul.bf16.gmra.mxu0 %v8664
        %v8976 = vpop.f32.mrf.mxu0
        %v8977 = vadd.f32 0.0, %v8976
        %v8978 = vpop.f32.mrf.mxu0
        %v8979 = vadd.f32 0.0, %v8978
        %8980 = vmatmul.bf16.gmra.mxu0 %v8667
        %v8981 = vpop.f32.mrf.mxu0
        %v8982 = vadd.f32 0.0, %v8981
        %v8983 = vpop.f32.mrf.mxu0
        %v8984 = vadd.f32 0.0, %v8983
        %8985 = vmatmul.bf16.gmra.mxu0 %v8670
        %v8986 = vpop.f32.mrf.mxu0
        %v8987 = vadd.f32 0.0, %v8986
        %v8988 = vpop.f32.mrf.mxu0
        %v8989 = vadd.f32 0.0, %v8988
        %8990 = vmatmul.bf16.gmra.mxu0 %v8673
        %v8991 = vpop.f32.mrf.mxu0
        %v8992 = vadd.f32 0.0, %v8991
        %v8993 = vpop.f32.mrf.mxu0
        %v8994 = vadd.f32 0.0, %v8993
        %8995 = vmatmul.bf16.gmra.mxu0 %v8676
        %v8996 = vpop.f32.mrf.mxu0
        %v8997 = vadd.f32 0.0, %v8996
        %v8998 = vpop.f32.mrf.mxu0
        %v8999 = vadd.f32 0.0, %v8998
        %9000 = vmatmul.bf16.gmra.mxu0 %v8679
        %v9001 = vpop.f32.mrf.mxu0
        %v9002 = vadd.f32 0.0, %v9001
        %v9003 = vpop.f32.mrf.mxu0
        %v9004 = vadd.f32 0.0, %v9003
        %9005 = vmatmul.bf16.gmra.mxu0 %v8682
        %v9006 = vpop.f32.mrf.mxu0
        %v9007 = vadd.f32 0.0, %v9006
        %v9008 = vpop.f32.mrf.mxu0
        %v9009 = vadd.f32 0.0, %v9008
        %9010 = vmatmul.bf16.gmra.mxu0 %v8685
        %v9011 = vpop.f32.mrf.mxu0
        %v9012 = vadd.f32 0.0, %v9011
        %v9013 = vpop.f32.mrf.mxu0
        %v9014 = vadd.f32 0.0, %v9013
        %9015 = vmatmul.bf16.gmra.mxu0 %v8688
        %v9016 = vpop.f32.mrf.mxu0
        %v9017 = vadd.f32 0.0, %v9016
        %v9018 = vpop.f32.mrf.mxu0
        %v9019 = vadd.f32 0.0, %v9018
        %9020 = vmatmul.bf16.gmra.mxu0 %v8691
        %v9021 = vpop.f32.mrf.mxu0
        %v9022 = vadd.f32 0.0, %v9021
        %v9023 = vpop.f32.mrf.mxu0
        %v9024 = vadd.f32 0.0, %v9023
        %9025 = vmatmul.bf16.gmra.mxu0 %v8694
        %v9026 = vpop.f32.mrf.mxu0
        %v9027 = vadd.f32 0.0, %v9026
        %v9028 = vpop.f32.mrf.mxu0
        %v9029 = vadd.f32 0.0, %v9028
        %9030 = vmatmul.bf16.gmra.mxu0 %v8697
        %v9031 = vpop.f32.mrf.mxu0
        %v9032 = vadd.f32 0.0, %v9031
        %v9033 = vpop.f32.mrf.mxu0
        %v9034 = vadd.f32 0.0, %v9033
        %9035 = vmatmul.bf16.gmra.mxu0 %v8700
        %v9036 = vpop.f32.mrf.mxu0
        %v9037 = vadd.f32 0.0, %v9036
        %v9038 = vpop.f32.mrf.mxu0
        %v9039 = vadd.f32 0.0, %v9038
        %9040 = vmatmul.bf16.gmra.mxu0 %v8703
        %v9041 = vpop.f32.mrf.mxu0
        %v9042 = vadd.f32 0.0, %v9041
        %v9043 = vpop.f32.mrf.mxu0
        %v9044 = vadd.f32 0.0, %v9043
        %9045 = vmatmul.bf16.gmra.mxu0 %v8706
        %v9046 = vpop.f32.mrf.mxu0
        %v9047 = vadd.f32 0.0, %v9046
        %v9048 = vpop.f32.mrf.mxu0
        %v9049 = vadd.f32 0.0, %v9048
        %9050 = vmatmul.bf16.gmra.mxu0 %v8709
        %v9051 = vpop.f32.mrf.mxu0
        %v9052 = vadd.f32 0.0, %v9051
        %v9053 = vpop.f32.mrf.mxu0
        %v9054 = vadd.f32 0.0, %v9053
        %9055 = vmatmul.bf16.gmra.mxu0 %v8712
        %v9056 = vpop.f32.mrf.mxu0
        %v9057 = vadd.f32 0.0, %v9056
        %v9058 = vpop.f32.mrf.mxu0
        %v9059 = vadd.f32 0.0, %v9058
        %9060 = vmatmul.bf16.gmra.mxu0 %v8715
        %v9061 = vpop.f32.mrf.mxu0
        %v9062 = vadd.f32 0.0, %v9061
        %v9063 = vpop.f32.mrf.mxu0
        %v9064 = vadd.f32 0.0, %v9063
        %9065 = vmatmul.bf16.gmra.mxu0 %v8718
        %v9066 = vpop.f32.mrf.mxu0
        %v9067 = vadd.f32 0.0, %v9066
        %v9068 = vpop.f32.mrf.mxu0
        %v9069 = vadd.f32 0.0, %v9068
        %9070 = vmatmul.bf16.gmra.mxu0 %v8721
        %v9071 = vpop.f32.mrf.mxu0
        %v9072 = vadd.f32 0.0, %v9071
        %v9073 = vpop.f32.mrf.mxu0
        %v9074 = vadd.f32 0.0, %v9073
        %9075 = vmatmul.bf16.gmra.mxu0 %v8724
        %v9076 = vpop.f32.mrf.mxu0
        %v9077 = vadd.f32 0.0, %v9076
        %v9078 = vpop.f32.mrf.mxu0
        %v9079 = vadd.f32 0.0, %v9078
        %9080 = vmatmul.bf16.gmra.mxu0 %v8727
        %v9081 = vpop.f32.mrf.mxu0
        %v9082 = vadd.f32 0.0, %v9081
        %v9083 = vpop.f32.mrf.mxu0
        %v9084 = vadd.f32 0.0, %v9083
        %9085 = vmatmul.bf16.gmra.mxu0 %v8730
        %v9086 = vpop.f32.mrf.mxu0
        %v9087 = vadd.f32 0.0, %v9086
        %v9088 = vpop.f32.mrf.mxu0
        %v9089 = vadd.f32 0.0, %v9088
        %9090 = vmatmul.bf16.gmra.mxu0 %v8733
        %v9091 = vpop.f32.mrf.mxu0
        %v9092 = vadd.f32 0.0, %v9091
        %v9093 = vpop.f32.mrf.mxu0
        %v9094 = vadd.f32 0.0, %v9093
        %9095 = vmatmul.bf16.gmra.mxu0 %v8736
        %v9096 = vpop.f32.mrf.mxu0
        %v9097 = vadd.f32 0.0, %v9096
        %v9098 = vpop.f32.mrf.mxu0
        %v9099 = vadd.f32 0.0, %v9098
        %9100 = vmatmul.bf16.gmra.mxu0 %v8739
        %v9101 = vpop.f32.mrf.mxu0
        %v9102 = vadd.f32 0.0, %v9101
        %v9103 = vpop.f32.mrf.mxu0
        %v9104 = vadd.f32 0.0, %v9103
        %9105 = vmatmul.bf16.gmra.mxu0 %v8742
        %v9106 = vpop.f32.mrf.mxu0
        %v9107 = vadd.f32 0.0, %v9106
        %v9108 = vpop.f32.mrf.mxu0
        %v9109 = vadd.f32 0.0, %v9108
        %9110 = vmatmul.bf16.gmra.mxu0 %v8745
        %v9111 = vpop.f32.mrf.mxu0
        %v9112 = vadd.f32 0.0, %v9111
        %v9113 = vpop.f32.mrf.mxu0
        %v9114 = vadd.f32 0.0, %v9113
        %9115 = vdwg.mxu0
        %v9116 = vadd.f32 %v7859, %v8757
        %v9117 = vadd.f32 %v7860, %v8759
        %v9118 = vadd.f32 %v7861, %v8762
        %v9119 = vadd.f32 %v7862, %v8764
        %v9120 = vadd.f32 %v7863, %v8767
        %v9121 = vadd.f32 %v7864, %v8769
        %v9122 = vadd.f32 %v7865, %v8772
        %v9123 = vadd.f32 %v7866, %v8774
        %v9124 = vadd.f32 %v7867, %v8777
        %v9125 = vadd.f32 %v7868, %v8779
        %v9126 = vadd.f32 %v7869, %v8782
        %v9127 = vadd.f32 %v7870, %v8784
        %v9128 = vadd.f32 %v7871, %v8787
        %v9129 = vadd.f32 %v7872, %v8789
        %v9130 = vadd.f32 %v7873, %v8792
        %v9131 = vadd.f32 %v7874, %v8794
        %v9132 = vadd.f32 %v7875, %v8797
        %v9133 = vadd.f32 %v7876, %v8799
        %v9134 = vadd.f32 %v7877, %v8802
        %v9135 = vadd.f32 %v7878, %v8804
        %v9136 = vadd.f32 %v7879, %v8807
        %v9137 = vadd.f32 %v7880, %v8809
        %v9138 = vadd.f32 %v7881, %v8812
        %v9139 = vadd.f32 %v7882, %v8814
        %v9140 = vadd.f32 %v7883, %v8817
        %v9141 = vadd.f32 %v7884, %v8819
        %v9142 = vadd.f32 %v7885, %v8822
        %v9143 = vadd.f32 %v7886, %v8824
        %v9144 = vadd.f32 %v7887, %v8827
        %v9145 = vadd.f32 %v7888, %v8829
        %v9146 = vadd.f32 %v7889, %v8832
        %v9147 = vadd.f32 %v7890, %v8834
        %v9148 = vadd.f32 %v7891, %v8837
        %v9149 = vadd.f32 %v7892, %v8839
        %v9150 = vadd.f32 %v7893, %v8842
        %v9151 = vadd.f32 %v7894, %v8844
        %v9152 = vadd.f32 %v7895, %v8847
        %v9153 = vadd.f32 %v7896, %v8849
        %v9154 = vadd.f32 %v7897, %v8852
        %v9155 = vadd.f32 %v7898, %v8854
        %v9156 = vadd.f32 %v7899, %v8857
        %v9157 = vadd.f32 %v7900, %v8859
        %v9158 = vadd.f32 %v7901, %v8862
        %v9159 = vadd.f32 %v7902, %v8864
        %v9160 = vadd.f32 %v7903, %v8867
        %v9161 = vadd.f32 %v7904, %v8869
        %v9162 = vadd.f32 %v7905, %v8872
        %v9163 = vadd.f32 %v7906, %v8874
        %v9164 = vadd.f32 %v7907, %v8877
        %v9165 = vadd.f32 %v7908, %v8879
        %v9166 = vadd.f32 %v7909, %v8882
        %v9167 = vadd.f32 %v7910, %v8884
        %v9168 = vadd.f32 %v7911, %v8887
        %v9169 = vadd.f32 %v7912, %v8889
        %v9170 = vadd.f32 %v7913, %v8892
        %v9171 = vadd.f32 %v7914, %v8894
        %v9172 = vadd.f32 %v7915, %v8897
        %v9173 = vadd.f32 %v7916, %v8899
        %v9174 = vadd.f32 %v7917, %v8902
        %v9175 = vadd.f32 %v7918, %v8904
        %v9176 = vadd.f32 %v7919, %v8907
        %v9177 = vadd.f32 %v7920, %v8909
        %v9178 = vadd.f32 %v7921, %v8912
        %v9179 = vadd.f32 %v7922, %v8914
        %v9180 = vadd.f32 %v7923, %v8917
        %v9181 = vadd.f32 %v7924, %v8919
        %v9182 = vadd.f32 %v7925, %v8922
        %v9183 = vadd.f32 %v7926, %v8924
        %v9184 = vadd.f32 %v7927, %v8927
        %v9185 = vadd.f32 %v7928, %v8929
        %v9186 = vadd.f32 %v7929, %v8932
        %v9187 = vadd.f32 %v7930, %v8934
        %v9188 = vadd.f32 %v7931, %v8937
        %v9189 = vadd.f32 %v7932, %v8939
        %v9190 = vadd.f32 %v7933, %v8942
        %v9191 = vadd.f32 %v7934, %v8944
        %v9192 = vadd.f32 %v7935, %v8947
        %v9193 = vadd.f32 %v7936, %v8949
        %v9194 = vadd.f32 %v7937, %v8952
        %v9195 = vadd.f32 %v7938, %v8954
        %v9196 = vadd.f32 %v7939, %v8957
        %v9197 = vadd.f32 %v7940, %v8959
        %v9198 = vadd.f32 %v7941, %v8962
        %v9199 = vadd.f32 %v7942, %v8964
        %v9200 = vadd.f32 %v7943, %v8967
        %v9201 = vadd.f32 %v7944, %v8969
        %v9202 = vadd.f32 %v7945, %v8972
        %v9203 = vadd.f32 %v7946, %v8974
        %v9204 = vadd.f32 %v7947, %v8977
        %v9205 = vadd.f32 %v7948, %v8979
        %v9206 = vadd.f32 %v7949, %v8982
        %v9207 = vadd.f32 %v7950, %v8984
        %v9208 = vadd.f32 %v7951, %v8987
        %v9209 = vadd.f32 %v7952, %v8989
        %v9210 = vadd.f32 %v7953, %v8992
        %v9211 = vadd.f32 %v7954, %v8994
        %v9212 = vadd.f32 %v7955, %v8997
        %v9213 = vadd.f32 %v7956, %v8999
        %v9214 = vadd.f32 %v7957, %v9002
        %v9215 = vadd.f32 %v7958, %v9004
        %v9216 = vadd.f32 %v7959, %v9007
        %v9217 = vadd.f32 %v7960, %v9009
        %v9218 = vadd.f32 %v7961, %v9012
        %v9219 = vadd.f32 %v7962, %v9014
        %v9220 = vadd.f32 %v7963, %v9017
        %v9221 = vadd.f32 %v7964, %v9019
        %v9222 = vadd.f32 %v7965, %v9022
        %v9223 = vadd.f32 %v7966, %v9024
        %v9224 = vadd.f32 %v7967, %v9027
        %v9225 = vadd.f32 %v7968, %v9029
        %v9226 = vadd.f32 %v7969, %v9032
        %v9227 = vadd.f32 %v7970, %v9034
        %v9228 = vadd.f32 %v7971, %v9037
        %v9229 = vadd.f32 %v7972, %v9039
        %v9230 = vadd.f32 %v7973, %v9042
        %v9231 = vadd.f32 %v7974, %v9044
        %v9232 = vadd.f32 %v7975, %v9047
        %v9233 = vadd.f32 %v7976, %v9049
        %v9234 = vadd.f32 %v7977, %v9052
        %v9235 = vadd.f32 %v7978, %v9054
        %v9236 = vadd.f32 %v7979, %v9057
        %v9237 = vadd.f32 %v7980, %v9059
        %v9238 = vadd.f32 %v7981, %v9062
        %v9239 = vadd.f32 %v7982, %v9064
        %v9240 = vadd.f32 %v7983, %v9067
        %v9241 = vadd.f32 %v7984, %v9069
        %v9242 = vadd.f32 %v7985, %v9072
        %v9243 = vadd.f32 %v7986, %v9074
        %v9244 = vadd.f32 %v7987, %v9077
        %v9245 = vadd.f32 %v7988, %v9079
        %v9246 = vadd.f32 %v7989, %v9082
        %v9247 = vadd.f32 %v7990, %v9084
        %v9248 = vadd.f32 %v7991, %v9087
        %v9249 = vadd.f32 %v7992, %v9089
        %v9250 = vadd.f32 %v7993, %v9092
        %v9251 = vadd.f32 %v7994, %v9094
        %v9252 = vadd.f32 %v7995, %v9097
        %v9253 = vadd.f32 %v7996, %v9099
        %v9254 = vadd.f32 %v7997, %v9102
        %v9255 = vadd.f32 %v7998, %v9104
        %v9256 = vadd.f32 %v7999, %v9107
        %v9257 = vadd.f32 %v8000, %v9109
        %v9258 = vadd.f32 %v8001, %v9112
        %v9259 = vadd.f32 %v8002, %v9114
        %s9260 = scalar_lea.vmem %s219, 128
        %v9261 = vld [vmem:[%s9260] sm:$0xf]
        %v9262 = vld [vmem:[%s9260 + $0x4] sm:$0xf]
        %v9263 = vld [vmem:[%s9260 + $0x8] sm:$0xf]
        %v9264 = vld [vmem:[%s9260 + $0xc] sm:$0xf]
        %v9265 = vrot.slane %v7190, 1
        %v9266 = vrot.slane %v7191, 1
        %v9267 = vsel %vm2456, %v9265, %v9266
        %v9268 = vrot.slane %v7192, 1
        %v9269 = vsel %vm2456, %v9266, %v9268
        %v9270 = vrot.slane %v7193, 1
        %v9271 = vsel %vm2456, %v9268, %v9270
        %v9272 = vrot.slane %v7194, 1
        %v9273 = vsel %vm2456, %v9270, %v9272
        %v9274 = vrot.slane %v7195, 1
        %v9275 = vsel %vm2456, %v9272, %v9274
        %v9276 = vrot.slane %v7196, 1
        %v9277 = vsel %vm2456, %v9274, %v9276
        %v9278 = vrot.slane %v7197, 1
        %v9279 = vsel %vm2456, %v9276, %v9278
        %v9280 = vrot.slane %v7198, 1
        %v9281 = vsel %vm2456, %v9278, %v9280
        %v9282 = vrot.slane %v7199, 1
        %v9283 = vsel %vm2456, %v9280, %v9282
        %v9284 = vrot.slane %v7200, 1
        %v9285 = vsel %vm2456, %v9282, %v9284
        %v9286 = vrot.slane %v7201, 1
        %v9287 = vsel %vm2456, %v9284, %v9286
        %v9288 = vrot.slane %v7202, 1
        %v9289 = vsel %vm2456, %v9286, %v9288
        %v9290 = vrot.slane %v7203, 1
        %v9291 = vsel %vm2456, %v9288, %v9290
        %v9292 = vrot.slane %v7204, 1
        %v9293 = vsel %vm2456, %v9290, %v9292
        %v9294 = vrot.slane %v7205, 1
        %v9295 = vsel %vm2456, %v9292, %v9294
        %v9296 = vrot.slane %v7206, 1
        %v9297 = vsel %vm2456, %v9294, %v9296
        %v9298 = vrot.slane %v7207, 1
        %v9299 = vsel %vm2456, %v9296, %v9298
        %v9300 = vrot.slane %v7208, 1
        %v9301 = vsel %vm2456, %v9298, %v9300
        %v9302 = vrot.slane %v7209, 1
        %v9303 = vsel %vm2456, %v9300, %v9302
        %v9304 = vrot.slane %v7210, 1
        %v9305 = vsel %vm2456, %v9302, %v9304
        %v9306 = vrot.slane %v7211, 1
        %v9307 = vsel %vm2456, %v9304, %v9306
        %v9308 = vrot.slane %v7212, 1
        %v9309 = vsel %vm2456, %v9306, %v9308
        %v9310 = vrot.slane %v7213, 1
        %v9311 = vsel %vm2456, %v9308, %v9310
        %v9312 = vrot.slane %v7214, 1
        %v9313 = vsel %vm2456, %v9310, %v9312
        %v9314 = vrot.slane %v7215, 1
        %v9315 = vsel %vm2456, %v9312, %v9314
        %v9316 = vrot.slane %v7216, 1
        %v9317 = vsel %vm2456, %v9314, %v9316
        %v9318 = vrot.slane %v7217, 1
        %v9319 = vsel %vm2456, %v9316, %v9318
        %v9320 = vrot.slane %v7218, 1
        %v9321 = vsel %vm2456, %v9318, %v9320
        %v9322 = vrot.slane %v7219, 1
        %v9323 = vsel %vm2456, %v9320, %v9322
        %v9324 = vrot.slane %v7220, 1
        %v9325 = vsel %vm2456, %v9322, %v9324
        %v9326 = vrot.slane %v7221, 1
        %v9327 = vsel %vm2456, %v9324, %v9326
        %v9328 = vrot.slane %v7222, 1
        %v9329 = vsel %vm2456, %v9326, %v9328
        %v9330 = vrot.slane %v7223, 1
        %v9331 = vsel %vm2456, %v9328, %v9330
        %v9332 = vrot.slane %v7224, 1
        %v9333 = vsel %vm2456, %v9330, %v9332
        %v9334 = vrot.slane %v7225, 1
        %v9335 = vsel %vm2456, %v9332, %v9334
        %v9336 = vrot.slane %v7226, 1
        %v9337 = vsel %vm2456, %v9334, %v9336
        %v9338 = vrot.slane %v7227, 1
        %v9339 = vsel %vm2456, %v9336, %v9338
        %v9340 = vrot.slane %v7228, 1
        %v9341 = vsel %vm2456, %v9338, %v9340
        %v9342 = vrot.slane %v7229, 1
        %v9343 = vsel %vm2456, %v9340, %v9342
        %v9344 = vrot.slane %v7230, 1
        %v9345 = vsel %vm2456, %v9342, %v9344
        %v9346 = vrot.slane %v7231, 1
        %v9347 = vsel %vm2456, %v9344, %v9346
        %v9348 = vrot.slane %v7232, 1
        %v9349 = vsel %vm2456, %v9346, %v9348
        %v9350 = vrot.slane %v7233, 1
        %v9351 = vsel %vm2456, %v9348, %v9350
        %v9352 = vrot.slane %v7234, 1
        %v9353 = vsel %vm2456, %v9350, %v9352
        %v9354 = vrot.slane %v7235, 1
        %v9355 = vsel %vm2456, %v9352, %v9354
        %v9356 = vrot.slane %v7236, 1
        %v9357 = vsel %vm2456, %v9354, %v9356
        %v9358 = vrot.slane %v7237, 1
        %v9359 = vsel %vm2456, %v9356, %v9358
        %v9360 = vrot.slane %v7238, 1
        %v9361 = vsel %vm2456, %v9358, %v9360
        %v9362 = vrot.slane %v7239, 1
        %v9363 = vsel %vm2456, %v9360, %v9362
        %v9364 = vrot.slane %v7240, 1
        %v9365 = vsel %vm2456, %v9362, %v9364
        %v9366 = vrot.slane %v7241, 1
        %v9367 = vsel %vm2456, %v9364, %v9366
        %v9368 = vrot.slane %v7242, 1
        %v9369 = vsel %vm2456, %v9366, %v9368
        %v9370 = vrot.slane %v7243, 1
        %v9371 = vsel %vm2456, %v9368, %v9370
        %v9372 = vrot.slane %v7244, 1
        %v9373 = vsel %vm2456, %v9370, %v9372
        %v9374 = vrot.slane %v7245, 1
        %v9375 = vsel %vm2456, %v9372, %v9374
        %v9376 = vrot.slane %v7246, 1
        %v9377 = vsel %vm2456, %v9374, %v9376
        %v9378 = vrot.slane %v7247, 1
        %v9379 = vsel %vm2456, %v9376, %v9378
        %v9380 = vrot.slane %v7248, 1
        %v9381 = vsel %vm2456, %v9378, %v9380
        %v9382 = vrot.slane %v7249, 1
        %v9383 = vsel %vm2456, %v9380, %v9382
        %v9384 = vrot.slane %v7250, 1
        %v9385 = vsel %vm2456, %v9382, %v9384
        %v9386 = vrot.slane %v7251, 1
        %v9387 = vsel %vm2456, %v9384, %v9386
        %v9388 = vrot.slane %v7252, 1
        %v9389 = vsel %vm2456, %v9386, %v9388
        %v9390 = vrot.slane %v7253, 1
        %v9391 = vsel %vm2456, %v9388, %v9390
        %v9392 = vrot.slane %v7254, 1
        %v9393 = vsel %vm2456, %v9390, %v9392
        %v9394 = vrot.slane %v7255, 1
        %v9395 = vsel %vm2456, %v9392, %v9394
        %v9396 = vrot.slane %v7256, 1
        %v9397 = vsel %vm2456, %v9394, %v9396
        %v9398 = vrot.slane %v7257, 1
        %v9399 = vsel %vm2456, %v9396, %v9398
        %v9400 = vrot.slane %v7258, 1
        %v9401 = vsel %vm2456, %v9398, %v9400
        %v9402 = vrot.slane %v7259, 1
        %v9403 = vsel %vm2456, %v9400, %v9402
        %v9404 = vrot.slane %v7260, 1
        %v9405 = vsel %vm2456, %v9402, %v9404
        %v9406 = vrot.slane %v7261, 1
        %v9407 = vsel %vm2456, %v9404, %v9406
        %v9408 = vrot.slane %v8010, 1
        %v9409 = vsel %vm2456, %v9406, %v9408
        %v9414 = vunpack.c.l.b16 %v9261
        %v9415 = vunpack.c.l.b16 %v9262
        %v9416 = vunpack.c.l.b16 %v9263
        %v9417 = vunpack.c.l.b16 %v9264
        %v9418 = vpack.c.b16 %v9415, %v9414
        %v9419 = vpack.c.b16 %v9417, %v9416
        %v9423 = vsel %vm1340, %v9267, 0
        %v9426 = vsel %vm1340, %v9269, 0
        %v9429 = vsel %vm1340, %v9271, 0
        %v9432 = vsel %vm1340, %v9273, 0
        %v9435 = vsel %vm1340, %v9275, 0
        %v9438 = vsel %vm1340, %v9277, 0
        %v9441 = vsel %vm1340, %v9279, 0
        %v9444 = vsel %vm1340, %v9281, 0
        %v9447 = vsel %vm1340, %v9283, 0
        %v9450 = vsel %vm1340, %v9285, 0
        %v9453 = vsel %vm1340, %v9287, 0
        %v9456 = vsel %vm1340, %v9289, 0
        %v9459 = vsel %vm1340, %v9291, 0
        %v9462 = vsel %vm1340, %v9293, 0
        %v9465 = vsel %vm1340, %v9295, 0
        %v9468 = vsel %vm1340, %v9297, 0
        %v9471 = vsel %vm1340, %v9299, 0
        %v9474 = vsel %vm1340, %v9301, 0
        %v9477 = vsel %vm1340, %v9303, 0
        %v9480 = vsel %vm1340, %v9305, 0
        %v9483 = vsel %vm1340, %v9307, 0
        %v9486 = vsel %vm1340, %v9309, 0
        %v9489 = vsel %vm1340, %v9311, 0
        %v9492 = vsel %vm1340, %v9313, 0
        %v9495 = vsel %vm1340, %v9315, 0
        %v9498 = vsel %vm1340, %v9317, 0
        %v9501 = vsel %vm1340, %v9319, 0
        %v9504 = vsel %vm1340, %v9321, 0
        %v9507 = vsel %vm1340, %v9323, 0
        %v9510 = vsel %vm1340, %v9325, 0
        %v9513 = vsel %vm1340, %v9327, 0
        %v9516 = vsel %vm1340, %v9329, 0
        %v9519 = vsel %vm1340, %v9331, 0
        %v9522 = vsel %vm1340, %v9333, 0
        %v9525 = vsel %vm1340, %v9335, 0
        %v9528 = vsel %vm1340, %v9337, 0
        %v9531 = vsel %vm1340, %v9339, 0
        %v9534 = vsel %vm1340, %v9341, 0
        %v9537 = vsel %vm1340, %v9343, 0
        %v9540 = vsel %vm1340, %v9345, 0
        %v9543 = vsel %vm1340, %v9347, 0
        %v9546 = vsel %vm1340, %v9349, 0
        %v9549 = vsel %vm1340, %v9351, 0
        %v9552 = vsel %vm1340, %v9353, 0
        %v9555 = vsel %vm1340, %v9355, 0
        %v9558 = vsel %vm1340, %v9357, 0
        %v9561 = vsel %vm1340, %v9359, 0
        %v9564 = vsel %vm1340, %v9361, 0
        %v9567 = vsel %vm1340, %v9363, 0
        %v9570 = vsel %vm1340, %v9365, 0
        %v9573 = vsel %vm1340, %v9367, 0
        %v9576 = vsel %vm1340, %v9369, 0
        %v9579 = vsel %vm1340, %v9371, 0
        %v9582 = vsel %vm1340, %v9373, 0
        %v9585 = vsel %vm1340, %v9375, 0
        %v9588 = vsel %vm1340, %v9377, 0
        %v9591 = vsel %vm1340, %v9379, 0
        %v9594 = vsel %vm1340, %v9381, 0
        %v9597 = vsel %vm1340, %v9383, 0
        %v9600 = vsel %vm1340, %v9385, 0
        %v9603 = vsel %vm1340, %v9387, 0
        %v9606 = vsel %vm1340, %v9389, 0
        %v9609 = vsel %vm1340, %v9391, 0
        %v9612 = vsel %vm1340, %v9393, 0
        %v9615 = vsel %vm1340, %v9395, 0
        %v9618 = vsel %vm1340, %v9397, 0
        %v9621 = vsel %vm1340, %v9399, 0
        %v9624 = vsel %vm1340, %v9401, 0
        %v9627 = vsel %vm1340, %v9403, 0
        %v9630 = vsel %vm1340, %v9405, 0
        %v9633 = vsel %vm1340, %v9407, 0
        %v9636 = vsel %vm1340, %v9409, 0
        %9638 = vmatpush.bf16.msra.mxu0 0
        %9639 = vmatpush.bf16.msra.mxu0 0
        %9640 = vmatpush.bf16.msra.mxu0 0
        %9641 = vmatpush.bf16.msra.mxu0 0
        %9642 = vmatpush.bf16.msra.mxu0 0
        %9643 = vmatpush.bf16.msra.mxu0 0
        %9644 = vmatpush.bf16.msra.mxu0 %v9419
        %9645 = vmatpush.bf16.msra.mxu0 %v9418
        %9646 = vmatmul.bf16.gmra.mxu0 %v9423
        %v9647 = vpop.f32.mrf.mxu0
        %v9648 = vadd.f32 0.0, %v9647
        %v9649 = vpop.f32.mrf.mxu0
        %v9650 = vadd.f32 0.0, %v9649
        %9651 = vmatmul.bf16.gmra.mxu0 %v9426
        %v9652 = vpop.f32.mrf.mxu0
        %v9653 = vadd.f32 0.0, %v9652
        %v9654 = vpop.f32.mrf.mxu0
        %v9655 = vadd.f32 0.0, %v9654
        %9656 = vmatmul.bf16.gmra.mxu0 %v9429
        %v9657 = vpop.f32.mrf.mxu0
        %v9658 = vadd.f32 0.0, %v9657
        %v9659 = vpop.f32.mrf.mxu0
        %v9660 = vadd.f32 0.0, %v9659
        %9661 = vmatmul.bf16.gmra.mxu0 %v9432
        %v9662 = vpop.f32.mrf.mxu0
        %v9663 = vadd.f32 0.0, %v9662
        %v9664 = vpop.f32.mrf.mxu0
        %v9665 = vadd.f32 0.0, %v9664
        %9666 = vmatmul.bf16.gmra.mxu0 %v9435
        %v9667 = vpop.f32.mrf.mxu0
        %v9668 = vadd.f32 0.0, %v9667
        %v9669 = vpop.f32.mrf.mxu0
        %v9670 = vadd.f32 0.0, %v9669
        %9671 = vmatmul.bf16.gmra.mxu0 %v9438
        %v9672 = vpop.f32.mrf.mxu0
        %v9673 = vadd.f32 0.0, %v9672
        %v9674 = vpop.f32.mrf.mxu0
        %v9675 = vadd.f32 0.0, %v9674
        %9676 = vmatmul.bf16.gmra.mxu0 %v9441
        %v9677 = vpop.f32.mrf.mxu0
        %v9678 = vadd.f32 0.0, %v9677
        %v9679 = vpop.f32.mrf.mxu0
        %v9680 = vadd.f32 0.0, %v9679
        %9681 = vmatmul.bf16.gmra.mxu0 %v9444
        %v9682 = vpop.f32.mrf.mxu0
        %v9683 = vadd.f32 0.0, %v9682
        %v9684 = vpop.f32.mrf.mxu0
        %v9685 = vadd.f32 0.0, %v9684
        %9686 = vmatmul.bf16.gmra.mxu0 %v9447
        %v9687 = vpop.f32.mrf.mxu0
        %v9688 = vadd.f32 0.0, %v9687
        %v9689 = vpop.f32.mrf.mxu0
        %v9690 = vadd.f32 0.0, %v9689
        %9691 = vmatmul.bf16.gmra.mxu0 %v9450
        %v9692 = vpop.f32.mrf.mxu0
        %v9693 = vadd.f32 0.0, %v9692
        %v9694 = vpop.f32.mrf.mxu0
        %v9695 = vadd.f32 0.0, %v9694
        %9696 = vmatmul.bf16.gmra.mxu0 %v9453
        %v9697 = vpop.f32.mrf.mxu0
        %v9698 = vadd.f32 0.0, %v9697
        %v9699 = vpop.f32.mrf.mxu0
        %v9700 = vadd.f32 0.0, %v9699
        %9701 = vmatmul.bf16.gmra.mxu0 %v9456
        %v9702 = vpop.f32.mrf.mxu0
        %v9703 = vadd.f32 0.0, %v9702
        %v9704 = vpop.f32.mrf.mxu0
        %v9705 = vadd.f32 0.0, %v9704
        %9706 = vmatmul.bf16.gmra.mxu0 %v9459
        %v9707 = vpop.f32.mrf.mxu0
        %v9708 = vadd.f32 0.0, %v9707
        %v9709 = vpop.f32.mrf.mxu0
        %v9710 = vadd.f32 0.0, %v9709
        %9711 = vmatmul.bf16.gmra.mxu0 %v9462
        %v9712 = vpop.f32.mrf.mxu0
        %v9713 = vadd.f32 0.0, %v9712
        %v9714 = vpop.f32.mrf.mxu0
        %v9715 = vadd.f32 0.0, %v9714
        %9716 = vmatmul.bf16.gmra.mxu0 %v9465
        %v9717 = vpop.f32.mrf.mxu0
        %v9718 = vadd.f32 0.0, %v9717
        %v9719 = vpop.f32.mrf.mxu0
        %v9720 = vadd.f32 0.0, %v9719
        %9721 = vmatmul.bf16.gmra.mxu0 %v9468
        %v9722 = vpop.f32.mrf.mxu0
        %v9723 = vadd.f32 0.0, %v9722
        %v9724 = vpop.f32.mrf.mxu0
        %v9725 = vadd.f32 0.0, %v9724
        %9726 = vmatmul.bf16.gmra.mxu0 %v9471
        %v9727 = vpop.f32.mrf.mxu0
        %v9728 = vadd.f32 0.0, %v9727
        %v9729 = vpop.f32.mrf.mxu0
        %v9730 = vadd.f32 0.0, %v9729
        %9731 = vmatmul.bf16.gmra.mxu0 %v9474
        %v9732 = vpop.f32.mrf.mxu0
        %v9733 = vadd.f32 0.0, %v9732
        %v9734 = vpop.f32.mrf.mxu0
        %v9735 = vadd.f32 0.0, %v9734
        %9736 = vmatmul.bf16.gmra.mxu0 %v9477
        %v9737 = vpop.f32.mrf.mxu0
        %v9738 = vadd.f32 0.0, %v9737
        %v9739 = vpop.f32.mrf.mxu0
        %v9740 = vadd.f32 0.0, %v9739
        %9741 = vmatmul.bf16.gmra.mxu0 %v9480
        %v9742 = vpop.f32.mrf.mxu0
        %v9743 = vadd.f32 0.0, %v9742
        %v9744 = vpop.f32.mrf.mxu0
        %v9745 = vadd.f32 0.0, %v9744
        %9746 = vmatmul.bf16.gmra.mxu0 %v9483
        %v9747 = vpop.f32.mrf.mxu0
        %v9748 = vadd.f32 0.0, %v9747
        %v9749 = vpop.f32.mrf.mxu0
        %v9750 = vadd.f32 0.0, %v9749
        %9751 = vmatmul.bf16.gmra.mxu0 %v9486
        %v9752 = vpop.f32.mrf.mxu0
        %v9753 = vadd.f32 0.0, %v9752
        %v9754 = vpop.f32.mrf.mxu0
        %v9755 = vadd.f32 0.0, %v9754
        %9756 = vmatmul.bf16.gmra.mxu0 %v9489
        %v9757 = vpop.f32.mrf.mxu0
        %v9758 = vadd.f32 0.0, %v9757
        %v9759 = vpop.f32.mrf.mxu0
        %v9760 = vadd.f32 0.0, %v9759
        %9761 = vmatmul.bf16.gmra.mxu0 %v9492
        %v9762 = vpop.f32.mrf.mxu0
        %v9763 = vadd.f32 0.0, %v9762
        %v9764 = vpop.f32.mrf.mxu0
        %v9765 = vadd.f32 0.0, %v9764
        %9766 = vmatmul.bf16.gmra.mxu0 %v9495
        %v9767 = vpop.f32.mrf.mxu0
        %v9768 = vadd.f32 0.0, %v9767
        %v9769 = vpop.f32.mrf.mxu0
        %v9770 = vadd.f32 0.0, %v9769
        %9771 = vmatmul.bf16.gmra.mxu0 %v9498
        %v9772 = vpop.f32.mrf.mxu0
        %v9773 = vadd.f32 0.0, %v9772
        %v9774 = vpop.f32.mrf.mxu0
        %v9775 = vadd.f32 0.0, %v9774
        %9776 = vmatmul.bf16.gmra.mxu0 %v9501
        %v9777 = vpop.f32.mrf.mxu0
        %v9778 = vadd.f32 0.0, %v9777
        %v9779 = vpop.f32.mrf.mxu0
        %v9780 = vadd.f32 0.0, %v9779
        %9781 = vmatmul.bf16.gmra.mxu0 %v9504
        %v9782 = vpop.f32.mrf.mxu0
        %v9783 = vadd.f32 0.0, %v9782
        %v9784 = vpop.f32.mrf.mxu0
        %v9785 = vadd.f32 0.0, %v9784
        %9786 = vmatmul.bf16.gmra.mxu0 %v9507
        %v9787 = vpop.f32.mrf.mxu0
        %v9788 = vadd.f32 0.0, %v9787
        %v9789 = vpop.f32.mrf.mxu0
        %v9790 = vadd.f32 0.0, %v9789
        %9791 = vmatmul.bf16.gmra.mxu0 %v9510
        %v9792 = vpop.f32.mrf.mxu0
        %v9793 = vadd.f32 0.0, %v9792
        %v9794 = vpop.f32.mrf.mxu0
        %v9795 = vadd.f32 0.0, %v9794
        %9796 = vmatmul.bf16.gmra.mxu0 %v9513
        %v9797 = vpop.f32.mrf.mxu0
        %v9798 = vadd.f32 0.0, %v9797
        %v9799 = vpop.f32.mrf.mxu0
        %v9800 = vadd.f32 0.0, %v9799
        %9801 = vmatmul.bf16.gmra.mxu0 %v9516
        %v9802 = vpop.f32.mrf.mxu0
        %v9803 = vadd.f32 0.0, %v9802
        %v9804 = vpop.f32.mrf.mxu0
        %v9805 = vadd.f32 0.0, %v9804
        %9806 = vmatmul.bf16.gmra.mxu0 %v9519
        %v9807 = vpop.f32.mrf.mxu0
        %v9808 = vadd.f32 0.0, %v9807
        %v9809 = vpop.f32.mrf.mxu0
        %v9810 = vadd.f32 0.0, %v9809
        %9811 = vmatmul.bf16.gmra.mxu0 %v9522
        %v9812 = vpop.f32.mrf.mxu0
        %v9813 = vadd.f32 0.0, %v9812
        %v9814 = vpop.f32.mrf.mxu0
        %v9815 = vadd.f32 0.0, %v9814
        %9816 = vmatmul.bf16.gmra.mxu0 %v9525
        %v9817 = vpop.f32.mrf.mxu0
        %v9818 = vadd.f32 0.0, %v9817
        %v9819 = vpop.f32.mrf.mxu0
        %v9820 = vadd.f32 0.0, %v9819
        %9821 = vmatmul.bf16.gmra.mxu0 %v9528
        %v9822 = vpop.f32.mrf.mxu0
        %v9823 = vadd.f32 0.0, %v9822
        %v9824 = vpop.f32.mrf.mxu0
        %v9825 = vadd.f32 0.0, %v9824
        %9826 = vmatmul.bf16.gmra.mxu0 %v9531
        %v9827 = vpop.f32.mrf.mxu0
        %v9828 = vadd.f32 0.0, %v9827
        %v9829 = vpop.f32.mrf.mxu0
        %v9830 = vadd.f32 0.0, %v9829
        %9831 = vmatmul.bf16.gmra.mxu0 %v9534
        %v9832 = vpop.f32.mrf.mxu0
        %v9833 = vadd.f32 0.0, %v9832
        %v9834 = vpop.f32.mrf.mxu0
        %v9835 = vadd.f32 0.0, %v9834
        %9836 = vmatmul.bf16.gmra.mxu0 %v9537
        %v9837 = vpop.f32.mrf.mxu0
        %v9838 = vadd.f32 0.0, %v9837
        %v9839 = vpop.f32.mrf.mxu0
        %v9840 = vadd.f32 0.0, %v9839
        %9841 = vmatmul.bf16.gmra.mxu0 %v9540
        %v9842 = vpop.f32.mrf.mxu0
        %v9843 = vadd.f32 0.0, %v9842
        %v9844 = vpop.f32.mrf.mxu0
        %v9845 = vadd.f32 0.0, %v9844
        %9846 = vmatmul.bf16.gmra.mxu0 %v9543
        %v9847 = vpop.f32.mrf.mxu0
        %v9848 = vadd.f32 0.0, %v9847
        %v9849 = vpop.f32.mrf.mxu0
        %v9850 = vadd.f32 0.0, %v9849
        %9851 = vmatmul.bf16.gmra.mxu0 %v9546
        %v9852 = vpop.f32.mrf.mxu0
        %v9853 = vadd.f32 0.0, %v9852
        %v9854 = vpop.f32.mrf.mxu0
        %v9855 = vadd.f32 0.0, %v9854
        %9856 = vmatmul.bf16.gmra.mxu0 %v9549
        %v9857 = vpop.f32.mrf.mxu0
        %v9858 = vadd.f32 0.0, %v9857
        %v9859 = vpop.f32.mrf.mxu0
        %v9860 = vadd.f32 0.0, %v9859
        %9861 = vmatmul.bf16.gmra.mxu0 %v9552
        %v9862 = vpop.f32.mrf.mxu0
        %v9863 = vadd.f32 0.0, %v9862
        %v9864 = vpop.f32.mrf.mxu0
        %v9865 = vadd.f32 0.0, %v9864
        %9866 = vmatmul.bf16.gmra.mxu0 %v9555
        %v9867 = vpop.f32.mrf.mxu0
        %v9868 = vadd.f32 0.0, %v9867
        %v9869 = vpop.f32.mrf.mxu0
        %v9870 = vadd.f32 0.0, %v9869
        %9871 = vmatmul.bf16.gmra.mxu0 %v9558
        %v9872 = vpop.f32.mrf.mxu0
        %v9873 = vadd.f32 0.0, %v9872
        %v9874 = vpop.f32.mrf.mxu0
        %v9875 = vadd.f32 0.0, %v9874
        %9876 = vmatmul.bf16.gmra.mxu0 %v9561
        %v9877 = vpop.f32.mrf.mxu0
        %v9878 = vadd.f32 0.0, %v9877
        %v9879 = vpop.f32.mrf.mxu0
        %v9880 = vadd.f32 0.0, %v9879
        %9881 = vmatmul.bf16.gmra.mxu0 %v9564
        %v9882 = vpop.f32.mrf.mxu0
        %v9883 = vadd.f32 0.0, %v9882
        %v9884 = vpop.f32.mrf.mxu0
        %v9885 = vadd.f32 0.0, %v9884
        %9886 = vmatmul.bf16.gmra.mxu0 %v9567
        %v9887 = vpop.f32.mrf.mxu0
        %v9888 = vadd.f32 0.0, %v9887
        %v9889 = vpop.f32.mrf.mxu0
        %v9890 = vadd.f32 0.0, %v9889
        %9891 = vmatmul.bf16.gmra.mxu0 %v9570
        %v9892 = vpop.f32.mrf.mxu0
        %v9893 = vadd.f32 0.0, %v9892
        %v9894 = vpop.f32.mrf.mxu0
        %v9895 = vadd.f32 0.0, %v9894
        %9896 = vmatmul.bf16.gmra.mxu0 %v9573
        %v9897 = vpop.f32.mrf.mxu0
        %v9898 = vadd.f32 0.0, %v9897
        %v9899 = vpop.f32.mrf.mxu0
        %v9900 = vadd.f32 0.0, %v9899
        %9901 = vmatmul.bf16.gmra.mxu0 %v9576
        %v9902 = vpop.f32.mrf.mxu0
        %v9903 = vadd.f32 0.0, %v9902
        %v9904 = vpop.f32.mrf.mxu0
        %v9905 = vadd.f32 0.0, %v9904
        %9906 = vmatmul.bf16.gmra.mxu0 %v9579
        %v9907 = vpop.f32.mrf.mxu0
        %v9908 = vadd.f32 0.0, %v9907
        %v9909 = vpop.f32.mrf.mxu0
        %v9910 = vadd.f32 0.0, %v9909
        %9911 = vmatmul.bf16.gmra.mxu0 %v9582
        %v9912 = vpop.f32.mrf.mxu0
        %v9913 = vadd.f32 0.0, %v9912
        %v9914 = vpop.f32.mrf.mxu0
        %v9915 = vadd.f32 0.0, %v9914
        %9916 = vmatmul.bf16.gmra.mxu0 %v9585
        %v9917 = vpop.f32.mrf.mxu0
        %v9918 = vadd.f32 0.0, %v9917
        %v9919 = vpop.f32.mrf.mxu0
        %v9920 = vadd.f32 0.0, %v9919
        %9921 = vmatmul.bf16.gmra.mxu0 %v9588
        %v9922 = vpop.f32.mrf.mxu0
        %v9923 = vadd.f32 0.0, %v9922
        %v9924 = vpop.f32.mrf.mxu0
        %v9925 = vadd.f32 0.0, %v9924
        %9926 = vmatmul.bf16.gmra.mxu0 %v9591
        %v9927 = vpop.f32.mrf.mxu0
        %v9928 = vadd.f32 0.0, %v9927
        %v9929 = vpop.f32.mrf.mxu0
        %v9930 = vadd.f32 0.0, %v9929
        %9931 = vmatmul.bf16.gmra.mxu0 %v9594
        %v9932 = vpop.f32.mrf.mxu0
        %v9933 = vadd.f32 0.0, %v9932
        %v9934 = vpop.f32.mrf.mxu0
        %v9935 = vadd.f32 0.0, %v9934
        %9936 = vmatmul.bf16.gmra.mxu0 %v9597
        %v9937 = vpop.f32.mrf.mxu0
        %v9938 = vadd.f32 0.0, %v9937
        %v9939 = vpop.f32.mrf.mxu0
        %v9940 = vadd.f32 0.0, %v9939
        %9941 = vmatmul.bf16.gmra.mxu0 %v9600
        %v9942 = vpop.f32.mrf.mxu0
        %v9943 = vadd.f32 0.0, %v9942
        %v9944 = vpop.f32.mrf.mxu0
        %v9945 = vadd.f32 0.0, %v9944
        %9946 = vmatmul.bf16.gmra.mxu0 %v9603
        %v9947 = vpop.f32.mrf.mxu0
        %v9948 = vadd.f32 0.0, %v9947
        %v9949 = vpop.f32.mrf.mxu0
        %v9950 = vadd.f32 0.0, %v9949
        %9951 = vmatmul.bf16.gmra.mxu0 %v9606
        %v9952 = vpop.f32.mrf.mxu0
        %v9953 = vadd.f32 0.0, %v9952
        %v9954 = vpop.f32.mrf.mxu0
        %v9955 = vadd.f32 0.0, %v9954
        %9956 = vmatmul.bf16.gmra.mxu0 %v9609
        %v9957 = vpop.f32.mrf.mxu0
        %v9958 = vadd.f32 0.0, %v9957
        %v9959 = vpop.f32.mrf.mxu0
        %v9960 = vadd.f32 0.0, %v9959
        %9961 = vmatmul.bf16.gmra.mxu0 %v9612
        %v9962 = vpop.f32.mrf.mxu0
        %v9963 = vadd.f32 0.0, %v9962
        %v9964 = vpop.f32.mrf.mxu0
        %v9965 = vadd.f32 0.0, %v9964
        %9966 = vmatmul.bf16.gmra.mxu0 %v9615
        %v9967 = vpop.f32.mrf.mxu0
        %v9968 = vadd.f32 0.0, %v9967
        %v9969 = vpop.f32.mrf.mxu0
        %v9970 = vadd.f32 0.0, %v9969
        %9971 = vmatmul.bf16.gmra.mxu0 %v9618
        %v9972 = vpop.f32.mrf.mxu0
        %v9973 = vadd.f32 0.0, %v9972
        %v9974 = vpop.f32.mrf.mxu0
        %v9975 = vadd.f32 0.0, %v9974
        %9976 = vmatmul.bf16.gmra.mxu0 %v9621
        %v9977 = vpop.f32.mrf.mxu0
        %v9978 = vadd.f32 0.0, %v9977
        %v9979 = vpop.f32.mrf.mxu0
        %v9980 = vadd.f32 0.0, %v9979
        %9981 = vmatmul.bf16.gmra.mxu0 %v9624
        %v9982 = vpop.f32.mrf.mxu0
        %v9983 = vadd.f32 0.0, %v9982
        %v9984 = vpop.f32.mrf.mxu0
        %v9985 = vadd.f32 0.0, %v9984
        %9986 = vmatmul.bf16.gmra.mxu0 %v9627
        %v9987 = vpop.f32.mrf.mxu0
        %v9988 = vadd.f32 0.0, %v9987
        %v9989 = vpop.f32.mrf.mxu0
        %v9990 = vadd.f32 0.0, %v9989
        %9991 = vmatmul.bf16.gmra.mxu0 %v9630
        %v9992 = vpop.f32.mrf.mxu0
        %v9993 = vadd.f32 0.0, %v9992
        %v9994 = vpop.f32.mrf.mxu0
        %v9995 = vadd.f32 0.0, %v9994
        %9996 = vmatmul.bf16.gmra.mxu0 %v9633
        %v9997 = vpop.f32.mrf.mxu0
        %v9998 = vadd.f32 0.0, %v9997
        %v9999 = vpop.f32.mrf.mxu0
        %v10000 = vadd.f32 0.0, %v9999
        %10001 = vmatmul.bf16.gmra.mxu0 %v9636
        %v10002 = vpop.f32.mrf.mxu0
        %v10003 = vadd.f32 0.0, %v10002
        %v10004 = vpop.f32.mrf.mxu0
        %v10005 = vadd.f32 0.0, %v10004
        %10006 = vdwg.mxu0
        %v10007 = vadd.f32 %v9116, %v9648
        %v10008 = vadd.f32 %v9117, %v9650
        %v10009 = vadd.f32 %v9118, %v9653
        %v10010 = vadd.f32 %v9119, %v9655
        %v10011 = vadd.f32 %v9120, %v9658
        %v10012 = vadd.f32 %v9121, %v9660
        %v10013 = vadd.f32 %v9122, %v9663
        %v10014 = vadd.f32 %v9123, %v9665
        %v10015 = vadd.f32 %v9124, %v9668
        %v10016 = vadd.f32 %v9125, %v9670
        %v10017 = vadd.f32 %v9126, %v9673
        %v10018 = vadd.f32 %v9127, %v9675
        %v10019 = vadd.f32 %v9128, %v9678
        %v10020 = vadd.f32 %v9129, %v9680
        %v10021 = vadd.f32 %v9130, %v9683
        %v10022 = vadd.f32 %v9131, %v9685
        %v10023 = vadd.f32 %v9132, %v9688
        %v10024 = vadd.f32 %v9133, %v9690
        %v10025 = vadd.f32 %v9134, %v9693
        %v10026 = vadd.f32 %v9135, %v9695
        %v10027 = vadd.f32 %v9136, %v9698
        %v10028 = vadd.f32 %v9137, %v9700
        %v10029 = vadd.f32 %v9138, %v9703
        %v10030 = vadd.f32 %v9139, %v9705
        %v10031 = vadd.f32 %v9140, %v9708
        %v10032 = vadd.f32 %v9141, %v9710
        %v10033 = vadd.f32 %v9142, %v9713
        %v10034 = vadd.f32 %v9143, %v9715
        %v10035 = vadd.f32 %v9144, %v9718
        %v10036 = vadd.f32 %v9145, %v9720
        %v10037 = vadd.f32 %v9146, %v9723
        %v10038 = vadd.f32 %v9147, %v9725
        %v10039 = vadd.f32 %v9148, %v9728
        %v10040 = vadd.f32 %v9149, %v9730
        %v10041 = vadd.f32 %v9150, %v9733
        %v10042 = vadd.f32 %v9151, %v9735
        %v10043 = vadd.f32 %v9152, %v9738
        %v10044 = vadd.f32 %v9153, %v9740
        %v10045 = vadd.f32 %v9154, %v9743
        %v10046 = vadd.f32 %v9155, %v9745
        %v10047 = vadd.f32 %v9156, %v9748
        %v10048 = vadd.f32 %v9157, %v9750
        %v10049 = vadd.f32 %v9158, %v9753
        %v10050 = vadd.f32 %v9159, %v9755
        %v10051 = vadd.f32 %v9160, %v9758
        %v10052 = vadd.f32 %v9161, %v9760
        %v10053 = vadd.f32 %v9162, %v9763
        %v10054 = vadd.f32 %v9163, %v9765
        %v10055 = vadd.f32 %v9164, %v9768
        %v10056 = vadd.f32 %v9165, %v9770
        %v10057 = vadd.f32 %v9166, %v9773
        %v10058 = vadd.f32 %v9167, %v9775
        %v10059 = vadd.f32 %v9168, %v9778
        %v10060 = vadd.f32 %v9169, %v9780
        %v10061 = vadd.f32 %v9170, %v9783
        %v10062 = vadd.f32 %v9171, %v9785
        %v10063 = vadd.f32 %v9172, %v9788
        %v10064 = vadd.f32 %v9173, %v9790
        %v10065 = vadd.f32 %v9174, %v9793
        %v10066 = vadd.f32 %v9175, %v9795
        %v10067 = vadd.f32 %v9176, %v9798
        %v10068 = vadd.f32 %v9177, %v9800
        %v10069 = vadd.f32 %v9178, %v9803
        %v10070 = vadd.f32 %v9179, %v9805
        %v10071 = vadd.f32 %v9180, %v9808
        %v10072 = vadd.f32 %v9181, %v9810
        %v10073 = vadd.f32 %v9182, %v9813
        %v10074 = vadd.f32 %v9183, %v9815
        %v10075 = vadd.f32 %v9184, %v9818
        %v10076 = vadd.f32 %v9185, %v9820
        %v10077 = vadd.f32 %v9186, %v9823
        %v10078 = vadd.f32 %v9187, %v9825
        %v10079 = vadd.f32 %v9188, %v9828
        %v10080 = vadd.f32 %v9189, %v9830
        %v10081 = vadd.f32 %v9190, %v9833
        %v10082 = vadd.f32 %v9191, %v9835
        %v10083 = vadd.f32 %v9192, %v9838
        %v10084 = vadd.f32 %v9193, %v9840
        %v10085 = vadd.f32 %v9194, %v9843
        %v10086 = vadd.f32 %v9195, %v9845
        %v10087 = vadd.f32 %v9196, %v9848
        %v10088 = vadd.f32 %v9197, %v9850
        %v10089 = vadd.f32 %v9198, %v9853
        %v10090 = vadd.f32 %v9199, %v9855
        %v10091 = vadd.f32 %v9200, %v9858
        %v10092 = vadd.f32 %v9201, %v9860
        %v10093 = vadd.f32 %v9202, %v9863
        %v10094 = vadd.f32 %v9203, %v9865
        %v10095 = vadd.f32 %v9204, %v9868
        %v10096 = vadd.f32 %v9205, %v9870
        %v10097 = vadd.f32 %v9206, %v9873
        %v10098 = vadd.f32 %v9207, %v9875
        %v10099 = vadd.f32 %v9208, %v9878
        %v10100 = vadd.f32 %v9209, %v9880
        %v10101 = vadd.f32 %v9210, %v9883
        %v10102 = vadd.f32 %v9211, %v9885
        %v10103 = vadd.f32 %v9212, %v9888
        %v10104 = vadd.f32 %v9213, %v9890
        %v10105 = vadd.f32 %v9214, %v9893
        %v10106 = vadd.f32 %v9215, %v9895
        %v10107 = vadd.f32 %v9216, %v9898
        %v10108 = vadd.f32 %v9217, %v9900
        %v10109 = vadd.f32 %v9218, %v9903
        %v10110 = vadd.f32 %v9219, %v9905
        %v10111 = vadd.f32 %v9220, %v9908
        %v10112 = vadd.f32 %v9221, %v9910
        %v10113 = vadd.f32 %v9222, %v9913
        %v10114 = vadd.f32 %v9223, %v9915
        %v10115 = vadd.f32 %v9224, %v9918
        %v10116 = vadd.f32 %v9225, %v9920
        %v10117 = vadd.f32 %v9226, %v9923
        %v10118 = vadd.f32 %v9227, %v9925
        %v10119 = vadd.f32 %v9228, %v9928
        %v10120 = vadd.f32 %v9229, %v9930
        %v10121 = vadd.f32 %v9230, %v9933
        %v10122 = vadd.f32 %v9231, %v9935
        %v10123 = vadd.f32 %v9232, %v9938
        %v10124 = vadd.f32 %v9233, %v9940
        %v10125 = vadd.f32 %v9234, %v9943
        %v10126 = vadd.f32 %v9235, %v9945
        %v10127 = vadd.f32 %v9236, %v9948
        %v10128 = vadd.f32 %v9237, %v9950
        %v10129 = vadd.f32 %v9238, %v9953
        %v10130 = vadd.f32 %v9239, %v9955
        %v10131 = vadd.f32 %v9240, %v9958
        %v10132 = vadd.f32 %v9241, %v9960
        %v10133 = vadd.f32 %v9242, %v9963
        %v10134 = vadd.f32 %v9243, %v9965
        %v10135 = vadd.f32 %v9244, %v9968
        %v10136 = vadd.f32 %v9245, %v9970
        %v10137 = vadd.f32 %v9246, %v9973
        %v10138 = vadd.f32 %v9247, %v9975
        %v10139 = vadd.f32 %v9248, %v9978
        %v10140 = vadd.f32 %v9249, %v9980
        %v10141 = vadd.f32 %v9250, %v9983
        %v10142 = vadd.f32 %v9251, %v9985
        %v10143 = vadd.f32 %v9252, %v9988
        %v10144 = vadd.f32 %v9253, %v9990
        %v10145 = vadd.f32 %v9254, %v9993
        %v10146 = vadd.f32 %v9255, %v9995
        %v10147 = vadd.f32 %v9256, %v9998
        %v10148 = vadd.f32 %v9257, %v10000
        %v10149 = vadd.f32 %v9258, %v10003
        %v10150 = vadd.f32 %v9259, %v10005
        %v10151 = vld [vmem:[%s222] sm:$0x1]
        %v10153 = vperm.slane %v10151, 0
        %v10155 = vadd.f32 %v10007, %v10153
        %v10156 = vadd.f32 %v10008, %v10153
        %v10157 = vadd.f32 %v10009, %v10153
        %v10158 = vadd.f32 %v10010, %v10153
        %v10159 = vadd.f32 %v10011, %v10153
        %v10160 = vadd.f32 %v10012, %v10153
        %v10161 = vadd.f32 %v10013, %v10153
        %v10162 = vadd.f32 %v10014, %v10153
        %v10163 = vadd.f32 %v10015, %v10153
        %v10164 = vadd.f32 %v10016, %v10153
        %v10165 = vadd.f32 %v10017, %v10153
        %v10166 = vadd.f32 %v10018, %v10153
        %v10167 = vadd.f32 %v10019, %v10153
        %v10168 = vadd.f32 %v10020, %v10153
        %v10169 = vadd.f32 %v10021, %v10153
        %v10170 = vadd.f32 %v10022, %v10153
        %v10171 = vadd.f32 %v10023, %v10153
        %v10172 = vadd.f32 %v10024, %v10153
        %v10173 = vadd.f32 %v10025, %v10153
        %v10174 = vadd.f32 %v10026, %v10153
        %v10175 = vadd.f32 %v10027, %v10153
        %v10176 = vadd.f32 %v10028, %v10153
        %v10177 = vadd.f32 %v10029, %v10153
        %v10178 = vadd.f32 %v10030, %v10153
        %v10179 = vadd.f32 %v10031, %v10153
        %v10180 = vadd.f32 %v10032, %v10153
        %v10181 = vadd.f32 %v10033, %v10153
        %v10182 = vadd.f32 %v10034, %v10153
        %v10183 = vadd.f32 %v10035, %v10153
        %v10184 = vadd.f32 %v10036, %v10153
        %v10185 = vadd.f32 %v10037, %v10153
        %v10186 = vadd.f32 %v10038, %v10153
        %v10187 = vadd.f32 %v10039, %v10153
        %v10188 = vadd.f32 %v10040, %v10153
        %v10189 = vadd.f32 %v10041, %v10153
        %v10190 = vadd.f32 %v10042, %v10153
        %v10191 = vadd.f32 %v10043, %v10153
        %v10192 = vadd.f32 %v10044, %v10153
        %v10193 = vadd.f32 %v10045, %v10153
        %v10194 = vadd.f32 %v10046, %v10153
        %v10195 = vadd.f32 %v10047, %v10153
        %v10196 = vadd.f32 %v10048, %v10153
        %v10197 = vadd.f32 %v10049, %v10153
        %v10198 = vadd.f32 %v10050, %v10153
        %v10199 = vadd.f32 %v10051, %v10153
        %v10200 = vadd.f32 %v10052, %v10153
        %v10201 = vadd.f32 %v10053, %v10153
        %v10202 = vadd.f32 %v10054, %v10153
        %v10203 = vadd.f32 %v10055, %v10153
        %v10204 = vadd.f32 %v10056, %v10153
        %v10205 = vadd.f32 %v10057, %v10153
        %v10206 = vadd.f32 %v10058, %v10153
        %v10207 = vadd.f32 %v10059, %v10153
        %v10208 = vadd.f32 %v10060, %v10153
        %v10209 = vadd.f32 %v10061, %v10153
        %v10210 = vadd.f32 %v10062, %v10153
        %v10211 = vadd.f32 %v10063, %v10153
        %v10212 = vadd.f32 %v10064, %v10153
        %v10213 = vadd.f32 %v10065, %v10153
        %v10214 = vadd.f32 %v10066, %v10153
        %v10215 = vadd.f32 %v10067, %v10153
        %v10216 = vadd.f32 %v10068, %v10153
        %v10217 = vadd.f32 %v10069, %v10153
        %v10218 = vadd.f32 %v10070, %v10153
        %v10219 = vadd.f32 %v10071, %v10153
        %v10220 = vadd.f32 %v10072, %v10153
        %v10221 = vadd.f32 %v10073, %v10153
        %v10222 = vadd.f32 %v10074, %v10153
        %v10223 = vadd.f32 %v10075, %v10153
        %v10224 = vadd.f32 %v10076, %v10153
        %v10225 = vadd.f32 %v10077, %v10153
        %v10226 = vadd.f32 %v10078, %v10153
        %v10227 = vadd.f32 %v10079, %v10153
        %v10228 = vadd.f32 %v10080, %v10153
        %v10229 = vadd.f32 %v10081, %v10153
        %v10230 = vadd.f32 %v10082, %v10153
        %v10231 = vadd.f32 %v10083, %v10153
        %v10232 = vadd.f32 %v10084, %v10153
        %v10233 = vadd.f32 %v10085, %v10153
        %v10234 = vadd.f32 %v10086, %v10153
        %v10235 = vadd.f32 %v10087, %v10153
        %v10236 = vadd.f32 %v10088, %v10153
        %v10237 = vadd.f32 %v10089, %v10153
        %v10238 = vadd.f32 %v10090, %v10153
        %v10239 = vadd.f32 %v10091, %v10153
        %v10240 = vadd.f32 %v10092, %v10153
        %v10241 = vadd.f32 %v10093, %v10153
        %v10242 = vadd.f32 %v10094, %v10153
        %v10243 = vadd.f32 %v10095, %v10153
        %v10244 = vadd.f32 %v10096, %v10153
        %v10245 = vadd.f32 %v10097, %v10153
        %v10246 = vadd.f32 %v10098, %v10153
        %v10247 = vadd.f32 %v10099, %v10153
        %v10248 = vadd.f32 %v10100, %v10153
        %v10249 = vadd.f32 %v10101, %v10153
        %v10250 = vadd.f32 %v10102, %v10153
        %v10251 = vadd.f32 %v10103, %v10153
        %v10252 = vadd.f32 %v10104, %v10153
        %v10253 = vadd.f32 %v10105, %v10153
        %v10254 = vadd.f32 %v10106, %v10153
        %v10255 = vadd.f32 %v10107, %v10153
        %v10256 = vadd.f32 %v10108, %v10153
        %v10257 = vadd.f32 %v10109, %v10153
        %v10258 = vadd.f32 %v10110, %v10153
        %v10259 = vadd.f32 %v10111, %v10153
        %v10260 = vadd.f32 %v10112, %v10153
        %v10261 = vadd.f32 %v10113, %v10153
        %v10262 = vadd.f32 %v10114, %v10153
        %v10263 = vadd.f32 %v10115, %v10153
        %v10264 = vadd.f32 %v10116, %v10153
        %v10265 = vadd.f32 %v10117, %v10153
        %v10266 = vadd.f32 %v10118, %v10153
        %v10267 = vadd.f32 %v10119, %v10153
        %v10268 = vadd.f32 %v10120, %v10153
        %v10269 = vadd.f32 %v10121, %v10153
        %v10270 = vadd.f32 %v10122, %v10153
        %v10271 = vadd.f32 %v10123, %v10153
        %v10272 = vadd.f32 %v10124, %v10153
        %v10273 = vadd.f32 %v10125, %v10153
        %v10274 = vadd.f32 %v10126, %v10153
        %v10275 = vadd.f32 %v10127, %v10153
        %v10276 = vadd.f32 %v10128, %v10153
        %v10277 = vadd.f32 %v10129, %v10153
        %v10278 = vadd.f32 %v10130, %v10153
        %v10279 = vadd.f32 %v10131, %v10153
        %v10280 = vadd.f32 %v10132, %v10153
        %v10281 = vadd.f32 %v10133, %v10153
        %v10282 = vadd.f32 %v10134, %v10153
        %v10283 = vadd.f32 %v10135, %v10153
        %v10284 = vadd.f32 %v10136, %v10153
        %v10285 = vadd.f32 %v10137, %v10153
        %v10286 = vadd.f32 %v10138, %v10153
        %v10287 = vadd.f32 %v10139, %v10153
        %v10288 = vadd.f32 %v10140, %v10153
        %v10289 = vadd.f32 %v10141, %v10153
        %v10290 = vadd.f32 %v10142, %v10153
        %v10291 = vadd.f32 %v10143, %v10153
        %v10292 = vadd.f32 %v10144, %v10153
        %v10293 = vadd.f32 %v10145, %v10153
        %v10294 = vadd.f32 %v10146, %v10153
        %v10295 = vadd.f32 %v10147, %v10153
        %v10296 = vadd.f32 %v10148, %v10153
        %v10297 = vadd.f32 %v10149, %v10153
        %v10298 = vadd.f32 %v10150, %v10153
        %v10299 = vmax.f32 %v10155, 0.0
        %v10300 = vmax.f32 %v10156, 0.0
        %v10301 = vmax.f32 %v10157, 0.0
        %v10302 = vmax.f32 %v10158, 0.0
        %v10303 = vmax.f32 %v10159, 0.0
        %v10304 = vmax.f32 %v10160, 0.0
        %v10305 = vmax.f32 %v10161, 0.0
        %v10306 = vmax.f32 %v10162, 0.0
        %v10307 = vmax.f32 %v10163, 0.0
        %v10308 = vmax.f32 %v10164, 0.0
        %v10309 = vmax.f32 %v10165, 0.0
        %v10310 = vmax.f32 %v10166, 0.0
        %v10311 = vmax.f32 %v10167, 0.0
        %v10312 = vmax.f32 %v10168, 0.0
        %v10313 = vmax.f32 %v10169, 0.0
        %v10314 = vmax.f32 %v10170, 0.0
        %v10315 = vmax.f32 %v10171, 0.0
        %v10316 = vmax.f32 %v10172, 0.0
        %v10317 = vmax.f32 %v10173, 0.0
        %v10318 = vmax.f32 %v10174, 0.0
        %v10319 = vmax.f32 %v10175, 0.0
        %v10320 = vmax.f32 %v10176, 0.0
        %v10321 = vmax.f32 %v10177, 0.0
        %v10322 = vmax.f32 %v10178, 0.0
        %v10323 = vmax.f32 %v10179, 0.0
        %v10324 = vmax.f32 %v10180, 0.0
        %v10325 = vmax.f32 %v10181, 0.0
        %v10326 = vmax.f32 %v10182, 0.0
        %v10327 = vmax.f32 %v10183, 0.0
        %v10328 = vmax.f32 %v10184, 0.0
        %v10329 = vmax.f32 %v10185, 0.0
        %v10330 = vmax.f32 %v10186, 0.0
        %v10331 = vmax.f32 %v10187, 0.0
        %v10332 = vmax.f32 %v10188, 0.0
        %v10333 = vmax.f32 %v10189, 0.0
        %v10334 = vmax.f32 %v10190, 0.0
        %v10335 = vmax.f32 %v10191, 0.0
        %v10336 = vmax.f32 %v10192, 0.0
        %v10337 = vmax.f32 %v10193, 0.0
        %v10338 = vmax.f32 %v10194, 0.0
        %v10339 = vmax.f32 %v10195, 0.0
        %v10340 = vmax.f32 %v10196, 0.0
        %v10341 = vmax.f32 %v10197, 0.0
        %v10342 = vmax.f32 %v10198, 0.0
        %v10343 = vmax.f32 %v10199, 0.0
        %v10344 = vmax.f32 %v10200, 0.0
        %v10345 = vmax.f32 %v10201, 0.0
        %v10346 = vmax.f32 %v10202, 0.0
        %v10347 = vmax.f32 %v10203, 0.0
        %v10348 = vmax.f32 %v10204, 0.0
        %v10349 = vmax.f32 %v10205, 0.0
        %v10350 = vmax.f32 %v10206, 0.0
        %v10351 = vmax.f32 %v10207, 0.0
        %v10352 = vmax.f32 %v10208, 0.0
        %v10353 = vmax.f32 %v10209, 0.0
        %v10354 = vmax.f32 %v10210, 0.0
        %v10355 = vmax.f32 %v10211, 0.0
        %v10356 = vmax.f32 %v10212, 0.0
        %v10357 = vmax.f32 %v10213, 0.0
        %v10358 = vmax.f32 %v10214, 0.0
        %v10359 = vmax.f32 %v10215, 0.0
        %v10360 = vmax.f32 %v10216, 0.0
        %v10361 = vmax.f32 %v10217, 0.0
        %v10362 = vmax.f32 %v10218, 0.0
        %v10363 = vmax.f32 %v10219, 0.0
        %v10364 = vmax.f32 %v10220, 0.0
        %v10365 = vmax.f32 %v10221, 0.0
        %v10366 = vmax.f32 %v10222, 0.0
        %v10367 = vmax.f32 %v10223, 0.0
        %v10368 = vmax.f32 %v10224, 0.0
        %v10369 = vmax.f32 %v10225, 0.0
        %v10370 = vmax.f32 %v10226, 0.0
        %v10371 = vmax.f32 %v10227, 0.0
        %v10372 = vmax.f32 %v10228, 0.0
        %v10373 = vmax.f32 %v10229, 0.0
        %v10374 = vmax.f32 %v10230, 0.0
        %v10375 = vmax.f32 %v10231, 0.0
        %v10376 = vmax.f32 %v10232, 0.0
        %v10377 = vmax.f32 %v10233, 0.0
        %v10378 = vmax.f32 %v10234, 0.0
        %v10379 = vmax.f32 %v10235, 0.0
        %v10380 = vmax.f32 %v10236, 0.0
        %v10381 = vmax.f32 %v10237, 0.0
        %v10382 = vmax.f32 %v10238, 0.0
        %v10383 = vmax.f32 %v10239, 0.0
        %v10384 = vmax.f32 %v10240, 0.0
        %v10385 = vmax.f32 %v10241, 0.0
        %v10386 = vmax.f32 %v10242, 0.0
        %v10387 = vmax.f32 %v10243, 0.0
        %v10388 = vmax.f32 %v10244, 0.0
        %v10389 = vmax.f32 %v10245, 0.0
        %v10390 = vmax.f32 %v10246, 0.0
        %v10391 = vmax.f32 %v10247, 0.0
        %v10392 = vmax.f32 %v10248, 0.0
        %v10393 = vmax.f32 %v10249, 0.0
        %v10394 = vmax.f32 %v10250, 0.0
        %v10395 = vmax.f32 %v10251, 0.0
        %v10396 = vmax.f32 %v10252, 0.0
        %v10397 = vmax.f32 %v10253, 0.0
        %v10398 = vmax.f32 %v10254, 0.0
        %v10399 = vmax.f32 %v10255, 0.0
        %v10400 = vmax.f32 %v10256, 0.0
        %v10401 = vmax.f32 %v10257, 0.0
        %v10402 = vmax.f32 %v10258, 0.0
        %v10403 = vmax.f32 %v10259, 0.0
        %v10404 = vmax.f32 %v10260, 0.0
        %v10405 = vmax.f32 %v10261, 0.0
        %v10406 = vmax.f32 %v10262, 0.0
        %v10407 = vmax.f32 %v10263, 0.0
        %v10408 = vmax.f32 %v10264, 0.0
        %v10409 = vmax.f32 %v10265, 0.0
        %v10410 = vmax.f32 %v10266, 0.0
        %v10411 = vmax.f32 %v10267, 0.0
        %v10412 = vmax.f32 %v10268, 0.0
        %v10413 = vmax.f32 %v10269, 0.0
        %v10414 = vmax.f32 %v10270, 0.0
        %v10415 = vmax.f32 %v10271, 0.0
        %v10416 = vmax.f32 %v10272, 0.0
        %v10417 = vmax.f32 %v10273, 0.0
        %v10418 = vmax.f32 %v10274, 0.0
        %v10419 = vmax.f32 %v10275, 0.0
        %v10420 = vmax.f32 %v10276, 0.0
        %v10421 = vmax.f32 %v10277, 0.0
        %v10422 = vmax.f32 %v10278, 0.0
        %v10423 = vmax.f32 %v10279, 0.0
        %v10424 = vmax.f32 %v10280, 0.0
        %v10425 = vmax.f32 %v10281, 0.0
        %v10426 = vmax.f32 %v10282, 0.0
        %v10427 = vmax.f32 %v10283, 0.0
        %v10428 = vmax.f32 %v10284, 0.0
        %v10429 = vmax.f32 %v10285, 0.0
        %v10430 = vmax.f32 %v10286, 0.0
        %v10431 = vmax.f32 %v10287, 0.0
        %v10432 = vmax.f32 %v10288, 0.0
        %v10433 = vmax.f32 %v10289, 0.0
        %v10434 = vmax.f32 %v10290, 0.0
        %v10435 = vmax.f32 %v10291, 0.0
        %v10436 = vmax.f32 %v10292, 0.0
        %v10437 = vmax.f32 %v10293, 0.0
        %v10438 = vmax.f32 %v10294, 0.0
        %v10439 = vmax.f32 %v10295, 0.0
        %v10440 = vmax.f32 %v10296, 0.0
        %v10441 = vmax.f32 %v10297, 0.0
        %v10442 = vmax.f32 %v10298, 0.0
        %v10443 = vpack.c.bf16 %v10299, %v10299
        %v10444 = vpack.c.bf16 %v10300, %v10300
        %v10445 = vpack.c.bf16 %v10301, %v10301
        %v10446 = vpack.c.bf16 %v10302, %v10302
        %v10447 = vpack.c.bf16 %v10303, %v10303
        %v10448 = vpack.c.bf16 %v10304, %v10304
        %v10449 = vpack.c.bf16 %v10305, %v10305
        %v10450 = vpack.c.bf16 %v10306, %v10306
        %v10451 = vpack.c.bf16 %v10307, %v10307
        %v10452 = vpack.c.bf16 %v10308, %v10308
        %v10453 = vpack.c.bf16 %v10309, %v10309
        %v10454 = vpack.c.bf16 %v10310, %v10310
        %v10455 = vpack.c.bf16 %v10311, %v10311
        %v10456 = vpack.c.bf16 %v10312, %v10312
        %v10457 = vpack.c.bf16 %v10313, %v10313
        %v10458 = vpack.c.bf16 %v10314, %v10314
        %v10459 = vpack.c.bf16 %v10315, %v10315
        %v10460 = vpack.c.bf16 %v10316, %v10316
        %v10461 = vpack.c.bf16 %v10317, %v10317
        %v10462 = vpack.c.bf16 %v10318, %v10318
        %v10463 = vpack.c.bf16 %v10319, %v10319
        %v10464 = vpack.c.bf16 %v10320, %v10320
        %v10465 = vpack.c.bf16 %v10321, %v10321
        %v10466 = vpack.c.bf16 %v10322, %v10322
        %v10467 = vpack.c.bf16 %v10323, %v10323
        %v10468 = vpack.c.bf16 %v10324, %v10324
        %v10469 = vpack.c.bf16 %v10325, %v10325
        %v10470 = vpack.c.bf16 %v10326, %v10326
        %v10471 = vpack.c.bf16 %v10327, %v10327
        %v10472 = vpack.c.bf16 %v10328, %v10328
        %v10473 = vpack.c.bf16 %v10329, %v10329
        %v10474 = vpack.c.bf16 %v10330, %v10330
        %v10475 = vpack.c.bf16 %v10331, %v10331
        %v10476 = vpack.c.bf16 %v10332, %v10332
        %v10477 = vpack.c.bf16 %v10333, %v10333
        %v10478 = vpack.c.bf16 %v10334, %v10334
        %v10479 = vpack.c.bf16 %v10335, %v10335
        %v10480 = vpack.c.bf16 %v10336, %v10336
        %v10481 = vpack.c.bf16 %v10337, %v10337
        %v10482 = vpack.c.bf16 %v10338, %v10338
        %v10483 = vpack.c.bf16 %v10339, %v10339
        %v10484 = vpack.c.bf16 %v10340, %v10340
        %v10485 = vpack.c.bf16 %v10341, %v10341
        %v10486 = vpack.c.bf16 %v10342, %v10342
        %v10487 = vpack.c.bf16 %v10343, %v10343
        %v10488 = vpack.c.bf16 %v10344, %v10344
        %v10489 = vpack.c.bf16 %v10345, %v10345
        %v10490 = vpack.c.bf16 %v10346, %v10346
        %v10491 = vpack.c.bf16 %v10347, %v10347
        %v10492 = vpack.c.bf16 %v10348, %v10348
        %v10493 = vpack.c.bf16 %v10349, %v10349
        %v10494 = vpack.c.bf16 %v10350, %v10350
        %v10495 = vpack.c.bf16 %v10351, %v10351
        %v10496 = vpack.c.bf16 %v10352, %v10352
        %v10497 = vpack.c.bf16 %v10353, %v10353
        %v10498 = vpack.c.bf16 %v10354, %v10354
        %v10499 = vpack.c.bf16 %v10355, %v10355
        %v10500 = vpack.c.bf16 %v10356, %v10356
        %v10501 = vpack.c.bf16 %v10357, %v10357
        %v10502 = vpack.c.bf16 %v10358, %v10358
        %v10503 = vpack.c.bf16 %v10359, %v10359
        %v10504 = vpack.c.bf16 %v10360, %v10360
        %v10505 = vpack.c.bf16 %v10361, %v10361
        %v10506 = vpack.c.bf16 %v10362, %v10362
        %v10507 = vpack.c.bf16 %v10363, %v10363
        %v10508 = vpack.c.bf16 %v10364, %v10364
        %v10509 = vpack.c.bf16 %v10365, %v10365
        %v10510 = vpack.c.bf16 %v10366, %v10366
        %v10511 = vpack.c.bf16 %v10367, %v10367
        %v10512 = vpack.c.bf16 %v10368, %v10368
        %v10513 = vpack.c.bf16 %v10369, %v10369
        %v10514 = vpack.c.bf16 %v10370, %v10370
        %v10515 = vpack.c.bf16 %v10371, %v10371
        %v10516 = vpack.c.bf16 %v10372, %v10372
        %v10517 = vpack.c.bf16 %v10373, %v10373
        %v10518 = vpack.c.bf16 %v10374, %v10374
        %v10519 = vpack.c.bf16 %v10375, %v10375
        %v10520 = vpack.c.bf16 %v10376, %v10376
        %v10521 = vpack.c.bf16 %v10377, %v10377
        %v10522 = vpack.c.bf16 %v10378, %v10378
        %v10523 = vpack.c.bf16 %v10379, %v10379
        %v10524 = vpack.c.bf16 %v10380, %v10380
        %v10525 = vpack.c.bf16 %v10381, %v10381
        %v10526 = vpack.c.bf16 %v10382, %v10382
        %v10527 = vpack.c.bf16 %v10383, %v10383
        %v10528 = vpack.c.bf16 %v10384, %v10384
        %v10529 = vpack.c.bf16 %v10385, %v10385
        %v10530 = vpack.c.bf16 %v10386, %v10386
        %v10531 = vpack.c.bf16 %v10387, %v10387
        %v10532 = vpack.c.bf16 %v10388, %v10388
        %v10533 = vpack.c.bf16 %v10389, %v10389
        %v10534 = vpack.c.bf16 %v10390, %v10390
        %v10535 = vpack.c.bf16 %v10391, %v10391
        %v10536 = vpack.c.bf16 %v10392, %v10392
        %v10537 = vpack.c.bf16 %v10393, %v10393
        %v10538 = vpack.c.bf16 %v10394, %v10394
        %v10539 = vpack.c.bf16 %v10395, %v10395
        %v10540 = vpack.c.bf16 %v10396, %v10396
        %v10541 = vpack.c.bf16 %v10397, %v10397
        %v10542 = vpack.c.bf16 %v10398, %v10398
        %v10543 = vpack.c.bf16 %v10399, %v10399
        %v10544 = vpack.c.bf16 %v10400, %v10400
        %v10545 = vpack.c.bf16 %v10401, %v10401
        %v10546 = vpack.c.bf16 %v10402, %v10402
        %v10547 = vpack.c.bf16 %v10403, %v10403
        %v10548 = vpack.c.bf16 %v10404, %v10404
        %v10549 = vpack.c.bf16 %v10405, %v10405
        %v10550 = vpack.c.bf16 %v10406, %v10406
        %v10551 = vpack.c.bf16 %v10407, %v10407
        %v10552 = vpack.c.bf16 %v10408, %v10408
        %v10553 = vpack.c.bf16 %v10409, %v10409
        %v10554 = vpack.c.bf16 %v10410, %v10410
        %v10555 = vpack.c.bf16 %v10411, %v10411
        %v10556 = vpack.c.bf16 %v10412, %v10412
        %v10557 = vpack.c.bf16 %v10413, %v10413
        %v10558 = vpack.c.bf16 %v10414, %v10414
        %v10559 = vpack.c.bf16 %v10415, %v10415
        %v10560 = vpack.c.bf16 %v10416, %v10416
        %v10561 = vpack.c.bf16 %v10417, %v10417
        %v10562 = vpack.c.bf16 %v10418, %v10418
        %v10563 = vpack.c.bf16 %v10419, %v10419
        %v10564 = vpack.c.bf16 %v10420, %v10420
        %v10565 = vpack.c.bf16 %v10421, %v10421
        %v10566 = vpack.c.bf16 %v10422, %v10422
        %v10567 = vpack.c.bf16 %v10423, %v10423
        %v10568 = vpack.c.bf16 %v10424, %v10424
        %v10569 = vpack.c.bf16 %v10425, %v10425
        %v10570 = vpack.c.bf16 %v10426, %v10426
        %v10571 = vpack.c.bf16 %v10427, %v10427
        %v10572 = vpack.c.bf16 %v10428, %v10428
        %v10573 = vpack.c.bf16 %v10429, %v10429
        %v10574 = vpack.c.bf16 %v10430, %v10430
        %v10575 = vpack.c.bf16 %v10431, %v10431
        %v10576 = vpack.c.bf16 %v10432, %v10432
        %v10577 = vpack.c.bf16 %v10433, %v10433
        %v10578 = vpack.c.bf16 %v10434, %v10434
        %v10579 = vpack.c.bf16 %v10435, %v10435
        %v10580 = vpack.c.bf16 %v10436, %v10436
        %v10581 = vpack.c.bf16 %v10437, %v10437
        %v10582 = vpack.c.bf16 %v10438, %v10438
        %v10583 = vpack.c.bf16 %v10439, %v10439
        %v10584 = vpack.c.bf16 %v10440, %v10440
        %v10585 = vpack.c.bf16 %v10441, %v10441
        %v10586 = vpack.c.bf16 %v10442, %v10442
        %10587 = vst [vmem:[%s210] sm:$0xf] %v10443
        %10588 = vst [vmem:[%s210 + $0x4] sm:$0xf] %v10444
        %10589 = vst [vmem:[%s210 + $0x8] sm:$0xf] %v10445
        %10590 = vst [vmem:[%s210 + $0xc] sm:$0xf] %v10446
        %10591 = vst [vmem:[%s210 + $0x10] sm:$0xf] %v10447
        %10592 = vst [vmem:[%s210 + $0x14] sm:$0xf] %v10448
        %10593 = vst [vmem:[%s210 + $0x18] sm:$0xf] %v10449
        %10594 = vst [vmem:[%s210 + $0x1c] sm:$0xf] %v10450
        %10595 = vst [vmem:[%s210 + $0x20] sm:$0xf] %v10451
        %10596 = vst [vmem:[%s210 + $0x24] sm:$0xf] %v10452
        %10597 = vst [vmem:[%s210 + $0x28] sm:$0xf] %v10453
        %10598 = vst [vmem:[%s210 + $0x2c] sm:$0xf] %v10454
        %10599 = vst [vmem:[%s210 + $0x30] sm:$0xf] %v10455
        %10600 = vst [vmem:[%s210 + $0x34] sm:$0xf] %v10456
        %10601 = vst [vmem:[%s210 + $0x38] sm:$0xf] %v10457
        %10602 = vst [vmem:[%s210 + $0x3c] sm:$0xf] %v10458
        %10603 = vst [vmem:[%s210 + $0x40] sm:$0xf] %v10459
        %10604 = vst [vmem:[%s210 + $0x44] sm:$0xf] %v10460
        %10605 = vst [vmem:[%s210 + $0x48] sm:$0xf] %v10461
        %10606 = vst [vmem:[%s210 + $0x4c] sm:$0xf] %v10462
        %10607 = vst [vmem:[%s210 + $0x50] sm:$0xf] %v10463
        %10608 = vst [vmem:[%s210 + $0x54] sm:$0xf] %v10464
        %10609 = vst [vmem:[%s210 + $0x58] sm:$0xf] %v10465
        %10610 = vst [vmem:[%s210 + $0x5c] sm:$0xf] %v10466
        %10611 = vst [vmem:[%s210 + $0x60] sm:$0xf] %v10467
        %10612 = vst [vmem:[%s210 + $0x64] sm:$0xf] %v10468
        %10613 = vst [vmem:[%s210 + $0x68] sm:$0xf] %v10469
        %10614 = vst [vmem:[%s210 + $0x6c] sm:$0xf] %v10470
        %10615 = vst [vmem:[%s210 + $0x70] sm:$0xf] %v10471
        %10616 = vst [vmem:[%s210 + $0x74] sm:$0xf] %v10472
        %10617 = vst [vmem:[%s210 + $0x78] sm:$0xf] %v10473
        %10618 = vst [vmem:[%s210 + $0x7c] sm:$0xf] %v10474
        %10619 = vst [vmem:[%s210 + $0x80] sm:$0xf] %v10475
        %10620 = vst [vmem:[%s210 + $0x84] sm:$0xf] %v10476
        %10621 = vst [vmem:[%s210 + $0x88] sm:$0xf] %v10477
        %10622 = vst [vmem:[%s210 + $0x8c] sm:$0xf] %v10478
        %10623 = vst [vmem:[%s210 + $0x90] sm:$0xf] %v10479
        %10624 = vst [vmem:[%s210 + $0x94] sm:$0xf] %v10480
        %10625 = vst [vmem:[%s210 + $0x98] sm:$0xf] %v10481
        %10626 = vst [vmem:[%s210 + $0x9c] sm:$0xf] %v10482
        %10627 = vst [vmem:[%s210 + $0xa0] sm:$0xf] %v10483
        %10628 = vst [vmem:[%s210 + $0xa4] sm:$0xf] %v10484
        %10629 = vst [vmem:[%s210 + $0xa8] sm:$0xf] %v10485
        %10630 = vst [vmem:[%s210 + $0xac] sm:$0xf] %v10486
        %10631 = vst [vmem:[%s210 + $0xb0] sm:$0xf] %v10487
        %10632 = vst [vmem:[%s210 + $0xb4] sm:$0xf] %v10488
        %10633 = vst [vmem:[%s210 + $0xb8] sm:$0xf] %v10489
        %10634 = vst [vmem:[%s210 + $0xbc] sm:$0xf] %v10490
        %10635 = vst [vmem:[%s210 + $0xc0] sm:$0xf] %v10491
        %10636 = vst [vmem:[%s210 + $0xc4] sm:$0xf] %v10492
        %10637 = vst [vmem:[%s210 + $0xc8] sm:$0xf] %v10493
        %10638 = vst [vmem:[%s210 + $0xcc] sm:$0xf] %v10494
        %10639 = vst [vmem:[%s210 + $0xd0] sm:$0xf] %v10495
        %10640 = vst [vmem:[%s210 + $0xd4] sm:$0xf] %v10496
        %10641 = vst [vmem:[%s210 + $0xd8] sm:$0xf] %v10497
        %10642 = vst [vmem:[%s210 + $0xdc] sm:$0xf] %v10498
        %10643 = vst [vmem:[%s210 + $0xe0] sm:$0xf] %v10499
        %10644 = vst [vmem:[%s210 + $0xe4] sm:$0xf] %v10500
        %10645 = vst [vmem:[%s210 + $0xe8] sm:$0xf] %v10501
        %10646 = vst [vmem:[%s210 + $0xec] sm:$0xf] %v10502
        %10647 = vst [vmem:[%s210 + $0xf0] sm:$0xf] %v10503
        %10648 = vst [vmem:[%s210 + $0xf4] sm:$0xf] %v10504
        %10649 = vst [vmem:[%s210 + $0xf8] sm:$0xf] %v10505
        %10650 = vst [vmem:[%s210 + $0xfc] sm:$0xf] %v10506
        %10651 = vst [vmem:[%s210 + $0x100] sm:$0xf] %v10507
        %10652 = vst [vmem:[%s210 + $0x104] sm:$0xf] %v10508
        %10653 = vst [vmem:[%s210 + $0x108] sm:$0xf] %v10509
        %10654 = vst [vmem:[%s210 + $0x10c] sm:$0xf] %v10510
        %10655 = vst [vmem:[%s210 + $0x110] sm:$0xf] %v10511
        %10656 = vst [vmem:[%s210 + $0x114] sm:$0xf] %v10512
        %10657 = vst [vmem:[%s210 + $0x118] sm:$0xf] %v10513
        %10658 = vst [vmem:[%s210 + $0x11c] sm:$0xf] %v10514
        %10659 = vst [vmem:[%s210 + $0x120] sm:$0xf] %v10515
        %10660 = vst [vmem:[%s210 + $0x124] sm:$0xf] %v10516
        %10661 = vst [vmem:[%s210 + $0x128] sm:$0xf] %v10517
        %10662 = vst [vmem:[%s210 + $0x12c] sm:$0xf] %v10518
        %10663 = vst [vmem:[%s210 + $0x130] sm:$0xf] %v10519
        %10664 = vst [vmem:[%s210 + $0x134] sm:$0xf] %v10520
        %10665 = vst [vmem:[%s210 + $0x138] sm:$0xf] %v10521
        %10666 = vst [vmem:[%s210 + $0x13c] sm:$0xf] %v10522
        %10667 = vst [vmem:[%s210 + $0x140] sm:$0xf] %v10523
        %10668 = vst [vmem:[%s210 + $0x144] sm:$0xf] %v10524
        %10669 = vst [vmem:[%s210 + $0x148] sm:$0xf] %v10525
        %10670 = vst [vmem:[%s210 + $0x14c] sm:$0xf] %v10526
        %10671 = vst [vmem:[%s210 + $0x150] sm:$0xf] %v10527
        %10672 = vst [vmem:[%s210 + $0x154] sm:$0xf] %v10528
        %10673 = vst [vmem:[%s210 + $0x158] sm:$0xf] %v10529
        %10674 = vst [vmem:[%s210 + $0x15c] sm:$0xf] %v10530
        %10675 = vst [vmem:[%s210 + $0x160] sm:$0xf] %v10531
        %10676 = vst [vmem:[%s210 + $0x164] sm:$0xf] %v10532
        %10677 = vst [vmem:[%s210 + $0x168] sm:$0xf] %v10533
        %10678 = vst [vmem:[%s210 + $0x16c] sm:$0xf] %v10534
        %10679 = vst [vmem:[%s210 + $0x170] sm:$0xf] %v10535
        %10680 = vst [vmem:[%s210 + $0x174] sm:$0xf] %v10536
        %10681 = vst [vmem:[%s210 + $0x178] sm:$0xf] %v10537
        %10682 = vst [vmem:[%s210 + $0x17c] sm:$0xf] %v10538
        %10683 = vst [vmem:[%s210 + $0x180] sm:$0xf] %v10539
        %10684 = vst [vmem:[%s210 + $0x184] sm:$0xf] %v10540
        %10685 = vst [vmem:[%s210 + $0x188] sm:$0xf] %v10541
        %10686 = vst [vmem:[%s210 + $0x18c] sm:$0xf] %v10542
        %10687 = vst [vmem:[%s210 + $0x190] sm:$0xf] %v10543
        %10688 = vst [vmem:[%s210 + $0x194] sm:$0xf] %v10544
        %10689 = vst [vmem:[%s210 + $0x198] sm:$0xf] %v10545
        %10690 = vst [vmem:[%s210 + $0x19c] sm:$0xf] %v10546
        %10691 = vst [vmem:[%s210 + $0x1a0] sm:$0xf] %v10547
        %10692 = vst [vmem:[%s210 + $0x1a4] sm:$0xf] %v10548
        %10693 = vst [vmem:[%s210 + $0x1a8] sm:$0xf] %v10549
        %10694 = vst [vmem:[%s210 + $0x1ac] sm:$0xf] %v10550
        %10695 = vst [vmem:[%s210 + $0x1b0] sm:$0xf] %v10551
        %10696 = vst [vmem:[%s210 + $0x1b4] sm:$0xf] %v10552
        %10697 = vst [vmem:[%s210 + $0x1b8] sm:$0xf] %v10553
        %10698 = vst [vmem:[%s210 + $0x1bc] sm:$0xf] %v10554
        %10699 = vst [vmem:[%s210 + $0x1c0] sm:$0xf] %v10555
        %10700 = vst [vmem:[%s210 + $0x1c4] sm:$0xf] %v10556
        %10701 = vst [vmem:[%s210 + $0x1c8] sm:$0xf] %v10557
        %10702 = vst [vmem:[%s210 + $0x1cc] sm:$0xf] %v10558
        %10703 = vst [vmem:[%s210 + $0x1d0] sm:$0xf] %v10559
        %10704 = vst [vmem:[%s210 + $0x1d4] sm:$0xf] %v10560
        %10705 = vst [vmem:[%s210 + $0x1d8] sm:$0xf] %v10561
        %10706 = vst [vmem:[%s210 + $0x1dc] sm:$0xf] %v10562
        %10707 = vst [vmem:[%s210 + $0x1e0] sm:$0xf] %v10563
        %10708 = vst [vmem:[%s210 + $0x1e4] sm:$0xf] %v10564
        %10709 = vst [vmem:[%s210 + $0x1e8] sm:$0xf] %v10565
        %10710 = vst [vmem:[%s210 + $0x1ec] sm:$0xf] %v10566
        %10711 = vst [vmem:[%s210 + $0x1f0] sm:$0xf] %v10567
        %10712 = vst [vmem:[%s210 + $0x1f4] sm:$0xf] %v10568
        %10713 = vst [vmem:[%s210 + $0x1f8] sm:$0xf] %v10569
        %10714 = vst [vmem:[%s210 + $0x1fc] sm:$0xf] %v10570
        %10715 = vst [vmem:[%s210 + $0x200] sm:$0xf] %v10571
        %10716 = vst [vmem:[%s210 + $0x204] sm:$0xf] %v10572
        %10717 = vst [vmem:[%s210 + $0x208] sm:$0xf] %v10573
        %10718 = vst [vmem:[%s210 + $0x20c] sm:$0xf] %v10574
        %10719 = vst [vmem:[%s210 + $0x210] sm:$0xf] %v10575
        %10720 = vst [vmem:[%s210 + $0x214] sm:$0xf] %v10576
        %10721 = vst [vmem:[%s210 + $0x218] sm:$0xf] %v10577
        %10722 = vst [vmem:[%s210 + $0x21c] sm:$0xf] %v10578
        %10723 = vst [vmem:[%s210 + $0x220] sm:$0xf] %v10579
        %10724 = vst [vmem:[%s210 + $0x224] sm:$0xf] %v10580
        %10725 = vst [vmem:[%s210 + $0x228] sm:$0xf] %v10581
        %10726 = vst [vmem:[%s210 + $0x22c] sm:$0xf] %v10582
        %10727 = vst [vmem:[%s210 + $0x230] sm:$0xf] %v10583
        %10728 = vst [vmem:[%s210 + $0x234] sm:$0xf] %v10584
        %10729 = vst [vmem:[%s210 + $0x238] sm:$0xf] %v10585
        %10730 = vst [vmem:[%s210 + $0x23c] sm:$0xf] %v10586
        %s10731 = sand.u32 %s126, 1
        %s10732 = scalar_lea.sflag [#allocation3], %s10731
        %s10733 = sand.u32 %s126, 1
        %s10734 = smul.addr %s10733, 576
        %s10735 = scalar_lea.vmem [#allocation2], %s10734
        // Predicated region
        $region33: #{tpu_custom_call.1} parent=31 // pred_check
          %p10736 = pneg %p136
        $region34: #{tpu_custom_call.1} parent=31 // pred_check_branch
          %10738 = sbr.rel (%p10736) target = $region36
        $region35: #{tpu_custom_call.1} parent=31 // pred_region
          %s10739 = smul.u32 144, %s24
          %10741 = vsyncadd %s10732, 0
          %s10742 = sadd.s32 %s22, %s10739
          %s10743 = smul.addr %s23, 576
          %s10744 = sadd.s32 %s10742, %s10743
          %s10745 = smul.addr %s10744, 4
          %s10746 = scalar_lea.hbm %s3, %s10745
          %s10747 = sshll.u32 %s10735, 4
          %s10748 = int_to_ptr.vmem [resolvable:$true] %s10747
          %s10749 = sshll.u32 %s10746, 4
          %s10750 = int_to_ptr.hbm [resolvable:$true] %s10749
          %10755 = dma.vmem_to_hbm [thread:$0]  %s10748, 9216, %s10750, %s10732, 64, 64, 4
        $region36: #{tpu_custom_call.1} parent=31 // pred_fallthru
          _
      $region32: #{tpu_custom_call.1} parent=5 // pred_fallthru
        _
      %p10756 = scmp.le.s32.totalorder 2, %s12
      // Predicated region
      $region37: #{tpu_custom_call.1} parent=5 // pred_check
        %p10757 = pneg %p10756
      $region38: #{tpu_custom_call.1} parent=5 // pred_check_branch
        %10759 = sbr.rel (%p10757) target = $region40
      $region39: #{tpu_custom_call.1} parent=5 // pred_region
        %s10760 = ssub.s32 %s12, 2
        // Predicated region
        $region41: #{tpu_custom_call.1} parent=39 // pred_check
          %p10761 = pneg %p142
        $region42: #{tpu_custom_call.1} parent=39 // pred_check_branch
          %10763 = sbr.rel (%p10761) target = $region44
        $region43: #{tpu_custom_call.1} parent=39 // pred_region
          %s10764 = sand.u32 %s127, 1
          %s10765 = scalar_lea.sflag [#allocation3], %s10764
          %s10766 = sand.u32 %s127, 1
          %s10767 = smul.addr %s10766, 576
          %s10768 = scalar_lea.vmem [#allocation2], %s10767
          %10770 = dma.done %s10765, 9216
        $region44: #{tpu_custom_call.1} parent=39 // pred_fallthru
          _
      $region40: #{tpu_custom_call.1} parent=5 // pred_fallthru
        _
    $region6: #{tpu_custom_call.1} parent=1 // loop_footer
      %s16 = sadd.s32 1, %s12
    $region7: #{tpu_custom_call.1} parent=1 // loop_footer_branch
      %11 = sbr.rel target = $region3
    $region8: #{tpu_custom_call.1} parent=1 // loop_exit
      _
    %10771 = vsyncpa [#allocation3], 1
    %s10772 = scalar_lea.sflag [#allocation3], 1
    %10773 = vsyncpa %s10772, 1

</llo_original>
